<compile_context>
chip_gen: v7x
topology: tpu7x:2x2x1
jax: 0.10.0
libtpu: 0.0.40
codegen_flags: <defaults>
</compile_context>

<pallas_src>
import functools

import jax
import jax.numpy as jnp
from jax.experimental import pallas as pl
from jax.experimental.pallas import tpu as pltpu

EPS = 1e-5      # nn.BatchNorm2d default
LANE = 128      # TPU lane width


def _round_up(x, m):
    return (x + m - 1) // m * m


def _halo(w):
    # zero rows padded on each side of the flattened (H*W, C) slab; must be
    # >= W + 1 (largest |tap offset|), rounded up so all slab stores stay
    # 8-row (sublane) aligned for the f32 scratch.
    return _round_up(w + 1, 8)


# ----------------------------------------------------------------------------
# Kernel 1: (optional folded BN+ReLU on the input) + 3x3 conv + output stats
# ----------------------------------------------------------------------------
def _conv_stats_kernel(x_ref, w_ref, scale_ref, shift_ref,
                       y_ref, sum_ref, sumsq_ref, xpad_ref,
                       *, H, W, apply_act):
    """One batch element per grid step (batch axis is fully parallel).

    x_ref     : (1, H*W, Cin_p)     input slab (channels-last, lane-dense, bf16)
    w_ref     : (9, Cin_p, Cout_p)  conv taps, bf16
    scale_ref : (1, Cin_p)          folded-BN scale for the input (f32)
    shift_ref : (1, Cin_p)          folded-BN shift for the input (f32)
    y_ref     : (1, H*W, Cout_p)    conv output slab (bf16)
    sum_ref   : (1, 1, Cout_p)      per-image channel sum of y (f32)
    sumsq_ref : (1, 1, Cout_p)      per-image channel sum of y^2 (f32)
    xpad_ref  : (H*W + 2*P, Cin_p)  flat zero-padded input scratch (f32)
    """
    HW = H * W
    P = _halo(W)
    Cin_p = xpad_ref.shape[-1]

    # Zero only the halo rows, not the whole slab.  Done every step (cheap:
    # 2*P rows) so the kernel stays correct when the parallel batch axis is
    # split across TensorCores (each core owns its own scratch).
    zeros_halo = jnp.zeros((P, Cin_p), jnp.float32)
    xpad_ref[0:P, :] = zeros_halo
    xpad_ref[P + HW:P + HW + P, :] = zeros_halo

    # Input slab, optionally with the previous layer's BN+ReLU folded in.
    # Elementwise BN math stays in f32 on every chip generation.
    x = x_ref[0].astype(jnp.float32)                       # (HW, Cin_p)
    if apply_act:
        x = jnp.maximum(x * scale_ref[...] + shift_ref[...], 0.0)
    xpad_ref[P:P + HW, :] = x                              # one aligned slab store
    # TODO(synk): xpad could be held in bf16 (matmul inputs are bf16 anyway)
    # to halve the tap-load bandwidth; kept f32 so all tap slices stay on the
    # well-trodden 32-bit unaligned-sublane path.

    # Column index of each flattened position (for the dw = +/-1 edge masks:
    # in the flat layout a horizontal shift wraps into the neighbouring row).
    col = jax.lax.broadcasted_iota(jnp.int32, (HW, 1), 0) % W
    left_ok = col >= 1                 # dw = -1 taps valid
    right_ok = col <= W - 2            # dw = +1 taps valid

    # 3x3 conv = 9 lane-dense (HW, Cin_p) @ (Cin_p, Cout_p) bf16 matmuls.
    acc = jnp.zeros((HW, w_ref.shape[-1]), jnp.float32)
    for t in range(9):                                     # static, 9 taps
        dh, dw = t // 3 - 1, t % 3 - 1
        start = P + dh * W + dw                            # static slice offset
        tap = xpad_ref[start:start + HW, :]                # (HW, Cin_p) f32
        if dw == -1:
            tap = jnp.where(left_ok, tap, 0.0)
        elif dw == 1:
            tap = jnp.where(right_ok, tap, 0.0)
        acc = acc + jnp.dot(tap.astype(jnp.bfloat16), w_ref[t],
                            preferred_element_type=jnp.float32)

    y_ref[0] = acc.astype(y_ref.dtype)                     # one lane-dense slab store
    # per-image batch-stat partials (from the f32 accumulator); combined
    # across N in the wrapper so the grid axis can stay "parallel".
    sum_ref[...] = jnp.sum(acc, axis=0, keepdims=True)[None]
    sumsq_ref[...] = jnp.sum(acc * acc, axis=0, keepdims=True)[None]


def _conv_bn_pallas(x, w, in_scale, in_shift, *, H, W, apply_act,
                    out_dtype=jnp.bfloat16):
    N, HW, Cin_p = x.shape
    Cout_p = w.shape[-1]
    P = _halo(W)
    kernel = functools.partial(_conv_stats_kernel, H=H, W=W, apply_act=apply_act)
    return pl.pallas_call(
        kernel,
        out_shape=(jax.ShapeDtypeStruct((N, HW, Cout_p), out_dtype),
                   jax.ShapeDtypeStruct((N, 1, Cout_p), jnp.float32),
                   jax.ShapeDtypeStruct((N, 1, Cout_p), jnp.float32)),
        grid_spec=pltpu.PrefetchScalarGridSpec(
            num_scalar_prefetch=0,
            grid=(N,),
            in_specs=[
                pl.BlockSpec((1, HW, Cin_p), lambda n: (n, 0, 0)),
                pl.BlockSpec((9, Cin_p, Cout_p), lambda n: (0, 0, 0)),  # resident
                pl.BlockSpec((1, Cin_p), lambda n: (0, 0)),
                pl.BlockSpec((1, Cin_p), lambda n: (0, 0)),
            ],
            out_specs=(
                pl.BlockSpec((1, HW, Cout_p), lambda n: (n, 0, 0)),
                pl.BlockSpec((1, 1, Cout_p), lambda n: (n, 0, 0)),
                pl.BlockSpec((1, 1, Cout_p), lambda n: (n, 0, 0)),
            ),
            scratch_shapes=[pltpu.VMEM((HW + 2 * P, Cin_p), jnp.float32)],
        ),
        compiler_params=pltpu.CompilerParams(
            dimension_semantics=("parallel",),   # per-image outputs -> megacore OK
            vmem_limit_bytes=32 * 1024 * 1024),
    )(x, w, in_scale, in_shift)
    # TODO(synk): for large images (v7x: 64 MiB VMEM) tile the H*W axis into
    # row strips with a 1-row halo instead of one whole image per grid step.


# ----------------------------------------------------------------------------
# Kernel 2: final BatchNorm (folded scale/shift) + ReLU + channel transpose
# ----------------------------------------------------------------------------
def _bn_relu_transpose_kernel(y_ref, scale_ref, shift_ref, o_ref, *, Cout):
    y = y_ref[0].astype(jnp.float32)                       # (HW, Cout_p)
    a = jnp.maximum(y * scale_ref[...] + shift_ref[...], 0.0)
    # fuse the channels-last -> channels-first transpose: the store stays
    # lane-dense (last dim = H*W) and the wrapper NCHW reshape is free.
    o_ref[0] = a.T[:Cout, :]                               # (Cout, HW)


def _bn_relu_transpose_pallas(y, scale, shift, cout):
    N, HW, Cout_p = y.shape
    kernel = functools.partial(_bn_relu_transpose_kernel, Cout=cout)
    return pl.pallas_call(
        kernel,
        out_shape=jax.ShapeDtypeStruct((N, cout, HW), jnp.float32),
        grid_spec=pltpu.PrefetchScalarGridSpec(
            num_scalar_prefetch=0,
            grid=(N,),
            in_specs=[pl.BlockSpec((1, HW, Cout_p), lambda n: (n, 0, 0)),
                      pl.BlockSpec((1, Cout_p), lambda n: (0, 0)),
                      pl.BlockSpec((1, Cout_p), lambda n: (0, 0))],
            out_specs=pl.BlockSpec((1, cout, HW), lambda n: (n, 0, 0))),
        compiler_params=pltpu.CompilerParams(
            dimension_semantics=("parallel",),
            vmem_limit_bytes=32 * 1024 * 1024),
    )(y, scale, shift)


# ----------------------------------------------------------------------------
# Full DoubleConv forward (PyTorch-style NCHW in / NCHW out)
# ----------------------------------------------------------------------------
def _prep_weight(w_oihw, cin_p, cout_p):
    co, ci, kh, kw = w_oihw.shape
    w = jnp.transpose(w_oihw, (2, 3, 1, 0)).reshape(kh * kw, ci, co)  # (9,Cin,Cout)
    w = jnp.pad(w, ((0, 0), (0, cin_p - ci), (0, cout_p - co)))
    return w.astype(jnp.bfloat16)          # native MXU dtype


def double_conv(x_nchw, w1_oihw, gamma1, beta1, w2_oihw, gamma2, beta2):
    N, Cin, H, W = x_nchw.shape
    Cout = w1_oihw.shape[0]
    HW = H * W
    Cin_p = _round_up(Cin, LANE)
    Cout_p = _round_up(Cout, LANE)
    count = float(N * HW)

    # layout glue: NCHW -> lane-dense channels-last slab (N, H*W, Cin_p), bf16
    x = jnp.transpose(x_nchw, (0, 2, 3, 1)).reshape(N, HW, Cin)
    x = jnp.pad(x, ((0, 0), (0, 0), (0, Cin_p - Cin))).astype(jnp.bfloat16)

    w1 = _prep_weight(w1_oihw, Cin_p, Cout_p)
    w2 = _prep_weight(w2_oihw, Cout_p, Cout_p)

    def pad_vec(v):
        return jnp.pad(v.astype(jnp.float32), (0, Cout_p - Cout)).reshape(1, Cout_p)

    g1, b1 = pad_vec(gamma1), pad_vec(beta1)
    g2, b2 = pad_vec(gamma2), pad_vec(beta2)

    ones = jnp.ones((1, Cin_p), jnp.float32)
    zeros = jnp.zeros((1, Cin_p), jnp.float32)

    # --- conv1 (+ per-image batch stats of its output), bf16 activation slab ---
    y1, s1, sq1 = _conv_bn_pallas(x, w1, ones, zeros, H=H, W=W, apply_act=False)
    mean1 = jnp.sum(s1, axis=0) / count                      # (1, Cout_p)
    var1 = jnp.maximum(jnp.sum(sq1, axis=0) / count - mean1 * mean1, 0.0)
    scale1 = g1 / jnp.sqrt(var1 + EPS)
    shift1 = b1 - mean1 * scale1

    # --- BN1 + ReLU1 folded into conv2 (+ stats of conv2 output) ---
    y2, s2, sq2 = _conv_bn_pallas(y1, w2, scale1, shift1, H=H, W=W, apply_act=True)
    mean2 = jnp.sum(s2, axis=0) / count
    var2 = jnp.maximum(jnp.sum(sq2, axis=0) / count - mean2 * mean2, 0.0)
    scale2 = g2 / jnp.sqrt(var2 + EPS)
    shift2 = b2 - mean2 * scale2

    # --- BN2 + ReLU2 fused with the channels-first transpose ---
    out = _bn_relu_transpose_pallas(y2, scale2, shift2, Cout)   # (N, Cout, H*W)
    return out.reshape(N, Cout, H, W)
    # TODO(synk): BatchNorm running_mean / running_var buffer updates (a
    # training-time side effect) are not modeled; forward output is unaffected.


# ----------------------------------------------------------------------------
# Pure-JAX reference (mirrors the PyTorch forward in training mode); matmuls
# run in bf16 with f32 accumulation, intermediates are kept in f32.  The
# kernel additionally stores its intermediate activation slabs in bf16 (HBM
# bandwidth), so the comparison tolerance covers one extra bf16 rounding.
# ----------------------------------------------------------------------------
def _reference(x, w1, gamma1, beta1, w2, gamma2, beta2):
    def conv(x, w):
        return jax.lax.conv_general_dilated(
            x.astype(jnp.bfloat16), w.astype(jnp.bfloat16),
            window_strides=(1, 1), padding=((1, 1), (1, 1)),
            dimension_numbers=("NCHW", "OIHW", "NCHW"),
            preferred_element_type=jnp.float32)

    def bn_relu(y, g, b):
        mean = jnp.mean(y, axis=(0, 2, 3), keepdims=True)
        var = jnp.var(y, axis=(0, 2, 3), keepdims=True)
        yn = (y - mean) / jnp.sqrt(var + EPS)
        yn = yn * g.reshape(1, -1, 1, 1) + b.reshape(1, -1, 1, 1)
        return jnp.maximum(yn, 0.0)

    h = bn_relu(conv(x, w1), gamma1, beta1)
    return bn_relu(conv(h, w2), gamma2, beta2)


if __name__ == "__main__":
    key = jax.random.PRNGKey(0)
    k_x, k_w1, k_w2, k_g1, k_b1, k_g2, k_b2 = jax.random.split(key, 7)

    N, Cin, Cout, H, W = 2, 4, 8, 16, 16
    x = jax.random.normal(k_x, (N, Cin, H, W), jnp.float32)
    # deterministic synthetic parameters (shapes follow nn.Conv2d / nn.BatchNorm2d)
    w1 = 0.2 * jax.random.normal(k_w1, (Cout, Cin, 3, 3), jnp.float32)   # OIHW
    w2 = 0.2 * jax.random.normal(k_w2, (Cout, Cout, 3, 3), jnp.float32)  # OIHW
    gamma1 = 1.0 + 0.1 * jax.random.normal(k_g1, (Cout,), jnp.float32)
    beta1 = 0.1 * jax.random.normal(k_b1, (Cout,), jnp.float32)
    gamma2 = 1.0 + 0.1 * jax.random.normal(k_g2, (Cout,), jnp.float32)
    beta2 = 0.1 * jax.random.normal(k_b2, (Cout,), jnp.float32)

    out = jax.jit(double_conv)(x, w1, gamma1, beta1, w2, gamma2, beta2)
    out = jax.block_until_ready(out)

    ref = _reference(x, w1, gamma1, beta1, w2, gamma2, beta2)
    assert out.shape == (N, Cout, H, W), out.shape
    max_err = float(jnp.max(jnp.abs(out - ref)))
    # tolerance covers the intentional bf16 storage of the intermediate
    # activation slabs (reference keeps them f32).
    assert jnp.allclose(out, ref, atol=3e-2, rtol=2e-2), f"max_err={max_err}"

    print("KERNEL_OK")
</pallas_src>

<mosaic_0001>
module attributes {stable_mosaic.version = 11 : i64} {
  func.func @_conv_stats_kernel(%arg0: i32, %arg1: memref<1x256x128xbf16, #tpu.memory_space<vmem>>, %arg2: memref<9x128x128xbf16, #tpu.memory_space<vmem>>, %arg3: memref<1x128xf32, #tpu.memory_space<vmem>>, %arg4: memref<1x128xf32, #tpu.memory_space<vmem>>, %arg5: memref<1x256x128xbf16, #tpu.memory_space<vmem>>, %arg6: memref<1x1x128xf32, #tpu.memory_space<vmem>>, %arg7: memref<1x1x128xf32, #tpu.memory_space<vmem>>, %arg8: memref<304x128xf32, #tpu.memory_space<vmem>>) attributes {dimension_semantics = [#tpu.dimension_semantics<parallel>], iteration_bounds = array<i64: 2>, scalar_prefetch = 0 : i64, scratch_operands = 1 : i64, tpu.core_type = #tpu.core_type<tc>, window_params = [{transform_indices = @transform_0, window_bounds = array<i64: 1, 256, 128>}, {pipeline_mode = #tpu.pipeline_mode<synchronous>, transform_indices = @transform_1, window_bounds = array<i64: 9, 128, 128>}, {pipeline_mode = #tpu.pipeline_mode<synchronous>, transform_indices = @transform_2, window_bounds = array<i64: 1, 128>}, {pipeline_mode = #tpu.pipeline_mode<synchronous>, transform_indices = @transform_3, window_bounds = array<i64: 1, 128>}, {transform_indices = @transform_4, window_bounds = array<i64: 1, 256, 128>}, {transform_indices = @transform_5, window_bounds = array<i64: 1, 1, 128>}, {transform_indices = @transform_6, window_bounds = array<i64: 1, 1, 128>}]} {
    %cst = arith.constant 0.000000e+00 : f32
    %0 = vector.broadcast %cst : f32 to vector<24x128xf32>
    %c0 = arith.constant 0 : index
    %c0_0 = arith.constant 0 : index
    %1 = vector.load %arg8[%c0, %c0_0] : memref<304x128xf32, #tpu.memory_space<vmem>>, vector<24x128xf32>
    tpu.vector_store %arg8[%c0, %c0_0], %0 {strides = array<i32>} : memref<304x128xf32, #tpu.memory_space<vmem>>, vector<24x128xf32>,
    %c280 = arith.constant 280 : index
    %c0_1 = arith.constant 0 : index
    %2 = vector.load %arg8[%c280, %c0_1] : memref<304x128xf32, #tpu.memory_space<vmem>>, vector<24x128xf32>
    tpu.vector_store %arg8[%c280, %c0_1], %0 {strides = array<i32>} : memref<304x128xf32, #tpu.memory_space<vmem>>, vector<24x128xf32>,
    %c0_2 = arith.constant 0 : index
    %c0_3 = arith.constant 0 : index
    %c0_4 = arith.constant 0 : index
    %3 = vector.load %arg1[%c0_2, %c0_3, %c0_4] : memref<1x256x128xbf16, #tpu.memory_space<vmem>>, vector<1x256x128xbf16>
    %4 = vector.shape_cast %3 : vector<1x256x128xbf16> to vector<256x128xbf16>
    %5 = arith.extf %4 : vector<256x128xbf16> to vector<256x128xf32>
    %c24 = arith.constant 24 : index
    %c0_5 = arith.constant 0 : index
    %6 = vector.load %arg8[%c24, %c0_5] : memref<304x128xf32, #tpu.memory_space<vmem>>, vector<256x128xf32>
    tpu.vector_store %arg8[%c24, %c0_5], %5 {strides = array<i32>} : memref<304x128xf32, #tpu.memory_space<vmem>>, vector<256x128xf32>,
    %7 = tpu.iota {dimensions = array<i32: 0>} : vector<256x1xi32>
    %c16_i32 = arith.constant 16 : i32
    %c0_i32 = arith.constant 0 : i32
    %8 = arith.cmpi eq, %c16_i32, %c0_i32 : i32
    %c1_i32 = arith.constant 1 : i32
    %9 = arith.select %8, %c1_i32, %c16_i32 : i32
    %10 = vector.broadcast %9 : i32 to vector<256x1xi32>
    %11 = arith.remsi %7, %10 : vector<256x1xi32>
    %c0_i32_6 = arith.constant 0 : i32
    %12 = vector.broadcast %c0_i32_6 : i32 to vector<256x1xi32>
    %13 = arith.cmpi ne, %11, %12 : vector<256x1xi32>
    %c0_i32_7 = arith.constant 0 : i32
    %14 = vector.broadcast %c0_i32_7 : i32 to vector<256x1xi32>
    %15 = arith.cmpi slt, %11, %14 : vector<256x1xi32>
    %c0_i32_8 = arith.constant 0 : i32
    %16 = arith.cmpi slt, %9, %c0_i32_8 : i32
    %17 = vector.broadcast %16 : i1 to vector<256x1xi1>
    %18 = vector.broadcast %17 : vector<256x1xi1> to vector<256x1xi1>
    %19 = arith.xori %15, %18 : vector<256x1xi1>
    %20 = arith.andi %19, %13 : vector<256x1xi1>
    %21 = vector.broadcast %9 : i32 to vector<256x1xi32>
    %22 = arith.addi %11, %21 : vector<256x1xi32>
    %23 = arith.select %20, %22, %11 : vector<256x1xi1>, vector<256x1xi32>
    %c1_i32_9 = arith.constant 1 : i32
    %24 = vector.broadcast %c1_i32_9 : i32 to vector<256x1xi32>
    %25 = arith.cmpi sge, %23, %24 : vector<256x1xi32>
    %c14_i32 = arith.constant 14 : i32
    %26 = vector.broadcast %c14_i32 : i32 to vector<256x1xi32>
    %27 = arith.cmpi sle, %23, %26 : vector<256x1xi32>
    %cst_10 = arith.constant 0.000000e+00 : f32
    %28 = vector.broadcast %cst_10 : f32 to vector<256x128xf32>
    %c7 = arith.constant 7 : index
    %c0_11 = arith.constant 0 : index
    %29 = vector.load %arg8[%c7, %c0_11] : memref<304x128xf32, #tpu.memory_space<vmem>>, vector<256x128xf32>
    %cst_12 = arith.constant 0.000000e+00 : f32
    %30 = vector.shape_cast %25 : vector<256x1xi1> to vector<256x1xi1>
    %31 = vector.broadcast %30 : vector<256x1xi1> to vector<256x128xi1>
    %32 = vector.broadcast %cst_12 : f32 to vector<256x128xf32>
    %33 = arith.select %31, %29, %32 : vector<256x128xi1>, vector<256x128xf32>
    %34 = arith.truncf %33 : vector<256x128xf32> to vector<256x128xbf16>
    %c0_13 = arith.constant 0 : index
    %c0_14 = arith.constant 0 : index
    %c0_15 = arith.constant 0 : index
    %35 = vector.load %arg2[%c0_13, %c0_14, %c0_15] : memref<9x128x128xbf16, #tpu.memory_space<vmem>>, vector<1x128x128xbf16>
    %36 = vector.shape_cast %35 : vector<1x128x128xbf16> to vector<128x128xbf16>
    %cst_16 = arith.constant dense<0.000000e+00> : vector<256x128xf32>
    %37 = tpu.matmul %34, %36, %cst_16 {dimension_numbers = #tpu.dot_dimension_numbers<[1], [0], [0], [1], [0, 0, 1, 1], [], []>} : vector<256x128xbf16>, vector<128x128xbf16>, vector<256x128xf32> -> vector<256x128xf32>
    %38 = arith.addf %28, %37 : vector<256x128xf32>
    %c8 = arith.constant 8 : index
    %c0_17 = arith.constant 0 : index
    %39 = vector.load %arg8[%c8, %c0_17] : memref<304x128xf32, #tpu.memory_space<vmem>>, vector<256x128xf32>
    %40 = arith.truncf %39 : vector<256x128xf32> to vector<256x128xbf16>
    %c1 = arith.constant 1 : index
    %c0_18 = arith.constant 0 : index
    %c0_19 = arith.constant 0 : index
    %41 = vector.load %arg2[%c1, %c0_18, %c0_19] : memref<9x128x128xbf16, #tpu.memory_space<vmem>>, vector<1x128x128xbf16>
    %42 = vector.shape_cast %41 : vector<1x128x128xbf16> to vector<128x128xbf16>
    %cst_20 = arith.constant dense<0.000000e+00> : vector<256x128xf32>
    %43 = tpu.matmul %40, %42, %cst_20 {dimension_numbers = #tpu.dot_dimension_numbers<[1], [0], [0], [1], [0, 0, 1, 1], [], []>} : vector<256x128xbf16>, vector<128x128xbf16>, vector<256x128xf32> -> vector<256x128xf32>
    %44 = arith.addf %38, %43 : vector<256x128xf32>
    %c9 = arith.constant 9 : index
    %c0_21 = arith.constant 0 : index
    %45 = vector.load %arg8[%c9, %c0_21] : memref<304x128xf32, #tpu.memory_space<vmem>>, vector<256x128xf32>
    %cst_22 = arith.constant 0.000000e+00 : f32
    %46 = vector.shape_cast %27 : vector<256x1xi1> to vector<256x1xi1>
    %47 = vector.broadcast %46 : vector<256x1xi1> to vector<256x128xi1>
    %48 = vector.broadcast %cst_22 : f32 to vector<256x128xf32>
    %49 = arith.select %47, %45, %48 : vector<256x128xi1>, vector<256x128xf32>
    %50 = arith.truncf %49 : vector<256x128xf32> to vector<256x128xbf16>
    %c2 = arith.constant 2 : index
    %c0_23 = arith.constant 0 : index
    %c0_24 = arith.constant 0 : index
    %51 = vector.load %arg2[%c2, %c0_23, %c0_24] : memref<9x128x128xbf16, #tpu.memory_space<vmem>>, vector<1x128x128xbf16>
    %52 = vector.shape_cast %51 : vector<1x128x128xbf16> to vector<128x128xbf16>
    %cst_25 = arith.constant dense<0.000000e+00> : vector<256x128xf32>
    %53 = tpu.matmul %50, %52, %cst_25 {dimension_numbers = #tpu.dot_dimension_numbers<[1], [0], [0], [1], [0, 0, 1, 1], [], []>} : vector<256x128xbf16>, vector<128x128xbf16>, vector<256x128xf32> -> vector<256x128xf32>
    %54 = arith.addf %44, %53 : vector<256x128xf32>
    %c23 = arith.constant 23 : index
    %c0_26 = arith.constant 0 : index
    %55 = vector.load %arg8[%c23, %c0_26] : memref<304x128xf32, #tpu.memory_space<vmem>>, vector<256x128xf32>
    %cst_27 = arith.constant 0.000000e+00 : f32
    %56 = vector.shape_cast %25 : vector<256x1xi1> to vector<256x1xi1>
    %57 = vector.broadcast %56 : vector<256x1xi1> to vector<256x128xi1>
    %58 = vector.broadcast %cst_27 : f32 to vector<256x128xf32>
    %59 = arith.select %57, %55, %58 : vector<256x128xi1>, vector<256x128xf32>
    %60 = arith.truncf %59 : vector<256x128xf32> to vector<256x128xbf16>
    %c3 = arith.constant 3 : index
    %c0_28 = arith.constant 0 : index
    %c0_29 = arith.constant 0 : index
    %61 = vector.load %arg2[%c3, %c0_28, %c0_29] : memref<9x128x128xbf16, #tpu.memory_space<vmem>>, vector<1x128x128xbf16>
    %62 = vector.shape_cast %61 : vector<1x128x128xbf16> to vector<128x128xbf16>
    %cst_30 = arith.constant dense<0.000000e+00> : vector<256x128xf32>
    %63 = tpu.matmul %60, %62, %cst_30 {dimension_numbers = #tpu.dot_dimension_numbers<[1], [0], [0], [1], [0, 0, 1, 1], [], []>} : vector<256x128xbf16>, vector<128x128xbf16>, vector<256x128xf32> -> vector<256x128xf32>
    %64 = arith.addf %54, %63 : vector<256x128xf32>
    %c24_31 = arith.constant 24 : index
    %c0_32 = arith.constant 0 : index
    %65 = vector.load %arg8[%c24_31, %c0_32] : memref<304x128xf32, #tpu.memory_space<vmem>>, vector<256x128xf32>
    %66 = arith.truncf %65 : vector<256x128xf32> to vector<256x128xbf16>
    %c4 = arith.constant 4 : index
    %c0_33 = arith.constant 0 : index
    %c0_34 = arith.constant 0 : index
    %67 = vector.load %arg2[%c4, %c0_33, %c0_34] : memref<9x128x128xbf16, #tpu.memory_space<vmem>>, vector<1x128x128xbf16>
    %68 = vector.shape_cast %67 : vector<1x128x128xbf16> to vector<128x128xbf16>
    %cst_35 = arith.constant dense<0.000000e+00> : vector<256x128xf32>
    %69 = tpu.matmul %66, %68, %cst_35 {dimension_numbers = #tpu.dot_dimension_numbers<[1], [0], [0], [1], [0, 0, 1, 1], [], []>} : vector<256x128xbf16>, vector<128x128xbf16>, vector<256x128xf32> -> vector<256x128xf32>
    %70 = arith.addf %64, %69 : vector<256x128xf32>
    %c25 = arith.constant 25 : index
    %c0_36 = arith.constant 0 : index
    %71 = vector.load %arg8[%c25, %c0_36] : memref<304x128xf32, #tpu.memory_space<vmem>>, vector<256x128xf32>
    %cst_37 = arith.constant 0.000000e+00 : f32
    %72 = vector.shape_cast %27 : vector<256x1xi1> to vector<256x1xi1>
    %73 = vector.broadcast %72 : vector<256x1xi1> to vector<256x128xi1>
    %74 = vector.broadcast %cst_37 : f32 to vector<256x128xf32>
    %75 = arith.select %73, %71, %74 : vector<256x128xi1>, vector<256x128xf32>
    %76 = arith.truncf %75 : vector<256x128xf32> to vector<256x128xbf16>
    %c5 = arith.constant 5 : index
    %c0_38 = arith.constant 0 : index
    %c0_39 = arith.constant 0 : index
    %77 = vector.load %arg2[%c5, %c0_38, %c0_39] : memref<9x128x128xbf16, #tpu.memory_space<vmem>>, vector<1x128x128xbf16>
    %78 = vector.shape_cast %77 : vector<1x128x128xbf16> to vector<128x128xbf16>
    %cst_40 = arith.constant dense<0.000000e+00> : vector<256x128xf32>
    %79 = tpu.matmul %76, %78, %cst_40 {dimension_numbers = #tpu.dot_dimension_numbers<[1], [0], [0], [1], [0, 0, 1, 1], [], []>} : vector<256x128xbf16>, vector<128x128xbf16>, vector<256x128xf32> -> vector<256x128xf32>
    %80 = arith.addf %70, %79 : vector<256x128xf32>
    %c39 = arith.constant 39 : index
    %c0_41 = arith.constant 0 : index
    %81 = vector.load %arg8[%c39, %c0_41] : memref<304x128xf32, #tpu.memory_space<vmem>>, vector<256x128xf32>
    %cst_42 = arith.constant 0.000000e+00 : f32
    %82 = vector.shape_cast %25 : vector<256x1xi1> to vector<256x1xi1>
    %83 = vector.broadcast %82 : vector<256x1xi1> to vector<256x128xi1>
    %84 = vector.broadcast %cst_42 : f32 to vector<256x128xf32>
    %85 = arith.select %83, %81, %84 : vector<256x128xi1>, vector<256x128xf32>
    %86 = arith.truncf %85 : vector<256x128xf32> to vector<256x128xbf16>
    %c6 = arith.constant 6 : index
    %c0_43 = arith.constant 0 : index
    %c0_44 = arith.constant 0 : index
    %87 = vector.load %arg2[%c6, %c0_43, %c0_44] : memref<9x128x128xbf16, #tpu.memory_space<vmem>>, vector<1x128x128xbf16>
    %88 = vector.shape_cast %87 : vector<1x128x128xbf16> to vector<128x128xbf16>
    %cst_45 = arith.constant dense<0.000000e+00> : vector<256x128xf32>
    %89 = tpu.matmul %86, %88, %cst_45 {dimension_numbers = #tpu.dot_dimension_numbers<[1], [0], [0], [1], [0, 0, 1, 1], [], []>} : vector<256x128xbf16>, vector<128x128xbf16>, vector<256x128xf32> -> vector<256x128xf32>
    %90 = arith.addf %80, %89 : vector<256x128xf32>
    %c40 = arith.constant 40 : index
    %c0_46 = arith.constant 0 : index
    %91 = vector.load %arg8[%c40, %c0_46] : memref<304x128xf32, #tpu.memory_space<vmem>>, vector<256x128xf32>
    %92 = arith.truncf %91 : vector<256x128xf32> to vector<256x128xbf16>
    %c7_47 = arith.constant 7 : index
    %c0_48 = arith.constant 0 : index
    %c0_49 = arith.constant 0 : index
    %93 = vector.load %arg2[%c7_47, %c0_48, %c0_49] : memref<9x128x128xbf16, #tpu.memory_space<vmem>>, vector<1x128x128xbf16>
    %94 = vector.shape_cast %93 : vector<1x128x128xbf16> to vector<128x128xbf16>
    %cst_50 = arith.constant dense<0.000000e+00> : vector<256x128xf32>
    %95 = tpu.matmul %92, %94, %cst_50 {dimension_numbers = #tpu.dot_dimension_numbers<[1], [0], [0], [1], [0, 0, 1, 1], [], []>} : vector<256x128xbf16>, vector<128x128xbf16>, vector<256x128xf32> -> vector<256x128xf32>
    %96 = arith.addf %90, %95 : vector<256x128xf32>
    %c41 = arith.constant 41 : index
    %c0_51 = arith.constant 0 : index
    %97 = vector.load %arg8[%c41, %c0_51] : memref<304x128xf32, #tpu.memory_space<vmem>>, vector<256x128xf32>
    %cst_52 = arith.constant 0.000000e+00 : f32
    %98 = vector.shape_cast %27 : vector<256x1xi1> to vector<256x1xi1>
    %99 = vector.broadcast %98 : vector<256x1xi1> to vector<256x128xi1>
    %100 = vector.broadcast %cst_52 : f32 to vector<256x128xf32>
    %101 = arith.select %99, %97, %100 : vector<256x128xi1>, vector<256x128xf32>
    %102 = arith.truncf %101 : vector<256x128xf32> to vector<256x128xbf16>
    %c8_53 = arith.constant 8 : index
    %c0_54 = arith.constant 0 : index
    %c0_55 = arith.constant 0 : index
    %103 = vector.load %arg2[%c8_53, %c0_54, %c0_55] : memref<9x128x128xbf16, #tpu.memory_space<vmem>>, vector<1x128x128xbf16>
    %104 = vector.shape_cast %103 : vector<1x128x128xbf16> to vector<128x128xbf16>
    %cst_56 = arith.constant dense<0.000000e+00> : vector<256x128xf32>
    %105 = tpu.matmul %102, %104, %cst_56 {dimension_numbers = #tpu.dot_dimension_numbers<[1], [0], [0], [1], [0, 0, 1, 1], [], []>} : vector<256x128xbf16>, vector<128x128xbf16>, vector<256x128xf32> -> vector<256x128xf32>
    %106 = arith.addf %96, %105 : vector<256x128xf32>
    %107 = arith.truncf %106 : vector<256x128xf32> to vector<256x128xbf16>
    %c0_57 = arith.constant 0 : index
    %c0_58 = arith.constant 0 : index
    %c0_59 = arith.constant 0 : index
    %108 = vector.load %arg5[%c0_57, %c0_58, %c0_59] : memref<1x256x128xbf16, #tpu.memory_space<vmem>>, vector<1x256x128xbf16>
    %109 = vector.shape_cast %108 : vector<1x256x128xbf16> to vector<256x128xbf16>
    %110 = vector.shape_cast %107 : vector<256x128xbf16> to vector<1x256x128xbf16>
    tpu.vector_store %arg5[%c0_57, %c0_58, %c0_59], %110 {strides = array<i32>} : memref<1x256x128xbf16, #tpu.memory_space<vmem>>, vector<1x256x128xbf16>,
    %cst_60 = arith.constant dense<0.000000e+00> : vector<128xf32>
    %111 = vector.multi_reduction <add>, %106, %cst_60 [0] : vector<256x128xf32> to vector<128xf32>
    %112 = vector.shape_cast %111 : vector<128xf32> to vector<1x128xf32>
    %113 = vector.shape_cast %112 : vector<1x128xf32> to vector<1x1x128xf32>
    %c0_61 = arith.constant 0 : index
    %c0_62 = arith.constant 0 : index
    %c0_63 = arith.constant 0 : index
    %114 = vector.load %arg6[%c0_61, %c0_62, %c0_63] : memref<1x1x128xf32, #tpu.memory_space<vmem>>, vector<1x1x128xf32>
    tpu.vector_store %arg6[%c0_61, %c0_62, %c0_63], %113 {strides = array<i32>} : memref<1x1x128xf32, #tpu.memory_space<vmem>>, vector<1x1x128xf32>,
    %115 = arith.mulf %106, %106 : vector<256x128xf32>
    %cst_64 = arith.constant dense<0.000000e+00> : vector<128xf32>
    %116 = vector.multi_reduction <add>, %115, %cst_64 [0] : vector<256x128xf32> to vector<128xf32>
    %117 = vector.shape_cast %116 : vector<128xf32> to vector<1x128xf32>
    %118 = vector.shape_cast %117 : vector<1x128xf32> to vector<1x1x128xf32>
    %c0_65 = arith.constant 0 : index
    %c0_66 = arith.constant 0 : index
    %c0_67 = arith.constant 0 : index
    %119 = vector.load %arg7[%c0_65, %c0_66, %c0_67] : memref<1x1x128xf32, #tpu.memory_space<vmem>>, vector<1x1x128xf32>
    tpu.vector_store %arg7[%c0_65, %c0_66, %c0_67], %118 {strides = array<i32>} : memref<1x1x128xf32, #tpu.memory_space<vmem>>, vector<1x1x128xf32>,
    return
  }
  func.func @transform_0(%arg0: i32) -> (i32, i32, i32) {
    %c0_i32 = arith.constant 0 : i32
    %c0_i32_0 = arith.constant 0 : i32
    %c0_i32_1 = arith.constant 0 : i32
    return %arg0, %c0_i32, %c0_i32_0 : i32, i32, i32
  }
  func.func @transform_1(%arg0: i32) -> (i32, i32, i32) {
    %c0_i32 = arith.constant 0 : i32
    %c0_i32_0 = arith.constant 0 : i32
    %c0_i32_1 = arith.constant 0 : i32
    %c0_i32_2 = arith.constant 0 : i32
    return %c0_i32, %c0_i32_0, %c0_i32_1 : i32, i32, i32
  }
  func.func @transform_2(%arg0: i32) -> (i32, i32) {
    %c0_i32 = arith.constant 0 : i32
    %c0_i32_0 = arith.constant 0 : i32
    %c0_i32_1 = arith.constant 0 : i32
    return %c0_i32, %c0_i32_0 : i32, i32
  }
  func.func @transform_3(%arg0: i32) -> (i32, i32) {
    %c0_i32 = arith.constant 0 : i32
    %c0_i32_0 = arith.constant 0 : i32
    %c0_i32_1 = arith.constant 0 : i32
    return %c0_i32, %c0_i32_0 : i32, i32
  }
  func.func @transform_4(%arg0: i32) -> (i32, i32, i32) {
    %c0_i32 = arith.constant 0 : i32
    %c0_i32_0 = arith.constant 0 : i32
    %c0_i32_1 = arith.constant 0 : i32
    return %arg0, %c0_i32, %c0_i32_0 : i32, i32, i32
  }
  func.func @transform_5(%arg0: i32) -> (i32, i32, i32) {
    %c0_i32 = arith.constant 0 : i32
    %c0_i32_0 = arith.constant 0 : i32
    %c0_i32_1 = arith.constant 0 : i32
    return %arg0, %c0_i32, %c0_i32_0 : i32, i32, i32
  }
  func.func @transform_6(%arg0: i32) -> (i32, i32, i32) {
    %c0_i32 = arith.constant 0 : i32
    %c0_i32_0 = arith.constant 0 : i32
    %c0_i32_1 = arith.constant 0 : i32
    return %arg0, %c0_i32, %c0_i32_0 : i32, i32, i32
  }
}

module attributes {stable_mosaic.version = 11 : i64} {
  func.func @_conv_stats_kernel(%arg0: i32, %arg1: memref<1x256x128xbf16, #tpu.memory_space<vmem>>, %arg2: memref<9x128x128xbf16, #tpu.memory_space<vmem>>, %arg3: memref<1x128xf32, #tpu.memory_space<vmem>>, %arg4: memref<1x128xf32, #tpu.memory_space<vmem>>, %arg5: memref<1x256x128xbf16, #tpu.memory_space<vmem>>, %arg6: memref<1x1x128xf32, #tpu.memory_space<vmem>>, %arg7: memref<1x1x128xf32, #tpu.memory_space<vmem>>, %arg8: memref<304x128xf32, #tpu.memory_space<vmem>>) attributes {dimension_semantics = [#tpu.dimension_semantics<parallel>], iteration_bounds = array<i64: 2>, scalar_prefetch = 0 : i64, scratch_operands = 1 : i64, tpu.core_type = #tpu.core_type<tc>, window_params = [{transform_indices = @transform_0, window_bounds = array<i64: 1, 256, 128>}, {pipeline_mode = #tpu.pipeline_mode<synchronous>, transform_indices = @transform_1, window_bounds = array<i64: 9, 128, 128>}, {pipeline_mode = #tpu.pipeline_mode<synchronous>, transform_indices = @transform_2, window_bounds = array<i64: 1, 128>}, {pipeline_mode = #tpu.pipeline_mode<synchronous>, transform_indices = @transform_3, window_bounds = array<i64: 1, 128>}, {transform_indices = @transform_4, window_bounds = array<i64: 1, 256, 128>}, {transform_indices = @transform_5, window_bounds = array<i64: 1, 1, 128>}, {transform_indices = @transform_6, window_bounds = array<i64: 1, 1, 128>}]} {
    %cst = arith.constant 0.000000e+00 : f32
    %0 = vector.broadcast %cst : f32 to vector<24x128xf32>
    %c0 = arith.constant 0 : index
    %c0_0 = arith.constant 0 : index
    %1 = vector.load %arg8[%c0, %c0_0] : memref<304x128xf32, #tpu.memory_space<vmem>>, vector<24x128xf32>
    tpu.vector_store %arg8[%c0, %c0_0], %0 {strides = array<i32>} : memref<304x128xf32, #tpu.memory_space<vmem>>, vector<24x128xf32>,
    %c280 = arith.constant 280 : index
    %c0_1 = arith.constant 0 : index
    %2 = vector.load %arg8[%c280, %c0_1] : memref<304x128xf32, #tpu.memory_space<vmem>>, vector<24x128xf32>
    tpu.vector_store %arg8[%c280, %c0_1], %0 {strides = array<i32>} : memref<304x128xf32, #tpu.memory_space<vmem>>, vector<24x128xf32>,
    %c0_2 = arith.constant 0 : index
    %c0_3 = arith.constant 0 : index
    %c0_4 = arith.constant 0 : index
    %3 = vector.load %arg1[%c0_2, %c0_3, %c0_4] : memref<1x256x128xbf16, #tpu.memory_space<vmem>>, vector<1x256x128xbf16>
    %4 = vector.shape_cast %3 : vector<1x256x128xbf16> to vector<256x128xbf16>
    %5 = arith.extf %4 : vector<256x128xbf16> to vector<256x128xf32>
    %c0_5 = arith.constant 0 : index
    %c0_6 = arith.constant 0 : index
    %6 = vector.load %arg3[%c0_5, %c0_6] : memref<1x128xf32, #tpu.memory_space<vmem>>, vector<1x128xf32>
    %7 = vector.broadcast %6 : vector<1x128xf32> to vector<256x128xf32>
    %8 = arith.mulf %5, %7 : vector<256x128xf32>
    %c0_7 = arith.constant 0 : index
    %c0_8 = arith.constant 0 : index
    %9 = vector.load %arg4[%c0_7, %c0_8] : memref<1x128xf32, #tpu.memory_space<vmem>>, vector<1x128xf32>
    %10 = vector.broadcast %9 : vector<1x128xf32> to vector<256x128xf32>
    %11 = arith.addf %8, %10 : vector<256x128xf32>
    %cst_9 = arith.constant 0.000000e+00 : f32
    %12 = vector.broadcast %cst_9 : f32 to vector<256x128xf32>
    %13 = arith.maximumf %11, %12 : vector<256x128xf32>
    %c24 = arith.constant 24 : index
    %c0_10 = arith.constant 0 : index
    %14 = vector.load %arg8[%c24, %c0_10] : memref<304x128xf32, #tpu.memory_space<vmem>>, vector<256x128xf32>
    tpu.vector_store %arg8[%c24, %c0_10], %13 {strides = array<i32>} : memref<304x128xf32, #tpu.memory_space<vmem>>, vector<256x128xf32>,
    %15 = tpu.iota {dimensions = array<i32: 0>} : vector<256x1xi32>
    %c16_i32 = arith.constant 16 : i32
    %c0_i32 = arith.constant 0 : i32
    %16 = arith.cmpi eq, %c16_i32, %c0_i32 : i32
    %c1_i32 = arith.constant 1 : i32
    %17 = arith.select %16, %c1_i32, %c16_i32 : i32
    %18 = vector.broadcast %17 : i32 to vector<256x1xi32>
    %19 = arith.remsi %15, %18 : vector<256x1xi32>
    %c0_i32_11 = arith.constant 0 : i32
    %20 = vector.broadcast %c0_i32_11 : i32 to vector<256x1xi32>
    %21 = arith.cmpi ne, %19, %20 : vector<256x1xi32>
    %c0_i32_12 = arith.constant 0 : i32
    %22 = vector.broadcast %c0_i32_12 : i32 to vector<256x1xi32>
    %23 = arith.cmpi slt, %19, %22 : vector<256x1xi32>
    %c0_i32_13 = arith.constant 0 : i32
    %24 = arith.cmpi slt, %17, %c0_i32_13 : i32
    %25 = vector.broadcast %24 : i1 to vector<256x1xi1>
    %26 = vector.broadcast %25 : vector<256x1xi1> to vector<256x1xi1>
    %27 = arith.xori %23, %26 : vector<256x1xi1>
    %28 = arith.andi %27, %21 : vector<256x1xi1>
    %29 = vector.broadcast %17 : i32 to vector<256x1xi32>
    %30 = arith.addi %19, %29 : vector<256x1xi32>
    %31 = arith.select %28, %30, %19 : vector<256x1xi1>, vector<256x1xi32>
    %c1_i32_14 = arith.constant 1 : i32
    %32 = vector.broadcast %c1_i32_14 : i32 to vector<256x1xi32>
    %33 = arith.cmpi sge, %31, %32 : vector<256x1xi32>
    %c14_i32 = arith.constant 14 : i32
    %34 = vector.broadcast %c14_i32 : i32 to vector<256x1xi32>
    %35 = arith.cmpi sle, %31, %34 : vector<256x1xi32>
    %cst_15 = arith.constant 0.000000e+00 : f32
    %36 = vector.broadcast %cst_15 : f32 to vector<256x128xf32>
    %c7 = arith.constant 7 : index
    %c0_16 = arith.constant 0 : index
    %37 = vector.load %arg8[%c7, %c0_16] : memref<304x128xf32, #tpu.memory_space<vmem>>, vector<256x128xf32>
    %cst_17 = arith.constant 0.000000e+00 : f32
    %38 = vector.shape_cast %33 : vector<256x1xi1> to vector<256x1xi1>
    %39 = vector.broadcast %38 : vector<256x1xi1> to vector<256x128xi1>
    %40 = vector.broadcast %cst_17 : f32 to vector<256x128xf32>
    %41 = arith.select %39, %37, %40 : vector<256x128xi1>, vector<256x128xf32>
    %42 = arith.truncf %41 : vector<256x128xf32> to vector<256x128xbf16>
    %c0_18 = arith.constant 0 : index
    %c0_19 = arith.constant 0 : index
    %c0_20 = arith.constant 0 : index
    %43 = vector.load %arg2[%c0_18, %c0_19, %c0_20] : memref<9x128x128xbf16, #tpu.memory_space<vmem>>, vector<1x128x128xbf16>
    %44 = vector.shape_cast %43 : vector<1x128x128xbf16> to vector<128x128xbf16>
    %cst_21 = arith.constant dense<0.000000e+00> : vector<256x128xf32>
    %45 = tpu.matmul %42, %44, %cst_21 {dimension_numbers = #tpu.dot_dimension_numbers<[1], [0], [0], [1], [0, 0, 1, 1], [], []>} : vector<256x128xbf16>, vector<128x128xbf16>, vector<256x128xf32> -> vector<256x128xf32>
    %46 = arith.addf %36, %45 : vector<256x128xf32>
    %c8 = arith.constant 8 : index
    %c0_22 = arith.constant 0 : index
    %47 = vector.load %arg8[%c8, %c0_22] : memref<304x128xf32, #tpu.memory_space<vmem>>, vector<256x128xf32>
    %48 = arith.truncf %47 : vector<256x128xf32> to vector<256x128xbf16>
    %c1 = arith.constant 1 : index
    %c0_23 = arith.constant 0 : index
    %c0_24 = arith.constant 0 : index
    %49 = vector.load %arg2[%c1, %c0_23, %c0_24] : memref<9x128x128xbf16, #tpu.memory_space<vmem>>, vector<1x128x128xbf16>
    %50 = vector.shape_cast %49 : vector<1x128x128xbf16> to vector<128x128xbf16>
    %cst_25 = arith.constant dense<0.000000e+00> : vector<256x128xf32>
    %51 = tpu.matmul %48, %50, %cst_25 {dimension_numbers = #tpu.dot_dimension_numbers<[1], [0], [0], [1], [0, 0, 1, 1], [], []>} : vector<256x128xbf16>, vector<128x128xbf16>, vector<256x128xf32> -> vector<256x128xf32>
    %52 = arith.addf %46, %51 : vector<256x128xf32>
    %c9 = arith.constant 9 : index
    %c0_26 = arith.constant 0 : index
    %53 = vector.load %arg8[%c9, %c0_26] : memref<304x128xf32, #tpu.memory_space<vmem>>, vector<256x128xf32>
    %cst_27 = arith.constant 0.000000e+00 : f32
    %54 = vector.shape_cast %35 : vector<256x1xi1> to vector<256x1xi1>
    %55 = vector.broadcast %54 : vector<256x1xi1> to vector<256x128xi1>
    %56 = vector.broadcast %cst_27 : f32 to vector<256x128xf32>
    %57 = arith.select %55, %53, %56 : vector<256x128xi1>, vector<256x128xf32>
    %58 = arith.truncf %57 : vector<256x128xf32> to vector<256x128xbf16>
    %c2 = arith.constant 2 : index
    %c0_28 = arith.constant 0 : index
    %c0_29 = arith.constant 0 : index
    %59 = vector.load %arg2[%c2, %c0_28, %c0_29] : memref<9x128x128xbf16, #tpu.memory_space<vmem>>, vector<1x128x128xbf16>
    %60 = vector.shape_cast %59 : vector<1x128x128xbf16> to vector<128x128xbf16>
    %cst_30 = arith.constant dense<0.000000e+00> : vector<256x128xf32>
    %61 = tpu.matmul %58, %60, %cst_30 {dimension_numbers = #tpu.dot_dimension_numbers<[1], [0], [0], [1], [0, 0, 1, 1], [], []>} : vector<256x128xbf16>, vector<128x128xbf16>, vector<256x128xf32> -> vector<256x128xf32>
    %62 = arith.addf %52, %61 : vector<256x128xf32>
    %c23 = arith.constant 23 : index
    %c0_31 = arith.constant 0 : index
    %63 = vector.load %arg8[%c23, %c0_31] : memref<304x128xf32, #tpu.memory_space<vmem>>, vector<256x128xf32>
    %cst_32 = arith.constant 0.000000e+00 : f32
    %64 = vector.shape_cast %33 : vector<256x1xi1> to vector<256x1xi1>
    %65 = vector.broadcast %64 : vector<256x1xi1> to vector<256x128xi1>
    %66 = vector.broadcast %cst_32 : f32 to vector<256x128xf32>
    %67 = arith.select %65, %63, %66 : vector<256x128xi1>, vector<256x128xf32>
    %68 = arith.truncf %67 : vector<256x128xf32> to vector<256x128xbf16>
    %c3 = arith.constant 3 : index
    %c0_33 = arith.constant 0 : index
    %c0_34 = arith.constant 0 : index
    %69 = vector.load %arg2[%c3, %c0_33, %c0_34] : memref<9x128x128xbf16, #tpu.memory_space<vmem>>, vector<1x128x128xbf16>
    %70 = vector.shape_cast %69 : vector<1x128x128xbf16> to vector<128x128xbf16>
    %cst_35 = arith.constant dense<0.000000e+00> : vector<256x128xf32>
    %71 = tpu.matmul %68, %70, %cst_35 {dimension_numbers = #tpu.dot_dimension_numbers<[1], [0], [0], [1], [0, 0, 1, 1], [], []>} : vector<256x128xbf16>, vector<128x128xbf16>, vector<256x128xf32> -> vector<256x128xf32>
    %72 = arith.addf %62, %71 : vector<256x128xf32>
    %c24_36 = arith.constant 24 : index
    %c0_37 = arith.constant 0 : index
    %73 = vector.load %arg8[%c24_36, %c0_37] : memref<304x128xf32, #tpu.memory_space<vmem>>, vector<256x128xf32>
    %74 = arith.truncf %73 : vector<256x128xf32> to vector<256x128xbf16>
    %c4 = arith.constant 4 : index
    %c0_38 = arith.constant 0 : index
    %c0_39 = arith.constant 0 : index
    %75 = vector.load %arg2[%c4, %c0_38, %c0_39] : memref<9x128x128xbf16, #tpu.memory_space<vmem>>, vector<1x128x128xbf16>
    %76 = vector.shape_cast %75 : vector<1x128x128xbf16> to vector<128x128xbf16>
    %cst_40 = arith.constant dense<0.000000e+00> : vector<256x128xf32>
    %77 = tpu.matmul %74, %76, %cst_40 {dimension_numbers = #tpu.dot_dimension_numbers<[1], [0], [0], [1], [0, 0, 1, 1], [], []>} : vector<256x128xbf16>, vector<128x128xbf16>, vector<256x128xf32> -> vector<256x128xf32>
    %78 = arith.addf %72, %77 : vector<256x128xf32>
    %c25 = arith.constant 25 : index
    %c0_41 = arith.constant 0 : index
    %79 = vector.load %arg8[%c25, %c0_41] : memref<304x128xf32, #tpu.memory_space<vmem>>, vector<256x128xf32>
    %cst_42 = arith.constant 0.000000e+00 : f32
    %80 = vector.shape_cast %35 : vector<256x1xi1> to vector<256x1xi1>
    %81 = vector.broadcast %80 : vector<256x1xi1> to vector<256x128xi1>
    %82 = vector.broadcast %cst_42 : f32 to vector<256x128xf32>
    %83 = arith.select %81, %79, %82 : vector<256x128xi1>, vector<256x128xf32>
    %84 = arith.truncf %83 : vector<256x128xf32> to vector<256x128xbf16>
    %c5 = arith.constant 5 : index
    %c0_43 = arith.constant 0 : index
    %c0_44 = arith.constant 0 : index
    %85 = vector.load %arg2[%c5, %c0_43, %c0_44] : memref<9x128x128xbf16, #tpu.memory_space<vmem>>, vector<1x128x128xbf16>
    %86 = vector.shape_cast %85 : vector<1x128x128xbf16> to vector<128x128xbf16>
    %cst_45 = arith.constant dense<0.000000e+00> : vector<256x128xf32>
    %87 = tpu.matmul %84, %86, %cst_45 {dimension_numbers = #tpu.dot_dimension_numbers<[1], [0], [0], [1], [0, 0, 1, 1], [], []>} : vector<256x128xbf16>, vector<128x128xbf16>, vector<256x128xf32> -> vector<256x128xf32>
    %88 = arith.addf %78, %87 : vector<256x128xf32>
    %c39 = arith.constant 39 : index
    %c0_46 = arith.constant 0 : index
    %89 = vector.load %arg8[%c39, %c0_46] : memref<304x128xf32, #tpu.memory_space<vmem>>, vector<256x128xf32>
    %cst_47 = arith.constant 0.000000e+00 : f32
    %90 = vector.shape_cast %33 : vector<256x1xi1> to vector<256x1xi1>
    %91 = vector.broadcast %90 : vector<256x1xi1> to vector<256x128xi1>
    %92 = vector.broadcast %cst_47 : f32 to vector<256x128xf32>
    %93 = arith.select %91, %89, %92 : vector<256x128xi1>, vector<256x128xf32>
    %94 = arith.truncf %93 : vector<256x128xf32> to vector<256x128xbf16>
    %c6 = arith.constant 6 : index
    %c0_48 = arith.constant 0 : index
    %c0_49 = arith.constant 0 : index
    %95 = vector.load %arg2[%c6, %c0_48, %c0_49] : memref<9x128x128xbf16, #tpu.memory_space<vmem>>, vector<1x128x128xbf16>
    %96 = vector.shape_cast %95 : vector<1x128x128xbf16> to vector<128x128xbf16>
    %cst_50 = arith.constant dense<0.000000e+00> : vector<256x128xf32>
    %97 = tpu.matmul %94, %96, %cst_50 {dimension_numbers = #tpu.dot_dimension_numbers<[1], [0], [0], [1], [0, 0, 1, 1], [], []>} : vector<256x128xbf16>, vector<128x128xbf16>, vector<256x128xf32> -> vector<256x128xf32>
    %98 = arith.addf %88, %97 : vector<256x128xf32>
    %c40 = arith.constant 40 : index
    %c0_51 = arith.constant 0 : index
    %99 = vector.load %arg8[%c40, %c0_51] : memref<304x128xf32, #tpu.memory_space<vmem>>, vector<256x128xf32>
    %100 = arith.truncf %99 : vector<256x128xf32> to vector<256x128xbf16>
    %c7_52 = arith.constant 7 : index
    %c0_53 = arith.constant 0 : index
    %c0_54 = arith.constant 0 : index
    %101 = vector.load %arg2[%c7_52, %c0_53, %c0_54] : memref<9x128x128xbf16, #tpu.memory_space<vmem>>, vector<1x128x128xbf16>
    %102 = vector.shape_cast %101 : vector<1x128x128xbf16> to vector<128x128xbf16>
    %cst_55 = arith.constant dense<0.000000e+00> : vector<256x128xf32>
    %103 = tpu.matmul %100, %102, %cst_55 {dimension_numbers = #tpu.dot_dimension_numbers<[1], [0], [0], [1], [0, 0, 1, 1], [], []>} : vector<256x128xbf16>, vector<128x128xbf16>, vector<256x128xf32> -> vector<256x128xf32>
    %104 = arith.addf %98, %103 : vector<256x128xf32>
    %c41 = arith.constant 41 : index
    %c0_56 = arith.constant 0 : index
    %105 = vector.load %arg8[%c41, %c0_56] : memref<304x128xf32, #tpu.memory_space<vmem>>, vector<256x128xf32>
    %cst_57 = arith.constant 0.000000e+00 : f32
    %106 = vector.shape_cast %35 : vector<256x1xi1> to vector<256x1xi1>
    %107 = vector.broadcast %106 : vector<256x1xi1> to vector<256x128xi1>
    %108 = vector.broadcast %cst_57 : f32 to vector<256x128xf32>
    %109 = arith.select %107, %105, %108 : vector<256x128xi1>, vector<256x128xf32>
    %110 = arith.truncf %109 : vector<256x128xf32> to vector<256x128xbf16>
    %c8_58 = arith.constant 8 : index
    %c0_59 = arith.constant 0 : index
    %c0_60 = arith.constant 0 : index
    %111 = vector.load %arg2[%c8_58, %c0_59, %c0_60] : memref<9x128x128xbf16, #tpu.memory_space<vmem>>, vector<1x128x128xbf16>
    %112 = vector.shape_cast %111 : vector<1x128x128xbf16> to vector<128x128xbf16>
    %cst_61 = arith.constant dense<0.000000e+00> : vector<256x128xf32>
    %113 = tpu.matmul %110, %112, %cst_61 {dimension_numbers = #tpu.dot_dimension_numbers<[1], [0], [0], [1], [0, 0, 1, 1], [], []>} : vector<256x128xbf16>, vector<128x128xbf16>, vector<256x128xf32> -> vector<256x128xf32>
    %114 = arith.addf %104, %113 : vector<256x128xf32>
    %115 = arith.truncf %114 : vector<256x128xf32> to vector<256x128xbf16>
    %c0_62 = arith.constant 0 : index
    %c0_63 = arith.constant 0 : index
    %c0_64 = arith.constant 0 : index
    %116 = vector.load %arg5[%c0_62, %c0_63, %c0_64] : memref<1x256x128xbf16, #tpu.memory_space<vmem>>, vector<1x256x128xbf16>
    %117 = vector.shape_cast %116 : vector<1x256x128xbf16> to vector<256x128xbf16>
    %118 = vector.shape_cast %115 : vector<256x128xbf16> to vector<1x256x128xbf16>
    tpu.vector_store %arg5[%c0_62, %c0_63, %c0_64], %118 {strides = array<i32>} : memref<1x256x128xbf16, #tpu.memory_space<vmem>>, vector<1x256x128xbf16>,
    %cst_65 = arith.constant dense<0.000000e+00> : vector<128xf32>
    %119 = vector.multi_reduction <add>, %114, %cst_65 [0] : vector<256x128xf32> to vector<128xf32>
    %120 = vector.shape_cast %119 : vector<128xf32> to vector<1x128xf32>
    %121 = vector.shape_cast %120 : vector<1x128xf32> to vector<1x1x128xf32>
    %c0_66 = arith.constant 0 : index
    %c0_67 = arith.constant 0 : index
    %c0_68 = arith.constant 0 : index
    %122 = vector.load %arg6[%c0_66, %c0_67, %c0_68] : memref<1x1x128xf32, #tpu.memory_space<vmem>>, vector<1x1x128xf32>
    tpu.vector_store %arg6[%c0_66, %c0_67, %c0_68], %121 {strides = array<i32>} : memref<1x1x128xf32, #tpu.memory_space<vmem>>, vector<1x1x128xf32>,
    %123 = arith.mulf %114, %114 : vector<256x128xf32>
    %cst_69 = arith.constant dense<0.000000e+00> : vector<128xf32>
    %124 = vector.multi_reduction <add>, %123, %cst_69 [0] : vector<256x128xf32> to vector<128xf32>
    %125 = vector.shape_cast %124 : vector<128xf32> to vector<1x128xf32>
    %126 = vector.shape_cast %125 : vector<1x128xf32> to vector<1x1x128xf32>
    %c0_70 = arith.constant 0 : index
    %c0_71 = arith.constant 0 : index
    %c0_72 = arith.constant 0 : index
    %127 = vector.load %arg7[%c0_70, %c0_71, %c0_72] : memref<1x1x128xf32, #tpu.memory_space<vmem>>, vector<1x1x128xf32>
    tpu.vector_store %arg7[%c0_70, %c0_71, %c0_72], %126 {strides = array<i32>} : memref<1x1x128xf32, #tpu.memory_space<vmem>>, vector<1x1x128xf32>,
    return
  }
  func.func @transform_0(%arg0: i32) -> (i32, i32, i32) {
    %c0_i32 = arith.constant 0 : i32
    %c0_i32_0 = arith.constant 0 : i32
    %c0_i32_1 = arith.constant 0 : i32
    return %arg0, %c0_i32, %c0_i32_0 : i32, i32, i32
  }
  func.func @transform_1(%arg0: i32) -> (i32, i32, i32) {
    %c0_i32 = arith.constant 0 : i32
    %c0_i32_0 = arith.constant 0 : i32
    %c0_i32_1 = arith.constant 0 : i32
    %c0_i32_2 = arith.constant 0 : i32
    return %c0_i32, %c0_i32_0, %c0_i32_1 : i32, i32, i32
  }
  func.func @transform_2(%arg0: i32) -> (i32, i32) {
    %c0_i32 = arith.constant 0 : i32
    %c0_i32_0 = arith.constant 0 : i32
    %c0_i32_1 = arith.constant 0 : i32
    return %c0_i32, %c0_i32_0 : i32, i32
  }
  func.func @transform_3(%arg0: i32) -> (i32, i32) {
    %c0_i32 = arith.constant 0 : i32
    %c0_i32_0 = arith.constant 0 : i32
    %c0_i32_1 = arith.constant 0 : i32
    return %c0_i32, %c0_i32_0 : i32, i32
  }
  func.func @transform_4(%arg0: i32) -> (i32, i32, i32) {
    %c0_i32 = arith.constant 0 : i32
    %c0_i32_0 = arith.constant 0 : i32
    %c0_i32_1 = arith.constant 0 : i32
    return %arg0, %c0_i32, %c0_i32_0 : i32, i32, i32
  }
  func.func @transform_5(%arg0: i32) -> (i32, i32, i32) {
    %c0_i32 = arith.constant 0 : i32
    %c0_i32_0 = arith.constant 0 : i32
    %c0_i32_1 = arith.constant 0 : i32
    return %arg0, %c0_i32, %c0_i32_0 : i32, i32, i32
  }
  func.func @transform_6(%arg0: i32) -> (i32, i32, i32) {
    %c0_i32 = arith.constant 0 : i32
    %c0_i32_0 = arith.constant 0 : i32
    %c0_i32_1 = arith.constant 0 : i32
    return %arg0, %c0_i32, %c0_i32_0 : i32, i32, i32
  }
}

module attributes {stable_mosaic.version = 11 : i64} {
  func.func @_bn_relu_transpose_kernel(%arg0: i32, %arg1: memref<1x256x128xbf16, #tpu.memory_space<vmem>>, %arg2: memref<1x128xf32, #tpu.memory_space<vmem>>, %arg3: memref<1x128xf32, #tpu.memory_space<vmem>>, %arg4: memref<1x8x256xf32, #tpu.memory_space<vmem>>) attributes {dimension_semantics = [#tpu.dimension_semantics<parallel>], iteration_bounds = array<i64: 2>, scalar_prefetch = 0 : i64, scratch_operands = 0 : i64, tpu.core_type = #tpu.core_type<tc>, window_params = [{transform_indices = @transform_0, window_bounds = array<i64: 1, 256, 128>}, {pipeline_mode = #tpu.pipeline_mode<synchronous>, transform_indices = @transform_1, window_bounds = array<i64: 1, 128>}, {pipeline_mode = #tpu.pipeline_mode<synchronous>, transform_indices = @transform_2, window_bounds = array<i64: 1, 128>}, {transform_indices = @transform_3, window_bounds = array<i64: 1, 8, 256>}]} {
    %c0 = arith.constant 0 : index
    %c0_0 = arith.constant 0 : index
    %c0_1 = arith.constant 0 : index
    %0 = vector.load %arg1[%c0, %c0_0, %c0_1] : memref<1x256x128xbf16, #tpu.memory_space<vmem>>, vector<1x256x128xbf16>
    %1 = vector.shape_cast %0 : vector<1x256x128xbf16> to vector<256x128xbf16>
    %2 = arith.extf %1 : vector<256x128xbf16> to vector<256x128xf32>
    %c0_2 = arith.constant 0 : index
    %c0_3 = arith.constant 0 : index
    %3 = vector.load %arg2[%c0_2, %c0_3] : memref<1x128xf32, #tpu.memory_space<vmem>>, vector<1x128xf32>
    %4 = vector.broadcast %3 : vector<1x128xf32> to vector<256x128xf32>
    %5 = arith.mulf %2, %4 : vector<256x128xf32>
    %c0_4 = arith.constant 0 : index
    %c0_5 = arith.constant 0 : index
    %6 = vector.load %arg3[%c0_4, %c0_5] : memref<1x128xf32, #tpu.memory_space<vmem>>, vector<1x128xf32>
    %7 = vector.broadcast %6 : vector<1x128xf32> to vector<256x128xf32>
    %8 = arith.addf %5, %7 : vector<256x128xf32>
    %cst = arith.constant 0.000000e+00 : f32
    %9 = vector.broadcast %cst : f32 to vector<256x128xf32>
    %10 = arith.maximumf %8, %9 : vector<256x128xf32>
    %11 = tpu.transpose %10, [1, 0] : vector<256x128xf32> -> vector<128x256xf32>
    %12 = vector.extract_strided_slice %11 {offsets = [0, 0], sizes = [8, 256], strides = [1, 1]} : vector<128x256xf32> to vector<8x256xf32>
    %c0_6 = arith.constant 0 : index
    %c0_7 = arith.constant 0 : index
    %c0_8 = arith.constant 0 : index
    %13 = vector.load %arg4[%c0_6, %c0_7, %c0_8] : memref<1x8x256xf32, #tpu.memory_space<vmem>>, vector<1x8x256xf32>
    %14 = vector.shape_cast %13 : vector<1x8x256xf32> to vector<8x256xf32>
    %15 = vector.shape_cast %12 : vector<8x256xf32> to vector<1x8x256xf32>
    tpu.vector_store %arg4[%c0_6, %c0_7, %c0_8], %15 {strides = array<i32>} : memref<1x8x256xf32, #tpu.memory_space<vmem>>, vector<1x8x256xf32>,
    return
  }
  func.func @transform_0(%arg0: i32) -> (i32, i32, i32) {
    %c0_i32 = arith.constant 0 : i32
    %c0_i32_0 = arith.constant 0 : i32
    %c0_i32_1 = arith.constant 0 : i32
    return %arg0, %c0_i32, %c0_i32_0 : i32, i32, i32
  }
  func.func @transform_1(%arg0: i32) -> (i32, i32) {
    %c0_i32 = arith.constant 0 : i32
    %c0_i32_0 = arith.constant 0 : i32
    %c0_i32_1 = arith.constant 0 : i32
    return %c0_i32, %c0_i32_0 : i32, i32
  }
  func.func @transform_2(%arg0: i32) -> (i32, i32) {
    %c0_i32 = arith.constant 0 : i32
    %c0_i32_0 = arith.constant 0 : i32
    %c0_i32_1 = arith.constant 0 : i32
    return %c0_i32, %c0_i32_0 : i32, i32
  }
  func.func @transform_3(%arg0: i32) -> (i32, i32, i32) {
    %c0_i32 = arith.constant 0 : i32
    %c0_i32_0 = arith.constant 0 : i32
    %c0_i32_1 = arith.constant 0 : i32
    return %arg0, %c0_i32, %c0_i32_0 : i32, i32, i32
  }
}

</mosaic_0001>

<llo_original>
// kernel: double_conv.5
$region0: #{double_conv.5}
  #allocation0 [shape = 'u32[]', space=smem, size = 0x4, offset = 0x4, fixed_abs, tag = 'smem constant byte address 0x4 - core index']
  #allocation1 [shape = 'u32[144,128]{1,0:T(1,128)}', space=vmem, size = 0x12000, scoped, tag = 'internal scratch']
  %s0 = inlined_call_operand.vmem [shape: bf16[2,256,128], index: 0, kind: input, shape index: {}]
  %s1 = inlined_call_operand.vmem [shape: f32[1,128], index: 1, kind: input, shape index: {}]
  %s2 = inlined_call_operand.vmem [shape: f32[1,128], index: 2, kind: input, shape index: {}]
  %s3 = inlined_call_operand.vmem [shape: f32[2,8,256], index: 3, kind: output, shape index: {}]
  %s4 = sld [smem:[#allocation0]]
  $region45: #{double_conv.5} parent=0
    _
  %s6 = ssub.s32 1, %s4
  %s7 = scalar_select 0, %s6, %s4
  loop: start=0, step=1, limit=4
  $region2: #{double_conv.5} parent=0 // loop_pre_header
    _
  $region3: #{double_conv.5} parent=0 // loop_header
    %s9 = sphi 0, %s13
    %p10 = scmp.ge.s32.totalorder %s9, 4
    %s19 = sphi 0, %s21
    %s22 = sphi 0, %s19
    %s23 = sphi 0, %s22
    %s39 = sphi 0, %s23
    %s43 = sphi 0, %s43
    %s45 = sphi 0, %s43
    %s46 = sphi 0, %s45
    %s60 = sphi 0, %s46
    %s64 = sphi 0, %s64
    %s66 = sphi 0, %s64
    %s67 = sphi 0, %s66
    %s81 = sphi 0, %s67
    %s87 = sphi 0, %s89
    %s90 = sphi 0, %s87
    %s91 = sphi 0, %s90
    %s107 = sphi 0, %s91
  $region4: #{double_conv.5} parent=0 // loop_header_branch
    %12 = sbr.rel (%p10) target = $region8
  $region5: #{double_conv.5} parent=0 // loop_body
    %s14 = ssub.s32 %s9, 1
    %s15 = ssub.s32 %s9, 2
    %s16 = sadd.s32 %s9, 1
    %s17 = ssub.s32 %s9, %s16
    %p18 = scmp.eq.s32.totalorder %s17, 0
    %s20 = sadd.s32 %s19, 1
    %s21 = scalar_select %p18, %s19, %s20
    %p24 = pneg %p18
    %p25 = scmp.eq.s32.totalorder %s9, 1
    %p26 = por %p24, %p25
    %p27 = scmp.ne.s32.totalorder %s19, %s22
    %p28 = scmp.eq.s32.totalorder %s9, 0
    %p29 = por %p27, %p28
    %p30 = scmp.ne.s32.totalorder %s19, %s22
    %p31 = scmp.eq.s32.totalorder %s14, 1
    %p32 = por %p30, %p31
    %p33 = scmp.ne.s32.totalorder %s22, %s23
    %p34 = scmp.eq.s32.totalorder %s14, 0
    %p35 = por %p33, %p34
    %p36 = scmp.ne.s32.totalorder %s22, %s23
    %p37 = scmp.eq.s32.totalorder %s15, 1
    %p38 = por %p36, %p37
    %p40 = scmp.ne.s32.totalorder %s23, %s39
    %p41 = scmp.eq.s32.totalorder %s15, 0
    %p42 = por %p40, %p41
    %s44 = sadd.s32 %s43, 1
    %p47 = scmp.eq.s32.totalorder %s9, 1
    %p48 = scmp.ne.s32.totalorder %s43, %s45
    %p49 = scmp.eq.s32.totalorder %s9, 0
    %p50 = por %p48, %p49
    %p51 = scmp.ne.s32.totalorder %s43, %s45
    %p52 = scmp.eq.s32.totalorder %s14, 1
    %p53 = por %p51, %p52
    %p54 = scmp.ne.s32.totalorder %s45, %s46
    %p55 = scmp.eq.s32.totalorder %s14, 0
    %p56 = por %p54, %p55
    %p57 = scmp.ne.s32.totalorder %s45, %s46
    %p58 = scmp.eq.s32.totalorder %s15, 1
    %p59 = por %p57, %p58
    %p61 = scmp.ne.s32.totalorder %s46, %s60
    %p62 = scmp.eq.s32.totalorder %s15, 0
    %p63 = por %p61, %p62
    %s65 = sadd.s32 %s64, 1
    %p68 = scmp.eq.s32.totalorder %s9, 1
    %p69 = scmp.ne.s32.totalorder %s64, %s66
    %p70 = scmp.eq.s32.totalorder %s9, 0
    %p71 = por %p69, %p70
    %p72 = scmp.ne.s32.totalorder %s64, %s66
    %p73 = scmp.eq.s32.totalorder %s14, 1
    %p74 = por %p72, %p73
    %p75 = scmp.ne.s32.totalorder %s66, %s67
    %p76 = scmp.eq.s32.totalorder %s14, 0
    %p77 = por %p75, %p76
    %p78 = scmp.ne.s32.totalorder %s66, %s67
    %p79 = scmp.eq.s32.totalorder %s15, 1
    %p80 = por %p78, %p79
    %p82 = scmp.ne.s32.totalorder %s67, %s81
    %p83 = scmp.eq.s32.totalorder %s15, 0
    %p84 = por %p82, %p83
    %s85 = ssub.s32 %s9, %s16
    %p86 = scmp.eq.s32.totalorder %s85, 0
    %s88 = sadd.s32 %s87, 1
    %s89 = scalar_select %p86, %s87, %s88
    %p92 = pneg %p86
    %p93 = scmp.eq.s32.totalorder %s9, 1
    %p94 = por %p92, %p93
    %p95 = scmp.ne.s32.totalorder %s87, %s90
    %p96 = scmp.eq.s32.totalorder %s9, 0
    %p97 = por %p95, %p96
    %p98 = scmp.ne.s32.totalorder %s87, %s90
    %p99 = scmp.eq.s32.totalorder %s14, 1
    %p100 = por %p98, %p99
    %p101 = scmp.ne.s32.totalorder %s90, %s91
    %p102 = scmp.eq.s32.totalorder %s14, 0
    %p103 = por %p101, %p102
    %p104 = scmp.ne.s32.totalorder %s90, %s91
    %p105 = scmp.eq.s32.totalorder %s15, 1
    %p106 = por %p104, %p105
    %p108 = scmp.ne.s32.totalorder %s91, %s107
    %p109 = scmp.eq.s32.totalorder %s15, 0
    %p110 = por %p108, %p109
    %p111 = scmp.le.s32.totalorder 1, %s9
    %p112 = scmp.lt.s32.totalorder %s9, 3
    %p113 = pnand %p111, %p112
    %p114 = pneg %p113
    // Predicated region
    $region9: #{double_conv.5} parent=5 // pred_check
      _
    $region10: #{double_conv.5} parent=5 // pred_check_branch
      %116 = sbr.rel (%p113) target = $region12
    $region11: #{double_conv.5} parent=5 // pred_region
      %s117 = ssub.s32 %s9, 1
      // Predicated region
      $region13: #{double_conv.5} parent=11 // pred_check
        %p118 = pneg %p56
      $region14: #{double_conv.5} parent=11 // pred_check_branch
        %120 = sbr.rel (%p118) target = $region16
      $region15: #{double_conv.5} parent=11 // pred_region
        _
      $region16: #{double_conv.5} parent=11 // pred_fallthru
        _
      // Predicated region
      $region17: #{double_conv.5} parent=11 // pred_check
        %p121 = pneg %p77
      $region18: #{double_conv.5} parent=11 // pred_check_branch
        %123 = sbr.rel (%p121) target = $region20
      $region19: #{double_conv.5} parent=11 // pred_region
        _
      $region20: #{double_conv.5} parent=11 // pred_fallthru
        _
    $region12: #{double_conv.5} parent=5 // pred_fallthru
      _
    %p124 = scmp.lt.s32.totalorder %s9, 2
    // Predicated region
    $region21: #{double_conv.5} parent=5 // pred_check
      %p125 = pneg %p124
    $region22: #{double_conv.5} parent=5 // pred_check_branch
      %127 = sbr.rel (%p125) target = $region24
    $region23: #{double_conv.5} parent=5 // pred_region
      // Predicated region
      $region25: #{double_conv.5} parent=23 // pred_check
        %p128 = pneg %p29
      $region26: #{double_conv.5} parent=23 // pred_check_branch
        %130 = sbr.rel (%p128) target = $region28
      $region27: #{double_conv.5} parent=23 // pred_region
        %p131 = scmp.lt.s32.totalorder %s9, 1
        %s132 = scalar_select %p131, %s9, 1
        %s133 = smul.addr %s132, 32
        %s134 = smul.addr %s133, 4
        %s135 = scalar_lea.vmem %s0, %s134
      $region28: #{double_conv.5} parent=23 // pred_fallthru
        _
    $region24: #{double_conv.5} parent=5 // pred_fallthru
      _
    %p136 = scmp.le.s32.totalorder 1, %s9
    %p137 = scmp.lt.s32.totalorder %s9, 3
    %p138 = pnand %p136, %p137
    %p139 = pneg %p138
    // Predicated region
    $region29: #{double_conv.5} parent=5 // pred_check
      _
    $region30: #{double_conv.5} parent=5 // pred_check_branch
      %141 = sbr.rel (%p138) target = $region32
    $region31: #{double_conv.5} parent=5 // pred_region
      %s142 = ssub.s32 %s9, 1
      %p143 = scmp.lt.s32.totalorder %s14, 1
      %s144 = scalar_select %p143, %s14, 1
      %s145 = smul.addr %s144, 32
      %s146 = smul.addr %s145, 4
      %s147 = scalar_lea.vmem %s0, %s146
      %p148 = pneg %p35
      %p149 = pneg %p32
      %p150 = pneg %p56
      %p151 = pneg %p53
      %p152 = pneg %p77
      %p153 = pneg %p74
      %p154 = pneg %p103
      %p155 = pneg %p100
      %p156 = scmp.lt.s32.totalorder %s14, 1
      %s157 = scalar_select %p156, %s14, 1
      %s158 = smul.addr %s157, 2
      %s159 = smul.addr %s158, 8
      %s160 = scalar_lea.vmem %s3, %s159
      %p161 = scmp.lt.s32.totalorder %s14, 1
      %s162 = scalar_select %p161, %s14, 1
      %s163 = smul.addr %s162, 32
      %s164 = smul.addr %s163, 4
      %s165 = scalar_lea.vmem %s0, %s164
      %p166 = scmp.lt.s32.totalorder %s14, 1
      %s167 = scalar_select %p166, %s14, 1
      %s168 = smul.addr %s167, 2
      %s169 = smul.addr %s168, 8
      %s170 = scalar_lea.vmem %s3, %s169
      %v171 = vld [vmem:[%s165] sm:$0xf]
      %v172 = vld [vmem:[%s165 + $0x4] sm:$0xf]
      %v173 = vld [vmem:[%s165 + $0x8] sm:$0xf]
      %v174 = vld [vmem:[%s165 + $0xc] sm:$0xf]
      %v175 = vld [vmem:[%s165 + $0x10] sm:$0xf]
      %v176 = vld [vmem:[%s165 + $0x14] sm:$0xf]
      %v177 = vld [vmem:[%s165 + $0x18] sm:$0xf]
      %v178 = vld [vmem:[%s165 + $0x1c] sm:$0xf]
      %v179 = vld [vmem:[%s165 + $0x20] sm:$0xf]
      %v180 = vld [vmem:[%s165 + $0x24] sm:$0xf]
      %v181 = vld [vmem:[%s165 + $0x28] sm:$0xf]
      %v182 = vld [vmem:[%s165 + $0x2c] sm:$0xf]
      %v183 = vld [vmem:[%s165 + $0x30] sm:$0xf]
      %v184 = vld [vmem:[%s165 + $0x34] sm:$0xf]
      %v185 = vld [vmem:[%s165 + $0x38] sm:$0xf]
      %v186 = vld [vmem:[%s165 + $0x3c] sm:$0xf]
      %v187 = vld [vmem:[%s165 + $0x40] sm:$0xf]
      %v188 = vld [vmem:[%s165 + $0x44] sm:$0xf]
      %v189 = vld [vmem:[%s165 + $0x48] sm:$0xf]
      %v190 = vld [vmem:[%s165 + $0x4c] sm:$0xf]
      %v191 = vld [vmem:[%s165 + $0x50] sm:$0xf]
      %v192 = vld [vmem:[%s165 + $0x54] sm:$0xf]
      %v193 = vld [vmem:[%s165 + $0x58] sm:$0xf]
      %v194 = vld [vmem:[%s165 + $0x5c] sm:$0xf]
      %v195 = vld [vmem:[%s165 + $0x60] sm:$0xf]
      %v196 = vld [vmem:[%s165 + $0x64] sm:$0xf]
      %v197 = vld [vmem:[%s165 + $0x68] sm:$0xf]
      %v198 = vld [vmem:[%s165 + $0x6c] sm:$0xf]
      %v199 = vld [vmem:[%s165 + $0x70] sm:$0xf]
      %v200 = vld [vmem:[%s165 + $0x74] sm:$0xf]
      %v201 = vld [vmem:[%s165 + $0x78] sm:$0xf]
      %v202 = vld [vmem:[%s165 + $0x7c] sm:$0xf]
      %v203 = vunpack.c.l.bf16 %v171
      %v204 = vunpack.c.l.bf16 %v172
      %v205 = vunpack.c.l.bf16 %v173
      %v206 = vunpack.c.l.bf16 %v174
      %v207 = vunpack.c.l.bf16 %v175
      %v208 = vunpack.c.l.bf16 %v176
      %v209 = vunpack.c.l.bf16 %v177
      %v210 = vunpack.c.l.bf16 %v178
      %v211 = vunpack.c.l.bf16 %v179
      %v212 = vunpack.c.l.bf16 %v180
      %v213 = vunpack.c.l.bf16 %v181
      %v214 = vunpack.c.l.bf16 %v182
      %v215 = vunpack.c.l.bf16 %v183
      %v216 = vunpack.c.l.bf16 %v184
      %v217 = vunpack.c.l.bf16 %v185
      %v218 = vunpack.c.l.bf16 %v186
      %v219 = vunpack.c.l.bf16 %v187
      %v220 = vunpack.c.l.bf16 %v188
      %v221 = vunpack.c.l.bf16 %v189
      %v222 = vunpack.c.l.bf16 %v190
      %v223 = vunpack.c.l.bf16 %v191
      %v224 = vunpack.c.l.bf16 %v192
      %v225 = vunpack.c.l.bf16 %v193
      %v226 = vunpack.c.l.bf16 %v194
      %v227 = vunpack.c.l.bf16 %v195
      %v228 = vunpack.c.l.bf16 %v196
      %v229 = vunpack.c.l.bf16 %v197
      %v230 = vunpack.c.l.bf16 %v198
      %v231 = vunpack.c.l.bf16 %v199
      %v232 = vunpack.c.l.bf16 %v200
      %v233 = vunpack.c.l.bf16 %v201
      %v234 = vunpack.c.l.bf16 %v202
      %v235 = vld [vmem:[%s1] sm:$0x1]
      %v237 = vlaneseq
      %v238 = vshrl.u32 %v237, 7
      %v239 = vsub.s32 0, %v238
      %v240 = vrot.slane %v235, %v239
      %v242 = vmul.f32 %v203, %v240
      %v243 = vmul.f32 %v204, %v240
      %v244 = vmul.f32 %v205, %v240
      %v245 = vmul.f32 %v206, %v240
      %v246 = vmul.f32 %v207, %v240
      %v247 = vmul.f32 %v208, %v240
      %v248 = vmul.f32 %v209, %v240
      %v249 = vmul.f32 %v210, %v240
      %v250 = vmul.f32 %v211, %v240
      %v251 = vmul.f32 %v212, %v240
      %v252 = vmul.f32 %v213, %v240
      %v253 = vmul.f32 %v214, %v240
      %v254 = vmul.f32 %v215, %v240
      %v255 = vmul.f32 %v216, %v240
      %v256 = vmul.f32 %v217, %v240
      %v257 = vmul.f32 %v218, %v240
      %v258 = vmul.f32 %v219, %v240
      %v259 = vmul.f32 %v220, %v240
      %v260 = vmul.f32 %v221, %v240
      %v261 = vmul.f32 %v222, %v240
      %v262 = vmul.f32 %v223, %v240
      %v263 = vmul.f32 %v224, %v240
      %v264 = vmul.f32 %v225, %v240
      %v265 = vmul.f32 %v226, %v240
      %v266 = vmul.f32 %v227, %v240
      %v267 = vmul.f32 %v228, %v240
      %v268 = vmul.f32 %v229, %v240
      %v269 = vmul.f32 %v230, %v240
      %v270 = vmul.f32 %v231, %v240
      %v271 = vmul.f32 %v232, %v240
      %v272 = vmul.f32 %v233, %v240
      %v273 = vmul.f32 %v234, %v240
      %v274 = vld [vmem:[%s2] sm:$0x1]
      %v276 = vlaneseq
      %v277 = vshrl.u32 %v276, 7
      %v278 = vsub.s32 0, %v277
      %v279 = vrot.slane %v274, %v278
      %v281 = vadd.f32 %v242, %v279
      %v282 = vadd.f32 %v243, %v279
      %v283 = vadd.f32 %v244, %v279
      %v284 = vadd.f32 %v245, %v279
      %v285 = vadd.f32 %v246, %v279
      %v286 = vadd.f32 %v247, %v279
      %v287 = vadd.f32 %v248, %v279
      %v288 = vadd.f32 %v249, %v279
      %v289 = vadd.f32 %v250, %v279
      %v290 = vadd.f32 %v251, %v279
      %v291 = vadd.f32 %v252, %v279
      %v292 = vadd.f32 %v253, %v279
      %v293 = vadd.f32 %v254, %v279
      %v294 = vadd.f32 %v255, %v279
      %v295 = vadd.f32 %v256, %v279
      %v296 = vadd.f32 %v257, %v279
      %v297 = vadd.f32 %v258, %v279
      %v298 = vadd.f32 %v259, %v279
      %v299 = vadd.f32 %v260, %v279
      %v300 = vadd.f32 %v261, %v279
      %v301 = vadd.f32 %v262, %v279
      %v302 = vadd.f32 %v263, %v279
      %v303 = vadd.f32 %v264, %v279
      %v304 = vadd.f32 %v265, %v279
      %v305 = vadd.f32 %v266, %v279
      %v306 = vadd.f32 %v267, %v279
      %v307 = vadd.f32 %v268, %v279
      %v308 = vadd.f32 %v269, %v279
      %v309 = vadd.f32 %v270, %v279
      %v310 = vadd.f32 %v271, %v279
      %v311 = vadd.f32 %v272, %v279
      %v312 = vadd.f32 %v273, %v279
      %v313 = vmax.f32 %v281, 0.0
      %v314 = vmax.f32 %v282, 0.0
      %v315 = vmax.f32 %v283, 0.0
      %v316 = vmax.f32 %v284, 0.0
      %v317 = vmax.f32 %v285, 0.0
      %v318 = vmax.f32 %v286, 0.0
      %v319 = vmax.f32 %v287, 0.0
      %v320 = vmax.f32 %v288, 0.0
      %v321 = vmax.f32 %v289, 0.0
      %v322 = vmax.f32 %v290, 0.0
      %v323 = vmax.f32 %v291, 0.0
      %v324 = vmax.f32 %v292, 0.0
      %v325 = vmax.f32 %v293, 0.0
      %v326 = vmax.f32 %v294, 0.0
      %v327 = vmax.f32 %v295, 0.0
      %v328 = vmax.f32 %v296, 0.0
      %v329 = vmax.f32 %v297, 0.0
      %v330 = vmax.f32 %v298, 0.0
      %v331 = vmax.f32 %v299, 0.0
      %v332 = vmax.f32 %v300, 0.0
      %v333 = vmax.f32 %v301, 0.0
      %v334 = vmax.f32 %v302, 0.0
      %v335 = vmax.f32 %v303, 0.0
      %v336 = vmax.f32 %v304, 0.0
      %v337 = vmax.f32 %v305, 0.0
      %v338 = vmax.f32 %v306, 0.0
      %v339 = vmax.f32 %v307, 0.0
      %v340 = vmax.f32 %v308, 0.0
      %v341 = vmax.f32 %v309, 0.0
      %v342 = vmax.f32 %v310, 0.0
      %v343 = vmax.f32 %v311, 0.0
      %v344 = vmax.f32 %v312, 0.0
      %345 = vxpose.xlu0.b32.start [1/16] %v313, 128
      %346 = vxpose.xlu0.b32.cont [2/16] %v314, 128
      %347 = vxpose.xlu0.b32.cont [3/16] %v315, 128
      %348 = vxpose.xlu0.b32.cont [4/16] %v316, 128
      %349 = vxpose.xlu0.b32.cont [5/16] %v317, 128
      %350 = vxpose.xlu0.b32.cont [6/16] %v318, 128
      %351 = vxpose.xlu0.b32.cont [7/16] %v319, 128
      %352 = vxpose.xlu0.b32.cont [8/16] %v320, 128
      %353 = vxpose.xlu0.b32.cont [9/16] %v321, 128
      %354 = vxpose.xlu0.b32.cont [10/16] %v322, 128
      %355 = vxpose.xlu0.b32.cont [11/16] %v323, 128
      %356 = vxpose.xlu0.b32.cont [12/16] %v324, 128
      %357 = vxpose.xlu0.b32.cont [13/16] %v325, 128
      %358 = vxpose.xlu0.b32.cont [14/16] %v326, 128
      %359 = vxpose.xlu0.b32.cont [15/16] %v327, 128
      %360 = vxpose.xlu0.b32.end [16/16] %v328, 128
      %v361 = vpop.trf.xlu0
      %v362 = vpop.trf.xlu0
      %v363 = vpop.trf.xlu0
      %v364 = vpop.trf.xlu0
      %v365 = vpop.trf.xlu0
      %v366 = vpop.trf.xlu0
      %v367 = vpop.trf.xlu0
      %v368 = vpop.trf.xlu0
      %v369 = vpop.trf.xlu0
      %v370 = vpop.trf.xlu0
      %v371 = vpop.trf.xlu0
      %v372 = vpop.trf.xlu0
      %v373 = vpop.trf.xlu0
      %v374 = vpop.trf.xlu0
      %v375 = vpop.trf.xlu0
      %v376 = vpop.trf.xlu0
      %377 = vxpose.xlu0.b32.start [1/16] %v329, 128
      %378 = vxpose.xlu0.b32.cont [2/16] %v330, 128
      %379 = vxpose.xlu0.b32.cont [3/16] %v331, 128
      %380 = vxpose.xlu0.b32.cont [4/16] %v332, 128
      %381 = vxpose.xlu0.b32.cont [5/16] %v333, 128
      %382 = vxpose.xlu0.b32.cont [6/16] %v334, 128
      %383 = vxpose.xlu0.b32.cont [7/16] %v335, 128
      %384 = vxpose.xlu0.b32.cont [8/16] %v336, 128
      %385 = vxpose.xlu0.b32.cont [9/16] %v337, 128
      %386 = vxpose.xlu0.b32.cont [10/16] %v338, 128
      %387 = vxpose.xlu0.b32.cont [11/16] %v339, 128
      %388 = vxpose.xlu0.b32.cont [12/16] %v340, 128
      %389 = vxpose.xlu0.b32.cont [13/16] %v341, 128
      %390 = vxpose.xlu0.b32.cont [14/16] %v342, 128
      %391 = vxpose.xlu0.b32.cont [15/16] %v343, 128
      %392 = vxpose.xlu0.b32.end [16/16] %v344, 128
      %v393 = vpop.trf.xlu0
      %v394 = vpop.trf.xlu0
      %v395 = vpop.trf.xlu0
      %v396 = vpop.trf.xlu0
      %v397 = vpop.trf.xlu0
      %v398 = vpop.trf.xlu0
      %v399 = vpop.trf.xlu0
      %v400 = vpop.trf.xlu0
      %v401 = vpop.trf.xlu0
      %v402 = vpop.trf.xlu0
      %v403 = vpop.trf.xlu0
      %v404 = vpop.trf.xlu0
      %v405 = vpop.trf.xlu0
      %v406 = vpop.trf.xlu0
      %v407 = vpop.trf.xlu0
      %v408 = vpop.trf.xlu0
      %409 = vst [vmem:[%s170] sm:$0xff] %v361
      %410 = vst [vmem:[%s170 + $0x8] sm:$0xff] %v393
      %p411 = scmp.lt.s32.totalorder %s14, 1
      %s412 = scalar_select %p411, %s14, 1
      %s413 = smul.addr %s412, 2
      %s414 = smul.addr %s413, 8
      %s415 = scalar_lea.vmem %s3, %s414
      // Predicated region
      $region33: #{double_conv.5} parent=31 // pred_check
        %p416 = pneg %p100
      $region34: #{double_conv.5} parent=31 // pred_check_branch
        %418 = sbr.rel (%p416) target = $region36
      $region35: #{double_conv.5} parent=31 // pred_region
        _
      $region36: #{double_conv.5} parent=31 // pred_fallthru
        _
    $region32: #{double_conv.5} parent=5 // pred_fallthru
      _
    %p419 = scmp.le.s32.totalorder 2, %s9
    // Predicated region
    $region37: #{double_conv.5} parent=5 // pred_check
      %p420 = pneg %p419
    $region38: #{double_conv.5} parent=5 // pred_check_branch
      %422 = sbr.rel (%p420) target = $region40
    $region39: #{double_conv.5} parent=5 // pred_region
      %s423 = ssub.s32 %s9, 2
      // Predicated region
      $region41: #{double_conv.5} parent=39 // pred_check
        %p424 = pneg %p106
      $region42: #{double_conv.5} parent=39 // pred_check_branch
        %426 = sbr.rel (%p424) target = $region44
      $region43: #{double_conv.5} parent=39 // pred_region
        %p427 = scmp.lt.s32.totalorder %s15, 1
        %s428 = scalar_select %p427, %s15, 1
        %s429 = smul.addr %s428, 2
        %s430 = smul.addr %s429, 8
        %s431 = scalar_lea.vmem %s3, %s430
      $region44: #{double_conv.5} parent=39 // pred_fallthru
        _
    $region40: #{double_conv.5} parent=5 // pred_fallthru
      _
  $region6: #{double_conv.5} parent=0 // loop_footer
    %s13 = sadd.s32 1, %s9
  $region7: #{double_conv.5} parent=0 // loop_footer_branch
    %8 = sbr.rel target = $region3
  $region8: #{double_conv.5} parent=0 // loop_exit
    _

// kernel: double_conv.4
$region0: #{double_conv.4}
  #allocation0 [shape = 'u32[]', space=smem, size = 0x4, offset = 0x4, fixed_abs, tag = 'smem constant byte address 0x4 - core index']
  #allocation1 [shape = 'u32[144,128]{1,0:T(1,128)}', space=vmem, size = 0x12000, scoped, tag = 'internal scratch']
  #allocation2 [shape = 'f32[304,128]{1,0:T(8,128)}', space=vmem, size = 0x26000, scoped, tag = 'scratch operand']
  %s0 = inlined_call_operand.vmem [shape: bf16[2,256,128], index: 0, kind: input, shape index: {}]
  %s1 = inlined_call_operand.vmem [shape: bf16[9,128,128], index: 1, kind: input, shape index: {}]
  %s2 = inlined_call_operand.vmem [shape: f32[1,128], index: 2, kind: input, shape index: {}]
  %s3 = inlined_call_operand.vmem [shape: f32[1,128], index: 3, kind: input, shape index: {}]
  %s4 = inlined_call_operand.vmem [shape: bf16[2,256,128], index: 4, kind: output, shape index: {0}]
  %s5 = inlined_call_operand.vmem [shape: f32[2,1,128], index: 5, kind: output, shape index: {1}]
  %s6 = inlined_call_operand.vmem [shape: f32[2,1,128], index: 6, kind: output, shape index: {2}]
  %7 = xla_tuple %s4, %s5, %s6
  %s8 = sld [smem:[#allocation0]]
  $region65: #{double_conv.4} parent=0
    _
  %s10 = ssub.s32 1, %s8
  %s11 = scalar_select 0, %s10, %s8
  loop: start=0, step=1, limit=4
  $region2: #{double_conv.4} parent=0 // loop_pre_header
    _
  $region3: #{double_conv.4} parent=0 // loop_header
    %s13 = sphi 0, %s17
    %p14 = scmp.ge.s32.totalorder %s13, 4
    %s23 = sphi 0, %s25
    %s26 = sphi 0, %s23
    %s27 = sphi 0, %s26
    %s43 = sphi 0, %s27
    %s47 = sphi 0, %s47
    %s49 = sphi 0, %s47
    %s50 = sphi 0, %s49
    %s64 = sphi 0, %s50
    %s68 = sphi 0, %s68
    %s70 = sphi 0, %s68
    %s71 = sphi 0, %s70
    %s85 = sphi 0, %s71
    %s89 = sphi 0, %s89
    %s91 = sphi 0, %s89
    %s92 = sphi 0, %s91
    %s106 = sphi 0, %s92
    %s112 = sphi 0, %s114
    %s115 = sphi 0, %s112
    %s116 = sphi 0, %s115
    %s132 = sphi 0, %s116
    %s138 = sphi 0, %s140
    %s141 = sphi 0, %s138
    %s142 = sphi 0, %s141
    %s158 = sphi 0, %s142
    %s164 = sphi 0, %s166
    %s167 = sphi 0, %s164
    %s168 = sphi 0, %s167
    %s184 = sphi 0, %s168
  $region4: #{double_conv.4} parent=0 // loop_header_branch
    %16 = sbr.rel (%p14) target = $region8
  $region5: #{double_conv.4} parent=0 // loop_body
    %s18 = ssub.s32 %s13, 1
    %s19 = ssub.s32 %s13, 2
    %s20 = sadd.s32 %s13, 1
    %s21 = ssub.s32 %s13, %s20
    %p22 = scmp.eq.s32.totalorder %s21, 0
    %s24 = sadd.s32 %s23, 1
    %s25 = scalar_select %p22, %s23, %s24
    %p28 = pneg %p22
    %p29 = scmp.eq.s32.totalorder %s13, 1
    %p30 = por %p28, %p29
    %p31 = scmp.ne.s32.totalorder %s23, %s26
    %p32 = scmp.eq.s32.totalorder %s13, 0
    %p33 = por %p31, %p32
    %p34 = scmp.ne.s32.totalorder %s23, %s26
    %p35 = scmp.eq.s32.totalorder %s18, 1
    %p36 = por %p34, %p35
    %p37 = scmp.ne.s32.totalorder %s26, %s27
    %p38 = scmp.eq.s32.totalorder %s18, 0
    %p39 = por %p37, %p38
    %p40 = scmp.ne.s32.totalorder %s26, %s27
    %p41 = scmp.eq.s32.totalorder %s19, 1
    %p42 = por %p40, %p41
    %p44 = scmp.ne.s32.totalorder %s27, %s43
    %p45 = scmp.eq.s32.totalorder %s19, 0
    %p46 = por %p44, %p45
    %s48 = sadd.s32 %s47, 1
    %p51 = scmp.eq.s32.totalorder %s13, 1
    %p52 = scmp.ne.s32.totalorder %s47, %s49
    %p53 = scmp.eq.s32.totalorder %s13, 0
    %p54 = por %p52, %p53
    %p55 = scmp.ne.s32.totalorder %s47, %s49
    %p56 = scmp.eq.s32.totalorder %s18, 1
    %p57 = por %p55, %p56
    %p58 = scmp.ne.s32.totalorder %s49, %s50
    %p59 = scmp.eq.s32.totalorder %s18, 0
    %p60 = por %p58, %p59
    %p61 = scmp.ne.s32.totalorder %s49, %s50
    %p62 = scmp.eq.s32.totalorder %s19, 1
    %p63 = por %p61, %p62
    %p65 = scmp.ne.s32.totalorder %s50, %s64
    %p66 = scmp.eq.s32.totalorder %s19, 0
    %p67 = por %p65, %p66
    %s69 = sadd.s32 %s68, 1
    %p72 = scmp.eq.s32.totalorder %s13, 1
    %p73 = scmp.ne.s32.totalorder %s68, %s70
    %p74 = scmp.eq.s32.totalorder %s13, 0
    %p75 = por %p73, %p74
    %p76 = scmp.ne.s32.totalorder %s68, %s70
    %p77 = scmp.eq.s32.totalorder %s18, 1
    %p78 = por %p76, %p77
    %p79 = scmp.ne.s32.totalorder %s70, %s71
    %p80 = scmp.eq.s32.totalorder %s18, 0
    %p81 = por %p79, %p80
    %p82 = scmp.ne.s32.totalorder %s70, %s71
    %p83 = scmp.eq.s32.totalorder %s19, 1
    %p84 = por %p82, %p83
    %p86 = scmp.ne.s32.totalorder %s71, %s85
    %p87 = scmp.eq.s32.totalorder %s19, 0
    %p88 = por %p86, %p87
    %s90 = sadd.s32 %s89, 1
    %p93 = scmp.eq.s32.totalorder %s13, 1
    %p94 = scmp.ne.s32.totalorder %s89, %s91
    %p95 = scmp.eq.s32.totalorder %s13, 0
    %p96 = por %p94, %p95
    %p97 = scmp.ne.s32.totalorder %s89, %s91
    %p98 = scmp.eq.s32.totalorder %s18, 1
    %p99 = por %p97, %p98
    %p100 = scmp.ne.s32.totalorder %s91, %s92
    %p101 = scmp.eq.s32.totalorder %s18, 0
    %p102 = por %p100, %p101
    %p103 = scmp.ne.s32.totalorder %s91, %s92
    %p104 = scmp.eq.s32.totalorder %s19, 1
    %p105 = por %p103, %p104
    %p107 = scmp.ne.s32.totalorder %s92, %s106
    %p108 = scmp.eq.s32.totalorder %s19, 0
    %p109 = por %p107, %p108
    %s110 = ssub.s32 %s13, %s20
    %p111 = scmp.eq.s32.totalorder %s110, 0
    %s113 = sadd.s32 %s112, 1
    %s114 = scalar_select %p111, %s112, %s113
    %p117 = pneg %p111
    %p118 = scmp.eq.s32.totalorder %s13, 1
    %p119 = por %p117, %p118
    %p120 = scmp.ne.s32.totalorder %s112, %s115
    %p121 = scmp.eq.s32.totalorder %s13, 0
    %p122 = por %p120, %p121
    %p123 = scmp.ne.s32.totalorder %s112, %s115
    %p124 = scmp.eq.s32.totalorder %s18, 1
    %p125 = por %p123, %p124
    %p126 = scmp.ne.s32.totalorder %s115, %s116
    %p127 = scmp.eq.s32.totalorder %s18, 0
    %p128 = por %p126, %p127
    %p129 = scmp.ne.s32.totalorder %s115, %s116
    %p130 = scmp.eq.s32.totalorder %s19, 1
    %p131 = por %p129, %p130
    %p133 = scmp.ne.s32.totalorder %s116, %s132
    %p134 = scmp.eq.s32.totalorder %s19, 0
    %p135 = por %p133, %p134
    %s136 = ssub.s32 %s13, %s20
    %p137 = scmp.eq.s32.totalorder %s136, 0
    %s139 = sadd.s32 %s138, 1
    %s140 = scalar_select %p137, %s138, %s139
    %p143 = pneg %p137
    %p144 = scmp.eq.s32.totalorder %s13, 1
    %p145 = por %p143, %p144
    %p146 = scmp.ne.s32.totalorder %s138, %s141
    %p147 = scmp.eq.s32.totalorder %s13, 0
    %p148 = por %p146, %p147
    %p149 = scmp.ne.s32.totalorder %s138, %s141
    %p150 = scmp.eq.s32.totalorder %s18, 1
    %p151 = por %p149, %p150
    %p152 = scmp.ne.s32.totalorder %s141, %s142
    %p153 = scmp.eq.s32.totalorder %s18, 0
    %p154 = por %p152, %p153
    %p155 = scmp.ne.s32.totalorder %s141, %s142
    %p156 = scmp.eq.s32.totalorder %s19, 1
    %p157 = por %p155, %p156
    %p159 = scmp.ne.s32.totalorder %s142, %s158
    %p160 = scmp.eq.s32.totalorder %s19, 0
    %p161 = por %p159, %p160
    %s162 = ssub.s32 %s13, %s20
    %p163 = scmp.eq.s32.totalorder %s162, 0
    %s165 = sadd.s32 %s164, 1
    %s166 = scalar_select %p163, %s164, %s165
    %p169 = pneg %p163
    %p170 = scmp.eq.s32.totalorder %s13, 1
    %p171 = por %p169, %p170
    %p172 = scmp.ne.s32.totalorder %s164, %s167
    %p173 = scmp.eq.s32.totalorder %s13, 0
    %p174 = por %p172, %p173
    %p175 = scmp.ne.s32.totalorder %s164, %s167
    %p176 = scmp.eq.s32.totalorder %s18, 1
    %p177 = por %p175, %p176
    %p178 = scmp.ne.s32.totalorder %s167, %s168
    %p179 = scmp.eq.s32.totalorder %s18, 0
    %p180 = por %p178, %p179
    %p181 = scmp.ne.s32.totalorder %s167, %s168
    %p182 = scmp.eq.s32.totalorder %s19, 1
    %p183 = por %p181, %p182
    %p185 = scmp.ne.s32.totalorder %s168, %s184
    %p186 = scmp.eq.s32.totalorder %s19, 0
    %p187 = por %p185, %p186
    %p188 = scmp.le.s32.totalorder 1, %s13
    %p189 = scmp.lt.s32.totalorder %s13, 3
    %p190 = pnand %p188, %p189
    %p191 = pneg %p190
    // Predicated region
    $region9: #{double_conv.4} parent=5 // pred_check
      _
    $region10: #{double_conv.4} parent=5 // pred_check_branch
      %193 = sbr.rel (%p190) target = $region12
    $region11: #{double_conv.4} parent=5 // pred_region
      %s194 = ssub.s32 %s13, 1
      // Predicated region
      $region13: #{double_conv.4} parent=11 // pred_check
        %p195 = pneg %p60
      $region14: #{double_conv.4} parent=11 // pred_check_branch
        %197 = sbr.rel (%p195) target = $region16
      $region15: #{double_conv.4} parent=11 // pred_region
        _
      $region16: #{double_conv.4} parent=11 // pred_fallthru
        _
      // Predicated region
      $region17: #{double_conv.4} parent=11 // pred_check
        %p198 = pneg %p81
      $region18: #{double_conv.4} parent=11 // pred_check_branch
        %200 = sbr.rel (%p198) target = $region20
      $region19: #{double_conv.4} parent=11 // pred_region
        _
      $region20: #{double_conv.4} parent=11 // pred_fallthru
        _
      // Predicated region
      $region21: #{double_conv.4} parent=11 // pred_check
        %p201 = pneg %p102
      $region22: #{double_conv.4} parent=11 // pred_check_branch
        %203 = sbr.rel (%p201) target = $region24
      $region23: #{double_conv.4} parent=11 // pred_region
        _
      $region24: #{double_conv.4} parent=11 // pred_fallthru
        _
    $region12: #{double_conv.4} parent=5 // pred_fallthru
      _
    %p204 = scmp.lt.s32.totalorder %s13, 2
    // Predicated region
    $region25: #{double_conv.4} parent=5 // pred_check
      %p205 = pneg %p204
    $region26: #{double_conv.4} parent=5 // pred_check_branch
      %207 = sbr.rel (%p205) target = $region28
    $region27: #{double_conv.4} parent=5 // pred_region
      // Predicated region
      $region29: #{double_conv.4} parent=27 // pred_check
        %p208 = pneg %p33
      $region30: #{double_conv.4} parent=27 // pred_check_branch
        %210 = sbr.rel (%p208) target = $region32
      $region31: #{double_conv.4} parent=27 // pred_region
        %p211 = scmp.lt.s32.totalorder %s13, 1
        %s212 = scalar_select %p211, %s13, 1
        %s213 = smul.addr %s212, 32
        %s214 = smul.addr %s213, 4
        %s215 = scalar_lea.vmem %s0, %s214
      $region32: #{double_conv.4} parent=27 // pred_fallthru
        _
    $region28: #{double_conv.4} parent=5 // pred_fallthru
      _
    %p216 = scmp.le.s32.totalorder 1, %s13
    %p217 = scmp.lt.s32.totalorder %s13, 3
    %p218 = pnand %p216, %p217
    %p219 = pneg %p218
    // Predicated region
    $region33: #{double_conv.4} parent=5 // pred_check
      _
    $region34: #{double_conv.4} parent=5 // pred_check_branch
      %221 = sbr.rel (%p218) target = $region36
    $region35: #{double_conv.4} parent=5 // pred_region
      %s222 = ssub.s32 %s13, 1
      %p223 = scmp.lt.s32.totalorder %s18, 1
      %s224 = scalar_select %p223, %s18, 1
      %s225 = smul.addr %s224, 32
      %s226 = smul.addr %s225, 4
      %s227 = scalar_lea.vmem %s0, %s226
      %p228 = pneg %p39
      %p229 = pneg %p36
      %p230 = pneg %p60
      %p231 = pneg %p57
      %p232 = pneg %p81
      %p233 = pneg %p78
      %p234 = pneg %p102
      %p235 = pneg %p99
      %p236 = pneg %p128
      %p237 = pneg %p125
      %p238 = scmp.lt.s32.totalorder %s18, 1
      %s239 = scalar_select %p238, %s18, 1
      %s240 = smul.addr %s239, 32
      %s241 = smul.addr %s240, 4
      %s242 = scalar_lea.vmem %s4, %s241
      %p243 = pneg %p154
      %p244 = pneg %p151
      %p245 = scmp.lt.s32.totalorder %s18, 1
      %s246 = scalar_select %p245, %s18, 1
      %s247 = scalar_lea.vmem %s5, %s246
      %p248 = pneg %p180
      %p249 = pneg %p177
      %p250 = scmp.lt.s32.totalorder %s18, 1
      %s251 = scalar_select %p250, %s18, 1
      %s252 = scalar_lea.vmem %s6, %s251
      %p253 = scmp.lt.s32.totalorder %s18, 1
      %s254 = scalar_select %p253, %s18, 1
      %s255 = smul.addr %s254, 32
      %s256 = smul.addr %s255, 4
      %s257 = scalar_lea.vmem %s0, %s256
      %p258 = scmp.lt.s32.totalorder %s18, 1
      %s259 = scalar_select %p258, %s18, 1
      %s260 = smul.addr %s259, 32
      %s261 = smul.addr %s260, 4
      %s262 = scalar_lea.vmem %s4, %s261
      %p263 = scmp.lt.s32.totalorder %s18, 1
      %s264 = scalar_select %p263, %s18, 1
      %s265 = scalar_lea.vmem %s5, %s264
      %p266 = scmp.lt.s32.totalorder %s18, 1
      %s267 = scalar_select %p266, %s18, 1
      %s268 = scalar_lea.vmem %s6, %s267
      %270 = vst [vmem:[#allocation2] sm:$0xff] 0.0
      %271 = vst [vmem:[#allocation2 + $0x8] sm:$0xff] 0.0
      %272 = vst [vmem:[#allocation2 + $0x10] sm:$0xff] 0.0
      %273 = vst [vmem:[#allocation2 + $0x118] sm:$0xff] 0.0
      %274 = vst [vmem:[#allocation2 + $0x120] sm:$0xff] 0.0
      %275 = vst [vmem:[#allocation2 + $0x128] sm:$0xff] 0.0
      %v276 = vld [vmem:[%s257] sm:$0xf]
      %v277 = vld [vmem:[%s257 + $0x4] sm:$0xf]
      %v278 = vld [vmem:[%s257 + $0x8] sm:$0xf]
      %v279 = vld [vmem:[%s257 + $0xc] sm:$0xf]
      %v280 = vld [vmem:[%s257 + $0x10] sm:$0xf]
      %v281 = vld [vmem:[%s257 + $0x14] sm:$0xf]
      %v282 = vld [vmem:[%s257 + $0x18] sm:$0xf]
      %v283 = vld [vmem:[%s257 + $0x1c] sm:$0xf]
      %v284 = vld [vmem:[%s257 + $0x20] sm:$0xf]
      %v285 = vld [vmem:[%s257 + $0x24] sm:$0xf]
      %v286 = vld [vmem:[%s257 + $0x28] sm:$0xf]
      %v287 = vld [vmem:[%s257 + $0x2c] sm:$0xf]
      %v288 = vld [vmem:[%s257 + $0x30] sm:$0xf]
      %v289 = vld [vmem:[%s257 + $0x34] sm:$0xf]
      %v290 = vld [vmem:[%s257 + $0x38] sm:$0xf]
      %v291 = vld [vmem:[%s257 + $0x3c] sm:$0xf]
      %v292 = vld [vmem:[%s257 + $0x40] sm:$0xf]
      %v293 = vld [vmem:[%s257 + $0x44] sm:$0xf]
      %v294 = vld [vmem:[%s257 + $0x48] sm:$0xf]
      %v295 = vld [vmem:[%s257 + $0x4c] sm:$0xf]
      %v296 = vld [vmem:[%s257 + $0x50] sm:$0xf]
      %v297 = vld [vmem:[%s257 + $0x54] sm:$0xf]
      %v298 = vld [vmem:[%s257 + $0x58] sm:$0xf]
      %v299 = vld [vmem:[%s257 + $0x5c] sm:$0xf]
      %v300 = vld [vmem:[%s257 + $0x60] sm:$0xf]
      %v301 = vld [vmem:[%s257 + $0x64] sm:$0xf]
      %v302 = vld [vmem:[%s257 + $0x68] sm:$0xf]
      %v303 = vld [vmem:[%s257 + $0x6c] sm:$0xf]
      %v304 = vld [vmem:[%s257 + $0x70] sm:$0xf]
      %v305 = vld [vmem:[%s257 + $0x74] sm:$0xf]
      %v306 = vld [vmem:[%s257 + $0x78] sm:$0xf]
      %v307 = vld [vmem:[%s257 + $0x7c] sm:$0xf]
      %v308 = vunpack.c.l.bf16 %v276
      %v309 = vunpack.c.l.bf16 %v277
      %v310 = vunpack.c.l.bf16 %v278
      %v311 = vunpack.c.l.bf16 %v279
      %v312 = vunpack.c.l.bf16 %v280
      %v313 = vunpack.c.l.bf16 %v281
      %v314 = vunpack.c.l.bf16 %v282
      %v315 = vunpack.c.l.bf16 %v283
      %v316 = vunpack.c.l.bf16 %v284
      %v317 = vunpack.c.l.bf16 %v285
      %v318 = vunpack.c.l.bf16 %v286
      %v319 = vunpack.c.l.bf16 %v287
      %v320 = vunpack.c.l.bf16 %v288
      %v321 = vunpack.c.l.bf16 %v289
      %v322 = vunpack.c.l.bf16 %v290
      %v323 = vunpack.c.l.bf16 %v291
      %v324 = vunpack.c.l.bf16 %v292
      %v325 = vunpack.c.l.bf16 %v293
      %v326 = vunpack.c.l.bf16 %v294
      %v327 = vunpack.c.l.bf16 %v295
      %v328 = vunpack.c.l.bf16 %v296
      %v329 = vunpack.c.l.bf16 %v297
      %v330 = vunpack.c.l.bf16 %v298
      %v331 = vunpack.c.l.bf16 %v299
      %v332 = vunpack.c.l.bf16 %v300
      %v333 = vunpack.c.l.bf16 %v301
      %v334 = vunpack.c.l.bf16 %v302
      %v335 = vunpack.c.l.bf16 %v303
      %v336 = vunpack.c.l.bf16 %v304
      %v337 = vunpack.c.l.bf16 %v305
      %v338 = vunpack.c.l.bf16 %v306
      %v339 = vunpack.c.l.bf16 %v307
      %v340 = vld [vmem:[%s2] sm:$0x1]
      %v342 = vlaneseq
      %v343 = vshrl.u32 %v342, 7
      %v344 = vsub.s32 0, %v343
      %v345 = vrot.slane %v340, %v344
      %v347 = vmul.f32 %v308, %v345
      %v348 = vmul.f32 %v309, %v345
      %v349 = vmul.f32 %v310, %v345
      %v350 = vmul.f32 %v311, %v345
      %v351 = vmul.f32 %v312, %v345
      %v352 = vmul.f32 %v313, %v345
      %v353 = vmul.f32 %v314, %v345
      %v354 = vmul.f32 %v315, %v345
      %v355 = vmul.f32 %v316, %v345
      %v356 = vmul.f32 %v317, %v345
      %v357 = vmul.f32 %v318, %v345
      %v358 = vmul.f32 %v319, %v345
      %v359 = vmul.f32 %v320, %v345
      %v360 = vmul.f32 %v321, %v345
      %v361 = vmul.f32 %v322, %v345
      %v362 = vmul.f32 %v323, %v345
      %v363 = vmul.f32 %v324, %v345
      %v364 = vmul.f32 %v325, %v345
      %v365 = vmul.f32 %v326, %v345
      %v366 = vmul.f32 %v327, %v345
      %v367 = vmul.f32 %v328, %v345
      %v368 = vmul.f32 %v329, %v345
      %v369 = vmul.f32 %v330, %v345
      %v370 = vmul.f32 %v331, %v345
      %v371 = vmul.f32 %v332, %v345
      %v372 = vmul.f32 %v333, %v345
      %v373 = vmul.f32 %v334, %v345
      %v374 = vmul.f32 %v335, %v345
      %v375 = vmul.f32 %v336, %v345
      %v376 = vmul.f32 %v337, %v345
      %v377 = vmul.f32 %v338, %v345
      %v378 = vmul.f32 %v339, %v345
      %v379 = vld [vmem:[%s3] sm:$0x1]
      %v381 = vlaneseq
      %v382 = vshrl.u32 %v381, 7
      %v383 = vsub.s32 0, %v382
      %v384 = vrot.slane %v379, %v383
      %v386 = vadd.f32 %v347, %v384
      %v387 = vadd.f32 %v348, %v384
      %v388 = vadd.f32 %v349, %v384
      %v389 = vadd.f32 %v350, %v384
      %v390 = vadd.f32 %v351, %v384
      %v391 = vadd.f32 %v352, %v384
      %v392 = vadd.f32 %v353, %v384
      %v393 = vadd.f32 %v354, %v384
      %v394 = vadd.f32 %v355, %v384
      %v395 = vadd.f32 %v356, %v384
      %v396 = vadd.f32 %v357, %v384
      %v397 = vadd.f32 %v358, %v384
      %v398 = vadd.f32 %v359, %v384
      %v399 = vadd.f32 %v360, %v384
      %v400 = vadd.f32 %v361, %v384
      %v401 = vadd.f32 %v362, %v384
      %v402 = vadd.f32 %v363, %v384
      %v403 = vadd.f32 %v364, %v384
      %v404 = vadd.f32 %v365, %v384
      %v405 = vadd.f32 %v366, %v384
      %v406 = vadd.f32 %v367, %v384
      %v407 = vadd.f32 %v368, %v384
      %v408 = vadd.f32 %v369, %v384
      %v409 = vadd.f32 %v370, %v384
      %v410 = vadd.f32 %v371, %v384
      %v411 = vadd.f32 %v372, %v384
      %v412 = vadd.f32 %v373, %v384
      %v413 = vadd.f32 %v374, %v384
      %v414 = vadd.f32 %v375, %v384
      %v415 = vadd.f32 %v376, %v384
      %v416 = vadd.f32 %v377, %v384
      %v417 = vadd.f32 %v378, %v384
      %v418 = vmax.f32 %v386, 0.0
      %v419 = vmax.f32 %v387, 0.0
      %v420 = vmax.f32 %v388, 0.0
      %v421 = vmax.f32 %v389, 0.0
      %v422 = vmax.f32 %v390, 0.0
      %v423 = vmax.f32 %v391, 0.0
      %v424 = vmax.f32 %v392, 0.0
      %v425 = vmax.f32 %v393, 0.0
      %v426 = vmax.f32 %v394, 0.0
      %v427 = vmax.f32 %v395, 0.0
      %v428 = vmax.f32 %v396, 0.0
      %v429 = vmax.f32 %v397, 0.0
      %v430 = vmax.f32 %v398, 0.0
      %v431 = vmax.f32 %v399, 0.0
      %v432 = vmax.f32 %v400, 0.0
      %v433 = vmax.f32 %v401, 0.0
      %v434 = vmax.f32 %v402, 0.0
      %v435 = vmax.f32 %v403, 0.0
      %v436 = vmax.f32 %v404, 0.0
      %v437 = vmax.f32 %v405, 0.0
      %v438 = vmax.f32 %v406, 0.0
      %v439 = vmax.f32 %v407, 0.0
      %v440 = vmax.f32 %v408, 0.0
      %v441 = vmax.f32 %v409, 0.0
      %v442 = vmax.f32 %v410, 0.0
      %v443 = vmax.f32 %v411, 0.0
      %v444 = vmax.f32 %v412, 0.0
      %v445 = vmax.f32 %v413, 0.0
      %v446 = vmax.f32 %v414, 0.0
      %v447 = vmax.f32 %v415, 0.0
      %v448 = vmax.f32 %v416, 0.0
      %v449 = vmax.f32 %v417, 0.0
      %450 = vst [vmem:[#allocation2 + $0x18] sm:$0xff] %v418
      %451 = vst [vmem:[#allocation2 + $0x20] sm:$0xff] %v419
      %452 = vst [vmem:[#allocation2 + $0x28] sm:$0xff] %v420
      %453 = vst [vmem:[#allocation2 + $0x30] sm:$0xff] %v421
      %454 = vst [vmem:[#allocation2 + $0x38] sm:$0xff] %v422
      %455 = vst [vmem:[#allocation2 + $0x40] sm:$0xff] %v423
      %456 = vst [vmem:[#allocation2 + $0x48] sm:$0xff] %v424
      %457 = vst [vmem:[#allocation2 + $0x50] sm:$0xff] %v425
      %458 = vst [vmem:[#allocation2 + $0x58] sm:$0xff] %v426
      %459 = vst [vmem:[#allocation2 + $0x60] sm:$0xff] %v427
      %460 = vst [vmem:[#allocation2 + $0x68] sm:$0xff] %v428
      %461 = vst [vmem:[#allocation2 + $0x70] sm:$0xff] %v429
      %462 = vst [vmem:[#allocation2 + $0x78] sm:$0xff] %v430
      %463 = vst [vmem:[#allocation2 + $0x80] sm:$0xff] %v431
      %464 = vst [vmem:[#allocation2 + $0x88] sm:$0xff] %v432
      %465 = vst [vmem:[#allocation2 + $0x90] sm:$0xff] %v433
      %466 = vst [vmem:[#allocation2 + $0x98] sm:$0xff] %v434
      %467 = vst [vmem:[#allocation2 + $0xa0] sm:$0xff] %v435
      %468 = vst [vmem:[#allocation2 + $0xa8] sm:$0xff] %v436
      %469 = vst [vmem:[#allocation2 + $0xb0] sm:$0xff] %v437
      %470 = vst [vmem:[#allocation2 + $0xb8] sm:$0xff] %v438
      %471 = vst [vmem:[#allocation2 + $0xc0] sm:$0xff] %v439
      %472 = vst [vmem:[#allocation2 + $0xc8] sm:$0xff] %v440
      %473 = vst [vmem:[#allocation2 + $0xd0] sm:$0xff] %v441
      %474 = vst [vmem:[#allocation2 + $0xd8] sm:$0xff] %v442
      %475 = vst [vmem:[#allocation2 + $0xe0] sm:$0xff] %v443
      %476 = vst [vmem:[#allocation2 + $0xe8] sm:$0xff] %v444
      %477 = vst [vmem:[#allocation2 + $0xf0] sm:$0xff] %v445
      %478 = vst [vmem:[#allocation2 + $0xf8] sm:$0xff] %v446
      %479 = vst [vmem:[#allocation2 + $0x100] sm:$0xff] %v447
      %480 = vst [vmem:[#allocation2 + $0x108] sm:$0xff] %v448
      %481 = vst [vmem:[#allocation2 + $0x110] sm:$0xff] %v449
      %v482 = vlaneseq
      %v483 = vshrl.u32 %v482, 7
      %v484 = vadd.s32 %v483, 8
      %v485 = vadd.s32 %v483, 16
      %v486 = vadd.s32 %v483, 24
      %v487 = vadd.s32 %v483, 32
      %v488 = vadd.s32 %v483, 40
      %v489 = vadd.s32 %v483, 48
      %v490 = vadd.s32 %v483, 56
      %v491 = vadd.s32 %v483, 64
      %v492 = vadd.s32 %v483, 72
      %v493 = vadd.s32 %v483, 80
      %v494 = vadd.s32 %v483, 88
      %v495 = vadd.s32 %v483, 96
      %v496 = vadd.s32 %v483, 104
      %v497 = vadd.s32 %v483, 112
      %v498 = vadd.s32 %v483, 120
      %v499 = vadd.s32 %v483, 128
      %v500 = vadd.s32 %v483, 136
      %v501 = vadd.s32 %v483, 144
      %v502 = vadd.s32 %v483, 152
      %v503 = vadd.s32 %v483, 160
      %v504 = vadd.s32 %v483, 168
      %v505 = vadd.s32 %v483, 176
      %v506 = vadd.s32 %v483, 184
      %v507 = vadd.s32 %v483, 192
      %v508 = vadd.s32 %v483, 200
      %v509 = vadd.s32 %v483, 208
      %v510 = vadd.s32 %v483, 216
      %v511 = vadd.s32 %v483, 224
      %v512 = vadd.s32 %v483, 232
      %v513 = vadd.s32 %v483, 240
      %v514 = vadd.s32 %v483, 248
      %vm515 = vcmp.lt.s32.totalorder %v483, 0
      %v516 = vsub.s32 0, %v483
      %v517 = vsel %vm515, %v516, %v483
      %v518 = vshrl.u32 %v517, 4
      %v519 = vand.u32 %v517, 15
      %v520 = vsub.s32 0, %v519
      %v521 = vsel %vm515, %v520, %v519
      %vm522 = vcmp.lt.s32.totalorder %v484, 0
      %v523 = vsub.s32 0, %v484
      %v524 = vsel %vm522, %v523, %v484
      %v525 = vshrl.u32 %v524, 4
      %v526 = vand.u32 %v524, 15
      %v527 = vsub.s32 0, %v526
      %v528 = vsel %vm522, %v527, %v526
      %vm529 = vcmp.lt.s32.totalorder %v485, 0
      %v530 = vsub.s32 0, %v485
      %v531 = vsel %vm529, %v530, %v485
      %v532 = vshrl.u32 %v531, 4
      %v533 = vand.u32 %v531, 15
      %v534 = vsub.s32 0, %v533
      %v535 = vsel %vm529, %v534, %v533
      %vm536 = vcmp.lt.s32.totalorder %v486, 0
      %v537 = vsub.s32 0, %v486
      %v538 = vsel %vm536, %v537, %v486
      %v539 = vshrl.u32 %v538, 4
      %v540 = vand.u32 %v538, 15
      %v541 = vsub.s32 0, %v540
      %v542 = vsel %vm536, %v541, %v540
      %vm543 = vcmp.lt.s32.totalorder %v487, 0
      %v544 = vsub.s32 0, %v487
      %v545 = vsel %vm543, %v544, %v487
      %v546 = vshrl.u32 %v545, 4
      %v547 = vand.u32 %v545, 15
      %v548 = vsub.s32 0, %v547
      %v549 = vsel %vm543, %v548, %v547
      %vm550 = vcmp.lt.s32.totalorder %v488, 0
      %v551 = vsub.s32 0, %v488
      %v552 = vsel %vm550, %v551, %v488
      %v553 = vshrl.u32 %v552, 4
      %v554 = vand.u32 %v552, 15
      %v555 = vsub.s32 0, %v554
      %v556 = vsel %vm550, %v555, %v554
      %vm557 = vcmp.lt.s32.totalorder %v489, 0
      %v558 = vsub.s32 0, %v489
      %v559 = vsel %vm557, %v558, %v489
      %v560 = vshrl.u32 %v559, 4
      %v561 = vand.u32 %v559, 15
      %v562 = vsub.s32 0, %v561
      %v563 = vsel %vm557, %v562, %v561
      %vm564 = vcmp.lt.s32.totalorder %v490, 0
      %v565 = vsub.s32 0, %v490
      %v566 = vsel %vm564, %v565, %v490
      %v567 = vshrl.u32 %v566, 4
      %v568 = vand.u32 %v566, 15
      %v569 = vsub.s32 0, %v568
      %v570 = vsel %vm564, %v569, %v568
      %vm571 = vcmp.lt.s32.totalorder %v491, 0
      %v572 = vsub.s32 0, %v491
      %v573 = vsel %vm571, %v572, %v491
      %v574 = vshrl.u32 %v573, 4
      %v575 = vand.u32 %v573, 15
      %v576 = vsub.s32 0, %v575
      %v577 = vsel %vm571, %v576, %v575
      %vm578 = vcmp.lt.s32.totalorder %v492, 0
      %v579 = vsub.s32 0, %v492
      %v580 = vsel %vm578, %v579, %v492
      %v581 = vshrl.u32 %v580, 4
      %v582 = vand.u32 %v580, 15
      %v583 = vsub.s32 0, %v582
      %v584 = vsel %vm578, %v583, %v582
      %vm585 = vcmp.lt.s32.totalorder %v493, 0
      %v586 = vsub.s32 0, %v493
      %v587 = vsel %vm585, %v586, %v493
      %v588 = vshrl.u32 %v587, 4
      %v589 = vand.u32 %v587, 15
      %v590 = vsub.s32 0, %v589
      %v591 = vsel %vm585, %v590, %v589
      %vm592 = vcmp.lt.s32.totalorder %v494, 0
      %v593 = vsub.s32 0, %v494
      %v594 = vsel %vm592, %v593, %v494
      %v595 = vshrl.u32 %v594, 4
      %v596 = vand.u32 %v594, 15
      %v597 = vsub.s32 0, %v596
      %v598 = vsel %vm592, %v597, %v596
      %vm599 = vcmp.lt.s32.totalorder %v495, 0
      %v600 = vsub.s32 0, %v495
      %v601 = vsel %vm599, %v600, %v495
      %v602 = vshrl.u32 %v601, 4
      %v603 = vand.u32 %v601, 15
      %v604 = vsub.s32 0, %v603
      %v605 = vsel %vm599, %v604, %v603
      %vm606 = vcmp.lt.s32.totalorder %v496, 0
      %v607 = vsub.s32 0, %v496
      %v608 = vsel %vm606, %v607, %v496
      %v609 = vshrl.u32 %v608, 4
      %v610 = vand.u32 %v608, 15
      %v611 = vsub.s32 0, %v610
      %v612 = vsel %vm606, %v611, %v610
      %vm613 = vcmp.lt.s32.totalorder %v497, 0
      %v614 = vsub.s32 0, %v497
      %v615 = vsel %vm613, %v614, %v497
      %v616 = vshrl.u32 %v615, 4
      %v617 = vand.u32 %v615, 15
      %v618 = vsub.s32 0, %v617
      %v619 = vsel %vm613, %v618, %v617
      %vm620 = vcmp.lt.s32.totalorder %v498, 0
      %v621 = vsub.s32 0, %v498
      %v622 = vsel %vm620, %v621, %v498
      %v623 = vshrl.u32 %v622, 4
      %v624 = vand.u32 %v622, 15
      %v625 = vsub.s32 0, %v624
      %v626 = vsel %vm620, %v625, %v624
      %vm627 = vcmp.lt.s32.totalorder %v499, 0
      %v628 = vsub.s32 0, %v499
      %v629 = vsel %vm627, %v628, %v499
      %v630 = vshrl.u32 %v629, 4
      %v631 = vand.u32 %v629, 15
      %v632 = vsub.s32 0, %v631
      %v633 = vsel %vm627, %v632, %v631
      %vm634 = vcmp.lt.s32.totalorder %v500, 0
      %v635 = vsub.s32 0, %v500
      %v636 = vsel %vm634, %v635, %v500
      %v637 = vshrl.u32 %v636, 4
      %v638 = vand.u32 %v636, 15
      %v639 = vsub.s32 0, %v638
      %v640 = vsel %vm634, %v639, %v638
      %vm641 = vcmp.lt.s32.totalorder %v501, 0
      %v642 = vsub.s32 0, %v501
      %v643 = vsel %vm641, %v642, %v501
      %v644 = vshrl.u32 %v643, 4
      %v645 = vand.u32 %v643, 15
      %v646 = vsub.s32 0, %v645
      %v647 = vsel %vm641, %v646, %v645
      %vm648 = vcmp.lt.s32.totalorder %v502, 0
      %v649 = vsub.s32 0, %v502
      %v650 = vsel %vm648, %v649, %v502
      %v651 = vshrl.u32 %v650, 4
      %v652 = vand.u32 %v650, 15
      %v653 = vsub.s32 0, %v652
      %v654 = vsel %vm648, %v653, %v652
      %vm655 = vcmp.lt.s32.totalorder %v503, 0
      %v656 = vsub.s32 0, %v503
      %v657 = vsel %vm655, %v656, %v503
      %v658 = vshrl.u32 %v657, 4
      %v659 = vand.u32 %v657, 15
      %v660 = vsub.s32 0, %v659
      %v661 = vsel %vm655, %v660, %v659
      %vm662 = vcmp.lt.s32.totalorder %v504, 0
      %v663 = vsub.s32 0, %v504
      %v664 = vsel %vm662, %v663, %v504
      %v665 = vshrl.u32 %v664, 4
      %v666 = vand.u32 %v664, 15
      %v667 = vsub.s32 0, %v666
      %v668 = vsel %vm662, %v667, %v666
      %vm669 = vcmp.lt.s32.totalorder %v505, 0
      %v670 = vsub.s32 0, %v505
      %v671 = vsel %vm669, %v670, %v505
      %v672 = vshrl.u32 %v671, 4
      %v673 = vand.u32 %v671, 15
      %v674 = vsub.s32 0, %v673
      %v675 = vsel %vm669, %v674, %v673
      %vm676 = vcmp.lt.s32.totalorder %v506, 0
      %v677 = vsub.s32 0, %v506
      %v678 = vsel %vm676, %v677, %v506
      %v679 = vshrl.u32 %v678, 4
      %v680 = vand.u32 %v678, 15
      %v681 = vsub.s32 0, %v680
      %v682 = vsel %vm676, %v681, %v680
      %vm683 = vcmp.lt.s32.totalorder %v507, 0
      %v684 = vsub.s32 0, %v507
      %v685 = vsel %vm683, %v684, %v507
      %v686 = vshrl.u32 %v685, 4
      %v687 = vand.u32 %v685, 15
      %v688 = vsub.s32 0, %v687
      %v689 = vsel %vm683, %v688, %v687
      %vm690 = vcmp.lt.s32.totalorder %v508, 0
      %v691 = vsub.s32 0, %v508
      %v692 = vsel %vm690, %v691, %v508
      %v693 = vshrl.u32 %v692, 4
      %v694 = vand.u32 %v692, 15
      %v695 = vsub.s32 0, %v694
      %v696 = vsel %vm690, %v695, %v694
      %vm697 = vcmp.lt.s32.totalorder %v509, 0
      %v698 = vsub.s32 0, %v509
      %v699 = vsel %vm697, %v698, %v509
      %v700 = vshrl.u32 %v699, 4
      %v701 = vand.u32 %v699, 15
      %v702 = vsub.s32 0, %v701
      %v703 = vsel %vm697, %v702, %v701
      %vm704 = vcmp.lt.s32.totalorder %v510, 0
      %v705 = vsub.s32 0, %v510
      %v706 = vsel %vm704, %v705, %v510
      %v707 = vshrl.u32 %v706, 4
      %v708 = vand.u32 %v706, 15
      %v709 = vsub.s32 0, %v708
      %v710 = vsel %vm704, %v709, %v708
      %vm711 = vcmp.lt.s32.totalorder %v511, 0
      %v712 = vsub.s32 0, %v511
      %v713 = vsel %vm711, %v712, %v511
      %v714 = vshrl.u32 %v713, 4
      %v715 = vand.u32 %v713, 15
      %v716 = vsub.s32 0, %v715
      %v717 = vsel %vm711, %v716, %v715
      %vm718 = vcmp.lt.s32.totalorder %v512, 0
      %v719 = vsub.s32 0, %v512
      %v720 = vsel %vm718, %v719, %v512
      %v721 = vshrl.u32 %v720, 4
      %v722 = vand.u32 %v720, 15
      %v723 = vsub.s32 0, %v722
      %v724 = vsel %vm718, %v723, %v722
      %vm725 = vcmp.lt.s32.totalorder %v513, 0
      %v726 = vsub.s32 0, %v513
      %v727 = vsel %vm725, %v726, %v513
      %v728 = vshrl.u32 %v727, 4
      %v729 = vand.u32 %v727, 15
      %v730 = vsub.s32 0, %v729
      %v731 = vsel %vm725, %v730, %v729
      %vm732 = vcmp.lt.s32.totalorder %v514, 0
      %v733 = vsub.s32 0, %v514
      %v734 = vsel %vm732, %v733, %v514
      %v735 = vshrl.u32 %v734, 4
      %v736 = vand.u32 %v734, 15
      %v737 = vsub.s32 0, %v736
      %v738 = vsel %vm732, %v737, %v736
      %vm739 = vcmp.ne.s32.totalorder %v521, 0
      %vm740 = vcmp.ne.s32.totalorder %v528, 0
      %vm741 = vcmp.ne.s32.totalorder %v535, 0
      %vm742 = vcmp.ne.s32.totalorder %v542, 0
      %vm743 = vcmp.ne.s32.totalorder %v549, 0
      %vm744 = vcmp.ne.s32.totalorder %v556, 0
      %vm745 = vcmp.ne.s32.totalorder %v563, 0
      %vm746 = vcmp.ne.s32.totalorder %v570, 0
      %vm747 = vcmp.ne.s32.totalorder %v577, 0
      %vm748 = vcmp.ne.s32.totalorder %v584, 0
      %vm749 = vcmp.ne.s32.totalorder %v591, 0
      %vm750 = vcmp.ne.s32.totalorder %v598, 0
      %vm751 = vcmp.ne.s32.totalorder %v605, 0
      %vm752 = vcmp.ne.s32.totalorder %v612, 0
      %vm753 = vcmp.ne.s32.totalorder %v619, 0
      %vm754 = vcmp.ne.s32.totalorder %v626, 0
      %vm755 = vcmp.ne.s32.totalorder %v633, 0
      %vm756 = vcmp.ne.s32.totalorder %v640, 0
      %vm757 = vcmp.ne.s32.totalorder %v647, 0
      %vm758 = vcmp.ne.s32.totalorder %v654, 0
      %vm759 = vcmp.ne.s32.totalorder %v661, 0
      %vm760 = vcmp.ne.s32.totalorder %v668, 0
      %vm761 = vcmp.ne.s32.totalorder %v675, 0
      %vm762 = vcmp.ne.s32.totalorder %v682, 0
      %vm763 = vcmp.ne.s32.totalorder %v689, 0
      %vm764 = vcmp.ne.s32.totalorder %v696, 0
      %vm765 = vcmp.ne.s32.totalorder %v703, 0
      %vm766 = vcmp.ne.s32.totalorder %v710, 0
      %vm767 = vcmp.ne.s32.totalorder %v717, 0
      %vm768 = vcmp.ne.s32.totalorder %v724, 0
      %vm769 = vcmp.ne.s32.totalorder %v731, 0
      %vm770 = vcmp.ne.s32.totalorder %v738, 0
      %vm771 = vcmp.lt.s32.totalorder %v521, 0
      %vm772 = vcmp.lt.s32.totalorder %v528, 0
      %vm773 = vcmp.lt.s32.totalorder %v535, 0
      %vm774 = vcmp.lt.s32.totalorder %v542, 0
      %vm775 = vcmp.lt.s32.totalorder %v549, 0
      %vm776 = vcmp.lt.s32.totalorder %v556, 0
      %vm777 = vcmp.lt.s32.totalorder %v563, 0
      %vm778 = vcmp.lt.s32.totalorder %v570, 0
      %vm779 = vcmp.lt.s32.totalorder %v577, 0
      %vm780 = vcmp.lt.s32.totalorder %v584, 0
      %vm781 = vcmp.lt.s32.totalorder %v591, 0
      %vm782 = vcmp.lt.s32.totalorder %v598, 0
      %vm783 = vcmp.lt.s32.totalorder %v605, 0
      %vm784 = vcmp.lt.s32.totalorder %v612, 0
      %vm785 = vcmp.lt.s32.totalorder %v619, 0
      %vm786 = vcmp.lt.s32.totalorder %v626, 0
      %vm787 = vcmp.lt.s32.totalorder %v633, 0
      %vm788 = vcmp.lt.s32.totalorder %v640, 0
      %vm789 = vcmp.lt.s32.totalorder %v647, 0
      %vm790 = vcmp.lt.s32.totalorder %v654, 0
      %vm791 = vcmp.lt.s32.totalorder %v661, 0
      %vm792 = vcmp.lt.s32.totalorder %v668, 0
      %vm793 = vcmp.lt.s32.totalorder %v675, 0
      %vm794 = vcmp.lt.s32.totalorder %v682, 0
      %vm795 = vcmp.lt.s32.totalorder %v689, 0
      %vm796 = vcmp.lt.s32.totalorder %v696, 0
      %vm797 = vcmp.lt.s32.totalorder %v703, 0
      %vm798 = vcmp.lt.s32.totalorder %v710, 0
      %vm799 = vcmp.lt.s32.totalorder %v717, 0
      %vm800 = vcmp.lt.s32.totalorder %v724, 0
      %vm801 = vcmp.lt.s32.totalorder %v731, 0
      %vm802 = vcmp.lt.s32.totalorder %v738, 0
      %vm803 = vmand %vm771, %vm739
      %vm804 = vmand %vm772, %vm740
      %vm805 = vmand %vm773, %vm741
      %vm806 = vmand %vm774, %vm742
      %vm807 = vmand %vm775, %vm743
      %vm808 = vmand %vm776, %vm744
      %vm809 = vmand %vm777, %vm745
      %vm810 = vmand %vm778, %vm746
      %vm811 = vmand %vm779, %vm747
      %vm812 = vmand %vm780, %vm748
      %vm813 = vmand %vm781, %vm749
      %vm814 = vmand %vm782, %vm750
      %vm815 = vmand %vm783, %vm751
      %vm816 = vmand %vm784, %vm752
      %vm817 = vmand %vm785, %vm753
      %vm818 = vmand %vm786, %vm754
      %vm819 = vmand %vm787, %vm755
      %vm820 = vmand %vm788, %vm756
      %vm821 = vmand %vm789, %vm757
      %vm822 = vmand %vm790, %vm758
      %vm823 = vmand %vm791, %vm759
      %vm824 = vmand %vm792, %vm760
      %vm825 = vmand %vm793, %vm761
      %vm826 = vmand %vm794, %vm762
      %vm827 = vmand %vm795, %vm763
      %vm828 = vmand %vm796, %vm764
      %vm829 = vmand %vm797, %vm765
      %vm830 = vmand %vm798, %vm766
      %vm831 = vmand %vm799, %vm767
      %vm832 = vmand %vm800, %vm768
      %vm833 = vmand %vm801, %vm769
      %vm834 = vmand %vm802, %vm770
      %v835 = vadd.s32 %v521, 16
      %v836 = vadd.s32 %v528, 16
      %v837 = vadd.s32 %v535, 16
      %v838 = vadd.s32 %v542, 16
      %v839 = vadd.s32 %v549, 16
      %v840 = vadd.s32 %v556, 16
      %v841 = vadd.s32 %v563, 16
      %v842 = vadd.s32 %v570, 16
      %v843 = vadd.s32 %v577, 16
      %v844 = vadd.s32 %v584, 16
      %v845 = vadd.s32 %v591, 16
      %v846 = vadd.s32 %v598, 16
      %v847 = vadd.s32 %v605, 16
      %v848 = vadd.s32 %v612, 16
      %v849 = vadd.s32 %v619, 16
      %v850 = vadd.s32 %v626, 16
      %v851 = vadd.s32 %v633, 16
      %v852 = vadd.s32 %v640, 16
      %v853 = vadd.s32 %v647, 16
      %v854 = vadd.s32 %v654, 16
      %v855 = vadd.s32 %v661, 16
      %v856 = vadd.s32 %v668, 16
      %v857 = vadd.s32 %v675, 16
      %v858 = vadd.s32 %v682, 16
      %v859 = vadd.s32 %v689, 16
      %v860 = vadd.s32 %v696, 16
      %v861 = vadd.s32 %v703, 16
      %v862 = vadd.s32 %v710, 16
      %v863 = vadd.s32 %v717, 16
      %v864 = vadd.s32 %v724, 16
      %v865 = vadd.s32 %v731, 16
      %v866 = vadd.s32 %v738, 16
      %v867 = vsel %vm803, %v835, %v521
      %v868 = vsel %vm804, %v836, %v528
      %v869 = vsel %vm805, %v837, %v535
      %v870 = vsel %vm806, %v838, %v542
      %v871 = vsel %vm807, %v839, %v549
      %v872 = vsel %vm808, %v840, %v556
      %v873 = vsel %vm809, %v841, %v563
      %v874 = vsel %vm810, %v842, %v570
      %v875 = vsel %vm811, %v843, %v577
      %v876 = vsel %vm812, %v844, %v584
      %v877 = vsel %vm813, %v845, %v591
      %v878 = vsel %vm814, %v846, %v598
      %v879 = vsel %vm815, %v847, %v605
      %v880 = vsel %vm816, %v848, %v612
      %v881 = vsel %vm817, %v849, %v619
      %v882 = vsel %vm818, %v850, %v626
      %v883 = vsel %vm819, %v851, %v633
      %v884 = vsel %vm820, %v852, %v640
      %v885 = vsel %vm821, %v853, %v647
      %v886 = vsel %vm822, %v854, %v654
      %v887 = vsel %vm823, %v855, %v661
      %v888 = vsel %vm824, %v856, %v668
      %v889 = vsel %vm825, %v857, %v675
      %v890 = vsel %vm826, %v858, %v682
      %v891 = vsel %vm827, %v859, %v689
      %v892 = vsel %vm828, %v860, %v696
      %v893 = vsel %vm829, %v861, %v703
      %v894 = vsel %vm830, %v862, %v710
      %v895 = vsel %vm831, %v863, %v717
      %v896 = vsel %vm832, %v864, %v724
      %v897 = vsel %vm833, %v865, %v731
      %v898 = vsel %vm834, %v866, %v738
      %vm899 = vcmp.ge.s32.totalorder %v867, 1
      %vm900 = vcmp.ge.s32.totalorder %v868, 1
      %vm901 = vcmp.ge.s32.totalorder %v869, 1
      %vm902 = vcmp.ge.s32.totalorder %v870, 1
      %vm903 = vcmp.ge.s32.totalorder %v871, 1
      %vm904 = vcmp.ge.s32.totalorder %v872, 1
      %vm905 = vcmp.ge.s32.totalorder %v873, 1
      %vm906 = vcmp.ge.s32.totalorder %v874, 1
      %vm907 = vcmp.ge.s32.totalorder %v875, 1
      %vm908 = vcmp.ge.s32.totalorder %v876, 1
      %vm909 = vcmp.ge.s32.totalorder %v877, 1
      %vm910 = vcmp.ge.s32.totalorder %v878, 1
      %vm911 = vcmp.ge.s32.totalorder %v879, 1
      %vm912 = vcmp.ge.s32.totalorder %v880, 1
      %vm913 = vcmp.ge.s32.totalorder %v881, 1
      %vm914 = vcmp.ge.s32.totalorder %v882, 1
      %vm915 = vcmp.ge.s32.totalorder %v883, 1
      %vm916 = vcmp.ge.s32.totalorder %v884, 1
      %vm917 = vcmp.ge.s32.totalorder %v885, 1
      %vm918 = vcmp.ge.s32.totalorder %v886, 1
      %vm919 = vcmp.ge.s32.totalorder %v887, 1
      %vm920 = vcmp.ge.s32.totalorder %v888, 1
      %vm921 = vcmp.ge.s32.totalorder %v889, 1
      %vm922 = vcmp.ge.s32.totalorder %v890, 1
      %vm923 = vcmp.ge.s32.totalorder %v891, 1
      %vm924 = vcmp.ge.s32.totalorder %v892, 1
      %vm925 = vcmp.ge.s32.totalorder %v893, 1
      %vm926 = vcmp.ge.s32.totalorder %v894, 1
      %vm927 = vcmp.ge.s32.totalorder %v895, 1
      %vm928 = vcmp.ge.s32.totalorder %v896, 1
      %vm929 = vcmp.ge.s32.totalorder %v897, 1
      %vm930 = vcmp.ge.s32.totalorder %v898, 1
      %vm931 = vcmp.le.s32.totalorder %v867, 14
      %vm932 = vcmp.le.s32.totalorder %v868, 14
      %vm933 = vcmp.le.s32.totalorder %v869, 14
      %vm934 = vcmp.le.s32.totalorder %v870, 14
      %vm935 = vcmp.le.s32.totalorder %v871, 14
      %vm936 = vcmp.le.s32.totalorder %v872, 14
      %vm937 = vcmp.le.s32.totalorder %v873, 14
      %vm938 = vcmp.le.s32.totalorder %v874, 14
      %vm939 = vcmp.le.s32.totalorder %v875, 14
      %vm940 = vcmp.le.s32.totalorder %v876, 14
      %vm941 = vcmp.le.s32.totalorder %v877, 14
      %vm942 = vcmp.le.s32.totalorder %v878, 14
      %vm943 = vcmp.le.s32.totalorder %v879, 14
      %vm944 = vcmp.le.s32.totalorder %v880, 14
      %vm945 = vcmp.le.s32.totalorder %v881, 14
      %vm946 = vcmp.le.s32.totalorder %v882, 14
      %vm947 = vcmp.le.s32.totalorder %v883, 14
      %vm948 = vcmp.le.s32.totalorder %v884, 14
      %vm949 = vcmp.le.s32.totalorder %v885, 14
      %vm950 = vcmp.le.s32.totalorder %v886, 14
      %vm951 = vcmp.le.s32.totalorder %v887, 14
      %vm952 = vcmp.le.s32.totalorder %v888, 14
      %vm953 = vcmp.le.s32.totalorder %v889, 14
      %vm954 = vcmp.le.s32.totalorder %v890, 14
      %vm955 = vcmp.le.s32.totalorder %v891, 14
      %vm956 = vcmp.le.s32.totalorder %v892, 14
      %vm957 = vcmp.le.s32.totalorder %v893, 14
      %vm958 = vcmp.le.s32.totalorder %v894, 14
      %vm959 = vcmp.le.s32.totalorder %v895, 14
      %vm960 = vcmp.le.s32.totalorder %v896, 14
      %vm961 = vcmp.le.s32.totalorder %v897, 14
      %vm962 = vcmp.le.s32.totalorder %v898, 14
      %v963 = vld [vmem:[#allocation2 + $0x7] sm:$0xff]
      %v964 = vld [vmem:[#allocation2 + $0xf] sm:$0xff]
      %v965 = vld [vmem:[#allocation2 + $0x17] sm:$0xff]
      %v966 = vld [vmem:[#allocation2 + $0x1f] sm:$0xff]
      %v967 = vld [vmem:[#allocation2 + $0x27] sm:$0xff]
      %v968 = vld [vmem:[#allocation2 + $0x2f] sm:$0xff]
      %v969 = vld [vmem:[#allocation2 + $0x37] sm:$0xff]
      %v970 = vld [vmem:[#allocation2 + $0x3f] sm:$0xff]
      %v971 = vld [vmem:[#allocation2 + $0x47] sm:$0xff]
      %v972 = vld [vmem:[#allocation2 + $0x4f] sm:$0xff]
      %v973 = vld [vmem:[#allocation2 + $0x57] sm:$0xff]
      %v974 = vld [vmem:[#allocation2 + $0x5f] sm:$0xff]
      %v975 = vld [vmem:[#allocation2 + $0x67] sm:$0xff]
      %v976 = vld [vmem:[#allocation2 + $0x6f] sm:$0xff]
      %v977 = vld [vmem:[#allocation2 + $0x77] sm:$0xff]
      %v978 = vld [vmem:[#allocation2 + $0x7f] sm:$0xff]
      %v979 = vld [vmem:[#allocation2 + $0x87] sm:$0xff]
      %v980 = vld [vmem:[#allocation2 + $0x8f] sm:$0xff]
      %v981 = vld [vmem:[#allocation2 + $0x97] sm:$0xff]
      %v982 = vld [vmem:[#allocation2 + $0x9f] sm:$0xff]
      %v983 = vld [vmem:[#allocation2 + $0xa7] sm:$0xff]
      %v984 = vld [vmem:[#allocation2 + $0xaf] sm:$0xff]
      %v985 = vld [vmem:[#allocation2 + $0xb7] sm:$0xff]
      %v986 = vld [vmem:[#allocation2 + $0xbf] sm:$0xff]
      %v987 = vld [vmem:[#allocation2 + $0xc7] sm:$0xff]
      %v988 = vld [vmem:[#allocation2 + $0xcf] sm:$0xff]
      %v989 = vld [vmem:[#allocation2 + $0xd7] sm:$0xff]
      %v990 = vld [vmem:[#allocation2 + $0xdf] sm:$0xff]
      %v991 = vld [vmem:[#allocation2 + $0xe7] sm:$0xff]
      %v992 = vld [vmem:[#allocation2 + $0xef] sm:$0xff]
      %v993 = vld [vmem:[#allocation2 + $0xf7] sm:$0xff]
      %v994 = vld [vmem:[#allocation2 + $0xff] sm:$0xff]
      %v995 = vsel %vm899, 1, 0
      %v996 = vsel %vm900, 1, 0
      %v997 = vsel %vm901, 1, 0
      %v998 = vsel %vm902, 1, 0
      %v999 = vsel %vm903, 1, 0
      %v1000 = vsel %vm904, 1, 0
      %v1001 = vsel %vm905, 1, 0
      %v1002 = vsel %vm906, 1, 0
      %v1003 = vsel %vm907, 1, 0
      %v1004 = vsel %vm908, 1, 0
      %v1005 = vsel %vm909, 1, 0
      %v1006 = vsel %vm910, 1, 0
      %v1007 = vsel %vm911, 1, 0
      %v1008 = vsel %vm912, 1, 0
      %v1009 = vsel %vm913, 1, 0
      %v1010 = vsel %vm914, 1, 0
      %v1011 = vsel %vm915, 1, 0
      %v1012 = vsel %vm916, 1, 0
      %v1013 = vsel %vm917, 1, 0
      %v1014 = vsel %vm918, 1, 0
      %v1015 = vsel %vm919, 1, 0
      %v1016 = vsel %vm920, 1, 0
      %v1017 = vsel %vm921, 1, 0
      %v1018 = vsel %vm922, 1, 0
      %v1019 = vsel %vm923, 1, 0
      %v1020 = vsel %vm924, 1, 0
      %v1021 = vsel %vm925, 1, 0
      %v1022 = vsel %vm926, 1, 0
      %v1023 = vsel %vm927, 1, 0
      %v1024 = vsel %vm928, 1, 0
      %v1025 = vsel %vm929, 1, 0
      %v1026 = vsel %vm930, 1, 0
      %vm1027 = vcmp.eq.s32.totalorder %v995, 1
      %vm1028 = vcmp.eq.s32.totalorder %v996, 1
      %vm1029 = vcmp.eq.s32.totalorder %v997, 1
      %vm1030 = vcmp.eq.s32.totalorder %v998, 1
      %vm1031 = vcmp.eq.s32.totalorder %v999, 1
      %vm1032 = vcmp.eq.s32.totalorder %v1000, 1
      %vm1033 = vcmp.eq.s32.totalorder %v1001, 1
      %vm1034 = vcmp.eq.s32.totalorder %v1002, 1
      %vm1035 = vcmp.eq.s32.totalorder %v1003, 1
      %vm1036 = vcmp.eq.s32.totalorder %v1004, 1
      %vm1037 = vcmp.eq.s32.totalorder %v1005, 1
      %vm1038 = vcmp.eq.s32.totalorder %v1006, 1
      %vm1039 = vcmp.eq.s32.totalorder %v1007, 1
      %vm1040 = vcmp.eq.s32.totalorder %v1008, 1
      %vm1041 = vcmp.eq.s32.totalorder %v1009, 1
      %vm1042 = vcmp.eq.s32.totalorder %v1010, 1
      %vm1043 = vcmp.eq.s32.totalorder %v1011, 1
      %vm1044 = vcmp.eq.s32.totalorder %v1012, 1
      %vm1045 = vcmp.eq.s32.totalorder %v1013, 1
      %vm1046 = vcmp.eq.s32.totalorder %v1014, 1
      %vm1047 = vcmp.eq.s32.totalorder %v1015, 1
      %vm1048 = vcmp.eq.s32.totalorder %v1016, 1
      %vm1049 = vcmp.eq.s32.totalorder %v1017, 1
      %vm1050 = vcmp.eq.s32.totalorder %v1018, 1
      %vm1051 = vcmp.eq.s32.totalorder %v1019, 1
      %vm1052 = vcmp.eq.s32.totalorder %v1020, 1
      %vm1053 = vcmp.eq.s32.totalorder %v1021, 1
      %vm1054 = vcmp.eq.s32.totalorder %v1022, 1
      %vm1055 = vcmp.eq.s32.totalorder %v1023, 1
      %vm1056 = vcmp.eq.s32.totalorder %v1024, 1
      %vm1057 = vcmp.eq.s32.totalorder %v1025, 1
      %vm1058 = vcmp.eq.s32.totalorder %v1026, 1
      %v1059 = vsel %vm1027, %v963, 0.0
      %v1060 = vsel %vm1028, %v964, 0.0
      %v1061 = vsel %vm1029, %v965, 0.0
      %v1062 = vsel %vm1030, %v966, 0.0
      %v1063 = vsel %vm1031, %v967, 0.0
      %v1064 = vsel %vm1032, %v968, 0.0
      %v1065 = vsel %vm1033, %v969, 0.0
      %v1066 = vsel %vm1034, %v970, 0.0
      %v1067 = vsel %vm1035, %v971, 0.0
      %v1068 = vsel %vm1036, %v972, 0.0
      %v1069 = vsel %vm1037, %v973, 0.0
      %v1070 = vsel %vm1038, %v974, 0.0
      %v1071 = vsel %vm1039, %v975, 0.0
      %v1072 = vsel %vm1040, %v976, 0.0
      %v1073 = vsel %vm1041, %v977, 0.0
      %v1074 = vsel %vm1042, %v978, 0.0
      %v1075 = vsel %vm1043, %v979, 0.0
      %v1076 = vsel %vm1044, %v980, 0.0
      %v1077 = vsel %vm1045, %v981, 0.0
      %v1078 = vsel %vm1046, %v982, 0.0
      %v1079 = vsel %vm1047, %v983, 0.0
      %v1080 = vsel %vm1048, %v984, 0.0
      %v1081 = vsel %vm1049, %v985, 0.0
      %v1082 = vsel %vm1050, %v986, 0.0
      %v1083 = vsel %vm1051, %v987, 0.0
      %v1084 = vsel %vm1052, %v988, 0.0
      %v1085 = vsel %vm1053, %v989, 0.0
      %v1086 = vsel %vm1054, %v990, 0.0
      %v1087 = vsel %vm1055, %v991, 0.0
      %v1088 = vsel %vm1056, %v992, 0.0
      %v1089 = vsel %vm1057, %v993, 0.0
      %v1090 = vsel %vm1058, %v994, 0.0
      %v1091 = vpack.c.bf16 %v1060, %v1059
      %v1092 = vpack.c.bf16 %v1062, %v1061
      %v1093 = vpack.c.bf16 %v1064, %v1063
      %v1094 = vpack.c.bf16 %v1066, %v1065
      %v1095 = vpack.c.bf16 %v1068, %v1067
      %v1096 = vpack.c.bf16 %v1070, %v1069
      %v1097 = vpack.c.bf16 %v1072, %v1071
      %v1098 = vpack.c.bf16 %v1074, %v1073
      %v1099 = vpack.c.bf16 %v1076, %v1075
      %v1100 = vpack.c.bf16 %v1078, %v1077
      %v1101 = vpack.c.bf16 %v1080, %v1079
      %v1102 = vpack.c.bf16 %v1082, %v1081
      %v1103 = vpack.c.bf16 %v1084, %v1083
      %v1104 = vpack.c.bf16 %v1086, %v1085
      %v1105 = vpack.c.bf16 %v1088, %v1087
      %v1106 = vpack.c.bf16 %v1090, %v1089
      %v1107 = vld [vmem:[%s1] sm:$0xf]
      %v1108 = vld [vmem:[%s1 + $0x4] sm:$0xf]
      %v1109 = vld [vmem:[%s1 + $0x8] sm:$0xf]
      %v1110 = vld [vmem:[%s1 + $0xc] sm:$0xf]
      %v1111 = vld [vmem:[%s1 + $0x10] sm:$0xf]
      %v1112 = vld [vmem:[%s1 + $0x14] sm:$0xf]
      %v1113 = vld [vmem:[%s1 + $0x18] sm:$0xf]
      %v1114 = vld [vmem:[%s1 + $0x1c] sm:$0xf]
      %v1115 = vld [vmem:[%s1 + $0x20] sm:$0xf]
      %v1116 = vld [vmem:[%s1 + $0x24] sm:$0xf]
      %v1117 = vld [vmem:[%s1 + $0x28] sm:$0xf]
      %v1118 = vld [vmem:[%s1 + $0x2c] sm:$0xf]
      %v1119 = vld [vmem:[%s1 + $0x30] sm:$0xf]
      %v1120 = vld [vmem:[%s1 + $0x34] sm:$0xf]
      %v1121 = vld [vmem:[%s1 + $0x38] sm:$0xf]
      %v1122 = vld [vmem:[%s1 + $0x3c] sm:$0xf]
      %v1123 = vld [vmem:[#allocation2 + $0x8] sm:$0xff]
      %v1124 = vld [vmem:[#allocation2 + $0x10] sm:$0xff]
      %v1125 = vld [vmem:[#allocation2 + $0x18] sm:$0xff]
      %v1126 = vld [vmem:[#allocation2 + $0x20] sm:$0xff]
      %v1127 = vld [vmem:[#allocation2 + $0x28] sm:$0xff]
      %v1128 = vld [vmem:[#allocation2 + $0x30] sm:$0xff]
      %v1129 = vld [vmem:[#allocation2 + $0x38] sm:$0xff]
      %v1130 = vld [vmem:[#allocation2 + $0x40] sm:$0xff]
      %v1131 = vld [vmem:[#allocation2 + $0x48] sm:$0xff]
      %v1132 = vld [vmem:[#allocation2 + $0x50] sm:$0xff]
      %v1133 = vld [vmem:[#allocation2 + $0x58] sm:$0xff]
      %v1134 = vld [vmem:[#allocation2 + $0x60] sm:$0xff]
      %v1135 = vld [vmem:[#allocation2 + $0x68] sm:$0xff]
      %v1136 = vld [vmem:[#allocation2 + $0x70] sm:$0xff]
      %v1137 = vld [vmem:[#allocation2 + $0x78] sm:$0xff]
      %v1138 = vld [vmem:[#allocation2 + $0x80] sm:$0xff]
      %v1139 = vld [vmem:[#allocation2 + $0x88] sm:$0xff]
      %v1140 = vld [vmem:[#allocation2 + $0x90] sm:$0xff]
      %v1141 = vld [vmem:[#allocation2 + $0x98] sm:$0xff]
      %v1142 = vld [vmem:[#allocation2 + $0xa0] sm:$0xff]
      %v1143 = vld [vmem:[#allocation2 + $0xa8] sm:$0xff]
      %v1144 = vld [vmem:[#allocation2 + $0xb0] sm:$0xff]
      %v1145 = vld [vmem:[#allocation2 + $0xb8] sm:$0xff]
      %v1146 = vld [vmem:[#allocation2 + $0xc0] sm:$0xff]
      %v1147 = vld [vmem:[#allocation2 + $0xc8] sm:$0xff]
      %v1148 = vld [vmem:[#allocation2 + $0xd0] sm:$0xff]
      %v1149 = vld [vmem:[#allocation2 + $0xd8] sm:$0xff]
      %v1150 = vld [vmem:[#allocation2 + $0xe0] sm:$0xff]
      %v1151 = vld [vmem:[#allocation2 + $0xe8] sm:$0xff]
      %v1152 = vld [vmem:[#allocation2 + $0xf0] sm:$0xff]
      %v1153 = vld [vmem:[#allocation2 + $0xf8] sm:$0xff]
      %v1154 = vld [vmem:[#allocation2 + $0x100] sm:$0xff]
      %v1155 = vpack.c.bf16 %v1124, %v1123
      %v1156 = vpack.c.bf16 %v1126, %v1125
      %v1157 = vpack.c.bf16 %v1128, %v1127
      %v1158 = vpack.c.bf16 %v1130, %v1129
      %v1159 = vpack.c.bf16 %v1132, %v1131
      %v1160 = vpack.c.bf16 %v1134, %v1133
      %v1161 = vpack.c.bf16 %v1136, %v1135
      %v1162 = vpack.c.bf16 %v1138, %v1137
      %v1163 = vpack.c.bf16 %v1140, %v1139
      %v1164 = vpack.c.bf16 %v1142, %v1141
      %v1165 = vpack.c.bf16 %v1144, %v1143
      %v1166 = vpack.c.bf16 %v1146, %v1145
      %v1167 = vpack.c.bf16 %v1148, %v1147
      %v1168 = vpack.c.bf16 %v1150, %v1149
      %v1169 = vpack.c.bf16 %v1152, %v1151
      %v1170 = vpack.c.bf16 %v1154, %v1153
      %s1171 = scalar_lea.vmem %s1, 64
      %v1172 = vld [vmem:[%s1171] sm:$0xf]
      %v1173 = vld [vmem:[%s1171 + $0x4] sm:$0xf]
      %v1174 = vld [vmem:[%s1171 + $0x8] sm:$0xf]
      %v1175 = vld [vmem:[%s1171 + $0xc] sm:$0xf]
      %v1176 = vld [vmem:[%s1171 + $0x10] sm:$0xf]
      %v1177 = vld [vmem:[%s1171 + $0x14] sm:$0xf]
      %v1178 = vld [vmem:[%s1171 + $0x18] sm:$0xf]
      %v1179 = vld [vmem:[%s1171 + $0x1c] sm:$0xf]
      %v1180 = vld [vmem:[%s1171 + $0x20] sm:$0xf]
      %v1181 = vld [vmem:[%s1171 + $0x24] sm:$0xf]
      %v1182 = vld [vmem:[%s1171 + $0x28] sm:$0xf]
      %v1183 = vld [vmem:[%s1171 + $0x2c] sm:$0xf]
      %v1184 = vld [vmem:[%s1171 + $0x30] sm:$0xf]
      %v1185 = vld [vmem:[%s1171 + $0x34] sm:$0xf]
      %v1186 = vld [vmem:[%s1171 + $0x38] sm:$0xf]
      %v1187 = vld [vmem:[%s1171 + $0x3c] sm:$0xf]
      %v1204 = vunpack.c.l.b16 %v1172
      %v1205 = vunpack.c.l.b16 %v1173
      %v1206 = vunpack.c.l.b16 %v1174
      %v1207 = vunpack.c.l.b16 %v1175
      %v1208 = vunpack.c.l.b16 %v1176
      %v1209 = vunpack.c.l.b16 %v1177
      %v1210 = vunpack.c.l.b16 %v1178
      %v1211 = vunpack.c.l.b16 %v1179
      %v1212 = vunpack.c.l.b16 %v1180
      %v1213 = vunpack.c.l.b16 %v1181
      %v1214 = vunpack.c.l.b16 %v1182
      %v1215 = vunpack.c.l.b16 %v1183
      %v1216 = vunpack.c.l.b16 %v1184
      %v1217 = vunpack.c.l.b16 %v1185
      %v1218 = vunpack.c.l.b16 %v1186
      %v1219 = vunpack.c.l.b16 %v1187
      %v1220 = vpack.c.b16 %v1205, %v1204
      %v1221 = vpack.c.b16 %v1207, %v1206
      %v1222 = vpack.c.b16 %v1209, %v1208
      %v1223 = vpack.c.b16 %v1211, %v1210
      %v1224 = vpack.c.b16 %v1213, %v1212
      %v1225 = vpack.c.b16 %v1215, %v1214
      %v1226 = vpack.c.b16 %v1217, %v1216
      %v1227 = vpack.c.b16 %v1219, %v1218
      %1236 = vmatprep.subr.bf16.mxu0 0
      %1237 = vmatpush1.bf16.msra.mxu0 %v1220
      %1238 = vmatprep.subr.bf16.mxu0 0
      %1239 = vmatpush1.bf16.msra.mxu0 %v1221
      %1240 = vmatprep.subr.bf16.mxu0 0
      %1241 = vmatpush1.bf16.msra.mxu0 %v1222
      %1242 = vmatprep.subr.bf16.mxu0 0
      %1243 = vmatpush1.bf16.msra.mxu0 %v1223
      %1244 = vmatprep.subr.bf16.mxu0 0
      %1245 = vmatpush1.bf16.msra.mxu0 %v1224
      %1246 = vmatprep.subr.bf16.mxu0 0
      %1247 = vmatpush1.bf16.msra.mxu0 %v1225
      %1248 = vmatprep.subr.bf16.mxu0 0
      %1249 = vmatpush1.bf16.msra.mxu0 %v1226
      %1250 = vmatprep.subr.bf16.mxu0 0
      %1251 = vmatpush1.bf16.msra.mxu0 %v1227
      %1252 = vmatprep.subr.bf16.mxu0 0
      %1253 = vmatpush1.bf16.msra.mxu0 0
      %1254 = vmatprep.subr.bf16.mxu0 0
      %1255 = vmatpush1.bf16.msra.mxu0 0
      %1256 = vmatprep.subr.bf16.mxu0 0
      %1257 = vmatpush1.bf16.msra.mxu0 0
      %1258 = vmatprep.subr.bf16.mxu0 0
      %1259 = vmatpush1.bf16.msra.mxu0 0
      %1260 = vmatprep.subr.bf16.mxu0 0
      %1261 = vmatpush1.bf16.msra.mxu0 0
      %1262 = vmatprep.subr.bf16.mxu0 0
      %1263 = vmatpush1.bf16.msra.mxu0 0
      %1264 = vmatprep.subr.bf16.mxu0 0
      %1265 = vmatpush1.bf16.msra.mxu0 0
      %1266 = vmatprep.subr.bf16.mxu0 0
      %1267 = vmatpush1.bf16.msra.mxu0 0
      %1268 = vmatprep.mubr.bf16.mxu0 0
      %1269 = vmatmul.mubr.bf16.gmra.mrb[0].mxu0 %v1155
      %v1270 = vpop.f32.mrb[0].mxu0
      %v1271 = vadd.f32 0.0, %v1270
      %v1272 = vpop.f32.mrb[0].mxu0
      %v1273 = vpop.f32.mrb[0].mxu0
      %v1274 = vadd.f32 0.0, %v1273
      %v1275 = vpop.f32.mrb[0].mxu0
      %1276 = vmatprep.mubr.bf16.mxu0 0
      %1277 = vmatmul.mubr.bf16.gmra.mrb[0].mxu0 %v1156
      %v1278 = vpop.f32.mrb[0].mxu0
      %v1279 = vadd.f32 0.0, %v1278
      %v1280 = vpop.f32.mrb[0].mxu0
      %v1281 = vpop.f32.mrb[0].mxu0
      %v1282 = vadd.f32 0.0, %v1281
      %v1283 = vpop.f32.mrb[0].mxu0
      %1284 = vmatprep.mubr.bf16.mxu0 0
      %1285 = vmatmul.mubr.bf16.gmra.mrb[0].mxu0 %v1157
      %v1286 = vpop.f32.mrb[0].mxu0
      %v1287 = vadd.f32 0.0, %v1286
      %v1288 = vpop.f32.mrb[0].mxu0
      %v1289 = vpop.f32.mrb[0].mxu0
      %v1290 = vadd.f32 0.0, %v1289
      %v1291 = vpop.f32.mrb[0].mxu0
      %1292 = vmatprep.mubr.bf16.mxu0 0
      %1293 = vmatmul.mubr.bf16.gmra.mrb[0].mxu0 %v1158
      %v1294 = vpop.f32.mrb[0].mxu0
      %v1295 = vadd.f32 0.0, %v1294
      %v1296 = vpop.f32.mrb[0].mxu0
      %v1297 = vpop.f32.mrb[0].mxu0
      %v1298 = vadd.f32 0.0, %v1297
      %v1299 = vpop.f32.mrb[0].mxu0
      %1300 = vmatprep.mubr.bf16.mxu0 0
      %1301 = vmatmul.mubr.bf16.gmra.mrb[0].mxu0 %v1159
      %v1302 = vpop.f32.mrb[0].mxu0
      %v1303 = vadd.f32 0.0, %v1302
      %v1304 = vpop.f32.mrb[0].mxu0
      %v1305 = vpop.f32.mrb[0].mxu0
      %v1306 = vadd.f32 0.0, %v1305
      %v1307 = vpop.f32.mrb[0].mxu0
      %1308 = vmatprep.mubr.bf16.mxu0 0
      %1309 = vmatmul.mubr.bf16.gmra.mrb[0].mxu0 %v1160
      %v1310 = vpop.f32.mrb[0].mxu0
      %v1311 = vadd.f32 0.0, %v1310
      %v1312 = vpop.f32.mrb[0].mxu0
      %v1313 = vpop.f32.mrb[0].mxu0
      %v1314 = vadd.f32 0.0, %v1313
      %v1315 = vpop.f32.mrb[0].mxu0
      %1316 = vmatprep.mubr.bf16.mxu0 0
      %1317 = vmatmul.mubr.bf16.gmra.mrb[0].mxu0 %v1161
      %v1318 = vpop.f32.mrb[0].mxu0
      %v1319 = vadd.f32 0.0, %v1318
      %v1320 = vpop.f32.mrb[0].mxu0
      %v1321 = vpop.f32.mrb[0].mxu0
      %v1322 = vadd.f32 0.0, %v1321
      %v1323 = vpop.f32.mrb[0].mxu0
      %1324 = vmatprep.mubr.bf16.mxu0 0
      %1325 = vmatmul.mubr.bf16.gmra.mrb[0].mxu0 %v1162
      %v1326 = vpop.f32.mrb[0].mxu0
      %v1327 = vadd.f32 0.0, %v1326
      %v1328 = vpop.f32.mrb[0].mxu0
      %v1329 = vpop.f32.mrb[0].mxu0
      %v1330 = vadd.f32 0.0, %v1329
      %v1331 = vpop.f32.mrb[0].mxu0
      %1332 = vmatprep.mubr.bf16.mxu0 0
      %1333 = vmatmul.mubr.bf16.gmra.mrb[0].mxu0 %v1163
      %v1334 = vpop.f32.mrb[0].mxu0
      %v1335 = vadd.f32 0.0, %v1334
      %v1336 = vpop.f32.mrb[0].mxu0
      %v1337 = vpop.f32.mrb[0].mxu0
      %v1338 = vadd.f32 0.0, %v1337
      %v1339 = vpop.f32.mrb[0].mxu0
      %1340 = vmatprep.mubr.bf16.mxu0 0
      %1341 = vmatmul.mubr.bf16.gmra.mrb[0].mxu0 %v1164
      %v1342 = vpop.f32.mrb[0].mxu0
      %v1343 = vadd.f32 0.0, %v1342
      %v1344 = vpop.f32.mrb[0].mxu0
      %v1345 = vpop.f32.mrb[0].mxu0
      %v1346 = vadd.f32 0.0, %v1345
      %v1347 = vpop.f32.mrb[0].mxu0
      %1348 = vmatprep.mubr.bf16.mxu0 0
      %1349 = vmatmul.mubr.bf16.gmra.mrb[0].mxu0 %v1165
      %v1350 = vpop.f32.mrb[0].mxu0
      %v1351 = vadd.f32 0.0, %v1350
      %v1352 = vpop.f32.mrb[0].mxu0
      %v1353 = vpop.f32.mrb[0].mxu0
      %v1354 = vadd.f32 0.0, %v1353
      %v1355 = vpop.f32.mrb[0].mxu0
      %1356 = vmatprep.mubr.bf16.mxu0 0
      %1357 = vmatmul.mubr.bf16.gmra.mrb[0].mxu0 %v1166
      %v1358 = vpop.f32.mrb[0].mxu0
      %v1359 = vadd.f32 0.0, %v1358
      %v1360 = vpop.f32.mrb[0].mxu0
      %v1361 = vpop.f32.mrb[0].mxu0
      %v1362 = vadd.f32 0.0, %v1361
      %v1363 = vpop.f32.mrb[0].mxu0
      %1364 = vmatprep.mubr.bf16.mxu0 0
      %1365 = vmatmul.mubr.bf16.gmra.mrb[0].mxu0 %v1167
      %v1366 = vpop.f32.mrb[0].mxu0
      %v1367 = vadd.f32 0.0, %v1366
      %v1368 = vpop.f32.mrb[0].mxu0
      %v1369 = vpop.f32.mrb[0].mxu0
      %v1370 = vadd.f32 0.0, %v1369
      %v1371 = vpop.f32.mrb[0].mxu0
      %1372 = vmatprep.mubr.bf16.mxu0 0
      %1373 = vmatmul.mubr.bf16.gmra.mrb[0].mxu0 %v1168
      %v1374 = vpop.f32.mrb[0].mxu0
      %v1375 = vadd.f32 0.0, %v1374
      %v1376 = vpop.f32.mrb[0].mxu0
      %v1377 = vpop.f32.mrb[0].mxu0
      %v1378 = vadd.f32 0.0, %v1377
      %v1379 = vpop.f32.mrb[0].mxu0
      %1380 = vmatprep.mubr.bf16.mxu0 0
      %1381 = vmatmul.mubr.bf16.gmra.mrb[0].mxu0 %v1169
      %v1382 = vpop.f32.mrb[0].mxu0
      %v1383 = vadd.f32 0.0, %v1382
      %v1384 = vpop.f32.mrb[0].mxu0
      %v1385 = vpop.f32.mrb[0].mxu0
      %v1386 = vadd.f32 0.0, %v1385
      %v1387 = vpop.f32.mrb[0].mxu0
      %1388 = vmatprep.mubr.bf16.mxu0 0
      %1389 = vmatmul.mubr.bf16.gmra.mrb[0].mxu0 %v1170
      %v1390 = vpop.f32.mrb[0].mxu0
      %v1391 = vadd.f32 0.0, %v1390
      %v1392 = vpop.f32.mrb[0].mxu0
      %v1393 = vpop.f32.mrb[0].mxu0
      %v1394 = vadd.f32 0.0, %v1393
      %v1395 = vpop.f32.mrb[0].mxu0
      %1396 = vdwg.mxu0
      %v1413 = vunpack.c.l.b16 %v1107
      %v1414 = vunpack.c.l.b16 %v1108
      %v1415 = vunpack.c.l.b16 %v1109
      %v1416 = vunpack.c.l.b16 %v1110
      %v1417 = vunpack.c.l.b16 %v1111
      %v1418 = vunpack.c.l.b16 %v1112
      %v1419 = vunpack.c.l.b16 %v1113
      %v1420 = vunpack.c.l.b16 %v1114
      %v1421 = vunpack.c.l.b16 %v1115
      %v1422 = vunpack.c.l.b16 %v1116
      %v1423 = vunpack.c.l.b16 %v1117
      %v1424 = vunpack.c.l.b16 %v1118
      %v1425 = vunpack.c.l.b16 %v1119
      %v1426 = vunpack.c.l.b16 %v1120
      %v1427 = vunpack.c.l.b16 %v1121
      %v1428 = vunpack.c.l.b16 %v1122
      %v1429 = vpack.c.b16 %v1414, %v1413
      %v1430 = vpack.c.b16 %v1416, %v1415
      %v1431 = vpack.c.b16 %v1418, %v1417
      %v1432 = vpack.c.b16 %v1420, %v1419
      %v1433 = vpack.c.b16 %v1422, %v1421
      %v1434 = vpack.c.b16 %v1424, %v1423
      %v1435 = vpack.c.b16 %v1426, %v1425
      %v1436 = vpack.c.b16 %v1428, %v1427
      %1445 = vmatprep.subr.bf16.mxu0 0
      %1446 = vmatpush1.bf16.msra.mxu0 %v1429
      %1447 = vmatprep.subr.bf16.mxu0 0
      %1448 = vmatpush1.bf16.msra.mxu0 %v1430
      %1449 = vmatprep.subr.bf16.mxu0 0
      %1450 = vmatpush1.bf16.msra.mxu0 %v1431
      %1451 = vmatprep.subr.bf16.mxu0 0
      %1452 = vmatpush1.bf16.msra.mxu0 %v1432
      %1453 = vmatprep.subr.bf16.mxu0 0
      %1454 = vmatpush1.bf16.msra.mxu0 %v1433
      %1455 = vmatprep.subr.bf16.mxu0 0
      %1456 = vmatpush1.bf16.msra.mxu0 %v1434
      %1457 = vmatprep.subr.bf16.mxu0 0
      %1458 = vmatpush1.bf16.msra.mxu0 %v1435
      %1459 = vmatprep.subr.bf16.mxu0 0
      %1460 = vmatpush1.bf16.msra.mxu0 %v1436
      %1461 = vmatprep.subr.bf16.mxu0 0
      %1462 = vmatpush1.bf16.msra.mxu0 0
      %1463 = vmatprep.subr.bf16.mxu0 0
      %1464 = vmatpush1.bf16.msra.mxu0 0
      %1465 = vmatprep.subr.bf16.mxu0 0
      %1466 = vmatpush1.bf16.msra.mxu0 0
      %1467 = vmatprep.subr.bf16.mxu0 0
      %1468 = vmatpush1.bf16.msra.mxu0 0
      %1469 = vmatprep.subr.bf16.mxu0 0
      %1470 = vmatpush1.bf16.msra.mxu0 0
      %1471 = vmatprep.subr.bf16.mxu0 0
      %1472 = vmatpush1.bf16.msra.mxu0 0
      %1473 = vmatprep.subr.bf16.mxu0 0
      %1474 = vmatpush1.bf16.msra.mxu0 0
      %1475 = vmatprep.subr.bf16.mxu0 0
      %1476 = vmatpush1.bf16.msra.mxu0 0
      %1477 = vmatprep.mubr.bf16.mxu0 0
      %1478 = vmatmul.mubr.bf16.gmra.mrb[0].mxu0 %v1091
      %v1479 = vpop.f32.mrb[0].mxu0
      %v1480 = vadd.f32 %v1271, %v1479
      %v1481 = vpop.f32.mrb[0].mxu0
      %v1482 = vpop.f32.mrb[0].mxu0
      %v1483 = vadd.f32 %v1274, %v1482
      %v1484 = vpop.f32.mrb[0].mxu0
      %1485 = vmatprep.mubr.bf16.mxu0 0
      %1486 = vmatmul.mubr.bf16.gmra.mrb[0].mxu0 %v1092
      %v1487 = vpop.f32.mrb[0].mxu0
      %v1488 = vadd.f32 %v1279, %v1487
      %v1489 = vpop.f32.mrb[0].mxu0
      %v1490 = vpop.f32.mrb[0].mxu0
      %v1491 = vadd.f32 %v1282, %v1490
      %v1492 = vpop.f32.mrb[0].mxu0
      %1493 = vmatprep.mubr.bf16.mxu0 0
      %1494 = vmatmul.mubr.bf16.gmra.mrb[0].mxu0 %v1093
      %v1495 = vpop.f32.mrb[0].mxu0
      %v1496 = vadd.f32 %v1287, %v1495
      %v1497 = vpop.f32.mrb[0].mxu0
      %v1498 = vpop.f32.mrb[0].mxu0
      %v1499 = vadd.f32 %v1290, %v1498
      %v1500 = vpop.f32.mrb[0].mxu0
      %1501 = vmatprep.mubr.bf16.mxu0 0
      %1502 = vmatmul.mubr.bf16.gmra.mrb[0].mxu0 %v1094
      %v1503 = vpop.f32.mrb[0].mxu0
      %v1504 = vadd.f32 %v1295, %v1503
      %v1505 = vpop.f32.mrb[0].mxu0
      %v1506 = vpop.f32.mrb[0].mxu0
      %v1507 = vadd.f32 %v1298, %v1506
      %v1508 = vpop.f32.mrb[0].mxu0
      %1509 = vmatprep.mubr.bf16.mxu0 0
      %1510 = vmatmul.mubr.bf16.gmra.mrb[0].mxu0 %v1095
      %v1511 = vpop.f32.mrb[0].mxu0
      %v1512 = vadd.f32 %v1303, %v1511
      %v1513 = vpop.f32.mrb[0].mxu0
      %v1514 = vpop.f32.mrb[0].mxu0
      %v1515 = vadd.f32 %v1306, %v1514
      %v1516 = vpop.f32.mrb[0].mxu0
      %1517 = vmatprep.mubr.bf16.mxu0 0
      %1518 = vmatmul.mubr.bf16.gmra.mrb[0].mxu0 %v1096
      %v1519 = vpop.f32.mrb[0].mxu0
      %v1520 = vadd.f32 %v1311, %v1519
      %v1521 = vpop.f32.mrb[0].mxu0
      %v1522 = vpop.f32.mrb[0].mxu0
      %v1523 = vadd.f32 %v1314, %v1522
      %v1524 = vpop.f32.mrb[0].mxu0
      %1525 = vmatprep.mubr.bf16.mxu0 0
      %1526 = vmatmul.mubr.bf16.gmra.mrb[0].mxu0 %v1097
      %v1527 = vpop.f32.mrb[0].mxu0
      %v1528 = vadd.f32 %v1319, %v1527
      %v1529 = vpop.f32.mrb[0].mxu0
      %v1530 = vpop.f32.mrb[0].mxu0
      %v1531 = vadd.f32 %v1322, %v1530
      %v1532 = vpop.f32.mrb[0].mxu0
      %1533 = vmatprep.mubr.bf16.mxu0 0
      %1534 = vmatmul.mubr.bf16.gmra.mrb[0].mxu0 %v1098
      %v1535 = vpop.f32.mrb[0].mxu0
      %v1536 = vadd.f32 %v1327, %v1535
      %v1537 = vpop.f32.mrb[0].mxu0
      %v1538 = vpop.f32.mrb[0].mxu0
      %v1539 = vadd.f32 %v1330, %v1538
      %v1540 = vpop.f32.mrb[0].mxu0
      %1541 = vmatprep.mubr.bf16.mxu0 0
      %1542 = vmatmul.mubr.bf16.gmra.mrb[0].mxu0 %v1099
      %v1543 = vpop.f32.mrb[0].mxu0
      %v1544 = vadd.f32 %v1335, %v1543
      %v1545 = vpop.f32.mrb[0].mxu0
      %v1546 = vpop.f32.mrb[0].mxu0
      %v1547 = vadd.f32 %v1338, %v1546
      %v1548 = vpop.f32.mrb[0].mxu0
      %1549 = vmatprep.mubr.bf16.mxu0 0
      %1550 = vmatmul.mubr.bf16.gmra.mrb[0].mxu0 %v1100
      %v1551 = vpop.f32.mrb[0].mxu0
      %v1552 = vadd.f32 %v1343, %v1551
      %v1553 = vpop.f32.mrb[0].mxu0
      %v1554 = vpop.f32.mrb[0].mxu0
      %v1555 = vadd.f32 %v1346, %v1554
      %v1556 = vpop.f32.mrb[0].mxu0
      %1557 = vmatprep.mubr.bf16.mxu0 0
      %1558 = vmatmul.mubr.bf16.gmra.mrb[0].mxu0 %v1101
      %v1559 = vpop.f32.mrb[0].mxu0
      %v1560 = vadd.f32 %v1351, %v1559
      %v1561 = vpop.f32.mrb[0].mxu0
      %v1562 = vpop.f32.mrb[0].mxu0
      %v1563 = vadd.f32 %v1354, %v1562
      %v1564 = vpop.f32.mrb[0].mxu0
      %1565 = vmatprep.mubr.bf16.mxu0 0
      %1566 = vmatmul.mubr.bf16.gmra.mrb[0].mxu0 %v1102
      %v1567 = vpop.f32.mrb[0].mxu0
      %v1568 = vadd.f32 %v1359, %v1567
      %v1569 = vpop.f32.mrb[0].mxu0
      %v1570 = vpop.f32.mrb[0].mxu0
      %v1571 = vadd.f32 %v1362, %v1570
      %v1572 = vpop.f32.mrb[0].mxu0
      %1573 = vmatprep.mubr.bf16.mxu0 0
      %1574 = vmatmul.mubr.bf16.gmra.mrb[0].mxu0 %v1103
      %v1575 = vpop.f32.mrb[0].mxu0
      %v1576 = vadd.f32 %v1367, %v1575
      %v1577 = vpop.f32.mrb[0].mxu0
      %v1578 = vpop.f32.mrb[0].mxu0
      %v1579 = vadd.f32 %v1370, %v1578
      %v1580 = vpop.f32.mrb[0].mxu0
      %1581 = vmatprep.mubr.bf16.mxu0 0
      %1582 = vmatmul.mubr.bf16.gmra.mrb[0].mxu0 %v1104
      %v1583 = vpop.f32.mrb[0].mxu0
      %v1584 = vadd.f32 %v1375, %v1583
      %v1585 = vpop.f32.mrb[0].mxu0
      %v1586 = vpop.f32.mrb[0].mxu0
      %v1587 = vadd.f32 %v1378, %v1586
      %v1588 = vpop.f32.mrb[0].mxu0
      %1589 = vmatprep.mubr.bf16.mxu0 0
      %1590 = vmatmul.mubr.bf16.gmra.mrb[0].mxu0 %v1105
      %v1591 = vpop.f32.mrb[0].mxu0
      %v1592 = vadd.f32 %v1383, %v1591
      %v1593 = vpop.f32.mrb[0].mxu0
      %v1594 = vpop.f32.mrb[0].mxu0
      %v1595 = vadd.f32 %v1386, %v1594
      %v1596 = vpop.f32.mrb[0].mxu0
      %1597 = vmatprep.mubr.bf16.mxu0 0
      %1598 = vmatmul.mubr.bf16.gmra.mrb[0].mxu0 %v1106
      %v1599 = vpop.f32.mrb[0].mxu0
      %v1600 = vadd.f32 %v1391, %v1599
      %v1601 = vpop.f32.mrb[0].mxu0
      %v1602 = vpop.f32.mrb[0].mxu0
      %v1603 = vadd.f32 %v1394, %v1602
      %v1604 = vpop.f32.mrb[0].mxu0
      %1605 = vdwg.mxu0
      %v1606 = vld [vmem:[#allocation2 + $0x9] sm:$0xff]
      %v1607 = vld [vmem:[#allocation2 + $0x11] sm:$0xff]
      %v1608 = vld [vmem:[#allocation2 + $0x19] sm:$0xff]
      %v1609 = vld [vmem:[#allocation2 + $0x21] sm:$0xff]
      %v1610 = vld [vmem:[#allocation2 + $0x29] sm:$0xff]
      %v1611 = vld [vmem:[#allocation2 + $0x31] sm:$0xff]
      %v1612 = vld [vmem:[#allocation2 + $0x39] sm:$0xff]
      %v1613 = vld [vmem:[#allocation2 + $0x41] sm:$0xff]
      %v1614 = vld [vmem:[#allocation2 + $0x49] sm:$0xff]
      %v1615 = vld [vmem:[#allocation2 + $0x51] sm:$0xff]
      %v1616 = vld [vmem:[#allocation2 + $0x59] sm:$0xff]
      %v1617 = vld [vmem:[#allocation2 + $0x61] sm:$0xff]
      %v1618 = vld [vmem:[#allocation2 + $0x69] sm:$0xff]
      %v1619 = vld [vmem:[#allocation2 + $0x71] sm:$0xff]
      %v1620 = vld [vmem:[#allocation2 + $0x79] sm:$0xff]
      %v1621 = vld [vmem:[#allocation2 + $0x81] sm:$0xff]
      %v1622 = vld [vmem:[#allocation2 + $0x89] sm:$0xff]
      %v1623 = vld [vmem:[#allocation2 + $0x91] sm:$0xff]
      %v1624 = vld [vmem:[#allocation2 + $0x99] sm:$0xff]
      %v1625 = vld [vmem:[#allocation2 + $0xa1] sm:$0xff]
      %v1626 = vld [vmem:[#allocation2 + $0xa9] sm:$0xff]
      %v1627 = vld [vmem:[#allocation2 + $0xb1] sm:$0xff]
      %v1628 = vld [vmem:[#allocation2 + $0xb9] sm:$0xff]
      %v1629 = vld [vmem:[#allocation2 + $0xc1] sm:$0xff]
      %v1630 = vld [vmem:[#allocation2 + $0xc9] sm:$0xff]
      %v1631 = vld [vmem:[#allocation2 + $0xd1] sm:$0xff]
      %v1632 = vld [vmem:[#allocation2 + $0xd9] sm:$0xff]
      %v1633 = vld [vmem:[#allocation2 + $0xe1] sm:$0xff]
      %v1634 = vld [vmem:[#allocation2 + $0xe9] sm:$0xff]
      %v1635 = vld [vmem:[#allocation2 + $0xf1] sm:$0xff]
      %v1636 = vld [vmem:[#allocation2 + $0xf9] sm:$0xff]
      %v1637 = vld [vmem:[#allocation2 + $0x101] sm:$0xff]
      %v1638 = vsel %vm931, 1, 0
      %v1639 = vsel %vm932, 1, 0
      %v1640 = vsel %vm933, 1, 0
      %v1641 = vsel %vm934, 1, 0
      %v1642 = vsel %vm935, 1, 0
      %v1643 = vsel %vm936, 1, 0
      %v1644 = vsel %vm937, 1, 0
      %v1645 = vsel %vm938, 1, 0
      %v1646 = vsel %vm939, 1, 0
      %v1647 = vsel %vm940, 1, 0
      %v1648 = vsel %vm941, 1, 0
      %v1649 = vsel %vm942, 1, 0
      %v1650 = vsel %vm943, 1, 0
      %v1651 = vsel %vm944, 1, 0
      %v1652 = vsel %vm945, 1, 0
      %v1653 = vsel %vm946, 1, 0
      %v1654 = vsel %vm947, 1, 0
      %v1655 = vsel %vm948, 1, 0
      %v1656 = vsel %vm949, 1, 0
      %v1657 = vsel %vm950, 1, 0
      %v1658 = vsel %vm951, 1, 0
      %v1659 = vsel %vm952, 1, 0
      %v1660 = vsel %vm953, 1, 0
      %v1661 = vsel %vm954, 1, 0
      %v1662 = vsel %vm955, 1, 0
      %v1663 = vsel %vm956, 1, 0
      %v1664 = vsel %vm957, 1, 0
      %v1665 = vsel %vm958, 1, 0
      %v1666 = vsel %vm959, 1, 0
      %v1667 = vsel %vm960, 1, 0
      %v1668 = vsel %vm961, 1, 0
      %v1669 = vsel %vm962, 1, 0
      %vm1670 = vcmp.eq.s32.totalorder %v1638, 1
      %vm1671 = vcmp.eq.s32.totalorder %v1639, 1
      %vm1672 = vcmp.eq.s32.totalorder %v1640, 1
      %vm1673 = vcmp.eq.s32.totalorder %v1641, 1
      %vm1674 = vcmp.eq.s32.totalorder %v1642, 1
      %vm1675 = vcmp.eq.s32.totalorder %v1643, 1
      %vm1676 = vcmp.eq.s32.totalorder %v1644, 1
      %vm1677 = vcmp.eq.s32.totalorder %v1645, 1
      %vm1678 = vcmp.eq.s32.totalorder %v1646, 1
      %vm1679 = vcmp.eq.s32.totalorder %v1647, 1
      %vm1680 = vcmp.eq.s32.totalorder %v1648, 1
      %vm1681 = vcmp.eq.s32.totalorder %v1649, 1
      %vm1682 = vcmp.eq.s32.totalorder %v1650, 1
      %vm1683 = vcmp.eq.s32.totalorder %v1651, 1
      %vm1684 = vcmp.eq.s32.totalorder %v1652, 1
      %vm1685 = vcmp.eq.s32.totalorder %v1653, 1
      %vm1686 = vcmp.eq.s32.totalorder %v1654, 1
      %vm1687 = vcmp.eq.s32.totalorder %v1655, 1
      %vm1688 = vcmp.eq.s32.totalorder %v1656, 1
      %vm1689 = vcmp.eq.s32.totalorder %v1657, 1
      %vm1690 = vcmp.eq.s32.totalorder %v1658, 1
      %vm1691 = vcmp.eq.s32.totalorder %v1659, 1
      %vm1692 = vcmp.eq.s32.totalorder %v1660, 1
      %vm1693 = vcmp.eq.s32.totalorder %v1661, 1
      %vm1694 = vcmp.eq.s32.totalorder %v1662, 1
      %vm1695 = vcmp.eq.s32.totalorder %v1663, 1
      %vm1696 = vcmp.eq.s32.totalorder %v1664, 1
      %vm1697 = vcmp.eq.s32.totalorder %v1665, 1
      %vm1698 = vcmp.eq.s32.totalorder %v1666, 1
      %vm1699 = vcmp.eq.s32.totalorder %v1667, 1
      %vm1700 = vcmp.eq.s32.totalorder %v1668, 1
      %vm1701 = vcmp.eq.s32.totalorder %v1669, 1
      %v1702 = vsel %vm1670, %v1606, 0.0
      %v1703 = vsel %vm1671, %v1607, 0.0
      %v1704 = vsel %vm1672, %v1608, 0.0
      %v1705 = vsel %vm1673, %v1609, 0.0
      %v1706 = vsel %vm1674, %v1610, 0.0
      %v1707 = vsel %vm1675, %v1611, 0.0
      %v1708 = vsel %vm1676, %v1612, 0.0
      %v1709 = vsel %vm1677, %v1613, 0.0
      %v1710 = vsel %vm1678, %v1614, 0.0
      %v1711 = vsel %vm1679, %v1615, 0.0
      %v1712 = vsel %vm1680, %v1616, 0.0
      %v1713 = vsel %vm1681, %v1617, 0.0
      %v1714 = vsel %vm1682, %v1618, 0.0
      %v1715 = vsel %vm1683, %v1619, 0.0
      %v1716 = vsel %vm1684, %v1620, 0.0
      %v1717 = vsel %vm1685, %v1621, 0.0
      %v1718 = vsel %vm1686, %v1622, 0.0
      %v1719 = vsel %vm1687, %v1623, 0.0
      %v1720 = vsel %vm1688, %v1624, 0.0
      %v1721 = vsel %vm1689, %v1625, 0.0
      %v1722 = vsel %vm1690, %v1626, 0.0
      %v1723 = vsel %vm1691, %v1627, 0.0
      %v1724 = vsel %vm1692, %v1628, 0.0
      %v1725 = vsel %vm1693, %v1629, 0.0
      %v1726 = vsel %vm1694, %v1630, 0.0
      %v1727 = vsel %vm1695, %v1631, 0.0
      %v1728 = vsel %vm1696, %v1632, 0.0
      %v1729 = vsel %vm1697, %v1633, 0.0
      %v1730 = vsel %vm1698, %v1634, 0.0
      %v1731 = vsel %vm1699, %v1635, 0.0
      %v1732 = vsel %vm1700, %v1636, 0.0
      %v1733 = vsel %vm1701, %v1637, 0.0
      %v1734 = vpack.c.bf16 %v1703, %v1702
      %v1735 = vpack.c.bf16 %v1705, %v1704
      %v1736 = vpack.c.bf16 %v1707, %v1706
      %v1737 = vpack.c.bf16 %v1709, %v1708
      %v1738 = vpack.c.bf16 %v1711, %v1710
      %v1739 = vpack.c.bf16 %v1713, %v1712
      %v1740 = vpack.c.bf16 %v1715, %v1714
      %v1741 = vpack.c.bf16 %v1717, %v1716
      %v1742 = vpack.c.bf16 %v1719, %v1718
      %v1743 = vpack.c.bf16 %v1721, %v1720
      %v1744 = vpack.c.bf16 %v1723, %v1722
      %v1745 = vpack.c.bf16 %v1725, %v1724
      %v1746 = vpack.c.bf16 %v1727, %v1726
      %v1747 = vpack.c.bf16 %v1729, %v1728
      %v1748 = vpack.c.bf16 %v1731, %v1730
      %v1749 = vpack.c.bf16 %v1733, %v1732
      %s1750 = scalar_lea.vmem %s1, 128
      %v1751 = vld [vmem:[%s1750] sm:$0xf]
      %v1752 = vld [vmem:[%s1750 + $0x4] sm:$0xf]
      %v1753 = vld [vmem:[%s1750 + $0x8] sm:$0xf]
      %v1754 = vld [vmem:[%s1750 + $0xc] sm:$0xf]
      %v1755 = vld [vmem:[%s1750 + $0x10] sm:$0xf]
      %v1756 = vld [vmem:[%s1750 + $0x14] sm:$0xf]
      %v1757 = vld [vmem:[%s1750 + $0x18] sm:$0xf]
      %v1758 = vld [vmem:[%s1750 + $0x1c] sm:$0xf]
      %v1759 = vld [vmem:[%s1750 + $0x20] sm:$0xf]
      %v1760 = vld [vmem:[%s1750 + $0x24] sm:$0xf]
      %v1761 = vld [vmem:[%s1750 + $0x28] sm:$0xf]
      %v1762 = vld [vmem:[%s1750 + $0x2c] sm:$0xf]
      %v1763 = vld [vmem:[%s1750 + $0x30] sm:$0xf]
      %v1764 = vld [vmem:[%s1750 + $0x34] sm:$0xf]
      %v1765 = vld [vmem:[%s1750 + $0x38] sm:$0xf]
      %v1766 = vld [vmem:[%s1750 + $0x3c] sm:$0xf]
      %v1783 = vunpack.c.l.b16 %v1751
      %v1784 = vunpack.c.l.b16 %v1752
      %v1785 = vunpack.c.l.b16 %v1753
      %v1786 = vunpack.c.l.b16 %v1754
      %v1787 = vunpack.c.l.b16 %v1755
      %v1788 = vunpack.c.l.b16 %v1756
      %v1789 = vunpack.c.l.b16 %v1757
      %v1790 = vunpack.c.l.b16 %v1758
      %v1791 = vunpack.c.l.b16 %v1759
      %v1792 = vunpack.c.l.b16 %v1760
      %v1793 = vunpack.c.l.b16 %v1761
      %v1794 = vunpack.c.l.b16 %v1762
      %v1795 = vunpack.c.l.b16 %v1763
      %v1796 = vunpack.c.l.b16 %v1764
      %v1797 = vunpack.c.l.b16 %v1765
      %v1798 = vunpack.c.l.b16 %v1766
      %v1799 = vpack.c.b16 %v1784, %v1783
      %v1800 = vpack.c.b16 %v1786, %v1785
      %v1801 = vpack.c.b16 %v1788, %v1787
      %v1802 = vpack.c.b16 %v1790, %v1789
      %v1803 = vpack.c.b16 %v1792, %v1791
      %v1804 = vpack.c.b16 %v1794, %v1793
      %v1805 = vpack.c.b16 %v1796, %v1795
      %v1806 = vpack.c.b16 %v1798, %v1797
      %1815 = vmatprep.subr.bf16.mxu0 0
      %1816 = vmatpush1.bf16.msra.mxu0 %v1799
      %1817 = vmatprep.subr.bf16.mxu0 0
      %1818 = vmatpush1.bf16.msra.mxu0 %v1800
      %1819 = vmatprep.subr.bf16.mxu0 0
      %1820 = vmatpush1.bf16.msra.mxu0 %v1801
      %1821 = vmatprep.subr.bf16.mxu0 0
      %1822 = vmatpush1.bf16.msra.mxu0 %v1802
      %1823 = vmatprep.subr.bf16.mxu0 0
      %1824 = vmatpush1.bf16.msra.mxu0 %v1803
      %1825 = vmatprep.subr.bf16.mxu0 0
      %1826 = vmatpush1.bf16.msra.mxu0 %v1804
      %1827 = vmatprep.subr.bf16.mxu0 0
      %1828 = vmatpush1.bf16.msra.mxu0 %v1805
      %1829 = vmatprep.subr.bf16.mxu0 0
      %1830 = vmatpush1.bf16.msra.mxu0 %v1806
      %1831 = vmatprep.subr.bf16.mxu0 0
      %1832 = vmatpush1.bf16.msra.mxu0 0
      %1833 = vmatprep.subr.bf16.mxu0 0
      %1834 = vmatpush1.bf16.msra.mxu0 0
      %1835 = vmatprep.subr.bf16.mxu0 0
      %1836 = vmatpush1.bf16.msra.mxu0 0
      %1837 = vmatprep.subr.bf16.mxu0 0
      %1838 = vmatpush1.bf16.msra.mxu0 0
      %1839 = vmatprep.subr.bf16.mxu0 0
      %1840 = vmatpush1.bf16.msra.mxu0 0
      %1841 = vmatprep.subr.bf16.mxu0 0
      %1842 = vmatpush1.bf16.msra.mxu0 0
      %1843 = vmatprep.subr.bf16.mxu0 0
      %1844 = vmatpush1.bf16.msra.mxu0 0
      %1845 = vmatprep.subr.bf16.mxu0 0
      %1846 = vmatpush1.bf16.msra.mxu0 0
      %1847 = vmatprep.mubr.bf16.mxu0 0
      %1848 = vmatmul.mubr.bf16.gmra.mrb[0].mxu0 %v1734
      %v1849 = vpop.f32.mrb[0].mxu0
      %v1850 = vadd.f32 0.0, %v1849
      %v1851 = vpop.f32.mrb[0].mxu0
      %v1852 = vpop.f32.mrb[0].mxu0
      %v1853 = vadd.f32 0.0, %v1852
      %v1854 = vpop.f32.mrb[0].mxu0
      %1855 = vmatprep.mubr.bf16.mxu0 0
      %1856 = vmatmul.mubr.bf16.gmra.mrb[0].mxu0 %v1735
      %v1857 = vpop.f32.mrb[0].mxu0
      %v1858 = vadd.f32 0.0, %v1857
      %v1859 = vpop.f32.mrb[0].mxu0
      %v1860 = vpop.f32.mrb[0].mxu0
      %v1861 = vadd.f32 0.0, %v1860
      %v1862 = vpop.f32.mrb[0].mxu0
      %1863 = vmatprep.mubr.bf16.mxu0 0
      %1864 = vmatmul.mubr.bf16.gmra.mrb[0].mxu0 %v1736
      %v1865 = vpop.f32.mrb[0].mxu0
      %v1866 = vadd.f32 0.0, %v1865
      %v1867 = vpop.f32.mrb[0].mxu0
      %v1868 = vpop.f32.mrb[0].mxu0
      %v1869 = vadd.f32 0.0, %v1868
      %v1870 = vpop.f32.mrb[0].mxu0
      %1871 = vmatprep.mubr.bf16.mxu0 0
      %1872 = vmatmul.mubr.bf16.gmra.mrb[0].mxu0 %v1737
      %v1873 = vpop.f32.mrb[0].mxu0
      %v1874 = vadd.f32 0.0, %v1873
      %v1875 = vpop.f32.mrb[0].mxu0
      %v1876 = vpop.f32.mrb[0].mxu0
      %v1877 = vadd.f32 0.0, %v1876
      %v1878 = vpop.f32.mrb[0].mxu0
      %1879 = vmatprep.mubr.bf16.mxu0 0
      %1880 = vmatmul.mubr.bf16.gmra.mrb[0].mxu0 %v1738
      %v1881 = vpop.f32.mrb[0].mxu0
      %v1882 = vadd.f32 0.0, %v1881
      %v1883 = vpop.f32.mrb[0].mxu0
      %v1884 = vpop.f32.mrb[0].mxu0
      %v1885 = vadd.f32 0.0, %v1884
      %v1886 = vpop.f32.mrb[0].mxu0
      %1887 = vmatprep.mubr.bf16.mxu0 0
      %1888 = vmatmul.mubr.bf16.gmra.mrb[0].mxu0 %v1739
      %v1889 = vpop.f32.mrb[0].mxu0
      %v1890 = vadd.f32 0.0, %v1889
      %v1891 = vpop.f32.mrb[0].mxu0
      %v1892 = vpop.f32.mrb[0].mxu0
      %v1893 = vadd.f32 0.0, %v1892
      %v1894 = vpop.f32.mrb[0].mxu0
      %1895 = vmatprep.mubr.bf16.mxu0 0
      %1896 = vmatmul.mubr.bf16.gmra.mrb[0].mxu0 %v1740
      %v1897 = vpop.f32.mrb[0].mxu0
      %v1898 = vadd.f32 0.0, %v1897
      %v1899 = vpop.f32.mrb[0].mxu0
      %v1900 = vpop.f32.mrb[0].mxu0
      %v1901 = vadd.f32 0.0, %v1900
      %v1902 = vpop.f32.mrb[0].mxu0
      %1903 = vmatprep.mubr.bf16.mxu0 0
      %1904 = vmatmul.mubr.bf16.gmra.mrb[0].mxu0 %v1741
      %v1905 = vpop.f32.mrb[0].mxu0
      %v1906 = vadd.f32 0.0, %v1905
      %v1907 = vpop.f32.mrb[0].mxu0
      %v1908 = vpop.f32.mrb[0].mxu0
      %v1909 = vadd.f32 0.0, %v1908
      %v1910 = vpop.f32.mrb[0].mxu0
      %1911 = vmatprep.mubr.bf16.mxu0 0
      %1912 = vmatmul.mubr.bf16.gmra.mrb[0].mxu0 %v1742
      %v1913 = vpop.f32.mrb[0].mxu0
      %v1914 = vadd.f32 0.0, %v1913
      %v1915 = vpop.f32.mrb[0].mxu0
      %v1916 = vpop.f32.mrb[0].mxu0
      %v1917 = vadd.f32 0.0, %v1916
      %v1918 = vpop.f32.mrb[0].mxu0
      %1919 = vmatprep.mubr.bf16.mxu0 0
      %1920 = vmatmul.mubr.bf16.gmra.mrb[0].mxu0 %v1743
      %v1921 = vpop.f32.mrb[0].mxu0
      %v1922 = vadd.f32 0.0, %v1921
      %v1923 = vpop.f32.mrb[0].mxu0
      %v1924 = vpop.f32.mrb[0].mxu0
      %v1925 = vadd.f32 0.0, %v1924
      %v1926 = vpop.f32.mrb[0].mxu0
      %1927 = vmatprep.mubr.bf16.mxu0 0
      %1928 = vmatmul.mubr.bf16.gmra.mrb[0].mxu0 %v1744
      %v1929 = vpop.f32.mrb[0].mxu0
      %v1930 = vadd.f32 0.0, %v1929
      %v1931 = vpop.f32.mrb[0].mxu0
      %v1932 = vpop.f32.mrb[0].mxu0
      %v1933 = vadd.f32 0.0, %v1932
      %v1934 = vpop.f32.mrb[0].mxu0
      %1935 = vmatprep.mubr.bf16.mxu0 0
      %1936 = vmatmul.mubr.bf16.gmra.mrb[0].mxu0 %v1745
      %v1937 = vpop.f32.mrb[0].mxu0
      %v1938 = vadd.f32 0.0, %v1937
      %v1939 = vpop.f32.mrb[0].mxu0
      %v1940 = vpop.f32.mrb[0].mxu0
      %v1941 = vadd.f32 0.0, %v1940
      %v1942 = vpop.f32.mrb[0].mxu0
      %1943 = vmatprep.mubr.bf16.mxu0 0
      %1944 = vmatmul.mubr.bf16.gmra.mrb[0].mxu0 %v1746
      %v1945 = vpop.f32.mrb[0].mxu0
      %v1946 = vadd.f32 0.0, %v1945
      %v1947 = vpop.f32.mrb[0].mxu0
      %v1948 = vpop.f32.mrb[0].mxu0
      %v1949 = vadd.f32 0.0, %v1948
      %v1950 = vpop.f32.mrb[0].mxu0
      %1951 = vmatprep.mubr.bf16.mxu0 0
      %1952 = vmatmul.mubr.bf16.gmra.mrb[0].mxu0 %v1747
      %v1953 = vpop.f32.mrb[0].mxu0
      %v1954 = vadd.f32 0.0, %v1953
      %v1955 = vpop.f32.mrb[0].mxu0
      %v1956 = vpop.f32.mrb[0].mxu0
      %v1957 = vadd.f32 0.0, %v1956
      %v1958 = vpop.f32.mrb[0].mxu0
      %1959 = vmatprep.mubr.bf16.mxu0 0
      %1960 = vmatmul.mubr.bf16.gmra.mrb[0].mxu0 %v1748
      %v1961 = vpop.f32.mrb[0].mxu0
      %v1962 = vadd.f32 0.0, %v1961
      %v1963 = vpop.f32.mrb[0].mxu0
      %v1964 = vpop.f32.mrb[0].mxu0
      %v1965 = vadd.f32 0.0, %v1964
      %v1966 = vpop.f32.mrb[0].mxu0
      %1967 = vmatprep.mubr.bf16.mxu0 0
      %1968 = vmatmul.mubr.bf16.gmra.mrb[0].mxu0 %v1749
      %v1969 = vpop.f32.mrb[0].mxu0
      %v1970 = vadd.f32 0.0, %v1969
      %v1971 = vpop.f32.mrb[0].mxu0
      %v1972 = vpop.f32.mrb[0].mxu0
      %v1973 = vadd.f32 0.0, %v1972
      %v1974 = vpop.f32.mrb[0].mxu0
      %1975 = vdwg.mxu0
      %v1976 = vadd.f32 %v1480, %v1850
      %v1977 = vadd.f32 %v1483, %v1853
      %v1978 = vadd.f32 %v1488, %v1858
      %v1979 = vadd.f32 %v1491, %v1861
      %v1980 = vadd.f32 %v1496, %v1866
      %v1981 = vadd.f32 %v1499, %v1869
      %v1982 = vadd.f32 %v1504, %v1874
      %v1983 = vadd.f32 %v1507, %v1877
      %v1984 = vadd.f32 %v1512, %v1882
      %v1985 = vadd.f32 %v1515, %v1885
      %v1986 = vadd.f32 %v1520, %v1890
      %v1987 = vadd.f32 %v1523, %v1893
      %v1988 = vadd.f32 %v1528, %v1898
      %v1989 = vadd.f32 %v1531, %v1901
      %v1990 = vadd.f32 %v1536, %v1906
      %v1991 = vadd.f32 %v1539, %v1909
      %v1992 = vadd.f32 %v1544, %v1914
      %v1993 = vadd.f32 %v1547, %v1917
      %v1994 = vadd.f32 %v1552, %v1922
      %v1995 = vadd.f32 %v1555, %v1925
      %v1996 = vadd.f32 %v1560, %v1930
      %v1997 = vadd.f32 %v1563, %v1933
      %v1998 = vadd.f32 %v1568, %v1938
      %v1999 = vadd.f32 %v1571, %v1941
      %v2000 = vadd.f32 %v1576, %v1946
      %v2001 = vadd.f32 %v1579, %v1949
      %v2002 = vadd.f32 %v1584, %v1954
      %v2003 = vadd.f32 %v1587, %v1957
      %v2004 = vadd.f32 %v1592, %v1962
      %v2005 = vadd.f32 %v1595, %v1965
      %v2006 = vadd.f32 %v1600, %v1970
      %v2007 = vadd.f32 %v1603, %v1973
      %v2008 = vld [vmem:[#allocation2 + $0x17] sm:$0xff]
      %v2009 = vld [vmem:[#allocation2 + $0x1f] sm:$0xff]
      %v2010 = vld [vmem:[#allocation2 + $0x27] sm:$0xff]
      %v2011 = vld [vmem:[#allocation2 + $0x2f] sm:$0xff]
      %v2012 = vld [vmem:[#allocation2 + $0x37] sm:$0xff]
      %v2013 = vld [vmem:[#allocation2 + $0x3f] sm:$0xff]
      %v2014 = vld [vmem:[#allocation2 + $0x47] sm:$0xff]
      %v2015 = vld [vmem:[#allocation2 + $0x4f] sm:$0xff]
      %v2016 = vld [vmem:[#allocation2 + $0x57] sm:$0xff]
      %v2017 = vld [vmem:[#allocation2 + $0x5f] sm:$0xff]
      %v2018 = vld [vmem:[#allocation2 + $0x67] sm:$0xff]
      %v2019 = vld [vmem:[#allocation2 + $0x6f] sm:$0xff]
      %v2020 = vld [vmem:[#allocation2 + $0x77] sm:$0xff]
      %v2021 = vld [vmem:[#allocation2 + $0x7f] sm:$0xff]
      %v2022 = vld [vmem:[#allocation2 + $0x87] sm:$0xff]
      %v2023 = vld [vmem:[#allocation2 + $0x8f] sm:$0xff]
      %v2024 = vld [vmem:[#allocation2 + $0x97] sm:$0xff]
      %v2025 = vld [vmem:[#allocation2 + $0x9f] sm:$0xff]
      %v2026 = vld [vmem:[#allocation2 + $0xa7] sm:$0xff]
      %v2027 = vld [vmem:[#allocation2 + $0xaf] sm:$0xff]
      %v2028 = vld [vmem:[#allocation2 + $0xb7] sm:$0xff]
      %v2029 = vld [vmem:[#allocation2 + $0xbf] sm:$0xff]
      %v2030 = vld [vmem:[#allocation2 + $0xc7] sm:$0xff]
      %v2031 = vld [vmem:[#allocation2 + $0xcf] sm:$0xff]
      %v2032 = vld [vmem:[#allocation2 + $0xd7] sm:$0xff]
      %v2033 = vld [vmem:[#allocation2 + $0xdf] sm:$0xff]
      %v2034 = vld [vmem:[#allocation2 + $0xe7] sm:$0xff]
      %v2035 = vld [vmem:[#allocation2 + $0xef] sm:$0xff]
      %v2036 = vld [vmem:[#allocation2 + $0xf7] sm:$0xff]
      %v2037 = vld [vmem:[#allocation2 + $0xff] sm:$0xff]
      %v2038 = vld [vmem:[#allocation2 + $0x107] sm:$0xff]
      %v2039 = vld [vmem:[#allocation2 + $0x10f] sm:$0xff]
      %v2040 = vsel %vm1027, %v2008, 0.0
      %v2041 = vsel %vm1028, %v2009, 0.0
      %v2042 = vsel %vm1029, %v2010, 0.0
      %v2043 = vsel %vm1030, %v2011, 0.0
      %v2044 = vsel %vm1031, %v2012, 0.0
      %v2045 = vsel %vm1032, %v2013, 0.0
      %v2046 = vsel %vm1033, %v2014, 0.0
      %v2047 = vsel %vm1034, %v2015, 0.0
      %v2048 = vsel %vm1035, %v2016, 0.0
      %v2049 = vsel %vm1036, %v2017, 0.0
      %v2050 = vsel %vm1037, %v2018, 0.0
      %v2051 = vsel %vm1038, %v2019, 0.0
      %v2052 = vsel %vm1039, %v2020, 0.0
      %v2053 = vsel %vm1040, %v2021, 0.0
      %v2054 = vsel %vm1041, %v2022, 0.0
      %v2055 = vsel %vm1042, %v2023, 0.0
      %v2056 = vsel %vm1043, %v2024, 0.0
      %v2057 = vsel %vm1044, %v2025, 0.0
      %v2058 = vsel %vm1045, %v2026, 0.0
      %v2059 = vsel %vm1046, %v2027, 0.0
      %v2060 = vsel %vm1047, %v2028, 0.0
      %v2061 = vsel %vm1048, %v2029, 0.0
      %v2062 = vsel %vm1049, %v2030, 0.0
      %v2063 = vsel %vm1050, %v2031, 0.0
      %v2064 = vsel %vm1051, %v2032, 0.0
      %v2065 = vsel %vm1052, %v2033, 0.0
      %v2066 = vsel %vm1053, %v2034, 0.0
      %v2067 = vsel %vm1054, %v2035, 0.0
      %v2068 = vsel %vm1055, %v2036, 0.0
      %v2069 = vsel %vm1056, %v2037, 0.0
      %v2070 = vsel %vm1057, %v2038, 0.0
      %v2071 = vsel %vm1058, %v2039, 0.0
      %v2072 = vpack.c.bf16 %v2041, %v2040
      %v2073 = vpack.c.bf16 %v2043, %v2042
      %v2074 = vpack.c.bf16 %v2045, %v2044
      %v2075 = vpack.c.bf16 %v2047, %v2046
      %v2076 = vpack.c.bf16 %v2049, %v2048
      %v2077 = vpack.c.bf16 %v2051, %v2050
      %v2078 = vpack.c.bf16 %v2053, %v2052
      %v2079 = vpack.c.bf16 %v2055, %v2054
      %v2080 = vpack.c.bf16 %v2057, %v2056
      %v2081 = vpack.c.bf16 %v2059, %v2058
      %v2082 = vpack.c.bf16 %v2061, %v2060
      %v2083 = vpack.c.bf16 %v2063, %v2062
      %v2084 = vpack.c.bf16 %v2065, %v2064
      %v2085 = vpack.c.bf16 %v2067, %v2066
      %v2086 = vpack.c.bf16 %v2069, %v2068
      %v2087 = vpack.c.bf16 %v2071, %v2070
      %s2088 = scalar_lea.vmem %s1, 192
      %v2089 = vld [vmem:[%s2088] sm:$0xf]
      %v2090 = vld [vmem:[%s2088 + $0x4] sm:$0xf]
      %v2091 = vld [vmem:[%s2088 + $0x8] sm:$0xf]
      %v2092 = vld [vmem:[%s2088 + $0xc] sm:$0xf]
      %v2093 = vld [vmem:[%s2088 + $0x10] sm:$0xf]
      %v2094 = vld [vmem:[%s2088 + $0x14] sm:$0xf]
      %v2095 = vld [vmem:[%s2088 + $0x18] sm:$0xf]
      %v2096 = vld [vmem:[%s2088 + $0x1c] sm:$0xf]
      %v2097 = vld [vmem:[%s2088 + $0x20] sm:$0xf]
      %v2098 = vld [vmem:[%s2088 + $0x24] sm:$0xf]
      %v2099 = vld [vmem:[%s2088 + $0x28] sm:$0xf]
      %v2100 = vld [vmem:[%s2088 + $0x2c] sm:$0xf]
      %v2101 = vld [vmem:[%s2088 + $0x30] sm:$0xf]
      %v2102 = vld [vmem:[%s2088 + $0x34] sm:$0xf]
      %v2103 = vld [vmem:[%s2088 + $0x38] sm:$0xf]
      %v2104 = vld [vmem:[%s2088 + $0x3c] sm:$0xf]
      %v2121 = vunpack.c.l.b16 %v2089
      %v2122 = vunpack.c.l.b16 %v2090
      %v2123 = vunpack.c.l.b16 %v2091
      %v2124 = vunpack.c.l.b16 %v2092
      %v2125 = vunpack.c.l.b16 %v2093
      %v2126 = vunpack.c.l.b16 %v2094
      %v2127 = vunpack.c.l.b16 %v2095
      %v2128 = vunpack.c.l.b16 %v2096
      %v2129 = vunpack.c.l.b16 %v2097
      %v2130 = vunpack.c.l.b16 %v2098
      %v2131 = vunpack.c.l.b16 %v2099
      %v2132 = vunpack.c.l.b16 %v2100
      %v2133 = vunpack.c.l.b16 %v2101
      %v2134 = vunpack.c.l.b16 %v2102
      %v2135 = vunpack.c.l.b16 %v2103
      %v2136 = vunpack.c.l.b16 %v2104
      %v2137 = vpack.c.b16 %v2122, %v2121
      %v2138 = vpack.c.b16 %v2124, %v2123
      %v2139 = vpack.c.b16 %v2126, %v2125
      %v2140 = vpack.c.b16 %v2128, %v2127
      %v2141 = vpack.c.b16 %v2130, %v2129
      %v2142 = vpack.c.b16 %v2132, %v2131
      %v2143 = vpack.c.b16 %v2134, %v2133
      %v2144 = vpack.c.b16 %v2136, %v2135
      %2153 = vmatprep.subr.bf16.mxu0 0
      %2154 = vmatpush1.bf16.msra.mxu0 %v2137
      %2155 = vmatprep.subr.bf16.mxu0 0
      %2156 = vmatpush1.bf16.msra.mxu0 %v2138
      %2157 = vmatprep.subr.bf16.mxu0 0
      %2158 = vmatpush1.bf16.msra.mxu0 %v2139
      %2159 = vmatprep.subr.bf16.mxu0 0
      %2160 = vmatpush1.bf16.msra.mxu0 %v2140
      %2161 = vmatprep.subr.bf16.mxu0 0
      %2162 = vmatpush1.bf16.msra.mxu0 %v2141
      %2163 = vmatprep.subr.bf16.mxu0 0
      %2164 = vmatpush1.bf16.msra.mxu0 %v2142
      %2165 = vmatprep.subr.bf16.mxu0 0
      %2166 = vmatpush1.bf16.msra.mxu0 %v2143
      %2167 = vmatprep.subr.bf16.mxu0 0
      %2168 = vmatpush1.bf16.msra.mxu0 %v2144
      %2169 = vmatprep.subr.bf16.mxu0 0
      %2170 = vmatpush1.bf16.msra.mxu0 0
      %2171 = vmatprep.subr.bf16.mxu0 0
      %2172 = vmatpush1.bf16.msra.mxu0 0
      %2173 = vmatprep.subr.bf16.mxu0 0
      %2174 = vmatpush1.bf16.msra.mxu0 0
      %2175 = vmatprep.subr.bf16.mxu0 0
      %2176 = vmatpush1.bf16.msra.mxu0 0
      %2177 = vmatprep.subr.bf16.mxu0 0
      %2178 = vmatpush1.bf16.msra.mxu0 0
      %2179 = vmatprep.subr.bf16.mxu0 0
      %2180 = vmatpush1.bf16.msra.mxu0 0
      %2181 = vmatprep.subr.bf16.mxu0 0
      %2182 = vmatpush1.bf16.msra.mxu0 0
      %2183 = vmatprep.subr.bf16.mxu0 0
      %2184 = vmatpush1.bf16.msra.mxu0 0
      %2185 = vmatprep.mubr.bf16.mxu0 0
      %2186 = vmatmul.mubr.bf16.gmra.mrb[0].mxu0 %v2072
      %v2187 = vpop.f32.mrb[0].mxu0
      %v2188 = vadd.f32 0.0, %v2187
      %v2189 = vpop.f32.mrb[0].mxu0
      %v2190 = vpop.f32.mrb[0].mxu0
      %v2191 = vadd.f32 0.0, %v2190
      %v2192 = vpop.f32.mrb[0].mxu0
      %2193 = vmatprep.mubr.bf16.mxu0 0
      %2194 = vmatmul.mubr.bf16.gmra.mrb[0].mxu0 %v2073
      %v2195 = vpop.f32.mrb[0].mxu0
      %v2196 = vadd.f32 0.0, %v2195
      %v2197 = vpop.f32.mrb[0].mxu0
      %v2198 = vpop.f32.mrb[0].mxu0
      %v2199 = vadd.f32 0.0, %v2198
      %v2200 = vpop.f32.mrb[0].mxu0
      %2201 = vmatprep.mubr.bf16.mxu0 0
      %2202 = vmatmul.mubr.bf16.gmra.mrb[0].mxu0 %v2074
      %v2203 = vpop.f32.mrb[0].mxu0
      %v2204 = vadd.f32 0.0, %v2203
      %v2205 = vpop.f32.mrb[0].mxu0
      %v2206 = vpop.f32.mrb[0].mxu0
      %v2207 = vadd.f32 0.0, %v2206
      %v2208 = vpop.f32.mrb[0].mxu0
      %2209 = vmatprep.mubr.bf16.mxu0 0
      %2210 = vmatmul.mubr.bf16.gmra.mrb[0].mxu0 %v2075
      %v2211 = vpop.f32.mrb[0].mxu0
      %v2212 = vadd.f32 0.0, %v2211
      %v2213 = vpop.f32.mrb[0].mxu0
      %v2214 = vpop.f32.mrb[0].mxu0
      %v2215 = vadd.f32 0.0, %v2214
      %v2216 = vpop.f32.mrb[0].mxu0
      %2217 = vmatprep.mubr.bf16.mxu0 0
      %2218 = vmatmul.mubr.bf16.gmra.mrb[0].mxu0 %v2076
      %v2219 = vpop.f32.mrb[0].mxu0
      %v2220 = vadd.f32 0.0, %v2219
      %v2221 = vpop.f32.mrb[0].mxu0
      %v2222 = vpop.f32.mrb[0].mxu0
      %v2223 = vadd.f32 0.0, %v2222
      %v2224 = vpop.f32.mrb[0].mxu0
      %2225 = vmatprep.mubr.bf16.mxu0 0
      %2226 = vmatmul.mubr.bf16.gmra.mrb[0].mxu0 %v2077
      %v2227 = vpop.f32.mrb[0].mxu0
      %v2228 = vadd.f32 0.0, %v2227
      %v2229 = vpop.f32.mrb[0].mxu0
      %v2230 = vpop.f32.mrb[0].mxu0
      %v2231 = vadd.f32 0.0, %v2230
      %v2232 = vpop.f32.mrb[0].mxu0
      %2233 = vmatprep.mubr.bf16.mxu0 0
      %2234 = vmatmul.mubr.bf16.gmra.mrb[0].mxu0 %v2078
      %v2235 = vpop.f32.mrb[0].mxu0
      %v2236 = vadd.f32 0.0, %v2235
      %v2237 = vpop.f32.mrb[0].mxu0
      %v2238 = vpop.f32.mrb[0].mxu0
      %v2239 = vadd.f32 0.0, %v2238
      %v2240 = vpop.f32.mrb[0].mxu0
      %2241 = vmatprep.mubr.bf16.mxu0 0
      %2242 = vmatmul.mubr.bf16.gmra.mrb[0].mxu0 %v2079
      %v2243 = vpop.f32.mrb[0].mxu0
      %v2244 = vadd.f32 0.0, %v2243
      %v2245 = vpop.f32.mrb[0].mxu0
      %v2246 = vpop.f32.mrb[0].mxu0
      %v2247 = vadd.f32 0.0, %v2246
      %v2248 = vpop.f32.mrb[0].mxu0
      %2249 = vmatprep.mubr.bf16.mxu0 0
      %2250 = vmatmul.mubr.bf16.gmra.mrb[0].mxu0 %v2080
      %v2251 = vpop.f32.mrb[0].mxu0
      %v2252 = vadd.f32 0.0, %v2251
      %v2253 = vpop.f32.mrb[0].mxu0
      %v2254 = vpop.f32.mrb[0].mxu0
      %v2255 = vadd.f32 0.0, %v2254
      %v2256 = vpop.f32.mrb[0].mxu0
      %2257 = vmatprep.mubr.bf16.mxu0 0
      %2258 = vmatmul.mubr.bf16.gmra.mrb[0].mxu0 %v2081
      %v2259 = vpop.f32.mrb[0].mxu0
      %v2260 = vadd.f32 0.0, %v2259
      %v2261 = vpop.f32.mrb[0].mxu0
      %v2262 = vpop.f32.mrb[0].mxu0
      %v2263 = vadd.f32 0.0, %v2262
      %v2264 = vpop.f32.mrb[0].mxu0
      %2265 = vmatprep.mubr.bf16.mxu0 0
      %2266 = vmatmul.mubr.bf16.gmra.mrb[0].mxu0 %v2082
      %v2267 = vpop.f32.mrb[0].mxu0
      %v2268 = vadd.f32 0.0, %v2267
      %v2269 = vpop.f32.mrb[0].mxu0
      %v2270 = vpop.f32.mrb[0].mxu0
      %v2271 = vadd.f32 0.0, %v2270
      %v2272 = vpop.f32.mrb[0].mxu0
      %2273 = vmatprep.mubr.bf16.mxu0 0
      %2274 = vmatmul.mubr.bf16.gmra.mrb[0].mxu0 %v2083
      %v2275 = vpop.f32.mrb[0].mxu0
      %v2276 = vadd.f32 0.0, %v2275
      %v2277 = vpop.f32.mrb[0].mxu0
      %v2278 = vpop.f32.mrb[0].mxu0
      %v2279 = vadd.f32 0.0, %v2278
      %v2280 = vpop.f32.mrb[0].mxu0
      %2281 = vmatprep.mubr.bf16.mxu0 0
      %2282 = vmatmul.mubr.bf16.gmra.mrb[0].mxu0 %v2084
      %v2283 = vpop.f32.mrb[0].mxu0
      %v2284 = vadd.f32 0.0, %v2283
      %v2285 = vpop.f32.mrb[0].mxu0
      %v2286 = vpop.f32.mrb[0].mxu0
      %v2287 = vadd.f32 0.0, %v2286
      %v2288 = vpop.f32.mrb[0].mxu0
      %2289 = vmatprep.mubr.bf16.mxu0 0
      %2290 = vmatmul.mubr.bf16.gmra.mrb[0].mxu0 %v2085
      %v2291 = vpop.f32.mrb[0].mxu0
      %v2292 = vadd.f32 0.0, %v2291
      %v2293 = vpop.f32.mrb[0].mxu0
      %v2294 = vpop.f32.mrb[0].mxu0
      %v2295 = vadd.f32 0.0, %v2294
      %v2296 = vpop.f32.mrb[0].mxu0
      %2297 = vmatprep.mubr.bf16.mxu0 0
      %2298 = vmatmul.mubr.bf16.gmra.mrb[0].mxu0 %v2086
      %v2299 = vpop.f32.mrb[0].mxu0
      %v2300 = vadd.f32 0.0, %v2299
      %v2301 = vpop.f32.mrb[0].mxu0
      %v2302 = vpop.f32.mrb[0].mxu0
      %v2303 = vadd.f32 0.0, %v2302
      %v2304 = vpop.f32.mrb[0].mxu0
      %2305 = vmatprep.mubr.bf16.mxu0 0
      %2306 = vmatmul.mubr.bf16.gmra.mrb[0].mxu0 %v2087
      %v2307 = vpop.f32.mrb[0].mxu0
      %v2308 = vadd.f32 0.0, %v2307
      %v2309 = vpop.f32.mrb[0].mxu0
      %v2310 = vpop.f32.mrb[0].mxu0
      %v2311 = vadd.f32 0.0, %v2310
      %v2312 = vpop.f32.mrb[0].mxu0
      %2313 = vdwg.mxu0
      %v2314 = vadd.f32 %v1976, %v2188
      %v2315 = vadd.f32 %v1977, %v2191
      %v2316 = vadd.f32 %v1978, %v2196
      %v2317 = vadd.f32 %v1979, %v2199
      %v2318 = vadd.f32 %v1980, %v2204
      %v2319 = vadd.f32 %v1981, %v2207
      %v2320 = vadd.f32 %v1982, %v2212
      %v2321 = vadd.f32 %v1983, %v2215
      %v2322 = vadd.f32 %v1984, %v2220
      %v2323 = vadd.f32 %v1985, %v2223
      %v2324 = vadd.f32 %v1986, %v2228
      %v2325 = vadd.f32 %v1987, %v2231
      %v2326 = vadd.f32 %v1988, %v2236
      %v2327 = vadd.f32 %v1989, %v2239
      %v2328 = vadd.f32 %v1990, %v2244
      %v2329 = vadd.f32 %v1991, %v2247
      %v2330 = vadd.f32 %v1992, %v2252
      %v2331 = vadd.f32 %v1993, %v2255
      %v2332 = vadd.f32 %v1994, %v2260
      %v2333 = vadd.f32 %v1995, %v2263
      %v2334 = vadd.f32 %v1996, %v2268
      %v2335 = vadd.f32 %v1997, %v2271
      %v2336 = vadd.f32 %v1998, %v2276
      %v2337 = vadd.f32 %v1999, %v2279
      %v2338 = vadd.f32 %v2000, %v2284
      %v2339 = vadd.f32 %v2001, %v2287
      %v2340 = vadd.f32 %v2002, %v2292
      %v2341 = vadd.f32 %v2003, %v2295
      %v2342 = vadd.f32 %v2004, %v2300
      %v2343 = vadd.f32 %v2005, %v2303
      %v2344 = vadd.f32 %v2006, %v2308
      %v2345 = vadd.f32 %v2007, %v2311
      %v2346 = vld [vmem:[#allocation2 + $0x18] sm:$0xff]
      %v2347 = vld [vmem:[#allocation2 + $0x20] sm:$0xff]
      %v2348 = vld [vmem:[#allocation2 + $0x28] sm:$0xff]
      %v2349 = vld [vmem:[#allocation2 + $0x30] sm:$0xff]
      %v2350 = vld [vmem:[#allocation2 + $0x38] sm:$0xff]
      %v2351 = vld [vmem:[#allocation2 + $0x40] sm:$0xff]
      %v2352 = vld [vmem:[#allocation2 + $0x48] sm:$0xff]
      %v2353 = vld [vmem:[#allocation2 + $0x50] sm:$0xff]
      %v2354 = vld [vmem:[#allocation2 + $0x58] sm:$0xff]
      %v2355 = vld [vmem:[#allocation2 + $0x60] sm:$0xff]
      %v2356 = vld [vmem:[#allocation2 + $0x68] sm:$0xff]
      %v2357 = vld [vmem:[#allocation2 + $0x70] sm:$0xff]
      %v2358 = vld [vmem:[#allocation2 + $0x78] sm:$0xff]
      %v2359 = vld [vmem:[#allocation2 + $0x80] sm:$0xff]
      %v2360 = vld [vmem:[#allocation2 + $0x88] sm:$0xff]
      %v2361 = vld [vmem:[#allocation2 + $0x90] sm:$0xff]
      %v2362 = vld [vmem:[#allocation2 + $0x98] sm:$0xff]
      %v2363 = vld [vmem:[#allocation2 + $0xa0] sm:$0xff]
      %v2364 = vld [vmem:[#allocation2 + $0xa8] sm:$0xff]
      %v2365 = vld [vmem:[#allocation2 + $0xb0] sm:$0xff]
      %v2366 = vld [vmem:[#allocation2 + $0xb8] sm:$0xff]
      %v2367 = vld [vmem:[#allocation2 + $0xc0] sm:$0xff]
      %v2368 = vld [vmem:[#allocation2 + $0xc8] sm:$0xff]
      %v2369 = vld [vmem:[#allocation2 + $0xd0] sm:$0xff]
      %v2370 = vld [vmem:[#allocation2 + $0xd8] sm:$0xff]
      %v2371 = vld [vmem:[#allocation2 + $0xe0] sm:$0xff]
      %v2372 = vld [vmem:[#allocation2 + $0xe8] sm:$0xff]
      %v2373 = vld [vmem:[#allocation2 + $0xf0] sm:$0xff]
      %v2374 = vld [vmem:[#allocation2 + $0xf8] sm:$0xff]
      %v2375 = vld [vmem:[#allocation2 + $0x100] sm:$0xff]
      %v2376 = vld [vmem:[#allocation2 + $0x108] sm:$0xff]
      %v2377 = vld [vmem:[#allocation2 + $0x110] sm:$0xff]
      %v2378 = vpack.c.bf16 %v2347, %v2346
      %v2379 = vpack.c.bf16 %v2349, %v2348
      %v2380 = vpack.c.bf16 %v2351, %v2350
      %v2381 = vpack.c.bf16 %v2353, %v2352
      %v2382 = vpack.c.bf16 %v2355, %v2354
      %v2383 = vpack.c.bf16 %v2357, %v2356
      %v2384 = vpack.c.bf16 %v2359, %v2358
      %v2385 = vpack.c.bf16 %v2361, %v2360
      %v2386 = vpack.c.bf16 %v2363, %v2362
      %v2387 = vpack.c.bf16 %v2365, %v2364
      %v2388 = vpack.c.bf16 %v2367, %v2366
      %v2389 = vpack.c.bf16 %v2369, %v2368
      %v2390 = vpack.c.bf16 %v2371, %v2370
      %v2391 = vpack.c.bf16 %v2373, %v2372
      %v2392 = vpack.c.bf16 %v2375, %v2374
      %v2393 = vpack.c.bf16 %v2377, %v2376
      %s2394 = scalar_lea.vmem %s1, 256
      %v2395 = vld [vmem:[%s2394] sm:$0xf]
      %v2396 = vld [vmem:[%s2394 + $0x4] sm:$0xf]
      %v2397 = vld [vmem:[%s2394 + $0x8] sm:$0xf]
      %v2398 = vld [vmem:[%s2394 + $0xc] sm:$0xf]
      %v2399 = vld [vmem:[%s2394 + $0x10] sm:$0xf]
      %v2400 = vld [vmem:[%s2394 + $0x14] sm:$0xf]
      %v2401 = vld [vmem:[%s2394 + $0x18] sm:$0xf]
      %v2402 = vld [vmem:[%s2394 + $0x1c] sm:$0xf]
      %v2403 = vld [vmem:[%s2394 + $0x20] sm:$0xf]
      %v2404 = vld [vmem:[%s2394 + $0x24] sm:$0xf]
      %v2405 = vld [vmem:[%s2394 + $0x28] sm:$0xf]
      %v2406 = vld [vmem:[%s2394 + $0x2c] sm:$0xf]
      %v2407 = vld [vmem:[%s2394 + $0x30] sm:$0xf]
      %v2408 = vld [vmem:[%s2394 + $0x34] sm:$0xf]
      %v2409 = vld [vmem:[%s2394 + $0x38] sm:$0xf]
      %v2410 = vld [vmem:[%s2394 + $0x3c] sm:$0xf]
      %v2427 = vunpack.c.l.b16 %v2395
      %v2428 = vunpack.c.l.b16 %v2396
      %v2429 = vunpack.c.l.b16 %v2397
      %v2430 = vunpack.c.l.b16 %v2398
      %v2431 = vunpack.c.l.b16 %v2399
      %v2432 = vunpack.c.l.b16 %v2400
      %v2433 = vunpack.c.l.b16 %v2401
      %v2434 = vunpack.c.l.b16 %v2402
      %v2435 = vunpack.c.l.b16 %v2403
      %v2436 = vunpack.c.l.b16 %v2404
      %v2437 = vunpack.c.l.b16 %v2405
      %v2438 = vunpack.c.l.b16 %v2406
      %v2439 = vunpack.c.l.b16 %v2407
      %v2440 = vunpack.c.l.b16 %v2408
      %v2441 = vunpack.c.l.b16 %v2409
      %v2442 = vunpack.c.l.b16 %v2410
      %v2443 = vpack.c.b16 %v2428, %v2427
      %v2444 = vpack.c.b16 %v2430, %v2429
      %v2445 = vpack.c.b16 %v2432, %v2431
      %v2446 = vpack.c.b16 %v2434, %v2433
      %v2447 = vpack.c.b16 %v2436, %v2435
      %v2448 = vpack.c.b16 %v2438, %v2437
      %v2449 = vpack.c.b16 %v2440, %v2439
      %v2450 = vpack.c.b16 %v2442, %v2441
      %2459 = vmatprep.subr.bf16.mxu0 0
      %2460 = vmatpush1.bf16.msra.mxu0 %v2443
      %2461 = vmatprep.subr.bf16.mxu0 0
      %2462 = vmatpush1.bf16.msra.mxu0 %v2444
      %2463 = vmatprep.subr.bf16.mxu0 0
      %2464 = vmatpush1.bf16.msra.mxu0 %v2445
      %2465 = vmatprep.subr.bf16.mxu0 0
      %2466 = vmatpush1.bf16.msra.mxu0 %v2446
      %2467 = vmatprep.subr.bf16.mxu0 0
      %2468 = vmatpush1.bf16.msra.mxu0 %v2447
      %2469 = vmatprep.subr.bf16.mxu0 0
      %2470 = vmatpush1.bf16.msra.mxu0 %v2448
      %2471 = vmatprep.subr.bf16.mxu0 0
      %2472 = vmatpush1.bf16.msra.mxu0 %v2449
      %2473 = vmatprep.subr.bf16.mxu0 0
      %2474 = vmatpush1.bf16.msra.mxu0 %v2450
      %2475 = vmatprep.subr.bf16.mxu0 0
      %2476 = vmatpush1.bf16.msra.mxu0 0
      %2477 = vmatprep.subr.bf16.mxu0 0
      %2478 = vmatpush1.bf16.msra.mxu0 0
      %2479 = vmatprep.subr.bf16.mxu0 0
      %2480 = vmatpush1.bf16.msra.mxu0 0
      %2481 = vmatprep.subr.bf16.mxu0 0
      %2482 = vmatpush1.bf16.msra.mxu0 0
      %2483 = vmatprep.subr.bf16.mxu0 0
      %2484 = vmatpush1.bf16.msra.mxu0 0
      %2485 = vmatprep.subr.bf16.mxu0 0
      %2486 = vmatpush1.bf16.msra.mxu0 0
      %2487 = vmatprep.subr.bf16.mxu0 0
      %2488 = vmatpush1.bf16.msra.mxu0 0
      %2489 = vmatprep.subr.bf16.mxu0 0
      %2490 = vmatpush1.bf16.msra.mxu0 0
      %2491 = vmatprep.mubr.bf16.mxu0 0
      %2492 = vmatmul.mubr.bf16.gmra.mrb[0].mxu0 %v2378
      %v2493 = vpop.f32.mrb[0].mxu0
      %v2494 = vadd.f32 0.0, %v2493
      %v2495 = vpop.f32.mrb[0].mxu0
      %v2496 = vpop.f32.mrb[0].mxu0
      %v2497 = vadd.f32 0.0, %v2496
      %v2498 = vpop.f32.mrb[0].mxu0
      %2499 = vmatprep.mubr.bf16.mxu0 0
      %2500 = vmatmul.mubr.bf16.gmra.mrb[0].mxu0 %v2379
      %v2501 = vpop.f32.mrb[0].mxu0
      %v2502 = vadd.f32 0.0, %v2501
      %v2503 = vpop.f32.mrb[0].mxu0
      %v2504 = vpop.f32.mrb[0].mxu0
      %v2505 = vadd.f32 0.0, %v2504
      %v2506 = vpop.f32.mrb[0].mxu0
      %2507 = vmatprep.mubr.bf16.mxu0 0
      %2508 = vmatmul.mubr.bf16.gmra.mrb[0].mxu0 %v2380
      %v2509 = vpop.f32.mrb[0].mxu0
      %v2510 = vadd.f32 0.0, %v2509
      %v2511 = vpop.f32.mrb[0].mxu0
      %v2512 = vpop.f32.mrb[0].mxu0
      %v2513 = vadd.f32 0.0, %v2512
      %v2514 = vpop.f32.mrb[0].mxu0
      %2515 = vmatprep.mubr.bf16.mxu0 0
      %2516 = vmatmul.mubr.bf16.gmra.mrb[0].mxu0 %v2381
      %v2517 = vpop.f32.mrb[0].mxu0
      %v2518 = vadd.f32 0.0, %v2517
      %v2519 = vpop.f32.mrb[0].mxu0
      %v2520 = vpop.f32.mrb[0].mxu0
      %v2521 = vadd.f32 0.0, %v2520
      %v2522 = vpop.f32.mrb[0].mxu0
      %2523 = vmatprep.mubr.bf16.mxu0 0
      %2524 = vmatmul.mubr.bf16.gmra.mrb[0].mxu0 %v2382
      %v2525 = vpop.f32.mrb[0].mxu0
      %v2526 = vadd.f32 0.0, %v2525
      %v2527 = vpop.f32.mrb[0].mxu0
      %v2528 = vpop.f32.mrb[0].mxu0
      %v2529 = vadd.f32 0.0, %v2528
      %v2530 = vpop.f32.mrb[0].mxu0
      %2531 = vmatprep.mubr.bf16.mxu0 0
      %2532 = vmatmul.mubr.bf16.gmra.mrb[0].mxu0 %v2383
      %v2533 = vpop.f32.mrb[0].mxu0
      %v2534 = vadd.f32 0.0, %v2533
      %v2535 = vpop.f32.mrb[0].mxu0
      %v2536 = vpop.f32.mrb[0].mxu0
      %v2537 = vadd.f32 0.0, %v2536
      %v2538 = vpop.f32.mrb[0].mxu0
      %2539 = vmatprep.mubr.bf16.mxu0 0
      %2540 = vmatmul.mubr.bf16.gmra.mrb[0].mxu0 %v2384
      %v2541 = vpop.f32.mrb[0].mxu0
      %v2542 = vadd.f32 0.0, %v2541
      %v2543 = vpop.f32.mrb[0].mxu0
      %v2544 = vpop.f32.mrb[0].mxu0
      %v2545 = vadd.f32 0.0, %v2544
      %v2546 = vpop.f32.mrb[0].mxu0
      %2547 = vmatprep.mubr.bf16.mxu0 0
      %2548 = vmatmul.mubr.bf16.gmra.mrb[0].mxu0 %v2385
      %v2549 = vpop.f32.mrb[0].mxu0
      %v2550 = vadd.f32 0.0, %v2549
      %v2551 = vpop.f32.mrb[0].mxu0
      %v2552 = vpop.f32.mrb[0].mxu0
      %v2553 = vadd.f32 0.0, %v2552
      %v2554 = vpop.f32.mrb[0].mxu0
      %2555 = vmatprep.mubr.bf16.mxu0 0
      %2556 = vmatmul.mubr.bf16.gmra.mrb[0].mxu0 %v2386
      %v2557 = vpop.f32.mrb[0].mxu0
      %v2558 = vadd.f32 0.0, %v2557
      %v2559 = vpop.f32.mrb[0].mxu0
      %v2560 = vpop.f32.mrb[0].mxu0
      %v2561 = vadd.f32 0.0, %v2560
      %v2562 = vpop.f32.mrb[0].mxu0
      %2563 = vmatprep.mubr.bf16.mxu0 0
      %2564 = vmatmul.mubr.bf16.gmra.mrb[0].mxu0 %v2387
      %v2565 = vpop.f32.mrb[0].mxu0
      %v2566 = vadd.f32 0.0, %v2565
      %v2567 = vpop.f32.mrb[0].mxu0
      %v2568 = vpop.f32.mrb[0].mxu0
      %v2569 = vadd.f32 0.0, %v2568
      %v2570 = vpop.f32.mrb[0].mxu0
      %2571 = vmatprep.mubr.bf16.mxu0 0
      %2572 = vmatmul.mubr.bf16.gmra.mrb[0].mxu0 %v2388
      %v2573 = vpop.f32.mrb[0].mxu0
      %v2574 = vadd.f32 0.0, %v2573
      %v2575 = vpop.f32.mrb[0].mxu0
      %v2576 = vpop.f32.mrb[0].mxu0
      %v2577 = vadd.f32 0.0, %v2576
      %v2578 = vpop.f32.mrb[0].mxu0
      %2579 = vmatprep.mubr.bf16.mxu0 0
      %2580 = vmatmul.mubr.bf16.gmra.mrb[0].mxu0 %v2389
      %v2581 = vpop.f32.mrb[0].mxu0
      %v2582 = vadd.f32 0.0, %v2581
      %v2583 = vpop.f32.mrb[0].mxu0
      %v2584 = vpop.f32.mrb[0].mxu0
      %v2585 = vadd.f32 0.0, %v2584
      %v2586 = vpop.f32.mrb[0].mxu0
      %2587 = vmatprep.mubr.bf16.mxu0 0
      %2588 = vmatmul.mubr.bf16.gmra.mrb[0].mxu0 %v2390
      %v2589 = vpop.f32.mrb[0].mxu0
      %v2590 = vadd.f32 0.0, %v2589
      %v2591 = vpop.f32.mrb[0].mxu0
      %v2592 = vpop.f32.mrb[0].mxu0
      %v2593 = vadd.f32 0.0, %v2592
      %v2594 = vpop.f32.mrb[0].mxu0
      %2595 = vmatprep.mubr.bf16.mxu0 0
      %2596 = vmatmul.mubr.bf16.gmra.mrb[0].mxu0 %v2391
      %v2597 = vpop.f32.mrb[0].mxu0
      %v2598 = vadd.f32 0.0, %v2597
      %v2599 = vpop.f32.mrb[0].mxu0
      %v2600 = vpop.f32.mrb[0].mxu0
      %v2601 = vadd.f32 0.0, %v2600
      %v2602 = vpop.f32.mrb[0].mxu0
      %2603 = vmatprep.mubr.bf16.mxu0 0
      %2604 = vmatmul.mubr.bf16.gmra.mrb[0].mxu0 %v2392
      %v2605 = vpop.f32.mrb[0].mxu0
      %v2606 = vadd.f32 0.0, %v2605
      %v2607 = vpop.f32.mrb[0].mxu0
      %v2608 = vpop.f32.mrb[0].mxu0
      %v2609 = vadd.f32 0.0, %v2608
      %v2610 = vpop.f32.mrb[0].mxu0
      %2611 = vmatprep.mubr.bf16.mxu0 0
      %2612 = vmatmul.mubr.bf16.gmra.mrb[0].mxu0 %v2393
      %v2613 = vpop.f32.mrb[0].mxu0
      %v2614 = vadd.f32 0.0, %v2613
      %v2615 = vpop.f32.mrb[0].mxu0
      %v2616 = vpop.f32.mrb[0].mxu0
      %v2617 = vadd.f32 0.0, %v2616
      %v2618 = vpop.f32.mrb[0].mxu0
      %2619 = vdwg.mxu0
      %v2620 = vadd.f32 %v2314, %v2494
      %v2621 = vadd.f32 %v2315, %v2497
      %v2622 = vadd.f32 %v2316, %v2502
      %v2623 = vadd.f32 %v2317, %v2505
      %v2624 = vadd.f32 %v2318, %v2510
      %v2625 = vadd.f32 %v2319, %v2513
      %v2626 = vadd.f32 %v2320, %v2518
      %v2627 = vadd.f32 %v2321, %v2521
      %v2628 = vadd.f32 %v2322, %v2526
      %v2629 = vadd.f32 %v2323, %v2529
      %v2630 = vadd.f32 %v2324, %v2534
      %v2631 = vadd.f32 %v2325, %v2537
      %v2632 = vadd.f32 %v2326, %v2542
      %v2633 = vadd.f32 %v2327, %v2545
      %v2634 = vadd.f32 %v2328, %v2550
      %v2635 = vadd.f32 %v2329, %v2553
      %v2636 = vadd.f32 %v2330, %v2558
      %v2637 = vadd.f32 %v2331, %v2561
      %v2638 = vadd.f32 %v2332, %v2566
      %v2639 = vadd.f32 %v2333, %v2569
      %v2640 = vadd.f32 %v2334, %v2574
      %v2641 = vadd.f32 %v2335, %v2577
      %v2642 = vadd.f32 %v2336, %v2582
      %v2643 = vadd.f32 %v2337, %v2585
      %v2644 = vadd.f32 %v2338, %v2590
      %v2645 = vadd.f32 %v2339, %v2593
      %v2646 = vadd.f32 %v2340, %v2598
      %v2647 = vadd.f32 %v2341, %v2601
      %v2648 = vadd.f32 %v2342, %v2606
      %v2649 = vadd.f32 %v2343, %v2609
      %v2650 = vadd.f32 %v2344, %v2614
      %v2651 = vadd.f32 %v2345, %v2617
      %v2652 = vld [vmem:[#allocation2 + $0x19] sm:$0xff]
      %v2653 = vld [vmem:[#allocation2 + $0x21] sm:$0xff]
      %v2654 = vld [vmem:[#allocation2 + $0x29] sm:$0xff]
      %v2655 = vld [vmem:[#allocation2 + $0x31] sm:$0xff]
      %v2656 = vld [vmem:[#allocation2 + $0x39] sm:$0xff]
      %v2657 = vld [vmem:[#allocation2 + $0x41] sm:$0xff]
      %v2658 = vld [vmem:[#allocation2 + $0x49] sm:$0xff]
      %v2659 = vld [vmem:[#allocation2 + $0x51] sm:$0xff]
      %v2660 = vld [vmem:[#allocation2 + $0x59] sm:$0xff]
      %v2661 = vld [vmem:[#allocation2 + $0x61] sm:$0xff]
      %v2662 = vld [vmem:[#allocation2 + $0x69] sm:$0xff]
      %v2663 = vld [vmem:[#allocation2 + $0x71] sm:$0xff]
      %v2664 = vld [vmem:[#allocation2 + $0x79] sm:$0xff]
      %v2665 = vld [vmem:[#allocation2 + $0x81] sm:$0xff]
      %v2666 = vld [vmem:[#allocation2 + $0x89] sm:$0xff]
      %v2667 = vld [vmem:[#allocation2 + $0x91] sm:$0xff]
      %v2668 = vld [vmem:[#allocation2 + $0x99] sm:$0xff]
      %v2669 = vld [vmem:[#allocation2 + $0xa1] sm:$0xff]
      %v2670 = vld [vmem:[#allocation2 + $0xa9] sm:$0xff]
      %v2671 = vld [vmem:[#allocation2 + $0xb1] sm:$0xff]
      %v2672 = vld [vmem:[#allocation2 + $0xb9] sm:$0xff]
      %v2673 = vld [vmem:[#allocation2 + $0xc1] sm:$0xff]
      %v2674 = vld [vmem:[#allocation2 + $0xc9] sm:$0xff]
      %v2675 = vld [vmem:[#allocation2 + $0xd1] sm:$0xff]
      %v2676 = vld [vmem:[#allocation2 + $0xd9] sm:$0xff]
      %v2677 = vld [vmem:[#allocation2 + $0xe1] sm:$0xff]
      %v2678 = vld [vmem:[#allocation2 + $0xe9] sm:$0xff]
      %v2679 = vld [vmem:[#allocation2 + $0xf1] sm:$0xff]
      %v2680 = vld [vmem:[#allocation2 + $0xf9] sm:$0xff]
      %v2681 = vld [vmem:[#allocation2 + $0x101] sm:$0xff]
      %v2682 = vld [vmem:[#allocation2 + $0x109] sm:$0xff]
      %v2683 = vld [vmem:[#allocation2 + $0x111] sm:$0xff]
      %v2684 = vsel %vm1670, %v2652, 0.0
      %v2685 = vsel %vm1671, %v2653, 0.0
      %v2686 = vsel %vm1672, %v2654, 0.0
      %v2687 = vsel %vm1673, %v2655, 0.0
      %v2688 = vsel %vm1674, %v2656, 0.0
      %v2689 = vsel %vm1675, %v2657, 0.0
      %v2690 = vsel %vm1676, %v2658, 0.0
      %v2691 = vsel %vm1677, %v2659, 0.0
      %v2692 = vsel %vm1678, %v2660, 0.0
      %v2693 = vsel %vm1679, %v2661, 0.0
      %v2694 = vsel %vm1680, %v2662, 0.0
      %v2695 = vsel %vm1681, %v2663, 0.0
      %v2696 = vsel %vm1682, %v2664, 0.0
      %v2697 = vsel %vm1683, %v2665, 0.0
      %v2698 = vsel %vm1684, %v2666, 0.0
      %v2699 = vsel %vm1685, %v2667, 0.0
      %v2700 = vsel %vm1686, %v2668, 0.0
      %v2701 = vsel %vm1687, %v2669, 0.0
      %v2702 = vsel %vm1688, %v2670, 0.0
      %v2703 = vsel %vm1689, %v2671, 0.0
      %v2704 = vsel %vm1690, %v2672, 0.0
      %v2705 = vsel %vm1691, %v2673, 0.0
      %v2706 = vsel %vm1692, %v2674, 0.0
      %v2707 = vsel %vm1693, %v2675, 0.0
      %v2708 = vsel %vm1694, %v2676, 0.0
      %v2709 = vsel %vm1695, %v2677, 0.0
      %v2710 = vsel %vm1696, %v2678, 0.0
      %v2711 = vsel %vm1697, %v2679, 0.0
      %v2712 = vsel %vm1698, %v2680, 0.0
      %v2713 = vsel %vm1699, %v2681, 0.0
      %v2714 = vsel %vm1700, %v2682, 0.0
      %v2715 = vsel %vm1701, %v2683, 0.0
      %v2716 = vpack.c.bf16 %v2685, %v2684
      %v2717 = vpack.c.bf16 %v2687, %v2686
      %v2718 = vpack.c.bf16 %v2689, %v2688
      %v2719 = vpack.c.bf16 %v2691, %v2690
      %v2720 = vpack.c.bf16 %v2693, %v2692
      %v2721 = vpack.c.bf16 %v2695, %v2694
      %v2722 = vpack.c.bf16 %v2697, %v2696
      %v2723 = vpack.c.bf16 %v2699, %v2698
      %v2724 = vpack.c.bf16 %v2701, %v2700
      %v2725 = vpack.c.bf16 %v2703, %v2702
      %v2726 = vpack.c.bf16 %v2705, %v2704
      %v2727 = vpack.c.bf16 %v2707, %v2706
      %v2728 = vpack.c.bf16 %v2709, %v2708
      %v2729 = vpack.c.bf16 %v2711, %v2710
      %v2730 = vpack.c.bf16 %v2713, %v2712
      %v2731 = vpack.c.bf16 %v2715, %v2714
      %s2732 = scalar_lea.vmem %s1, 320
      %v2733 = vld [vmem:[%s2732] sm:$0xf]
      %v2734 = vld [vmem:[%s2732 + $0x4] sm:$0xf]
      %v2735 = vld [vmem:[%s2732 + $0x8] sm:$0xf]
      %v2736 = vld [vmem:[%s2732 + $0xc] sm:$0xf]
      %v2737 = vld [vmem:[%s2732 + $0x10] sm:$0xf]
      %v2738 = vld [vmem:[%s2732 + $0x14] sm:$0xf]
      %v2739 = vld [vmem:[%s2732 + $0x18] sm:$0xf]
      %v2740 = vld [vmem:[%s2732 + $0x1c] sm:$0xf]
      %v2741 = vld [vmem:[%s2732 + $0x20] sm:$0xf]
      %v2742 = vld [vmem:[%s2732 + $0x24] sm:$0xf]
      %v2743 = vld [vmem:[%s2732 + $0x28] sm:$0xf]
      %v2744 = vld [vmem:[%s2732 + $0x2c] sm:$0xf]
      %v2745 = vld [vmem:[%s2732 + $0x30] sm:$0xf]
      %v2746 = vld [vmem:[%s2732 + $0x34] sm:$0xf]
      %v2747 = vld [vmem:[%s2732 + $0x38] sm:$0xf]
      %v2748 = vld [vmem:[%s2732 + $0x3c] sm:$0xf]
      %v2765 = vunpack.c.l.b16 %v2733
      %v2766 = vunpack.c.l.b16 %v2734
      %v2767 = vunpack.c.l.b16 %v2735
      %v2768 = vunpack.c.l.b16 %v2736
      %v2769 = vunpack.c.l.b16 %v2737
      %v2770 = vunpack.c.l.b16 %v2738
      %v2771 = vunpack.c.l.b16 %v2739
      %v2772 = vunpack.c.l.b16 %v2740
      %v2773 = vunpack.c.l.b16 %v2741
      %v2774 = vunpack.c.l.b16 %v2742
      %v2775 = vunpack.c.l.b16 %v2743
      %v2776 = vunpack.c.l.b16 %v2744
      %v2777 = vunpack.c.l.b16 %v2745
      %v2778 = vunpack.c.l.b16 %v2746
      %v2779 = vunpack.c.l.b16 %v2747
      %v2780 = vunpack.c.l.b16 %v2748
      %v2781 = vpack.c.b16 %v2766, %v2765
      %v2782 = vpack.c.b16 %v2768, %v2767
      %v2783 = vpack.c.b16 %v2770, %v2769
      %v2784 = vpack.c.b16 %v2772, %v2771
      %v2785 = vpack.c.b16 %v2774, %v2773
      %v2786 = vpack.c.b16 %v2776, %v2775
      %v2787 = vpack.c.b16 %v2778, %v2777
      %v2788 = vpack.c.b16 %v2780, %v2779
      %2797 = vmatprep.subr.bf16.mxu0 0
      %2798 = vmatpush1.bf16.msra.mxu0 %v2781
      %2799 = vmatprep.subr.bf16.mxu0 0
      %2800 = vmatpush1.bf16.msra.mxu0 %v2782
      %2801 = vmatprep.subr.bf16.mxu0 0
      %2802 = vmatpush1.bf16.msra.mxu0 %v2783
      %2803 = vmatprep.subr.bf16.mxu0 0
      %2804 = vmatpush1.bf16.msra.mxu0 %v2784
      %2805 = vmatprep.subr.bf16.mxu0 0
      %2806 = vmatpush1.bf16.msra.mxu0 %v2785
      %2807 = vmatprep.subr.bf16.mxu0 0
      %2808 = vmatpush1.bf16.msra.mxu0 %v2786
      %2809 = vmatprep.subr.bf16.mxu0 0
      %2810 = vmatpush1.bf16.msra.mxu0 %v2787
      %2811 = vmatprep.subr.bf16.mxu0 0
      %2812 = vmatpush1.bf16.msra.mxu0 %v2788
      %2813 = vmatprep.subr.bf16.mxu0 0
      %2814 = vmatpush1.bf16.msra.mxu0 0
      %2815 = vmatprep.subr.bf16.mxu0 0
      %2816 = vmatpush1.bf16.msra.mxu0 0
      %2817 = vmatprep.subr.bf16.mxu0 0
      %2818 = vmatpush1.bf16.msra.mxu0 0
      %2819 = vmatprep.subr.bf16.mxu0 0
      %2820 = vmatpush1.bf16.msra.mxu0 0
      %2821 = vmatprep.subr.bf16.mxu0 0
      %2822 = vmatpush1.bf16.msra.mxu0 0
      %2823 = vmatprep.subr.bf16.mxu0 0
      %2824 = vmatpush1.bf16.msra.mxu0 0
      %2825 = vmatprep.subr.bf16.mxu0 0
      %2826 = vmatpush1.bf16.msra.mxu0 0
      %2827 = vmatprep.subr.bf16.mxu0 0
      %2828 = vmatpush1.bf16.msra.mxu0 0
      %2829 = vmatprep.mubr.bf16.mxu0 0
      %2830 = vmatmul.mubr.bf16.gmra.mrb[0].mxu0 %v2716
      %v2831 = vpop.f32.mrb[0].mxu0
      %v2832 = vadd.f32 0.0, %v2831
      %v2833 = vpop.f32.mrb[0].mxu0
      %v2834 = vpop.f32.mrb[0].mxu0
      %v2835 = vadd.f32 0.0, %v2834
      %v2836 = vpop.f32.mrb[0].mxu0
      %2837 = vmatprep.mubr.bf16.mxu0 0
      %2838 = vmatmul.mubr.bf16.gmra.mrb[0].mxu0 %v2717
      %v2839 = vpop.f32.mrb[0].mxu0
      %v2840 = vadd.f32 0.0, %v2839
      %v2841 = vpop.f32.mrb[0].mxu0
      %v2842 = vpop.f32.mrb[0].mxu0
      %v2843 = vadd.f32 0.0, %v2842
      %v2844 = vpop.f32.mrb[0].mxu0
      %2845 = vmatprep.mubr.bf16.mxu0 0
      %2846 = vmatmul.mubr.bf16.gmra.mrb[0].mxu0 %v2718
      %v2847 = vpop.f32.mrb[0].mxu0
      %v2848 = vadd.f32 0.0, %v2847
      %v2849 = vpop.f32.mrb[0].mxu0
      %v2850 = vpop.f32.mrb[0].mxu0
      %v2851 = vadd.f32 0.0, %v2850
      %v2852 = vpop.f32.mrb[0].mxu0
      %2853 = vmatprep.mubr.bf16.mxu0 0
      %2854 = vmatmul.mubr.bf16.gmra.mrb[0].mxu0 %v2719
      %v2855 = vpop.f32.mrb[0].mxu0
      %v2856 = vadd.f32 0.0, %v2855
      %v2857 = vpop.f32.mrb[0].mxu0
      %v2858 = vpop.f32.mrb[0].mxu0
      %v2859 = vadd.f32 0.0, %v2858
      %v2860 = vpop.f32.mrb[0].mxu0
      %2861 = vmatprep.mubr.bf16.mxu0 0
      %2862 = vmatmul.mubr.bf16.gmra.mrb[0].mxu0 %v2720
      %v2863 = vpop.f32.mrb[0].mxu0
      %v2864 = vadd.f32 0.0, %v2863
      %v2865 = vpop.f32.mrb[0].mxu0
      %v2866 = vpop.f32.mrb[0].mxu0
      %v2867 = vadd.f32 0.0, %v2866
      %v2868 = vpop.f32.mrb[0].mxu0
      %2869 = vmatprep.mubr.bf16.mxu0 0
      %2870 = vmatmul.mubr.bf16.gmra.mrb[0].mxu0 %v2721
      %v2871 = vpop.f32.mrb[0].mxu0
      %v2872 = vadd.f32 0.0, %v2871
      %v2873 = vpop.f32.mrb[0].mxu0
      %v2874 = vpop.f32.mrb[0].mxu0
      %v2875 = vadd.f32 0.0, %v2874
      %v2876 = vpop.f32.mrb[0].mxu0
      %2877 = vmatprep.mubr.bf16.mxu0 0
      %2878 = vmatmul.mubr.bf16.gmra.mrb[0].mxu0 %v2722
      %v2879 = vpop.f32.mrb[0].mxu0
      %v2880 = vadd.f32 0.0, %v2879
      %v2881 = vpop.f32.mrb[0].mxu0
      %v2882 = vpop.f32.mrb[0].mxu0
      %v2883 = vadd.f32 0.0, %v2882
      %v2884 = vpop.f32.mrb[0].mxu0
      %2885 = vmatprep.mubr.bf16.mxu0 0
      %2886 = vmatmul.mubr.bf16.gmra.mrb[0].mxu0 %v2723
      %v2887 = vpop.f32.mrb[0].mxu0
      %v2888 = vadd.f32 0.0, %v2887
      %v2889 = vpop.f32.mrb[0].mxu0
      %v2890 = vpop.f32.mrb[0].mxu0
      %v2891 = vadd.f32 0.0, %v2890
      %v2892 = vpop.f32.mrb[0].mxu0
      %2893 = vmatprep.mubr.bf16.mxu0 0
      %2894 = vmatmul.mubr.bf16.gmra.mrb[0].mxu0 %v2724
      %v2895 = vpop.f32.mrb[0].mxu0
      %v2896 = vadd.f32 0.0, %v2895
      %v2897 = vpop.f32.mrb[0].mxu0
      %v2898 = vpop.f32.mrb[0].mxu0
      %v2899 = vadd.f32 0.0, %v2898
      %v2900 = vpop.f32.mrb[0].mxu0
      %2901 = vmatprep.mubr.bf16.mxu0 0
      %2902 = vmatmul.mubr.bf16.gmra.mrb[0].mxu0 %v2725
      %v2903 = vpop.f32.mrb[0].mxu0
      %v2904 = vadd.f32 0.0, %v2903
      %v2905 = vpop.f32.mrb[0].mxu0
      %v2906 = vpop.f32.mrb[0].mxu0
      %v2907 = vadd.f32 0.0, %v2906
      %v2908 = vpop.f32.mrb[0].mxu0
      %2909 = vmatprep.mubr.bf16.mxu0 0
      %2910 = vmatmul.mubr.bf16.gmra.mrb[0].mxu0 %v2726
      %v2911 = vpop.f32.mrb[0].mxu0
      %v2912 = vadd.f32 0.0, %v2911
      %v2913 = vpop.f32.mrb[0].mxu0
      %v2914 = vpop.f32.mrb[0].mxu0
      %v2915 = vadd.f32 0.0, %v2914
      %v2916 = vpop.f32.mrb[0].mxu0
      %2917 = vmatprep.mubr.bf16.mxu0 0
      %2918 = vmatmul.mubr.bf16.gmra.mrb[0].mxu0 %v2727
      %v2919 = vpop.f32.mrb[0].mxu0
      %v2920 = vadd.f32 0.0, %v2919
      %v2921 = vpop.f32.mrb[0].mxu0
      %v2922 = vpop.f32.mrb[0].mxu0
      %v2923 = vadd.f32 0.0, %v2922
      %v2924 = vpop.f32.mrb[0].mxu0
      %2925 = vmatprep.mubr.bf16.mxu0 0
      %2926 = vmatmul.mubr.bf16.gmra.mrb[0].mxu0 %v2728
      %v2927 = vpop.f32.mrb[0].mxu0
      %v2928 = vadd.f32 0.0, %v2927
      %v2929 = vpop.f32.mrb[0].mxu0
      %v2930 = vpop.f32.mrb[0].mxu0
      %v2931 = vadd.f32 0.0, %v2930
      %v2932 = vpop.f32.mrb[0].mxu0
      %2933 = vmatprep.mubr.bf16.mxu0 0
      %2934 = vmatmul.mubr.bf16.gmra.mrb[0].mxu0 %v2729
      %v2935 = vpop.f32.mrb[0].mxu0
      %v2936 = vadd.f32 0.0, %v2935
      %v2937 = vpop.f32.mrb[0].mxu0
      %v2938 = vpop.f32.mrb[0].mxu0
      %v2939 = vadd.f32 0.0, %v2938
      %v2940 = vpop.f32.mrb[0].mxu0
      %2941 = vmatprep.mubr.bf16.mxu0 0
      %2942 = vmatmul.mubr.bf16.gmra.mrb[0].mxu0 %v2730
      %v2943 = vpop.f32.mrb[0].mxu0
      %v2944 = vadd.f32 0.0, %v2943
      %v2945 = vpop.f32.mrb[0].mxu0
      %v2946 = vpop.f32.mrb[0].mxu0
      %v2947 = vadd.f32 0.0, %v2946
      %v2948 = vpop.f32.mrb[0].mxu0
      %2949 = vmatprep.mubr.bf16.mxu0 0
      %2950 = vmatmul.mubr.bf16.gmra.mrb[0].mxu0 %v2731
      %v2951 = vpop.f32.mrb[0].mxu0
      %v2952 = vadd.f32 0.0, %v2951
      %v2953 = vpop.f32.mrb[0].mxu0
      %v2954 = vpop.f32.mrb[0].mxu0
      %v2955 = vadd.f32 0.0, %v2954
      %v2956 = vpop.f32.mrb[0].mxu0
      %2957 = vdwg.mxu0
      %v2958 = vadd.f32 %v2620, %v2832
      %v2959 = vadd.f32 %v2621, %v2835
      %v2960 = vadd.f32 %v2622, %v2840
      %v2961 = vadd.f32 %v2623, %v2843
      %v2962 = vadd.f32 %v2624, %v2848
      %v2963 = vadd.f32 %v2625, %v2851
      %v2964 = vadd.f32 %v2626, %v2856
      %v2965 = vadd.f32 %v2627, %v2859
      %v2966 = vadd.f32 %v2628, %v2864
      %v2967 = vadd.f32 %v2629, %v2867
      %v2968 = vadd.f32 %v2630, %v2872
      %v2969 = vadd.f32 %v2631, %v2875
      %v2970 = vadd.f32 %v2632, %v2880
      %v2971 = vadd.f32 %v2633, %v2883
      %v2972 = vadd.f32 %v2634, %v2888
      %v2973 = vadd.f32 %v2635, %v2891
      %v2974 = vadd.f32 %v2636, %v2896
      %v2975 = vadd.f32 %v2637, %v2899
      %v2976 = vadd.f32 %v2638, %v2904
      %v2977 = vadd.f32 %v2639, %v2907
      %v2978 = vadd.f32 %v2640, %v2912
      %v2979 = vadd.f32 %v2641, %v2915
      %v2980 = vadd.f32 %v2642, %v2920
      %v2981 = vadd.f32 %v2643, %v2923
      %v2982 = vadd.f32 %v2644, %v2928
      %v2983 = vadd.f32 %v2645, %v2931
      %v2984 = vadd.f32 %v2646, %v2936
      %v2985 = vadd.f32 %v2647, %v2939
      %v2986 = vadd.f32 %v2648, %v2944
      %v2987 = vadd.f32 %v2649, %v2947
      %v2988 = vadd.f32 %v2650, %v2952
      %v2989 = vadd.f32 %v2651, %v2955
      %v2990 = vld [vmem:[#allocation2 + $0x27] sm:$0xff]
      %v2991 = vld [vmem:[#allocation2 + $0x2f] sm:$0xff]
      %v2992 = vld [vmem:[#allocation2 + $0x37] sm:$0xff]
      %v2993 = vld [vmem:[#allocation2 + $0x3f] sm:$0xff]
      %v2994 = vld [vmem:[#allocation2 + $0x47] sm:$0xff]
      %v2995 = vld [vmem:[#allocation2 + $0x4f] sm:$0xff]
      %v2996 = vld [vmem:[#allocation2 + $0x57] sm:$0xff]
      %v2997 = vld [vmem:[#allocation2 + $0x5f] sm:$0xff]
      %v2998 = vld [vmem:[#allocation2 + $0x67] sm:$0xff]
      %v2999 = vld [vmem:[#allocation2 + $0x6f] sm:$0xff]
      %v3000 = vld [vmem:[#allocation2 + $0x77] sm:$0xff]
      %v3001 = vld [vmem:[#allocation2 + $0x7f] sm:$0xff]
      %v3002 = vld [vmem:[#allocation2 + $0x87] sm:$0xff]
      %v3003 = vld [vmem:[#allocation2 + $0x8f] sm:$0xff]
      %v3004 = vld [vmem:[#allocation2 + $0x97] sm:$0xff]
      %v3005 = vld [vmem:[#allocation2 + $0x9f] sm:$0xff]
      %v3006 = vld [vmem:[#allocation2 + $0xa7] sm:$0xff]
      %v3007 = vld [vmem:[#allocation2 + $0xaf] sm:$0xff]
      %v3008 = vld [vmem:[#allocation2 + $0xb7] sm:$0xff]
      %v3009 = vld [vmem:[#allocation2 + $0xbf] sm:$0xff]
      %v3010 = vld [vmem:[#allocation2 + $0xc7] sm:$0xff]
      %v3011 = vld [vmem:[#allocation2 + $0xcf] sm:$0xff]
      %v3012 = vld [vmem:[#allocation2 + $0xd7] sm:$0xff]
      %v3013 = vld [vmem:[#allocation2 + $0xdf] sm:$0xff]
      %v3014 = vld [vmem:[#allocation2 + $0xe7] sm:$0xff]
      %v3015 = vld [vmem:[#allocation2 + $0xef] sm:$0xff]
      %v3016 = vld [vmem:[#allocation2 + $0xf7] sm:$0xff]
      %v3017 = vld [vmem:[#allocation2 + $0xff] sm:$0xff]
      %v3018 = vld [vmem:[#allocation2 + $0x107] sm:$0xff]
      %v3019 = vld [vmem:[#allocation2 + $0x10f] sm:$0xff]
      %v3020 = vld [vmem:[#allocation2 + $0x117] sm:$0xff]
      %v3021 = vld [vmem:[#allocation2 + $0x11f] sm:$0xff]
      %v3022 = vsel %vm1027, %v2990, 0.0
      %v3023 = vsel %vm1028, %v2991, 0.0
      %v3024 = vsel %vm1029, %v2992, 0.0
      %v3025 = vsel %vm1030, %v2993, 0.0
      %v3026 = vsel %vm1031, %v2994, 0.0
      %v3027 = vsel %vm1032, %v2995, 0.0
      %v3028 = vsel %vm1033, %v2996, 0.0
      %v3029 = vsel %vm1034, %v2997, 0.0
      %v3030 = vsel %vm1035, %v2998, 0.0
      %v3031 = vsel %vm1036, %v2999, 0.0
      %v3032 = vsel %vm1037, %v3000, 0.0
      %v3033 = vsel %vm1038, %v3001, 0.0
      %v3034 = vsel %vm1039, %v3002, 0.0
      %v3035 = vsel %vm1040, %v3003, 0.0
      %v3036 = vsel %vm1041, %v3004, 0.0
      %v3037 = vsel %vm1042, %v3005, 0.0
      %v3038 = vsel %vm1043, %v3006, 0.0
      %v3039 = vsel %vm1044, %v3007, 0.0
      %v3040 = vsel %vm1045, %v3008, 0.0
      %v3041 = vsel %vm1046, %v3009, 0.0
      %v3042 = vsel %vm1047, %v3010, 0.0
      %v3043 = vsel %vm1048, %v3011, 0.0
      %v3044 = vsel %vm1049, %v3012, 0.0
      %v3045 = vsel %vm1050, %v3013, 0.0
      %v3046 = vsel %vm1051, %v3014, 0.0
      %v3047 = vsel %vm1052, %v3015, 0.0
      %v3048 = vsel %vm1053, %v3016, 0.0
      %v3049 = vsel %vm1054, %v3017, 0.0
      %v3050 = vsel %vm1055, %v3018, 0.0
      %v3051 = vsel %vm1056, %v3019, 0.0
      %v3052 = vsel %vm1057, %v3020, 0.0
      %v3053 = vsel %vm1058, %v3021, 0.0
      %v3054 = vpack.c.bf16 %v3023, %v3022
      %v3055 = vpack.c.bf16 %v3025, %v3024
      %v3056 = vpack.c.bf16 %v3027, %v3026
      %v3057 = vpack.c.bf16 %v3029, %v3028
      %v3058 = vpack.c.bf16 %v3031, %v3030
      %v3059 = vpack.c.bf16 %v3033, %v3032
      %v3060 = vpack.c.bf16 %v3035, %v3034
      %v3061 = vpack.c.bf16 %v3037, %v3036
      %v3062 = vpack.c.bf16 %v3039, %v3038
      %v3063 = vpack.c.bf16 %v3041, %v3040
      %v3064 = vpack.c.bf16 %v3043, %v3042
      %v3065 = vpack.c.bf16 %v3045, %v3044
      %v3066 = vpack.c.bf16 %v3047, %v3046
      %v3067 = vpack.c.bf16 %v3049, %v3048
      %v3068 = vpack.c.bf16 %v3051, %v3050
      %v3069 = vpack.c.bf16 %v3053, %v3052
      %s3070 = scalar_lea.vmem %s1, 384
      %v3071 = vld [vmem:[%s3070] sm:$0xf]
      %v3072 = vld [vmem:[%s3070 + $0x4] sm:$0xf]
      %v3073 = vld [vmem:[%s3070 + $0x8] sm:$0xf]
      %v3074 = vld [vmem:[%s3070 + $0xc] sm:$0xf]
      %v3075 = vld [vmem:[%s3070 + $0x10] sm:$0xf]
      %v3076 = vld [vmem:[%s3070 + $0x14] sm:$0xf]
      %v3077 = vld [vmem:[%s3070 + $0x18] sm:$0xf]
      %v3078 = vld [vmem:[%s3070 + $0x1c] sm:$0xf]
      %v3079 = vld [vmem:[%s3070 + $0x20] sm:$0xf]
      %v3080 = vld [vmem:[%s3070 + $0x24] sm:$0xf]
      %v3081 = vld [vmem:[%s3070 + $0x28] sm:$0xf]
      %v3082 = vld [vmem:[%s3070 + $0x2c] sm:$0xf]
      %v3083 = vld [vmem:[%s3070 + $0x30] sm:$0xf]
      %v3084 = vld [vmem:[%s3070 + $0x34] sm:$0xf]
      %v3085 = vld [vmem:[%s3070 + $0x38] sm:$0xf]
      %v3086 = vld [vmem:[%s3070 + $0x3c] sm:$0xf]
      %v3103 = vunpack.c.l.b16 %v3071
      %v3104 = vunpack.c.l.b16 %v3072
      %v3105 = vunpack.c.l.b16 %v3073
      %v3106 = vunpack.c.l.b16 %v3074
      %v3107 = vunpack.c.l.b16 %v3075
      %v3108 = vunpack.c.l.b16 %v3076
      %v3109 = vunpack.c.l.b16 %v3077
      %v3110 = vunpack.c.l.b16 %v3078
      %v3111 = vunpack.c.l.b16 %v3079
      %v3112 = vunpack.c.l.b16 %v3080
      %v3113 = vunpack.c.l.b16 %v3081
      %v3114 = vunpack.c.l.b16 %v3082
      %v3115 = vunpack.c.l.b16 %v3083
      %v3116 = vunpack.c.l.b16 %v3084
      %v3117 = vunpack.c.l.b16 %v3085
      %v3118 = vunpack.c.l.b16 %v3086
      %v3119 = vpack.c.b16 %v3104, %v3103
      %v3120 = vpack.c.b16 %v3106, %v3105
      %v3121 = vpack.c.b16 %v3108, %v3107
      %v3122 = vpack.c.b16 %v3110, %v3109
      %v3123 = vpack.c.b16 %v3112, %v3111
      %v3124 = vpack.c.b16 %v3114, %v3113
      %v3125 = vpack.c.b16 %v3116, %v3115
      %v3126 = vpack.c.b16 %v3118, %v3117
      %3135 = vmatprep.subr.bf16.mxu0 0
      %3136 = vmatpush1.bf16.msra.mxu0 %v3119
      %3137 = vmatprep.subr.bf16.mxu0 0
      %3138 = vmatpush1.bf16.msra.mxu0 %v3120
      %3139 = vmatprep.subr.bf16.mxu0 0
      %3140 = vmatpush1.bf16.msra.mxu0 %v3121
      %3141 = vmatprep.subr.bf16.mxu0 0
      %3142 = vmatpush1.bf16.msra.mxu0 %v3122
      %3143 = vmatprep.subr.bf16.mxu0 0
      %3144 = vmatpush1.bf16.msra.mxu0 %v3123
      %3145 = vmatprep.subr.bf16.mxu0 0
      %3146 = vmatpush1.bf16.msra.mxu0 %v3124
      %3147 = vmatprep.subr.bf16.mxu0 0
      %3148 = vmatpush1.bf16.msra.mxu0 %v3125
      %3149 = vmatprep.subr.bf16.mxu0 0
      %3150 = vmatpush1.bf16.msra.mxu0 %v3126
      %3151 = vmatprep.subr.bf16.mxu0 0
      %3152 = vmatpush1.bf16.msra.mxu0 0
      %3153 = vmatprep.subr.bf16.mxu0 0
      %3154 = vmatpush1.bf16.msra.mxu0 0
      %3155 = vmatprep.subr.bf16.mxu0 0
      %3156 = vmatpush1.bf16.msra.mxu0 0
      %3157 = vmatprep.subr.bf16.mxu0 0
      %3158 = vmatpush1.bf16.msra.mxu0 0
      %3159 = vmatprep.subr.bf16.mxu0 0
      %3160 = vmatpush1.bf16.msra.mxu0 0
      %3161 = vmatprep.subr.bf16.mxu0 0
      %3162 = vmatpush1.bf16.msra.mxu0 0
      %3163 = vmatprep.subr.bf16.mxu0 0
      %3164 = vmatpush1.bf16.msra.mxu0 0
      %3165 = vmatprep.subr.bf16.mxu0 0
      %3166 = vmatpush1.bf16.msra.mxu0 0
      %3167 = vmatprep.mubr.bf16.mxu0 0
      %3168 = vmatmul.mubr.bf16.gmra.mrb[0].mxu0 %v3054
      %v3169 = vpop.f32.mrb[0].mxu0
      %v3170 = vadd.f32 0.0, %v3169
      %v3171 = vpop.f32.mrb[0].mxu0
      %v3172 = vpop.f32.mrb[0].mxu0
      %v3173 = vadd.f32 0.0, %v3172
      %v3174 = vpop.f32.mrb[0].mxu0
      %3175 = vmatprep.mubr.bf16.mxu0 0
      %3176 = vmatmul.mubr.bf16.gmra.mrb[0].mxu0 %v3055
      %v3177 = vpop.f32.mrb[0].mxu0
      %v3178 = vadd.f32 0.0, %v3177
      %v3179 = vpop.f32.mrb[0].mxu0
      %v3180 = vpop.f32.mrb[0].mxu0
      %v3181 = vadd.f32 0.0, %v3180
      %v3182 = vpop.f32.mrb[0].mxu0
      %3183 = vmatprep.mubr.bf16.mxu0 0
      %3184 = vmatmul.mubr.bf16.gmra.mrb[0].mxu0 %v3056
      %v3185 = vpop.f32.mrb[0].mxu0
      %v3186 = vadd.f32 0.0, %v3185
      %v3187 = vpop.f32.mrb[0].mxu0
      %v3188 = vpop.f32.mrb[0].mxu0
      %v3189 = vadd.f32 0.0, %v3188
      %v3190 = vpop.f32.mrb[0].mxu0
      %3191 = vmatprep.mubr.bf16.mxu0 0
      %3192 = vmatmul.mubr.bf16.gmra.mrb[0].mxu0 %v3057
      %v3193 = vpop.f32.mrb[0].mxu0
      %v3194 = vadd.f32 0.0, %v3193
      %v3195 = vpop.f32.mrb[0].mxu0
      %v3196 = vpop.f32.mrb[0].mxu0
      %v3197 = vadd.f32 0.0, %v3196
      %v3198 = vpop.f32.mrb[0].mxu0
      %3199 = vmatprep.mubr.bf16.mxu0 0
      %3200 = vmatmul.mubr.bf16.gmra.mrb[0].mxu0 %v3058
      %v3201 = vpop.f32.mrb[0].mxu0
      %v3202 = vadd.f32 0.0, %v3201
      %v3203 = vpop.f32.mrb[0].mxu0
      %v3204 = vpop.f32.mrb[0].mxu0
      %v3205 = vadd.f32 0.0, %v3204
      %v3206 = vpop.f32.mrb[0].mxu0
      %3207 = vmatprep.mubr.bf16.mxu0 0
      %3208 = vmatmul.mubr.bf16.gmra.mrb[0].mxu0 %v3059
      %v3209 = vpop.f32.mrb[0].mxu0
      %v3210 = vadd.f32 0.0, %v3209
      %v3211 = vpop.f32.mrb[0].mxu0
      %v3212 = vpop.f32.mrb[0].mxu0
      %v3213 = vadd.f32 0.0, %v3212
      %v3214 = vpop.f32.mrb[0].mxu0
      %3215 = vmatprep.mubr.bf16.mxu0 0
      %3216 = vmatmul.mubr.bf16.gmra.mrb[0].mxu0 %v3060
      %v3217 = vpop.f32.mrb[0].mxu0
      %v3218 = vadd.f32 0.0, %v3217
      %v3219 = vpop.f32.mrb[0].mxu0
      %v3220 = vpop.f32.mrb[0].mxu0
      %v3221 = vadd.f32 0.0, %v3220
      %v3222 = vpop.f32.mrb[0].mxu0
      %3223 = vmatprep.mubr.bf16.mxu0 0
      %3224 = vmatmul.mubr.bf16.gmra.mrb[0].mxu0 %v3061
      %v3225 = vpop.f32.mrb[0].mxu0
      %v3226 = vadd.f32 0.0, %v3225
      %v3227 = vpop.f32.mrb[0].mxu0
      %v3228 = vpop.f32.mrb[0].mxu0
      %v3229 = vadd.f32 0.0, %v3228
      %v3230 = vpop.f32.mrb[0].mxu0
      %3231 = vmatprep.mubr.bf16.mxu0 0
      %3232 = vmatmul.mubr.bf16.gmra.mrb[0].mxu0 %v3062
      %v3233 = vpop.f32.mrb[0].mxu0
      %v3234 = vadd.f32 0.0, %v3233
      %v3235 = vpop.f32.mrb[0].mxu0
      %v3236 = vpop.f32.mrb[0].mxu0
      %v3237 = vadd.f32 0.0, %v3236
      %v3238 = vpop.f32.mrb[0].mxu0
      %3239 = vmatprep.mubr.bf16.mxu0 0
      %3240 = vmatmul.mubr.bf16.gmra.mrb[0].mxu0 %v3063
      %v3241 = vpop.f32.mrb[0].mxu0
      %v3242 = vadd.f32 0.0, %v3241
      %v3243 = vpop.f32.mrb[0].mxu0
      %v3244 = vpop.f32.mrb[0].mxu0
      %v3245 = vadd.f32 0.0, %v3244
      %v3246 = vpop.f32.mrb[0].mxu0
      %3247 = vmatprep.mubr.bf16.mxu0 0
      %3248 = vmatmul.mubr.bf16.gmra.mrb[0].mxu0 %v3064
      %v3249 = vpop.f32.mrb[0].mxu0
      %v3250 = vadd.f32 0.0, %v3249
      %v3251 = vpop.f32.mrb[0].mxu0
      %v3252 = vpop.f32.mrb[0].mxu0
      %v3253 = vadd.f32 0.0, %v3252
      %v3254 = vpop.f32.mrb[0].mxu0
      %3255 = vmatprep.mubr.bf16.mxu0 0
      %3256 = vmatmul.mubr.bf16.gmra.mrb[0].mxu0 %v3065
      %v3257 = vpop.f32.mrb[0].mxu0
      %v3258 = vadd.f32 0.0, %v3257
      %v3259 = vpop.f32.mrb[0].mxu0
      %v3260 = vpop.f32.mrb[0].mxu0
      %v3261 = vadd.f32 0.0, %v3260
      %v3262 = vpop.f32.mrb[0].mxu0
      %3263 = vmatprep.mubr.bf16.mxu0 0
      %3264 = vmatmul.mubr.bf16.gmra.mrb[0].mxu0 %v3066
      %v3265 = vpop.f32.mrb[0].mxu0
      %v3266 = vadd.f32 0.0, %v3265
      %v3267 = vpop.f32.mrb[0].mxu0
      %v3268 = vpop.f32.mrb[0].mxu0
      %v3269 = vadd.f32 0.0, %v3268
      %v3270 = vpop.f32.mrb[0].mxu0
      %3271 = vmatprep.mubr.bf16.mxu0 0
      %3272 = vmatmul.mubr.bf16.gmra.mrb[0].mxu0 %v3067
      %v3273 = vpop.f32.mrb[0].mxu0
      %v3274 = vadd.f32 0.0, %v3273
      %v3275 = vpop.f32.mrb[0].mxu0
      %v3276 = vpop.f32.mrb[0].mxu0
      %v3277 = vadd.f32 0.0, %v3276
      %v3278 = vpop.f32.mrb[0].mxu0
      %3279 = vmatprep.mubr.bf16.mxu0 0
      %3280 = vmatmul.mubr.bf16.gmra.mrb[0].mxu0 %v3068
      %v3281 = vpop.f32.mrb[0].mxu0
      %v3282 = vadd.f32 0.0, %v3281
      %v3283 = vpop.f32.mrb[0].mxu0
      %v3284 = vpop.f32.mrb[0].mxu0
      %v3285 = vadd.f32 0.0, %v3284
      %v3286 = vpop.f32.mrb[0].mxu0
      %3287 = vmatprep.mubr.bf16.mxu0 0
      %3288 = vmatmul.mubr.bf16.gmra.mrb[0].mxu0 %v3069
      %v3289 = vpop.f32.mrb[0].mxu0
      %v3290 = vadd.f32 0.0, %v3289
      %v3291 = vpop.f32.mrb[0].mxu0
      %v3292 = vpop.f32.mrb[0].mxu0
      %v3293 = vadd.f32 0.0, %v3292
      %v3294 = vpop.f32.mrb[0].mxu0
      %3295 = vdwg.mxu0
      %v3296 = vadd.f32 %v2958, %v3170
      %v3297 = vadd.f32 %v2959, %v3173
      %v3298 = vadd.f32 %v2960, %v3178
      %v3299 = vadd.f32 %v2961, %v3181
      %v3300 = vadd.f32 %v2962, %v3186
      %v3301 = vadd.f32 %v2963, %v3189
      %v3302 = vadd.f32 %v2964, %v3194
      %v3303 = vadd.f32 %v2965, %v3197
      %v3304 = vadd.f32 %v2966, %v3202
      %v3305 = vadd.f32 %v2967, %v3205
      %v3306 = vadd.f32 %v2968, %v3210
      %v3307 = vadd.f32 %v2969, %v3213
      %v3308 = vadd.f32 %v2970, %v3218
      %v3309 = vadd.f32 %v2971, %v3221
      %v3310 = vadd.f32 %v2972, %v3226
      %v3311 = vadd.f32 %v2973, %v3229
      %v3312 = vadd.f32 %v2974, %v3234
      %v3313 = vadd.f32 %v2975, %v3237
      %v3314 = vadd.f32 %v2976, %v3242
      %v3315 = vadd.f32 %v2977, %v3245
      %v3316 = vadd.f32 %v2978, %v3250
      %v3317 = vadd.f32 %v2979, %v3253
      %v3318 = vadd.f32 %v2980, %v3258
      %v3319 = vadd.f32 %v2981, %v3261
      %v3320 = vadd.f32 %v2982, %v3266
      %v3321 = vadd.f32 %v2983, %v3269
      %v3322 = vadd.f32 %v2984, %v3274
      %v3323 = vadd.f32 %v2985, %v3277
      %v3324 = vadd.f32 %v2986, %v3282
      %v3325 = vadd.f32 %v2987, %v3285
      %v3326 = vadd.f32 %v2988, %v3290
      %v3327 = vadd.f32 %v2989, %v3293
      %v3328 = vld [vmem:[#allocation2 + $0x28] sm:$0xff]
      %v3329 = vld [vmem:[#allocation2 + $0x30] sm:$0xff]
      %v3330 = vld [vmem:[#allocation2 + $0x38] sm:$0xff]
      %v3331 = vld [vmem:[#allocation2 + $0x40] sm:$0xff]
      %v3332 = vld [vmem:[#allocation2 + $0x48] sm:$0xff]
      %v3333 = vld [vmem:[#allocation2 + $0x50] sm:$0xff]
      %v3334 = vld [vmem:[#allocation2 + $0x58] sm:$0xff]
      %v3335 = vld [vmem:[#allocation2 + $0x60] sm:$0xff]
      %v3336 = vld [vmem:[#allocation2 + $0x68] sm:$0xff]
      %v3337 = vld [vmem:[#allocation2 + $0x70] sm:$0xff]
      %v3338 = vld [vmem:[#allocation2 + $0x78] sm:$0xff]
      %v3339 = vld [vmem:[#allocation2 + $0x80] sm:$0xff]
      %v3340 = vld [vmem:[#allocation2 + $0x88] sm:$0xff]
      %v3341 = vld [vmem:[#allocation2 + $0x90] sm:$0xff]
      %v3342 = vld [vmem:[#allocation2 + $0x98] sm:$0xff]
      %v3343 = vld [vmem:[#allocation2 + $0xa0] sm:$0xff]
      %v3344 = vld [vmem:[#allocation2 + $0xa8] sm:$0xff]
      %v3345 = vld [vmem:[#allocation2 + $0xb0] sm:$0xff]
      %v3346 = vld [vmem:[#allocation2 + $0xb8] sm:$0xff]
      %v3347 = vld [vmem:[#allocation2 + $0xc0] sm:$0xff]
      %v3348 = vld [vmem:[#allocation2 + $0xc8] sm:$0xff]
      %v3349 = vld [vmem:[#allocation2 + $0xd0] sm:$0xff]
      %v3350 = vld [vmem:[#allocation2 + $0xd8] sm:$0xff]
      %v3351 = vld [vmem:[#allocation2 + $0xe0] sm:$0xff]
      %v3352 = vld [vmem:[#allocation2 + $0xe8] sm:$0xff]
      %v3353 = vld [vmem:[#allocation2 + $0xf0] sm:$0xff]
      %v3354 = vld [vmem:[#allocation2 + $0xf8] sm:$0xff]
      %v3355 = vld [vmem:[#allocation2 + $0x100] sm:$0xff]
      %v3356 = vld [vmem:[#allocation2 + $0x108] sm:$0xff]
      %v3357 = vld [vmem:[#allocation2 + $0x110] sm:$0xff]
      %v3358 = vld [vmem:[#allocation2 + $0x118] sm:$0xff]
      %v3359 = vld [vmem:[#allocation2 + $0x120] sm:$0xff]
      %v3360 = vpack.c.bf16 %v3329, %v3328
      %v3361 = vpack.c.bf16 %v3331, %v3330
      %v3362 = vpack.c.bf16 %v3333, %v3332
      %v3363 = vpack.c.bf16 %v3335, %v3334
      %v3364 = vpack.c.bf16 %v3337, %v3336
      %v3365 = vpack.c.bf16 %v3339, %v3338
      %v3366 = vpack.c.bf16 %v3341, %v3340
      %v3367 = vpack.c.bf16 %v3343, %v3342
      %v3368 = vpack.c.bf16 %v3345, %v3344
      %v3369 = vpack.c.bf16 %v3347, %v3346
      %v3370 = vpack.c.bf16 %v3349, %v3348
      %v3371 = vpack.c.bf16 %v3351, %v3350
      %v3372 = vpack.c.bf16 %v3353, %v3352
      %v3373 = vpack.c.bf16 %v3355, %v3354
      %v3374 = vpack.c.bf16 %v3357, %v3356
      %v3375 = vpack.c.bf16 %v3359, %v3358
      %s3376 = scalar_lea.vmem %s1, 448
      %v3377 = vld [vmem:[%s3376] sm:$0xf]
      %v3378 = vld [vmem:[%s3376 + $0x4] sm:$0xf]
      %v3379 = vld [vmem:[%s3376 + $0x8] sm:$0xf]
      %v3380 = vld [vmem:[%s3376 + $0xc] sm:$0xf]
      %v3381 = vld [vmem:[%s3376 + $0x10] sm:$0xf]
      %v3382 = vld [vmem:[%s3376 + $0x14] sm:$0xf]
      %v3383 = vld [vmem:[%s3376 + $0x18] sm:$0xf]
      %v3384 = vld [vmem:[%s3376 + $0x1c] sm:$0xf]
      %v3385 = vld [vmem:[%s3376 + $0x20] sm:$0xf]
      %v3386 = vld [vmem:[%s3376 + $0x24] sm:$0xf]
      %v3387 = vld [vmem:[%s3376 + $0x28] sm:$0xf]
      %v3388 = vld [vmem:[%s3376 + $0x2c] sm:$0xf]
      %v3389 = vld [vmem:[%s3376 + $0x30] sm:$0xf]
      %v3390 = vld [vmem:[%s3376 + $0x34] sm:$0xf]
      %v3391 = vld [vmem:[%s3376 + $0x38] sm:$0xf]
      %v3392 = vld [vmem:[%s3376 + $0x3c] sm:$0xf]
      %v3409 = vunpack.c.l.b16 %v3377
      %v3410 = vunpack.c.l.b16 %v3378
      %v3411 = vunpack.c.l.b16 %v3379
      %v3412 = vunpack.c.l.b16 %v3380
      %v3413 = vunpack.c.l.b16 %v3381
      %v3414 = vunpack.c.l.b16 %v3382
      %v3415 = vunpack.c.l.b16 %v3383
      %v3416 = vunpack.c.l.b16 %v3384
      %v3417 = vunpack.c.l.b16 %v3385
      %v3418 = vunpack.c.l.b16 %v3386
      %v3419 = vunpack.c.l.b16 %v3387
      %v3420 = vunpack.c.l.b16 %v3388
      %v3421 = vunpack.c.l.b16 %v3389
      %v3422 = vunpack.c.l.b16 %v3390
      %v3423 = vunpack.c.l.b16 %v3391
      %v3424 = vunpack.c.l.b16 %v3392
      %v3425 = vpack.c.b16 %v3410, %v3409
      %v3426 = vpack.c.b16 %v3412, %v3411
      %v3427 = vpack.c.b16 %v3414, %v3413
      %v3428 = vpack.c.b16 %v3416, %v3415
      %v3429 = vpack.c.b16 %v3418, %v3417
      %v3430 = vpack.c.b16 %v3420, %v3419
      %v3431 = vpack.c.b16 %v3422, %v3421
      %v3432 = vpack.c.b16 %v3424, %v3423
      %3441 = vmatprep.subr.bf16.mxu0 0
      %3442 = vmatpush1.bf16.msra.mxu0 %v3425
      %3443 = vmatprep.subr.bf16.mxu0 0
      %3444 = vmatpush1.bf16.msra.mxu0 %v3426
      %3445 = vmatprep.subr.bf16.mxu0 0
      %3446 = vmatpush1.bf16.msra.mxu0 %v3427
      %3447 = vmatprep.subr.bf16.mxu0 0
      %3448 = vmatpush1.bf16.msra.mxu0 %v3428
      %3449 = vmatprep.subr.bf16.mxu0 0
      %3450 = vmatpush1.bf16.msra.mxu0 %v3429
      %3451 = vmatprep.subr.bf16.mxu0 0
      %3452 = vmatpush1.bf16.msra.mxu0 %v3430
      %3453 = vmatprep.subr.bf16.mxu0 0
      %3454 = vmatpush1.bf16.msra.mxu0 %v3431
      %3455 = vmatprep.subr.bf16.mxu0 0
      %3456 = vmatpush1.bf16.msra.mxu0 %v3432
      %3457 = vmatprep.subr.bf16.mxu0 0
      %3458 = vmatpush1.bf16.msra.mxu0 0
      %3459 = vmatprep.subr.bf16.mxu0 0
      %3460 = vmatpush1.bf16.msra.mxu0 0
      %3461 = vmatprep.subr.bf16.mxu0 0
      %3462 = vmatpush1.bf16.msra.mxu0 0
      %3463 = vmatprep.subr.bf16.mxu0 0
      %3464 = vmatpush1.bf16.msra.mxu0 0
      %3465 = vmatprep.subr.bf16.mxu0 0
      %3466 = vmatpush1.bf16.msra.mxu0 0
      %3467 = vmatprep.subr.bf16.mxu0 0
      %3468 = vmatpush1.bf16.msra.mxu0 0
      %3469 = vmatprep.subr.bf16.mxu0 0
      %3470 = vmatpush1.bf16.msra.mxu0 0
      %3471 = vmatprep.subr.bf16.mxu0 0
      %3472 = vmatpush1.bf16.msra.mxu0 0
      %3473 = vmatprep.mubr.bf16.mxu0 0
      %3474 = vmatmul.mubr.bf16.gmra.mrb[0].mxu0 %v3360
      %v3475 = vpop.f32.mrb[0].mxu0
      %v3476 = vadd.f32 0.0, %v3475
      %v3477 = vpop.f32.mrb[0].mxu0
      %v3478 = vpop.f32.mrb[0].mxu0
      %v3479 = vadd.f32 0.0, %v3478
      %v3480 = vpop.f32.mrb[0].mxu0
      %3481 = vmatprep.mubr.bf16.mxu0 0
      %3482 = vmatmul.mubr.bf16.gmra.mrb[0].mxu0 %v3361
      %v3483 = vpop.f32.mrb[0].mxu0
      %v3484 = vadd.f32 0.0, %v3483
      %v3485 = vpop.f32.mrb[0].mxu0
      %v3486 = vpop.f32.mrb[0].mxu0
      %v3487 = vadd.f32 0.0, %v3486
      %v3488 = vpop.f32.mrb[0].mxu0
      %3489 = vmatprep.mubr.bf16.mxu0 0
      %3490 = vmatmul.mubr.bf16.gmra.mrb[0].mxu0 %v3362
      %v3491 = vpop.f32.mrb[0].mxu0
      %v3492 = vadd.f32 0.0, %v3491
      %v3493 = vpop.f32.mrb[0].mxu0
      %v3494 = vpop.f32.mrb[0].mxu0
      %v3495 = vadd.f32 0.0, %v3494
      %v3496 = vpop.f32.mrb[0].mxu0
      %3497 = vmatprep.mubr.bf16.mxu0 0
      %3498 = vmatmul.mubr.bf16.gmra.mrb[0].mxu0 %v3363
      %v3499 = vpop.f32.mrb[0].mxu0
      %v3500 = vadd.f32 0.0, %v3499
      %v3501 = vpop.f32.mrb[0].mxu0
      %v3502 = vpop.f32.mrb[0].mxu0
      %v3503 = vadd.f32 0.0, %v3502
      %v3504 = vpop.f32.mrb[0].mxu0
      %3505 = vmatprep.mubr.bf16.mxu0 0
      %3506 = vmatmul.mubr.bf16.gmra.mrb[0].mxu0 %v3364
      %v3507 = vpop.f32.mrb[0].mxu0
      %v3508 = vadd.f32 0.0, %v3507
      %v3509 = vpop.f32.mrb[0].mxu0
      %v3510 = vpop.f32.mrb[0].mxu0
      %v3511 = vadd.f32 0.0, %v3510
      %v3512 = vpop.f32.mrb[0].mxu0
      %3513 = vmatprep.mubr.bf16.mxu0 0
      %3514 = vmatmul.mubr.bf16.gmra.mrb[0].mxu0 %v3365
      %v3515 = vpop.f32.mrb[0].mxu0
      %v3516 = vadd.f32 0.0, %v3515
      %v3517 = vpop.f32.mrb[0].mxu0
      %v3518 = vpop.f32.mrb[0].mxu0
      %v3519 = vadd.f32 0.0, %v3518
      %v3520 = vpop.f32.mrb[0].mxu0
      %3521 = vmatprep.mubr.bf16.mxu0 0
      %3522 = vmatmul.mubr.bf16.gmra.mrb[0].mxu0 %v3366
      %v3523 = vpop.f32.mrb[0].mxu0
      %v3524 = vadd.f32 0.0, %v3523
      %v3525 = vpop.f32.mrb[0].mxu0
      %v3526 = vpop.f32.mrb[0].mxu0
      %v3527 = vadd.f32 0.0, %v3526
      %v3528 = vpop.f32.mrb[0].mxu0
      %3529 = vmatprep.mubr.bf16.mxu0 0
      %3530 = vmatmul.mubr.bf16.gmra.mrb[0].mxu0 %v3367
      %v3531 = vpop.f32.mrb[0].mxu0
      %v3532 = vadd.f32 0.0, %v3531
      %v3533 = vpop.f32.mrb[0].mxu0
      %v3534 = vpop.f32.mrb[0].mxu0
      %v3535 = vadd.f32 0.0, %v3534
      %v3536 = vpop.f32.mrb[0].mxu0
      %3537 = vmatprep.mubr.bf16.mxu0 0
      %3538 = vmatmul.mubr.bf16.gmra.mrb[0].mxu0 %v3368
      %v3539 = vpop.f32.mrb[0].mxu0
      %v3540 = vadd.f32 0.0, %v3539
      %v3541 = vpop.f32.mrb[0].mxu0
      %v3542 = vpop.f32.mrb[0].mxu0
      %v3543 = vadd.f32 0.0, %v3542
      %v3544 = vpop.f32.mrb[0].mxu0
      %3545 = vmatprep.mubr.bf16.mxu0 0
      %3546 = vmatmul.mubr.bf16.gmra.mrb[0].mxu0 %v3369
      %v3547 = vpop.f32.mrb[0].mxu0
      %v3548 = vadd.f32 0.0, %v3547
      %v3549 = vpop.f32.mrb[0].mxu0
      %v3550 = vpop.f32.mrb[0].mxu0
      %v3551 = vadd.f32 0.0, %v3550
      %v3552 = vpop.f32.mrb[0].mxu0
      %3553 = vmatprep.mubr.bf16.mxu0 0
      %3554 = vmatmul.mubr.bf16.gmra.mrb[0].mxu0 %v3370
      %v3555 = vpop.f32.mrb[0].mxu0
      %v3556 = vadd.f32 0.0, %v3555
      %v3557 = vpop.f32.mrb[0].mxu0
      %v3558 = vpop.f32.mrb[0].mxu0
      %v3559 = vadd.f32 0.0, %v3558
      %v3560 = vpop.f32.mrb[0].mxu0
      %3561 = vmatprep.mubr.bf16.mxu0 0
      %3562 = vmatmul.mubr.bf16.gmra.mrb[0].mxu0 %v3371
      %v3563 = vpop.f32.mrb[0].mxu0
      %v3564 = vadd.f32 0.0, %v3563
      %v3565 = vpop.f32.mrb[0].mxu0
      %v3566 = vpop.f32.mrb[0].mxu0
      %v3567 = vadd.f32 0.0, %v3566
      %v3568 = vpop.f32.mrb[0].mxu0
      %3569 = vmatprep.mubr.bf16.mxu0 0
      %3570 = vmatmul.mubr.bf16.gmra.mrb[0].mxu0 %v3372
      %v3571 = vpop.f32.mrb[0].mxu0
      %v3572 = vadd.f32 0.0, %v3571
      %v3573 = vpop.f32.mrb[0].mxu0
      %v3574 = vpop.f32.mrb[0].mxu0
      %v3575 = vadd.f32 0.0, %v3574
      %v3576 = vpop.f32.mrb[0].mxu0
      %3577 = vmatprep.mubr.bf16.mxu0 0
      %3578 = vmatmul.mubr.bf16.gmra.mrb[0].mxu0 %v3373
      %v3579 = vpop.f32.mrb[0].mxu0
      %v3580 = vadd.f32 0.0, %v3579
      %v3581 = vpop.f32.mrb[0].mxu0
      %v3582 = vpop.f32.mrb[0].mxu0
      %v3583 = vadd.f32 0.0, %v3582
      %v3584 = vpop.f32.mrb[0].mxu0
      %3585 = vmatprep.mubr.bf16.mxu0 0
      %3586 = vmatmul.mubr.bf16.gmra.mrb[0].mxu0 %v3374
      %v3587 = vpop.f32.mrb[0].mxu0
      %v3588 = vadd.f32 0.0, %v3587
      %v3589 = vpop.f32.mrb[0].mxu0
      %v3590 = vpop.f32.mrb[0].mxu0
      %v3591 = vadd.f32 0.0, %v3590
      %v3592 = vpop.f32.mrb[0].mxu0
      %3593 = vmatprep.mubr.bf16.mxu0 0
      %3594 = vmatmul.mubr.bf16.gmra.mrb[0].mxu0 %v3375
      %v3595 = vpop.f32.mrb[0].mxu0
      %v3596 = vadd.f32 0.0, %v3595
      %v3597 = vpop.f32.mrb[0].mxu0
      %v3598 = vpop.f32.mrb[0].mxu0
      %v3599 = vadd.f32 0.0, %v3598
      %v3600 = vpop.f32.mrb[0].mxu0
      %3601 = vdwg.mxu0
      %v3602 = vadd.f32 %v3296, %v3476
      %v3603 = vadd.f32 %v3297, %v3479
      %v3604 = vadd.f32 %v3298, %v3484
      %v3605 = vadd.f32 %v3299, %v3487
      %v3606 = vadd.f32 %v3300, %v3492
      %v3607 = vadd.f32 %v3301, %v3495
      %v3608 = vadd.f32 %v3302, %v3500
      %v3609 = vadd.f32 %v3303, %v3503
      %v3610 = vadd.f32 %v3304, %v3508
      %v3611 = vadd.f32 %v3305, %v3511
      %v3612 = vadd.f32 %v3306, %v3516
      %v3613 = vadd.f32 %v3307, %v3519
      %v3614 = vadd.f32 %v3308, %v3524
      %v3615 = vadd.f32 %v3309, %v3527
      %v3616 = vadd.f32 %v3310, %v3532
      %v3617 = vadd.f32 %v3311, %v3535
      %v3618 = vadd.f32 %v3312, %v3540
      %v3619 = vadd.f32 %v3313, %v3543
      %v3620 = vadd.f32 %v3314, %v3548
      %v3621 = vadd.f32 %v3315, %v3551
      %v3622 = vadd.f32 %v3316, %v3556
      %v3623 = vadd.f32 %v3317, %v3559
      %v3624 = vadd.f32 %v3318, %v3564
      %v3625 = vadd.f32 %v3319, %v3567
      %v3626 = vadd.f32 %v3320, %v3572
      %v3627 = vadd.f32 %v3321, %v3575
      %v3628 = vadd.f32 %v3322, %v3580
      %v3629 = vadd.f32 %v3323, %v3583
      %v3630 = vadd.f32 %v3324, %v3588
      %v3631 = vadd.f32 %v3325, %v3591
      %v3632 = vadd.f32 %v3326, %v3596
      %v3633 = vadd.f32 %v3327, %v3599
      %v3634 = vld [vmem:[#allocation2 + $0x29] sm:$0xff]
      %v3635 = vld [vmem:[#allocation2 + $0x31] sm:$0xff]
      %v3636 = vld [vmem:[#allocation2 + $0x39] sm:$0xff]
      %v3637 = vld [vmem:[#allocation2 + $0x41] sm:$0xff]
      %v3638 = vld [vmem:[#allocation2 + $0x49] sm:$0xff]
      %v3639 = vld [vmem:[#allocation2 + $0x51] sm:$0xff]
      %v3640 = vld [vmem:[#allocation2 + $0x59] sm:$0xff]
      %v3641 = vld [vmem:[#allocation2 + $0x61] sm:$0xff]
      %v3642 = vld [vmem:[#allocation2 + $0x69] sm:$0xff]
      %v3643 = vld [vmem:[#allocation2 + $0x71] sm:$0xff]
      %v3644 = vld [vmem:[#allocation2 + $0x79] sm:$0xff]
      %v3645 = vld [vmem:[#allocation2 + $0x81] sm:$0xff]
      %v3646 = vld [vmem:[#allocation2 + $0x89] sm:$0xff]
      %v3647 = vld [vmem:[#allocation2 + $0x91] sm:$0xff]
      %v3648 = vld [vmem:[#allocation2 + $0x99] sm:$0xff]
      %v3649 = vld [vmem:[#allocation2 + $0xa1] sm:$0xff]
      %v3650 = vld [vmem:[#allocation2 + $0xa9] sm:$0xff]
      %v3651 = vld [vmem:[#allocation2 + $0xb1] sm:$0xff]
      %v3652 = vld [vmem:[#allocation2 + $0xb9] sm:$0xff]
      %v3653 = vld [vmem:[#allocation2 + $0xc1] sm:$0xff]
      %v3654 = vld [vmem:[#allocation2 + $0xc9] sm:$0xff]
      %v3655 = vld [vmem:[#allocation2 + $0xd1] sm:$0xff]
      %v3656 = vld [vmem:[#allocation2 + $0xd9] sm:$0xff]
      %v3657 = vld [vmem:[#allocation2 + $0xe1] sm:$0xff]
      %v3658 = vld [vmem:[#allocation2 + $0xe9] sm:$0xff]
      %v3659 = vld [vmem:[#allocation2 + $0xf1] sm:$0xff]
      %v3660 = vld [vmem:[#allocation2 + $0xf9] sm:$0xff]
      %v3661 = vld [vmem:[#allocation2 + $0x101] sm:$0xff]
      %v3662 = vld [vmem:[#allocation2 + $0x109] sm:$0xff]
      %v3663 = vld [vmem:[#allocation2 + $0x111] sm:$0xff]
      %v3664 = vld [vmem:[#allocation2 + $0x119] sm:$0xff]
      %v3665 = vld [vmem:[#allocation2 + $0x121] sm:$0xff]
      %v3666 = vsel %vm1670, %v3634, 0.0
      %v3667 = vsel %vm1671, %v3635, 0.0
      %v3668 = vsel %vm1672, %v3636, 0.0
      %v3669 = vsel %vm1673, %v3637, 0.0
      %v3670 = vsel %vm1674, %v3638, 0.0
      %v3671 = vsel %vm1675, %v3639, 0.0
      %v3672 = vsel %vm1676, %v3640, 0.0
      %v3673 = vsel %vm1677, %v3641, 0.0
      %v3674 = vsel %vm1678, %v3642, 0.0
      %v3675 = vsel %vm1679, %v3643, 0.0
      %v3676 = vsel %vm1680, %v3644, 0.0
      %v3677 = vsel %vm1681, %v3645, 0.0
      %v3678 = vsel %vm1682, %v3646, 0.0
      %v3679 = vsel %vm1683, %v3647, 0.0
      %v3680 = vsel %vm1684, %v3648, 0.0
      %v3681 = vsel %vm1685, %v3649, 0.0
      %v3682 = vsel %vm1686, %v3650, 0.0
      %v3683 = vsel %vm1687, %v3651, 0.0
      %v3684 = vsel %vm1688, %v3652, 0.0
      %v3685 = vsel %vm1689, %v3653, 0.0
      %v3686 = vsel %vm1690, %v3654, 0.0
      %v3687 = vsel %vm1691, %v3655, 0.0
      %v3688 = vsel %vm1692, %v3656, 0.0
      %v3689 = vsel %vm1693, %v3657, 0.0
      %v3690 = vsel %vm1694, %v3658, 0.0
      %v3691 = vsel %vm1695, %v3659, 0.0
      %v3692 = vsel %vm1696, %v3660, 0.0
      %v3693 = vsel %vm1697, %v3661, 0.0
      %v3694 = vsel %vm1698, %v3662, 0.0
      %v3695 = vsel %vm1699, %v3663, 0.0
      %v3696 = vsel %vm1700, %v3664, 0.0
      %v3697 = vsel %vm1701, %v3665, 0.0
      %v3698 = vpack.c.bf16 %v3667, %v3666
      %v3699 = vpack.c.bf16 %v3669, %v3668
      %v3700 = vpack.c.bf16 %v3671, %v3670
      %v3701 = vpack.c.bf16 %v3673, %v3672
      %v3702 = vpack.c.bf16 %v3675, %v3674
      %v3703 = vpack.c.bf16 %v3677, %v3676
      %v3704 = vpack.c.bf16 %v3679, %v3678
      %v3705 = vpack.c.bf16 %v3681, %v3680
      %v3706 = vpack.c.bf16 %v3683, %v3682
      %v3707 = vpack.c.bf16 %v3685, %v3684
      %v3708 = vpack.c.bf16 %v3687, %v3686
      %v3709 = vpack.c.bf16 %v3689, %v3688
      %v3710 = vpack.c.bf16 %v3691, %v3690
      %v3711 = vpack.c.bf16 %v3693, %v3692
      %v3712 = vpack.c.bf16 %v3695, %v3694
      %v3713 = vpack.c.bf16 %v3697, %v3696
      %s3714 = scalar_lea.vmem %s1, 512
      %v3715 = vld [vmem:[%s3714] sm:$0xf]
      %v3716 = vld [vmem:[%s3714 + $0x4] sm:$0xf]
      %v3717 = vld [vmem:[%s3714 + $0x8] sm:$0xf]
      %v3718 = vld [vmem:[%s3714 + $0xc] sm:$0xf]
      %v3719 = vld [vmem:[%s3714 + $0x10] sm:$0xf]
      %v3720 = vld [vmem:[%s3714 + $0x14] sm:$0xf]
      %v3721 = vld [vmem:[%s3714 + $0x18] sm:$0xf]
      %v3722 = vld [vmem:[%s3714 + $0x1c] sm:$0xf]
      %v3723 = vld [vmem:[%s3714 + $0x20] sm:$0xf]
      %v3724 = vld [vmem:[%s3714 + $0x24] sm:$0xf]
      %v3725 = vld [vmem:[%s3714 + $0x28] sm:$0xf]
      %v3726 = vld [vmem:[%s3714 + $0x2c] sm:$0xf]
      %v3727 = vld [vmem:[%s3714 + $0x30] sm:$0xf]
      %v3728 = vld [vmem:[%s3714 + $0x34] sm:$0xf]
      %v3729 = vld [vmem:[%s3714 + $0x38] sm:$0xf]
      %v3730 = vld [vmem:[%s3714 + $0x3c] sm:$0xf]
      %v3747 = vunpack.c.l.b16 %v3715
      %v3748 = vunpack.c.l.b16 %v3716
      %v3749 = vunpack.c.l.b16 %v3717
      %v3750 = vunpack.c.l.b16 %v3718
      %v3751 = vunpack.c.l.b16 %v3719
      %v3752 = vunpack.c.l.b16 %v3720
      %v3753 = vunpack.c.l.b16 %v3721
      %v3754 = vunpack.c.l.b16 %v3722
      %v3755 = vunpack.c.l.b16 %v3723
      %v3756 = vunpack.c.l.b16 %v3724
      %v3757 = vunpack.c.l.b16 %v3725
      %v3758 = vunpack.c.l.b16 %v3726
      %v3759 = vunpack.c.l.b16 %v3727
      %v3760 = vunpack.c.l.b16 %v3728
      %v3761 = vunpack.c.l.b16 %v3729
      %v3762 = vunpack.c.l.b16 %v3730
      %v3763 = vpack.c.b16 %v3748, %v3747
      %v3764 = vpack.c.b16 %v3750, %v3749
      %v3765 = vpack.c.b16 %v3752, %v3751
      %v3766 = vpack.c.b16 %v3754, %v3753
      %v3767 = vpack.c.b16 %v3756, %v3755
      %v3768 = vpack.c.b16 %v3758, %v3757
      %v3769 = vpack.c.b16 %v3760, %v3759
      %v3770 = vpack.c.b16 %v3762, %v3761
      %3779 = vmatprep.subr.bf16.mxu0 0
      %3780 = vmatpush1.bf16.msra.mxu0 %v3763
      %3781 = vmatprep.subr.bf16.mxu0 0
      %3782 = vmatpush1.bf16.msra.mxu0 %v3764
      %3783 = vmatprep.subr.bf16.mxu0 0
      %3784 = vmatpush1.bf16.msra.mxu0 %v3765
      %3785 = vmatprep.subr.bf16.mxu0 0
      %3786 = vmatpush1.bf16.msra.mxu0 %v3766
      %3787 = vmatprep.subr.bf16.mxu0 0
      %3788 = vmatpush1.bf16.msra.mxu0 %v3767
      %3789 = vmatprep.subr.bf16.mxu0 0
      %3790 = vmatpush1.bf16.msra.mxu0 %v3768
      %3791 = vmatprep.subr.bf16.mxu0 0
      %3792 = vmatpush1.bf16.msra.mxu0 %v3769
      %3793 = vmatprep.subr.bf16.mxu0 0
      %3794 = vmatpush1.bf16.msra.mxu0 %v3770
      %3795 = vmatprep.subr.bf16.mxu0 0
      %3796 = vmatpush1.bf16.msra.mxu0 0
      %3797 = vmatprep.subr.bf16.mxu0 0
      %3798 = vmatpush1.bf16.msra.mxu0 0
      %3799 = vmatprep.subr.bf16.mxu0 0
      %3800 = vmatpush1.bf16.msra.mxu0 0
      %3801 = vmatprep.subr.bf16.mxu0 0
      %3802 = vmatpush1.bf16.msra.mxu0 0
      %3803 = vmatprep.subr.bf16.mxu0 0
      %3804 = vmatpush1.bf16.msra.mxu0 0
      %3805 = vmatprep.subr.bf16.mxu0 0
      %3806 = vmatpush1.bf16.msra.mxu0 0
      %3807 = vmatprep.subr.bf16.mxu0 0
      %3808 = vmatpush1.bf16.msra.mxu0 0
      %3809 = vmatprep.subr.bf16.mxu0 0
      %3810 = vmatpush1.bf16.msra.mxu0 0
      %3811 = vmatprep.mubr.bf16.mxu0 0
      %3812 = vmatmul.mubr.bf16.gmra.mrb[0].mxu0 %v3698
      %v3813 = vpop.f32.mrb[0].mxu0
      %v3814 = vadd.f32 0.0, %v3813
      %v3815 = vpop.f32.mrb[0].mxu0
      %v3816 = vpop.f32.mrb[0].mxu0
      %v3817 = vadd.f32 0.0, %v3816
      %v3818 = vpop.f32.mrb[0].mxu0
      %3819 = vmatprep.mubr.bf16.mxu0 0
      %3820 = vmatmul.mubr.bf16.gmra.mrb[0].mxu0 %v3699
      %v3821 = vpop.f32.mrb[0].mxu0
      %v3822 = vadd.f32 0.0, %v3821
      %v3823 = vpop.f32.mrb[0].mxu0
      %v3824 = vpop.f32.mrb[0].mxu0
      %v3825 = vadd.f32 0.0, %v3824
      %v3826 = vpop.f32.mrb[0].mxu0
      %3827 = vmatprep.mubr.bf16.mxu0 0
      %3828 = vmatmul.mubr.bf16.gmra.mrb[0].mxu0 %v3700
      %v3829 = vpop.f32.mrb[0].mxu0
      %v3830 = vadd.f32 0.0, %v3829
      %v3831 = vpop.f32.mrb[0].mxu0
      %v3832 = vpop.f32.mrb[0].mxu0
      %v3833 = vadd.f32 0.0, %v3832
      %v3834 = vpop.f32.mrb[0].mxu0
      %3835 = vmatprep.mubr.bf16.mxu0 0
      %3836 = vmatmul.mubr.bf16.gmra.mrb[0].mxu0 %v3701
      %v3837 = vpop.f32.mrb[0].mxu0
      %v3838 = vadd.f32 0.0, %v3837
      %v3839 = vpop.f32.mrb[0].mxu0
      %v3840 = vpop.f32.mrb[0].mxu0
      %v3841 = vadd.f32 0.0, %v3840
      %v3842 = vpop.f32.mrb[0].mxu0
      %3843 = vmatprep.mubr.bf16.mxu0 0
      %3844 = vmatmul.mubr.bf16.gmra.mrb[0].mxu0 %v3702
      %v3845 = vpop.f32.mrb[0].mxu0
      %v3846 = vadd.f32 0.0, %v3845
      %v3847 = vpop.f32.mrb[0].mxu0
      %v3848 = vpop.f32.mrb[0].mxu0
      %v3849 = vadd.f32 0.0, %v3848
      %v3850 = vpop.f32.mrb[0].mxu0
      %3851 = vmatprep.mubr.bf16.mxu0 0
      %3852 = vmatmul.mubr.bf16.gmra.mrb[0].mxu0 %v3703
      %v3853 = vpop.f32.mrb[0].mxu0
      %v3854 = vadd.f32 0.0, %v3853
      %v3855 = vpop.f32.mrb[0].mxu0
      %v3856 = vpop.f32.mrb[0].mxu0
      %v3857 = vadd.f32 0.0, %v3856
      %v3858 = vpop.f32.mrb[0].mxu0
      %3859 = vmatprep.mubr.bf16.mxu0 0
      %3860 = vmatmul.mubr.bf16.gmra.mrb[0].mxu0 %v3704
      %v3861 = vpop.f32.mrb[0].mxu0
      %v3862 = vadd.f32 0.0, %v3861
      %v3863 = vpop.f32.mrb[0].mxu0
      %v3864 = vpop.f32.mrb[0].mxu0
      %v3865 = vadd.f32 0.0, %v3864
      %v3866 = vpop.f32.mrb[0].mxu0
      %3867 = vmatprep.mubr.bf16.mxu0 0
      %3868 = vmatmul.mubr.bf16.gmra.mrb[0].mxu0 %v3705
      %v3869 = vpop.f32.mrb[0].mxu0
      %v3870 = vadd.f32 0.0, %v3869
      %v3871 = vpop.f32.mrb[0].mxu0
      %v3872 = vpop.f32.mrb[0].mxu0
      %v3873 = vadd.f32 0.0, %v3872
      %v3874 = vpop.f32.mrb[0].mxu0
      %3875 = vmatprep.mubr.bf16.mxu0 0
      %3876 = vmatmul.mubr.bf16.gmra.mrb[0].mxu0 %v3706
      %v3877 = vpop.f32.mrb[0].mxu0
      %v3878 = vadd.f32 0.0, %v3877
      %v3879 = vpop.f32.mrb[0].mxu0
      %v3880 = vpop.f32.mrb[0].mxu0
      %v3881 = vadd.f32 0.0, %v3880
      %v3882 = vpop.f32.mrb[0].mxu0
      %3883 = vmatprep.mubr.bf16.mxu0 0
      %3884 = vmatmul.mubr.bf16.gmra.mrb[0].mxu0 %v3707
      %v3885 = vpop.f32.mrb[0].mxu0
      %v3886 = vadd.f32 0.0, %v3885
      %v3887 = vpop.f32.mrb[0].mxu0
      %v3888 = vpop.f32.mrb[0].mxu0
      %v3889 = vadd.f32 0.0, %v3888
      %v3890 = vpop.f32.mrb[0].mxu0
      %3891 = vmatprep.mubr.bf16.mxu0 0
      %3892 = vmatmul.mubr.bf16.gmra.mrb[0].mxu0 %v3708
      %v3893 = vpop.f32.mrb[0].mxu0
      %v3894 = vadd.f32 0.0, %v3893
      %v3895 = vpop.f32.mrb[0].mxu0
      %v3896 = vpop.f32.mrb[0].mxu0
      %v3897 = vadd.f32 0.0, %v3896
      %v3898 = vpop.f32.mrb[0].mxu0
      %3899 = vmatprep.mubr.bf16.mxu0 0
      %3900 = vmatmul.mubr.bf16.gmra.mrb[0].mxu0 %v3709
      %v3901 = vpop.f32.mrb[0].mxu0
      %v3902 = vadd.f32 0.0, %v3901
      %v3903 = vpop.f32.mrb[0].mxu0
      %v3904 = vpop.f32.mrb[0].mxu0
      %v3905 = vadd.f32 0.0, %v3904
      %v3906 = vpop.f32.mrb[0].mxu0
      %3907 = vmatprep.mubr.bf16.mxu0 0
      %3908 = vmatmul.mubr.bf16.gmra.mrb[0].mxu0 %v3710
      %v3909 = vpop.f32.mrb[0].mxu0
      %v3910 = vadd.f32 0.0, %v3909
      %v3911 = vpop.f32.mrb[0].mxu0
      %v3912 = vpop.f32.mrb[0].mxu0
      %v3913 = vadd.f32 0.0, %v3912
      %v3914 = vpop.f32.mrb[0].mxu0
      %3915 = vmatprep.mubr.bf16.mxu0 0
      %3916 = vmatmul.mubr.bf16.gmra.mrb[0].mxu0 %v3711
      %v3917 = vpop.f32.mrb[0].mxu0
      %v3918 = vadd.f32 0.0, %v3917
      %v3919 = vpop.f32.mrb[0].mxu0
      %v3920 = vpop.f32.mrb[0].mxu0
      %v3921 = vadd.f32 0.0, %v3920
      %v3922 = vpop.f32.mrb[0].mxu0
      %3923 = vmatprep.mubr.bf16.mxu0 0
      %3924 = vmatmul.mubr.bf16.gmra.mrb[0].mxu0 %v3712
      %v3925 = vpop.f32.mrb[0].mxu0
      %v3926 = vadd.f32 0.0, %v3925
      %v3927 = vpop.f32.mrb[0].mxu0
      %v3928 = vpop.f32.mrb[0].mxu0
      %v3929 = vadd.f32 0.0, %v3928
      %v3930 = vpop.f32.mrb[0].mxu0
      %3931 = vmatprep.mubr.bf16.mxu0 0
      %3932 = vmatmul.mubr.bf16.gmra.mrb[0].mxu0 %v3713
      %v3933 = vpop.f32.mrb[0].mxu0
      %v3934 = vadd.f32 0.0, %v3933
      %v3935 = vpop.f32.mrb[0].mxu0
      %v3936 = vpop.f32.mrb[0].mxu0
      %v3937 = vadd.f32 0.0, %v3936
      %v3938 = vpop.f32.mrb[0].mxu0
      %3939 = vdwg.mxu0
      %v3940 = vadd.f32 %v3602, %v3814
      %v3941 = vadd.f32 %v3603, %v3817
      %v3942 = vadd.f32 %v3604, %v3822
      %v3943 = vadd.f32 %v3605, %v3825
      %v3944 = vadd.f32 %v3606, %v3830
      %v3945 = vadd.f32 %v3607, %v3833
      %v3946 = vadd.f32 %v3608, %v3838
      %v3947 = vadd.f32 %v3609, %v3841
      %v3948 = vadd.f32 %v3610, %v3846
      %v3949 = vadd.f32 %v3611, %v3849
      %v3950 = vadd.f32 %v3612, %v3854
      %v3951 = vadd.f32 %v3613, %v3857
      %v3952 = vadd.f32 %v3614, %v3862
      %v3953 = vadd.f32 %v3615, %v3865
      %v3954 = vadd.f32 %v3616, %v3870
      %v3955 = vadd.f32 %v3617, %v3873
      %v3956 = vadd.f32 %v3618, %v3878
      %v3957 = vadd.f32 %v3619, %v3881
      %v3958 = vadd.f32 %v3620, %v3886
      %v3959 = vadd.f32 %v3621, %v3889
      %v3960 = vadd.f32 %v3622, %v3894
      %v3961 = vadd.f32 %v3623, %v3897
      %v3962 = vadd.f32 %v3624, %v3902
      %v3963 = vadd.f32 %v3625, %v3905
      %v3964 = vadd.f32 %v3626, %v3910
      %v3965 = vadd.f32 %v3627, %v3913
      %v3966 = vadd.f32 %v3628, %v3918
      %v3967 = vadd.f32 %v3629, %v3921
      %v3968 = vadd.f32 %v3630, %v3926
      %v3969 = vadd.f32 %v3631, %v3929
      %v3970 = vadd.f32 %v3632, %v3934
      %v3971 = vadd.f32 %v3633, %v3937
      %v3972 = vpack.c.bf16 %v3941, %v3940
      %v3973 = vpack.c.bf16 %v3943, %v3942
      %v3974 = vpack.c.bf16 %v3945, %v3944
      %v3975 = vpack.c.bf16 %v3947, %v3946
      %v3976 = vpack.c.bf16 %v3949, %v3948
      %v3977 = vpack.c.bf16 %v3951, %v3950
      %v3978 = vpack.c.bf16 %v3953, %v3952
      %v3979 = vpack.c.bf16 %v3955, %v3954
      %v3980 = vpack.c.bf16 %v3957, %v3956
      %v3981 = vpack.c.bf16 %v3959, %v3958
      %v3982 = vpack.c.bf16 %v3961, %v3960
      %v3983 = vpack.c.bf16 %v3963, %v3962
      %v3984 = vpack.c.bf16 %v3965, %v3964
      %v3985 = vpack.c.bf16 %v3967, %v3966
      %v3986 = vpack.c.bf16 %v3969, %v3968
      %v3987 = vpack.c.bf16 %v3971, %v3970
      %v4004 = vunpack.c.l.b16 %v3972
      %v4005 = vunpack.c.h.b16 %v3972
      %v4006 = vunpack.c.l.b16 %v3973
      %v4007 = vunpack.c.h.b16 %v3973
      %v4008 = vunpack.c.l.b16 %v3974
      %v4009 = vunpack.c.h.b16 %v3974
      %v4010 = vunpack.c.l.b16 %v3975
      %v4011 = vunpack.c.h.b16 %v3975
      %v4012 = vunpack.c.l.b16 %v3976
      %v4013 = vunpack.c.h.b16 %v3976
      %v4014 = vunpack.c.l.b16 %v3977
      %v4015 = vunpack.c.h.b16 %v3977
      %v4016 = vunpack.c.l.b16 %v3978
      %v4017 = vunpack.c.h.b16 %v3978
      %v4018 = vunpack.c.l.b16 %v3979
      %v4019 = vunpack.c.h.b16 %v3979
      %v4020 = vunpack.c.l.b16 %v3980
      %v4021 = vunpack.c.h.b16 %v3980
      %v4022 = vunpack.c.l.b16 %v3981
      %v4023 = vunpack.c.h.b16 %v3981
      %v4024 = vunpack.c.l.b16 %v3982
      %v4025 = vunpack.c.h.b16 %v3982
      %v4026 = vunpack.c.l.b16 %v3983
      %v4027 = vunpack.c.h.b16 %v3983
      %v4028 = vunpack.c.l.b16 %v3984
      %v4029 = vunpack.c.h.b16 %v3984
      %v4030 = vunpack.c.l.b16 %v3985
      %v4031 = vunpack.c.h.b16 %v3985
      %v4032 = vunpack.c.l.b16 %v3986
      %v4033 = vunpack.c.h.b16 %v3986
      %v4034 = vunpack.c.l.b16 %v3987
      %v4035 = vunpack.c.h.b16 %v3987
      %v4036 = vpack.c.b16 %v4004, %v4004
      %v4037 = vpack.c.b16 %v4005, %v4005
      %v4038 = vpack.c.b16 %v4006, %v4006
      %v4039 = vpack.c.b16 %v4007, %v4007
      %v4040 = vpack.c.b16 %v4008, %v4008
      %v4041 = vpack.c.b16 %v4009, %v4009
      %v4042 = vpack.c.b16 %v4010, %v4010
      %v4043 = vpack.c.b16 %v4011, %v4011
      %v4044 = vpack.c.b16 %v4012, %v4012
      %v4045 = vpack.c.b16 %v4013, %v4013
      %v4046 = vpack.c.b16 %v4014, %v4014
      %v4047 = vpack.c.b16 %v4015, %v4015
      %v4048 = vpack.c.b16 %v4016, %v4016
      %v4049 = vpack.c.b16 %v4017, %v4017
      %v4050 = vpack.c.b16 %v4018, %v4018
      %v4051 = vpack.c.b16 %v4019, %v4019
      %v4052 = vpack.c.b16 %v4020, %v4020
      %v4053 = vpack.c.b16 %v4021, %v4021
      %v4054 = vpack.c.b16 %v4022, %v4022
      %v4055 = vpack.c.b16 %v4023, %v4023
      %v4056 = vpack.c.b16 %v4024, %v4024
      %v4057 = vpack.c.b16 %v4025, %v4025
      %v4058 = vpack.c.b16 %v4026, %v4026
      %v4059 = vpack.c.b16 %v4027, %v4027
      %v4060 = vpack.c.b16 %v4028, %v4028
      %v4061 = vpack.c.b16 %v4029, %v4029
      %v4062 = vpack.c.b16 %v4030, %v4030
      %v4063 = vpack.c.b16 %v4031, %v4031
      %v4064 = vpack.c.b16 %v4032, %v4032
      %v4065 = vpack.c.b16 %v4033, %v4033
      %v4066 = vpack.c.b16 %v4034, %v4034
      %v4067 = vpack.c.b16 %v4035, %v4035
      %4100 = vst [vmem:[%s262] sm:$0xf] %v4036
      %4101 = vst [vmem:[%s262 + $0x4] sm:$0xf] %v4037
      %4102 = vst [vmem:[%s262 + $0x8] sm:$0xf] %v4038
      %4103 = vst [vmem:[%s262 + $0xc] sm:$0xf] %v4039
      %4104 = vst [vmem:[%s262 + $0x10] sm:$0xf] %v4040
      %4105 = vst [vmem:[%s262 + $0x14] sm:$0xf] %v4041
      %4106 = vst [vmem:[%s262 + $0x18] sm:$0xf] %v4042
      %4107 = vst [vmem:[%s262 + $0x1c] sm:$0xf] %v4043
      %4108 = vst [vmem:[%s262 + $0x20] sm:$0xf] %v4044
      %4109 = vst [vmem:[%s262 + $0x24] sm:$0xf] %v4045
      %4110 = vst [vmem:[%s262 + $0x28] sm:$0xf] %v4046
      %4111 = vst [vmem:[%s262 + $0x2c] sm:$0xf] %v4047
      %4112 = vst [vmem:[%s262 + $0x30] sm:$0xf] %v4048
      %4113 = vst [vmem:[%s262 + $0x34] sm:$0xf] %v4049
      %4114 = vst [vmem:[%s262 + $0x38] sm:$0xf] %v4050
      %4115 = vst [vmem:[%s262 + $0x3c] sm:$0xf] %v4051
      %4116 = vst [vmem:[%s262 + $0x40] sm:$0xf] %v4052
      %4117 = vst [vmem:[%s262 + $0x44] sm:$0xf] %v4053
      %4118 = vst [vmem:[%s262 + $0x48] sm:$0xf] %v4054
      %4119 = vst [vmem:[%s262 + $0x4c] sm:$0xf] %v4055
      %4120 = vst [vmem:[%s262 + $0x50] sm:$0xf] %v4056
      %4121 = vst [vmem:[%s262 + $0x54] sm:$0xf] %v4057
      %4122 = vst [vmem:[%s262 + $0x58] sm:$0xf] %v4058
      %4123 = vst [vmem:[%s262 + $0x5c] sm:$0xf] %v4059
      %4124 = vst [vmem:[%s262 + $0x60] sm:$0xf] %v4060
      %4125 = vst [vmem:[%s262 + $0x64] sm:$0xf] %v4061
      %4126 = vst [vmem:[%s262 + $0x68] sm:$0xf] %v4062
      %4127 = vst [vmem:[%s262 + $0x6c] sm:$0xf] %v4063
      %4128 = vst [vmem:[%s262 + $0x70] sm:$0xf] %v4064
      %4129 = vst [vmem:[%s262 + $0x74] sm:$0xf] %v4065
      %4130 = vst [vmem:[%s262 + $0x78] sm:$0xf] %v4066
      %4131 = vst [vmem:[%s262 + $0x7c] sm:$0xf] %v4067
      %v4132 = vadd.f32 %v3940, %v3941
      %v4133 = vadd.f32 %v4132, %v3942
      %v4134 = vadd.f32 %v4133, %v3943
      %v4135 = vadd.f32 %v4134, %v3944
      %v4136 = vadd.f32 %v4135, %v3945
      %v4137 = vadd.f32 %v4136, %v3946
      %v4138 = vadd.f32 %v4137, %v3947
      %v4139 = vadd.f32 %v4138, %v3948
      %v4140 = vadd.f32 %v4139, %v3949
      %v4141 = vadd.f32 %v4140, %v3950
      %v4142 = vadd.f32 %v4141, %v3951
      %v4143 = vadd.f32 %v4142, %v3952
      %v4144 = vadd.f32 %v4143, %v3953
      %v4145 = vadd.f32 %v4144, %v3954
      %v4146 = vadd.f32 %v4145, %v3955
      %v4147 = vadd.f32 %v4146, %v3956
      %v4148 = vadd.f32 %v4147, %v3957
      %v4149 = vadd.f32 %v4148, %v3958
      %v4150 = vadd.f32 %v4149, %v3959
      %v4151 = vadd.f32 %v4150, %v3960
      %v4152 = vadd.f32 %v4151, %v3961
      %v4153 = vadd.f32 %v4152, %v3962
      %v4154 = vadd.f32 %v4153, %v3963
      %v4155 = vadd.f32 %v4154, %v3964
      %v4156 = vadd.f32 %v4155, %v3965
      %v4157 = vadd.f32 %v4156, %v3966
      %v4158 = vadd.f32 %v4157, %v3967
      %v4159 = vadd.f32 %v4158, %v3968
      %v4160 = vadd.f32 %v4159, %v3969
      %v4161 = vadd.f32 %v4160, %v3970
      %v4162 = vadd.f32 %v4161, %v3971
      %v4163 = vrot.slane %v4162, 4
      %v4164 = vadd.f32 %v4162, %v4163
      %v4165 = vrot.slane %v4164, 2
      %v4166 = vadd.f32 %v4164, %v4165
      %v4167 = vrot.slane %v4166, 1
      %v4168 = vadd.f32 %v4166, %v4167
      %4169 = vst [vmem:[%s265] sm:$0x1] %v4168
      %v4170 = vmul.f32 %v3940, %v3940
      %v4171 = vmul.f32 %v3941, %v3941
      %v4172 = vmul.f32 %v3942, %v3942
      %v4173 = vmul.f32 %v3943, %v3943
      %v4174 = vmul.f32 %v3944, %v3944
      %v4175 = vmul.f32 %v3945, %v3945
      %v4176 = vmul.f32 %v3946, %v3946
      %v4177 = vmul.f32 %v3947, %v3947
      %v4178 = vmul.f32 %v3948, %v3948
      %v4179 = vmul.f32 %v3949, %v3949
      %v4180 = vmul.f32 %v3950, %v3950
      %v4181 = vmul.f32 %v3951, %v3951
      %v4182 = vmul.f32 %v3952, %v3952
      %v4183 = vmul.f32 %v3953, %v3953
      %v4184 = vmul.f32 %v3954, %v3954
      %v4185 = vmul.f32 %v3955, %v3955
      %v4186 = vmul.f32 %v3956, %v3956
      %v4187 = vmul.f32 %v3957, %v3957
      %v4188 = vmul.f32 %v3958, %v3958
      %v4189 = vmul.f32 %v3959, %v3959
      %v4190 = vmul.f32 %v3960, %v3960
      %v4191 = vmul.f32 %v3961, %v3961
      %v4192 = vmul.f32 %v3962, %v3962
      %v4193 = vmul.f32 %v3963, %v3963
      %v4194 = vmul.f32 %v3964, %v3964
      %v4195 = vmul.f32 %v3965, %v3965
      %v4196 = vmul.f32 %v3966, %v3966
      %v4197 = vmul.f32 %v3967, %v3967
      %v4198 = vmul.f32 %v3968, %v3968
      %v4199 = vmul.f32 %v3969, %v3969
      %v4200 = vmul.f32 %v3970, %v3970
      %v4201 = vmul.f32 %v3971, %v3971
      %v4202 = vadd.f32 %v4170, %v4171
      %v4203 = vadd.f32 %v4202, %v4172
      %v4204 = vadd.f32 %v4203, %v4173
      %v4205 = vadd.f32 %v4204, %v4174
      %v4206 = vadd.f32 %v4205, %v4175
      %v4207 = vadd.f32 %v4206, %v4176
      %v4208 = vadd.f32 %v4207, %v4177
      %v4209 = vadd.f32 %v4208, %v4178
      %v4210 = vadd.f32 %v4209, %v4179
      %v4211 = vadd.f32 %v4210, %v4180
      %v4212 = vadd.f32 %v4211, %v4181
      %v4213 = vadd.f32 %v4212, %v4182
      %v4214 = vadd.f32 %v4213, %v4183
      %v4215 = vadd.f32 %v4214, %v4184
      %v4216 = vadd.f32 %v4215, %v4185
      %v4217 = vadd.f32 %v4216, %v4186
      %v4218 = vadd.f32 %v4217, %v4187
      %v4219 = vadd.f32 %v4218, %v4188
      %v4220 = vadd.f32 %v4219, %v4189
      %v4221 = vadd.f32 %v4220, %v4190
      %v4222 = vadd.f32 %v4221, %v4191
      %v4223 = vadd.f32 %v4222, %v4192
      %v4224 = vadd.f32 %v4223, %v4193
      %v4225 = vadd.f32 %v4224, %v4194
      %v4226 = vadd.f32 %v4225, %v4195
      %v4227 = vadd.f32 %v4226, %v4196
      %v4228 = vadd.f32 %v4227, %v4197
      %v4229 = vadd.f32 %v4228, %v4198
      %v4230 = vadd.f32 %v4229, %v4199
      %v4231 = vadd.f32 %v4230, %v4200
      %v4232 = vadd.f32 %v4231, %v4201
      %v4233 = vrot.slane %v4232, 4
      %v4234 = vadd.f32 %v4232, %v4233
      %v4235 = vrot.slane %v4234, 2
      %v4236 = vadd.f32 %v4234, %v4235
      %v4237 = vrot.slane %v4236, 1
      %v4238 = vadd.f32 %v4236, %v4237
      %4239 = vst [vmem:[%s268] sm:$0x1] %v4238
      %p4240 = scmp.lt.s32.totalorder %s18, 1
      %s4241 = scalar_select %p4240, %s18, 1
      %s4242 = smul.addr %s4241, 32
      %s4243 = smul.addr %s4242, 4
      %s4244 = scalar_lea.vmem %s4, %s4243
      %p4245 = scmp.lt.s32.totalorder %s18, 1
      %s4246 = scalar_select %p4245, %s18, 1
      %s4247 = scalar_lea.vmem %s5, %s4246
      %p4248 = scmp.lt.s32.totalorder %s18, 1
      %s4249 = scalar_select %p4248, %s18, 1
      %s4250 = scalar_lea.vmem %s6, %s4249
      // Predicated region
      $region37: #{double_conv.4} parent=35 // pred_check
        %p4251 = pneg %p125
      $region38: #{double_conv.4} parent=35 // pred_check_branch
        %4253 = sbr.rel (%p4251) target = $region40
      $region39: #{double_conv.4} parent=35 // pred_region
        _
      $region40: #{double_conv.4} parent=35 // pred_fallthru
        _
      // Predicated region
      $region41: #{double_conv.4} parent=35 // pred_check
        %p4254 = pneg %p151
      $region42: #{double_conv.4} parent=35 // pred_check_branch
        %4256 = sbr.rel (%p4254) target = $region44
      $region43: #{double_conv.4} parent=35 // pred_region
        _
      $region44: #{double_conv.4} parent=35 // pred_fallthru
        _
      // Predicated region
      $region45: #{double_conv.4} parent=35 // pred_check
        %p4257 = pneg %p177
      $region46: #{double_conv.4} parent=35 // pred_check_branch
        %4259 = sbr.rel (%p4257) target = $region48
      $region47: #{double_conv.4} parent=35 // pred_region
        _
      $region48: #{double_conv.4} parent=35 // pred_fallthru
        _
    $region36: #{double_conv.4} parent=5 // pred_fallthru
      _
    %p4260 = scmp.le.s32.totalorder 2, %s13
    // Predicated region
    $region49: #{double_conv.4} parent=5 // pred_check
      %p4261 = pneg %p4260
    $region50: #{double_conv.4} parent=5 // pred_check_branch
      %4263 = sbr.rel (%p4261) target = $region52
    $region51: #{double_conv.4} parent=5 // pred_region
      %s4264 = ssub.s32 %s13, 2
      // Predicated region
      $region53: #{double_conv.4} parent=51 // pred_check
        %p4265 = pneg %p131
      $region54: #{double_conv.4} parent=51 // pred_check_branch
        %4267 = sbr.rel (%p4265) target = $region56
      $region55: #{double_conv.4} parent=51 // pred_region
        %p4268 = scmp.lt.s32.totalorder %s19, 1
        %s4269 = scalar_select %p4268, %s19, 1
        %s4270 = smul.addr %s4269, 32
        %s4271 = smul.addr %s4270, 4
        %s4272 = scalar_lea.vmem %s4, %s4271
      $region56: #{double_conv.4} parent=51 // pred_fallthru
        _
      // Predicated region
      $region57: #{double_conv.4} parent=51 // pred_check
        %p4273 = pneg %p157
      $region58: #{double_conv.4} parent=51 // pred_check_branch
        %4275 = sbr.rel (%p4273) target = $region60
      $region59: #{double_conv.4} parent=51 // pred_region
        %p4276 = scmp.lt.s32.totalorder %s19, 1
        %s4277 = scalar_select %p4276, %s19, 1
        %s4278 = scalar_lea.vmem %s5, %s4277
      $region60: #{double_conv.4} parent=51 // pred_fallthru
        _
      // Predicated region
      $region61: #{double_conv.4} parent=51 // pred_check
        %p4279 = pneg %p183
      $region62: #{double_conv.4} parent=51 // pred_check_branch
        %4281 = sbr.rel (%p4279) target = $region64
      $region63: #{double_conv.4} parent=51 // pred_region
        %p4282 = scmp.lt.s32.totalorder %s19, 1
        %s4283 = scalar_select %p4282, %s19, 1
        %s4284 = scalar_lea.vmem %s6, %s4283
      $region64: #{double_conv.4} parent=51 // pred_fallthru
        _
    $region52: #{double_conv.4} parent=5 // pred_fallthru
      _
  $region6: #{double_conv.4} parent=0 // loop_footer
    %s17 = sadd.s32 1, %s13
  $region7: #{double_conv.4} parent=0 // loop_footer_branch
    %12 = sbr.rel target = $region3
  $region8: #{double_conv.4} parent=0 // loop_exit
    _

// kernel: double_conv.3
$region0: #{double_conv.3}
  #allocation0 [shape = 'u32[]', space=smem, size = 0x4, offset = 0x4, fixed_abs, tag = 'smem constant byte address 0x4 - core index']
  #allocation1 [shape = 'u32[144,128]{1,0:T(1,128)}', space=vmem, size = 0x12000, scoped, tag = 'internal scratch']
  #allocation2 [shape = 'f32[304,128]{1,0:T(8,128)}', space=vmem, size = 0x26000, scoped, tag = 'scratch operand']
  %s0 = inlined_call_operand.vmem [shape: bf16[2,256,128], index: 0, kind: input, shape index: {}]
  %s1 = inlined_call_operand.vmem [shape: bf16[9,128,128], index: 1, kind: input, shape index: {}]
  %s2 = inlined_call_operand.vmem [shape: f32[1,128], index: 2, kind: input, shape index: {}]
  %s3 = inlined_call_operand.vmem [shape: f32[1,128], index: 3, kind: input, shape index: {}]
  %s4 = inlined_call_operand.vmem [shape: bf16[2,256,128], index: 4, kind: output, shape index: {0}]
  %s5 = inlined_call_operand.vmem [shape: f32[2,1,128], index: 5, kind: output, shape index: {1}]
  %s6 = inlined_call_operand.vmem [shape: f32[2,1,128], index: 6, kind: output, shape index: {2}]
  %7 = xla_tuple %s4, %s5, %s6
  %s8 = sld [smem:[#allocation0]]
  $region65: #{double_conv.3} parent=0
    _
  %s10 = ssub.s32 1, %s8
  %s11 = scalar_select 0, %s10, %s8
  loop: start=0, step=1, limit=4
  $region2: #{double_conv.3} parent=0 // loop_pre_header
    _
  $region3: #{double_conv.3} parent=0 // loop_header
    %s13 = sphi 0, %s17
    %p14 = scmp.ge.s32.totalorder %s13, 4
    %s23 = sphi 0, %s25
    %s26 = sphi 0, %s23
    %s27 = sphi 0, %s26
    %s43 = sphi 0, %s27
    %s47 = sphi 0, %s47
    %s49 = sphi 0, %s47
    %s50 = sphi 0, %s49
    %s64 = sphi 0, %s50
    %s68 = sphi 0, %s68
    %s70 = sphi 0, %s68
    %s71 = sphi 0, %s70
    %s85 = sphi 0, %s71
    %s89 = sphi 0, %s89
    %s91 = sphi 0, %s89
    %s92 = sphi 0, %s91
    %s106 = sphi 0, %s92
    %s112 = sphi 0, %s114
    %s115 = sphi 0, %s112
    %s116 = sphi 0, %s115
    %s132 = sphi 0, %s116
    %s138 = sphi 0, %s140
    %s141 = sphi 0, %s138
    %s142 = sphi 0, %s141
    %s158 = sphi 0, %s142
    %s164 = sphi 0, %s166
    %s167 = sphi 0, %s164
    %s168 = sphi 0, %s167
    %s184 = sphi 0, %s168
  $region4: #{double_conv.3} parent=0 // loop_header_branch
    %16 = sbr.rel (%p14) target = $region8
  $region5: #{double_conv.3} parent=0 // loop_body
    %s18 = ssub.s32 %s13, 1
    %s19 = ssub.s32 %s13, 2
    %s20 = sadd.s32 %s13, 1
    %s21 = ssub.s32 %s13, %s20
    %p22 = scmp.eq.s32.totalorder %s21, 0
    %s24 = sadd.s32 %s23, 1
    %s25 = scalar_select %p22, %s23, %s24
    %p28 = pneg %p22
    %p29 = scmp.eq.s32.totalorder %s13, 1
    %p30 = por %p28, %p29
    %p31 = scmp.ne.s32.totalorder %s23, %s26
    %p32 = scmp.eq.s32.totalorder %s13, 0
    %p33 = por %p31, %p32
    %p34 = scmp.ne.s32.totalorder %s23, %s26
    %p35 = scmp.eq.s32.totalorder %s18, 1
    %p36 = por %p34, %p35
    %p37 = scmp.ne.s32.totalorder %s26, %s27
    %p38 = scmp.eq.s32.totalorder %s18, 0
    %p39 = por %p37, %p38
    %p40 = scmp.ne.s32.totalorder %s26, %s27
    %p41 = scmp.eq.s32.totalorder %s19, 1
    %p42 = por %p40, %p41
    %p44 = scmp.ne.s32.totalorder %s27, %s43
    %p45 = scmp.eq.s32.totalorder %s19, 0
    %p46 = por %p44, %p45
    %s48 = sadd.s32 %s47, 1
    %p51 = scmp.eq.s32.totalorder %s13, 1
    %p52 = scmp.ne.s32.totalorder %s47, %s49
    %p53 = scmp.eq.s32.totalorder %s13, 0
    %p54 = por %p52, %p53
    %p55 = scmp.ne.s32.totalorder %s47, %s49
    %p56 = scmp.eq.s32.totalorder %s18, 1
    %p57 = por %p55, %p56
    %p58 = scmp.ne.s32.totalorder %s49, %s50
    %p59 = scmp.eq.s32.totalorder %s18, 0
    %p60 = por %p58, %p59
    %p61 = scmp.ne.s32.totalorder %s49, %s50
    %p62 = scmp.eq.s32.totalorder %s19, 1
    %p63 = por %p61, %p62
    %p65 = scmp.ne.s32.totalorder %s50, %s64
    %p66 = scmp.eq.s32.totalorder %s19, 0
    %p67 = por %p65, %p66
    %s69 = sadd.s32 %s68, 1
    %p72 = scmp.eq.s32.totalorder %s13, 1
    %p73 = scmp.ne.s32.totalorder %s68, %s70
    %p74 = scmp.eq.s32.totalorder %s13, 0
    %p75 = por %p73, %p74
    %p76 = scmp.ne.s32.totalorder %s68, %s70
    %p77 = scmp.eq.s32.totalorder %s18, 1
    %p78 = por %p76, %p77
    %p79 = scmp.ne.s32.totalorder %s70, %s71
    %p80 = scmp.eq.s32.totalorder %s18, 0
    %p81 = por %p79, %p80
    %p82 = scmp.ne.s32.totalorder %s70, %s71
    %p83 = scmp.eq.s32.totalorder %s19, 1
    %p84 = por %p82, %p83
    %p86 = scmp.ne.s32.totalorder %s71, %s85
    %p87 = scmp.eq.s32.totalorder %s19, 0
    %p88 = por %p86, %p87
    %s90 = sadd.s32 %s89, 1
    %p93 = scmp.eq.s32.totalorder %s13, 1
    %p94 = scmp.ne.s32.totalorder %s89, %s91
    %p95 = scmp.eq.s32.totalorder %s13, 0
    %p96 = por %p94, %p95
    %p97 = scmp.ne.s32.totalorder %s89, %s91
    %p98 = scmp.eq.s32.totalorder %s18, 1
    %p99 = por %p97, %p98
    %p100 = scmp.ne.s32.totalorder %s91, %s92
    %p101 = scmp.eq.s32.totalorder %s18, 0
    %p102 = por %p100, %p101
    %p103 = scmp.ne.s32.totalorder %s91, %s92
    %p104 = scmp.eq.s32.totalorder %s19, 1
    %p105 = por %p103, %p104
    %p107 = scmp.ne.s32.totalorder %s92, %s106
    %p108 = scmp.eq.s32.totalorder %s19, 0
    %p109 = por %p107, %p108
    %s110 = ssub.s32 %s13, %s20
    %p111 = scmp.eq.s32.totalorder %s110, 0
    %s113 = sadd.s32 %s112, 1
    %s114 = scalar_select %p111, %s112, %s113
    %p117 = pneg %p111
    %p118 = scmp.eq.s32.totalorder %s13, 1
    %p119 = por %p117, %p118
    %p120 = scmp.ne.s32.totalorder %s112, %s115
    %p121 = scmp.eq.s32.totalorder %s13, 0
    %p122 = por %p120, %p121
    %p123 = scmp.ne.s32.totalorder %s112, %s115
    %p124 = scmp.eq.s32.totalorder %s18, 1
    %p125 = por %p123, %p124
    %p126 = scmp.ne.s32.totalorder %s115, %s116
    %p127 = scmp.eq.s32.totalorder %s18, 0
    %p128 = por %p126, %p127
    %p129 = scmp.ne.s32.totalorder %s115, %s116
    %p130 = scmp.eq.s32.totalorder %s19, 1
    %p131 = por %p129, %p130
    %p133 = scmp.ne.s32.totalorder %s116, %s132
    %p134 = scmp.eq.s32.totalorder %s19, 0
    %p135 = por %p133, %p134
    %s136 = ssub.s32 %s13, %s20
    %p137 = scmp.eq.s32.totalorder %s136, 0
    %s139 = sadd.s32 %s138, 1
    %s140 = scalar_select %p137, %s138, %s139
    %p143 = pneg %p137
    %p144 = scmp.eq.s32.totalorder %s13, 1
    %p145 = por %p143, %p144
    %p146 = scmp.ne.s32.totalorder %s138, %s141
    %p147 = scmp.eq.s32.totalorder %s13, 0
    %p148 = por %p146, %p147
    %p149 = scmp.ne.s32.totalorder %s138, %s141
    %p150 = scmp.eq.s32.totalorder %s18, 1
    %p151 = por %p149, %p150
    %p152 = scmp.ne.s32.totalorder %s141, %s142
    %p153 = scmp.eq.s32.totalorder %s18, 0
    %p154 = por %p152, %p153
    %p155 = scmp.ne.s32.totalorder %s141, %s142
    %p156 = scmp.eq.s32.totalorder %s19, 1
    %p157 = por %p155, %p156
    %p159 = scmp.ne.s32.totalorder %s142, %s158
    %p160 = scmp.eq.s32.totalorder %s19, 0
    %p161 = por %p159, %p160
    %s162 = ssub.s32 %s13, %s20
    %p163 = scmp.eq.s32.totalorder %s162, 0
    %s165 = sadd.s32 %s164, 1
    %s166 = scalar_select %p163, %s164, %s165
    %p169 = pneg %p163
    %p170 = scmp.eq.s32.totalorder %s13, 1
    %p171 = por %p169, %p170
    %p172 = scmp.ne.s32.totalorder %s164, %s167
    %p173 = scmp.eq.s32.totalorder %s13, 0
    %p174 = por %p172, %p173
    %p175 = scmp.ne.s32.totalorder %s164, %s167
    %p176 = scmp.eq.s32.totalorder %s18, 1
    %p177 = por %p175, %p176
    %p178 = scmp.ne.s32.totalorder %s167, %s168
    %p179 = scmp.eq.s32.totalorder %s18, 0
    %p180 = por %p178, %p179
    %p181 = scmp.ne.s32.totalorder %s167, %s168
    %p182 = scmp.eq.s32.totalorder %s19, 1
    %p183 = por %p181, %p182
    %p185 = scmp.ne.s32.totalorder %s168, %s184
    %p186 = scmp.eq.s32.totalorder %s19, 0
    %p187 = por %p185, %p186
    %p188 = scmp.le.s32.totalorder 1, %s13
    %p189 = scmp.lt.s32.totalorder %s13, 3
    %p190 = pnand %p188, %p189
    %p191 = pneg %p190
    // Predicated region
    $region9: #{double_conv.3} parent=5 // pred_check
      _
    $region10: #{double_conv.3} parent=5 // pred_check_branch
      %193 = sbr.rel (%p190) target = $region12
    $region11: #{double_conv.3} parent=5 // pred_region
      %s194 = ssub.s32 %s13, 1
      // Predicated region
      $region13: #{double_conv.3} parent=11 // pred_check
        %p195 = pneg %p60
      $region14: #{double_conv.3} parent=11 // pred_check_branch
        %197 = sbr.rel (%p195) target = $region16
      $region15: #{double_conv.3} parent=11 // pred_region
        _
      $region16: #{double_conv.3} parent=11 // pred_fallthru
        _
      // Predicated region
      $region17: #{double_conv.3} parent=11 // pred_check
        %p198 = pneg %p81
      $region18: #{double_conv.3} parent=11 // pred_check_branch
        %200 = sbr.rel (%p198) target = $region20
      $region19: #{double_conv.3} parent=11 // pred_region
        _
      $region20: #{double_conv.3} parent=11 // pred_fallthru
        _
      // Predicated region
      $region21: #{double_conv.3} parent=11 // pred_check
        %p201 = pneg %p102
      $region22: #{double_conv.3} parent=11 // pred_check_branch
        %203 = sbr.rel (%p201) target = $region24
      $region23: #{double_conv.3} parent=11 // pred_region
        _
      $region24: #{double_conv.3} parent=11 // pred_fallthru
        _
    $region12: #{double_conv.3} parent=5 // pred_fallthru
      _
    %p204 = scmp.lt.s32.totalorder %s13, 2
    // Predicated region
    $region25: #{double_conv.3} parent=5 // pred_check
      %p205 = pneg %p204
    $region26: #{double_conv.3} parent=5 // pred_check_branch
      %207 = sbr.rel (%p205) target = $region28
    $region27: #{double_conv.3} parent=5 // pred_region
      // Predicated region
      $region29: #{double_conv.3} parent=27 // pred_check
        %p208 = pneg %p33
      $region30: #{double_conv.3} parent=27 // pred_check_branch
        %210 = sbr.rel (%p208) target = $region32
      $region31: #{double_conv.3} parent=27 // pred_region
        %p211 = scmp.lt.s32.totalorder %s13, 1
        %s212 = scalar_select %p211, %s13, 1
        %s213 = smul.addr %s212, 32
        %s214 = smul.addr %s213, 4
        %s215 = scalar_lea.vmem %s0, %s214
      $region32: #{double_conv.3} parent=27 // pred_fallthru
        _
    $region28: #{double_conv.3} parent=5 // pred_fallthru
      _
    %p216 = scmp.le.s32.totalorder 1, %s13
    %p217 = scmp.lt.s32.totalorder %s13, 3
    %p218 = pnand %p216, %p217
    %p219 = pneg %p218
    // Predicated region
    $region33: #{double_conv.3} parent=5 // pred_check
      _
    $region34: #{double_conv.3} parent=5 // pred_check_branch
      %221 = sbr.rel (%p218) target = $region36
    $region35: #{double_conv.3} parent=5 // pred_region
      %s222 = ssub.s32 %s13, 1
      %p223 = scmp.lt.s32.totalorder %s18, 1
      %s224 = scalar_select %p223, %s18, 1
      %s225 = smul.addr %s224, 32
      %s226 = smul.addr %s225, 4
      %s227 = scalar_lea.vmem %s0, %s226
      %p228 = pneg %p39
      %p229 = pneg %p36
      %p230 = pneg %p60
      %p231 = pneg %p57
      %p232 = pneg %p81
      %p233 = pneg %p78
      %p234 = pneg %p102
      %p235 = pneg %p99
      %p236 = pneg %p128
      %p237 = pneg %p125
      %p238 = scmp.lt.s32.totalorder %s18, 1
      %s239 = scalar_select %p238, %s18, 1
      %s240 = smul.addr %s239, 32
      %s241 = smul.addr %s240, 4
      %s242 = scalar_lea.vmem %s4, %s241
      %p243 = pneg %p154
      %p244 = pneg %p151
      %p245 = scmp.lt.s32.totalorder %s18, 1
      %s246 = scalar_select %p245, %s18, 1
      %s247 = scalar_lea.vmem %s5, %s246
      %p248 = pneg %p180
      %p249 = pneg %p177
      %p250 = scmp.lt.s32.totalorder %s18, 1
      %s251 = scalar_select %p250, %s18, 1
      %s252 = scalar_lea.vmem %s6, %s251
      %p253 = scmp.lt.s32.totalorder %s18, 1
      %s254 = scalar_select %p253, %s18, 1
      %s255 = smul.addr %s254, 32
      %s256 = smul.addr %s255, 4
      %s257 = scalar_lea.vmem %s0, %s256
      %p258 = scmp.lt.s32.totalorder %s18, 1
      %s259 = scalar_select %p258, %s18, 1
      %s260 = smul.addr %s259, 32
      %s261 = smul.addr %s260, 4
      %s262 = scalar_lea.vmem %s4, %s261
      %p263 = scmp.lt.s32.totalorder %s18, 1
      %s264 = scalar_select %p263, %s18, 1
      %s265 = scalar_lea.vmem %s5, %s264
      %p266 = scmp.lt.s32.totalorder %s18, 1
      %s267 = scalar_select %p266, %s18, 1
      %s268 = scalar_lea.vmem %s6, %s267
      %270 = vst [vmem:[#allocation2] sm:$0xff] 0.0
      %271 = vst [vmem:[#allocation2 + $0x8] sm:$0xff] 0.0
      %272 = vst [vmem:[#allocation2 + $0x10] sm:$0xff] 0.0
      %273 = vst [vmem:[#allocation2 + $0x118] sm:$0xff] 0.0
      %274 = vst [vmem:[#allocation2 + $0x120] sm:$0xff] 0.0
      %275 = vst [vmem:[#allocation2 + $0x128] sm:$0xff] 0.0
      %v276 = vld [vmem:[%s257] sm:$0xf]
      %v277 = vld [vmem:[%s257 + $0x4] sm:$0xf]
      %v278 = vld [vmem:[%s257 + $0x8] sm:$0xf]
      %v279 = vld [vmem:[%s257 + $0xc] sm:$0xf]
      %v280 = vld [vmem:[%s257 + $0x10] sm:$0xf]
      %v281 = vld [vmem:[%s257 + $0x14] sm:$0xf]
      %v282 = vld [vmem:[%s257 + $0x18] sm:$0xf]
      %v283 = vld [vmem:[%s257 + $0x1c] sm:$0xf]
      %v284 = vld [vmem:[%s257 + $0x20] sm:$0xf]
      %v285 = vld [vmem:[%s257 + $0x24] sm:$0xf]
      %v286 = vld [vmem:[%s257 + $0x28] sm:$0xf]
      %v287 = vld [vmem:[%s257 + $0x2c] sm:$0xf]
      %v288 = vld [vmem:[%s257 + $0x30] sm:$0xf]
      %v289 = vld [vmem:[%s257 + $0x34] sm:$0xf]
      %v290 = vld [vmem:[%s257 + $0x38] sm:$0xf]
      %v291 = vld [vmem:[%s257 + $0x3c] sm:$0xf]
      %v292 = vld [vmem:[%s257 + $0x40] sm:$0xf]
      %v293 = vld [vmem:[%s257 + $0x44] sm:$0xf]
      %v294 = vld [vmem:[%s257 + $0x48] sm:$0xf]
      %v295 = vld [vmem:[%s257 + $0x4c] sm:$0xf]
      %v296 = vld [vmem:[%s257 + $0x50] sm:$0xf]
      %v297 = vld [vmem:[%s257 + $0x54] sm:$0xf]
      %v298 = vld [vmem:[%s257 + $0x58] sm:$0xf]
      %v299 = vld [vmem:[%s257 + $0x5c] sm:$0xf]
      %v300 = vld [vmem:[%s257 + $0x60] sm:$0xf]
      %v301 = vld [vmem:[%s257 + $0x64] sm:$0xf]
      %v302 = vld [vmem:[%s257 + $0x68] sm:$0xf]
      %v303 = vld [vmem:[%s257 + $0x6c] sm:$0xf]
      %v304 = vld [vmem:[%s257 + $0x70] sm:$0xf]
      %v305 = vld [vmem:[%s257 + $0x74] sm:$0xf]
      %v306 = vld [vmem:[%s257 + $0x78] sm:$0xf]
      %v307 = vld [vmem:[%s257 + $0x7c] sm:$0xf]
      %v308 = vunpack.c.l.bf16 %v276
      %v309 = vunpack.c.l.bf16 %v277
      %v310 = vunpack.c.l.bf16 %v278
      %v311 = vunpack.c.l.bf16 %v279
      %v312 = vunpack.c.l.bf16 %v280
      %v313 = vunpack.c.l.bf16 %v281
      %v314 = vunpack.c.l.bf16 %v282
      %v315 = vunpack.c.l.bf16 %v283
      %v316 = vunpack.c.l.bf16 %v284
      %v317 = vunpack.c.l.bf16 %v285
      %v318 = vunpack.c.l.bf16 %v286
      %v319 = vunpack.c.l.bf16 %v287
      %v320 = vunpack.c.l.bf16 %v288
      %v321 = vunpack.c.l.bf16 %v289
      %v322 = vunpack.c.l.bf16 %v290
      %v323 = vunpack.c.l.bf16 %v291
      %v324 = vunpack.c.l.bf16 %v292
      %v325 = vunpack.c.l.bf16 %v293
      %v326 = vunpack.c.l.bf16 %v294
      %v327 = vunpack.c.l.bf16 %v295
      %v328 = vunpack.c.l.bf16 %v296
      %v329 = vunpack.c.l.bf16 %v297
      %v330 = vunpack.c.l.bf16 %v298
      %v331 = vunpack.c.l.bf16 %v299
      %v332 = vunpack.c.l.bf16 %v300
      %v333 = vunpack.c.l.bf16 %v301
      %v334 = vunpack.c.l.bf16 %v302
      %v335 = vunpack.c.l.bf16 %v303
      %v336 = vunpack.c.l.bf16 %v304
      %v337 = vunpack.c.l.bf16 %v305
      %v338 = vunpack.c.l.bf16 %v306
      %v339 = vunpack.c.l.bf16 %v307
      %340 = vst [vmem:[#allocation2 + $0x18] sm:$0xff] %v308
      %341 = vst [vmem:[#allocation2 + $0x20] sm:$0xff] %v309
      %342 = vst [vmem:[#allocation2 + $0x28] sm:$0xff] %v310
      %343 = vst [vmem:[#allocation2 + $0x30] sm:$0xff] %v311
      %344 = vst [vmem:[#allocation2 + $0x38] sm:$0xff] %v312
      %345 = vst [vmem:[#allocation2 + $0x40] sm:$0xff] %v313
      %346 = vst [vmem:[#allocation2 + $0x48] sm:$0xff] %v314
      %347 = vst [vmem:[#allocation2 + $0x50] sm:$0xff] %v315
      %348 = vst [vmem:[#allocation2 + $0x58] sm:$0xff] %v316
      %349 = vst [vmem:[#allocation2 + $0x60] sm:$0xff] %v317
      %350 = vst [vmem:[#allocation2 + $0x68] sm:$0xff] %v318
      %351 = vst [vmem:[#allocation2 + $0x70] sm:$0xff] %v319
      %352 = vst [vmem:[#allocation2 + $0x78] sm:$0xff] %v320
      %353 = vst [vmem:[#allocation2 + $0x80] sm:$0xff] %v321
      %354 = vst [vmem:[#allocation2 + $0x88] sm:$0xff] %v322
      %355 = vst [vmem:[#allocation2 + $0x90] sm:$0xff] %v323
      %356 = vst [vmem:[#allocation2 + $0x98] sm:$0xff] %v324
      %357 = vst [vmem:[#allocation2 + $0xa0] sm:$0xff] %v325
      %358 = vst [vmem:[#allocation2 + $0xa8] sm:$0xff] %v326
      %359 = vst [vmem:[#allocation2 + $0xb0] sm:$0xff] %v327
      %360 = vst [vmem:[#allocation2 + $0xb8] sm:$0xff] %v328
      %361 = vst [vmem:[#allocation2 + $0xc0] sm:$0xff] %v329
      %362 = vst [vmem:[#allocation2 + $0xc8] sm:$0xff] %v330
      %363 = vst [vmem:[#allocation2 + $0xd0] sm:$0xff] %v331
      %364 = vst [vmem:[#allocation2 + $0xd8] sm:$0xff] %v332
      %365 = vst [vmem:[#allocation2 + $0xe0] sm:$0xff] %v333
      %366 = vst [vmem:[#allocation2 + $0xe8] sm:$0xff] %v334
      %367 = vst [vmem:[#allocation2 + $0xf0] sm:$0xff] %v335
      %368 = vst [vmem:[#allocation2 + $0xf8] sm:$0xff] %v336
      %369 = vst [vmem:[#allocation2 + $0x100] sm:$0xff] %v337
      %370 = vst [vmem:[#allocation2 + $0x108] sm:$0xff] %v338
      %371 = vst [vmem:[#allocation2 + $0x110] sm:$0xff] %v339
      %v372 = vlaneseq
      %v373 = vshrl.u32 %v372, 7
      %v374 = vadd.s32 %v373, 8
      %v375 = vadd.s32 %v373, 16
      %v376 = vadd.s32 %v373, 24
      %v377 = vadd.s32 %v373, 32
      %v378 = vadd.s32 %v373, 40
      %v379 = vadd.s32 %v373, 48
      %v380 = vadd.s32 %v373, 56
      %v381 = vadd.s32 %v373, 64
      %v382 = vadd.s32 %v373, 72
      %v383 = vadd.s32 %v373, 80
      %v384 = vadd.s32 %v373, 88
      %v385 = vadd.s32 %v373, 96
      %v386 = vadd.s32 %v373, 104
      %v387 = vadd.s32 %v373, 112
      %v388 = vadd.s32 %v373, 120
      %v389 = vadd.s32 %v373, 128
      %v390 = vadd.s32 %v373, 136
      %v391 = vadd.s32 %v373, 144
      %v392 = vadd.s32 %v373, 152
      %v393 = vadd.s32 %v373, 160
      %v394 = vadd.s32 %v373, 168
      %v395 = vadd.s32 %v373, 176
      %v396 = vadd.s32 %v373, 184
      %v397 = vadd.s32 %v373, 192
      %v398 = vadd.s32 %v373, 200
      %v399 = vadd.s32 %v373, 208
      %v400 = vadd.s32 %v373, 216
      %v401 = vadd.s32 %v373, 224
      %v402 = vadd.s32 %v373, 232
      %v403 = vadd.s32 %v373, 240
      %v404 = vadd.s32 %v373, 248
      %vm405 = vcmp.lt.s32.totalorder %v373, 0
      %v406 = vsub.s32 0, %v373
      %v407 = vsel %vm405, %v406, %v373
      %v408 = vshrl.u32 %v407, 4
      %v409 = vand.u32 %v407, 15
      %v410 = vsub.s32 0, %v409
      %v411 = vsel %vm405, %v410, %v409
      %vm412 = vcmp.lt.s32.totalorder %v374, 0
      %v413 = vsub.s32 0, %v374
      %v414 = vsel %vm412, %v413, %v374
      %v415 = vshrl.u32 %v414, 4
      %v416 = vand.u32 %v414, 15
      %v417 = vsub.s32 0, %v416
      %v418 = vsel %vm412, %v417, %v416
      %vm419 = vcmp.lt.s32.totalorder %v375, 0
      %v420 = vsub.s32 0, %v375
      %v421 = vsel %vm419, %v420, %v375
      %v422 = vshrl.u32 %v421, 4
      %v423 = vand.u32 %v421, 15
      %v424 = vsub.s32 0, %v423
      %v425 = vsel %vm419, %v424, %v423
      %vm426 = vcmp.lt.s32.totalorder %v376, 0
      %v427 = vsub.s32 0, %v376
      %v428 = vsel %vm426, %v427, %v376
      %v429 = vshrl.u32 %v428, 4
      %v430 = vand.u32 %v428, 15
      %v431 = vsub.s32 0, %v430
      %v432 = vsel %vm426, %v431, %v430
      %vm433 = vcmp.lt.s32.totalorder %v377, 0
      %v434 = vsub.s32 0, %v377
      %v435 = vsel %vm433, %v434, %v377
      %v436 = vshrl.u32 %v435, 4
      %v437 = vand.u32 %v435, 15
      %v438 = vsub.s32 0, %v437
      %v439 = vsel %vm433, %v438, %v437
      %vm440 = vcmp.lt.s32.totalorder %v378, 0
      %v441 = vsub.s32 0, %v378
      %v442 = vsel %vm440, %v441, %v378
      %v443 = vshrl.u32 %v442, 4
      %v444 = vand.u32 %v442, 15
      %v445 = vsub.s32 0, %v444
      %v446 = vsel %vm440, %v445, %v444
      %vm447 = vcmp.lt.s32.totalorder %v379, 0
      %v448 = vsub.s32 0, %v379
      %v449 = vsel %vm447, %v448, %v379
      %v450 = vshrl.u32 %v449, 4
      %v451 = vand.u32 %v449, 15
      %v452 = vsub.s32 0, %v451
      %v453 = vsel %vm447, %v452, %v451
      %vm454 = vcmp.lt.s32.totalorder %v380, 0
      %v455 = vsub.s32 0, %v380
      %v456 = vsel %vm454, %v455, %v380
      %v457 = vshrl.u32 %v456, 4
      %v458 = vand.u32 %v456, 15
      %v459 = vsub.s32 0, %v458
      %v460 = vsel %vm454, %v459, %v458
      %vm461 = vcmp.lt.s32.totalorder %v381, 0
      %v462 = vsub.s32 0, %v381
      %v463 = vsel %vm461, %v462, %v381
      %v464 = vshrl.u32 %v463, 4
      %v465 = vand.u32 %v463, 15
      %v466 = vsub.s32 0, %v465
      %v467 = vsel %vm461, %v466, %v465
      %vm468 = vcmp.lt.s32.totalorder %v382, 0
      %v469 = vsub.s32 0, %v382
      %v470 = vsel %vm468, %v469, %v382
      %v471 = vshrl.u32 %v470, 4
      %v472 = vand.u32 %v470, 15
      %v473 = vsub.s32 0, %v472
      %v474 = vsel %vm468, %v473, %v472
      %vm475 = vcmp.lt.s32.totalorder %v383, 0
      %v476 = vsub.s32 0, %v383
      %v477 = vsel %vm475, %v476, %v383
      %v478 = vshrl.u32 %v477, 4
      %v479 = vand.u32 %v477, 15
      %v480 = vsub.s32 0, %v479
      %v481 = vsel %vm475, %v480, %v479
      %vm482 = vcmp.lt.s32.totalorder %v384, 0
      %v483 = vsub.s32 0, %v384
      %v484 = vsel %vm482, %v483, %v384
      %v485 = vshrl.u32 %v484, 4
      %v486 = vand.u32 %v484, 15
      %v487 = vsub.s32 0, %v486
      %v488 = vsel %vm482, %v487, %v486
      %vm489 = vcmp.lt.s32.totalorder %v385, 0
      %v490 = vsub.s32 0, %v385
      %v491 = vsel %vm489, %v490, %v385
      %v492 = vshrl.u32 %v491, 4
      %v493 = vand.u32 %v491, 15
      %v494 = vsub.s32 0, %v493
      %v495 = vsel %vm489, %v494, %v493
      %vm496 = vcmp.lt.s32.totalorder %v386, 0
      %v497 = vsub.s32 0, %v386
      %v498 = vsel %vm496, %v497, %v386
      %v499 = vshrl.u32 %v498, 4
      %v500 = vand.u32 %v498, 15
      %v501 = vsub.s32 0, %v500
      %v502 = vsel %vm496, %v501, %v500
      %vm503 = vcmp.lt.s32.totalorder %v387, 0
      %v504 = vsub.s32 0, %v387
      %v505 = vsel %vm503, %v504, %v387
      %v506 = vshrl.u32 %v505, 4
      %v507 = vand.u32 %v505, 15
      %v508 = vsub.s32 0, %v507
      %v509 = vsel %vm503, %v508, %v507
      %vm510 = vcmp.lt.s32.totalorder %v388, 0
      %v511 = vsub.s32 0, %v388
      %v512 = vsel %vm510, %v511, %v388
      %v513 = vshrl.u32 %v512, 4
      %v514 = vand.u32 %v512, 15
      %v515 = vsub.s32 0, %v514
      %v516 = vsel %vm510, %v515, %v514
      %vm517 = vcmp.lt.s32.totalorder %v389, 0
      %v518 = vsub.s32 0, %v389
      %v519 = vsel %vm517, %v518, %v389
      %v520 = vshrl.u32 %v519, 4
      %v521 = vand.u32 %v519, 15
      %v522 = vsub.s32 0, %v521
      %v523 = vsel %vm517, %v522, %v521
      %vm524 = vcmp.lt.s32.totalorder %v390, 0
      %v525 = vsub.s32 0, %v390
      %v526 = vsel %vm524, %v525, %v390
      %v527 = vshrl.u32 %v526, 4
      %v528 = vand.u32 %v526, 15
      %v529 = vsub.s32 0, %v528
      %v530 = vsel %vm524, %v529, %v528
      %vm531 = vcmp.lt.s32.totalorder %v391, 0
      %v532 = vsub.s32 0, %v391
      %v533 = vsel %vm531, %v532, %v391
      %v534 = vshrl.u32 %v533, 4
      %v535 = vand.u32 %v533, 15
      %v536 = vsub.s32 0, %v535
      %v537 = vsel %vm531, %v536, %v535
      %vm538 = vcmp.lt.s32.totalorder %v392, 0
      %v539 = vsub.s32 0, %v392
      %v540 = vsel %vm538, %v539, %v392
      %v541 = vshrl.u32 %v540, 4
      %v542 = vand.u32 %v540, 15
      %v543 = vsub.s32 0, %v542
      %v544 = vsel %vm538, %v543, %v542
      %vm545 = vcmp.lt.s32.totalorder %v393, 0
      %v546 = vsub.s32 0, %v393
      %v547 = vsel %vm545, %v546, %v393
      %v548 = vshrl.u32 %v547, 4
      %v549 = vand.u32 %v547, 15
      %v550 = vsub.s32 0, %v549
      %v551 = vsel %vm545, %v550, %v549
      %vm552 = vcmp.lt.s32.totalorder %v394, 0
      %v553 = vsub.s32 0, %v394
      %v554 = vsel %vm552, %v553, %v394
      %v555 = vshrl.u32 %v554, 4
      %v556 = vand.u32 %v554, 15
      %v557 = vsub.s32 0, %v556
      %v558 = vsel %vm552, %v557, %v556
      %vm559 = vcmp.lt.s32.totalorder %v395, 0
      %v560 = vsub.s32 0, %v395
      %v561 = vsel %vm559, %v560, %v395
      %v562 = vshrl.u32 %v561, 4
      %v563 = vand.u32 %v561, 15
      %v564 = vsub.s32 0, %v563
      %v565 = vsel %vm559, %v564, %v563
      %vm566 = vcmp.lt.s32.totalorder %v396, 0
      %v567 = vsub.s32 0, %v396
      %v568 = vsel %vm566, %v567, %v396
      %v569 = vshrl.u32 %v568, 4
      %v570 = vand.u32 %v568, 15
      %v571 = vsub.s32 0, %v570
      %v572 = vsel %vm566, %v571, %v570
      %vm573 = vcmp.lt.s32.totalorder %v397, 0
      %v574 = vsub.s32 0, %v397
      %v575 = vsel %vm573, %v574, %v397
      %v576 = vshrl.u32 %v575, 4
      %v577 = vand.u32 %v575, 15
      %v578 = vsub.s32 0, %v577
      %v579 = vsel %vm573, %v578, %v577
      %vm580 = vcmp.lt.s32.totalorder %v398, 0
      %v581 = vsub.s32 0, %v398
      %v582 = vsel %vm580, %v581, %v398
      %v583 = vshrl.u32 %v582, 4
      %v584 = vand.u32 %v582, 15
      %v585 = vsub.s32 0, %v584
      %v586 = vsel %vm580, %v585, %v584
      %vm587 = vcmp.lt.s32.totalorder %v399, 0
      %v588 = vsub.s32 0, %v399
      %v589 = vsel %vm587, %v588, %v399
      %v590 = vshrl.u32 %v589, 4
      %v591 = vand.u32 %v589, 15
      %v592 = vsub.s32 0, %v591
      %v593 = vsel %vm587, %v592, %v591
      %vm594 = vcmp.lt.s32.totalorder %v400, 0
      %v595 = vsub.s32 0, %v400
      %v596 = vsel %vm594, %v595, %v400
      %v597 = vshrl.u32 %v596, 4
      %v598 = vand.u32 %v596, 15
      %v599 = vsub.s32 0, %v598
      %v600 = vsel %vm594, %v599, %v598
      %vm601 = vcmp.lt.s32.totalorder %v401, 0
      %v602 = vsub.s32 0, %v401
      %v603 = vsel %vm601, %v602, %v401
      %v604 = vshrl.u32 %v603, 4
      %v605 = vand.u32 %v603, 15
      %v606 = vsub.s32 0, %v605
      %v607 = vsel %vm601, %v606, %v605
      %vm608 = vcmp.lt.s32.totalorder %v402, 0
      %v609 = vsub.s32 0, %v402
      %v610 = vsel %vm608, %v609, %v402
      %v611 = vshrl.u32 %v610, 4
      %v612 = vand.u32 %v610, 15
      %v613 = vsub.s32 0, %v612
      %v614 = vsel %vm608, %v613, %v612
      %vm615 = vcmp.lt.s32.totalorder %v403, 0
      %v616 = vsub.s32 0, %v403
      %v617 = vsel %vm615, %v616, %v403
      %v618 = vshrl.u32 %v617, 4
      %v619 = vand.u32 %v617, 15
      %v620 = vsub.s32 0, %v619
      %v621 = vsel %vm615, %v620, %v619
      %vm622 = vcmp.lt.s32.totalorder %v404, 0
      %v623 = vsub.s32 0, %v404
      %v624 = vsel %vm622, %v623, %v404
      %v625 = vshrl.u32 %v624, 4
      %v626 = vand.u32 %v624, 15
      %v627 = vsub.s32 0, %v626
      %v628 = vsel %vm622, %v627, %v626
      %vm629 = vcmp.ne.s32.totalorder %v411, 0
      %vm630 = vcmp.ne.s32.totalorder %v418, 0
      %vm631 = vcmp.ne.s32.totalorder %v425, 0
      %vm632 = vcmp.ne.s32.totalorder %v432, 0
      %vm633 = vcmp.ne.s32.totalorder %v439, 0
      %vm634 = vcmp.ne.s32.totalorder %v446, 0
      %vm635 = vcmp.ne.s32.totalorder %v453, 0
      %vm636 = vcmp.ne.s32.totalorder %v460, 0
      %vm637 = vcmp.ne.s32.totalorder %v467, 0
      %vm638 = vcmp.ne.s32.totalorder %v474, 0
      %vm639 = vcmp.ne.s32.totalorder %v481, 0
      %vm640 = vcmp.ne.s32.totalorder %v488, 0
      %vm641 = vcmp.ne.s32.totalorder %v495, 0
      %vm642 = vcmp.ne.s32.totalorder %v502, 0
      %vm643 = vcmp.ne.s32.totalorder %v509, 0
      %vm644 = vcmp.ne.s32.totalorder %v516, 0
      %vm645 = vcmp.ne.s32.totalorder %v523, 0
      %vm646 = vcmp.ne.s32.totalorder %v530, 0
      %vm647 = vcmp.ne.s32.totalorder %v537, 0
      %vm648 = vcmp.ne.s32.totalorder %v544, 0
      %vm649 = vcmp.ne.s32.totalorder %v551, 0
      %vm650 = vcmp.ne.s32.totalorder %v558, 0
      %vm651 = vcmp.ne.s32.totalorder %v565, 0
      %vm652 = vcmp.ne.s32.totalorder %v572, 0
      %vm653 = vcmp.ne.s32.totalorder %v579, 0
      %vm654 = vcmp.ne.s32.totalorder %v586, 0
      %vm655 = vcmp.ne.s32.totalorder %v593, 0
      %vm656 = vcmp.ne.s32.totalorder %v600, 0
      %vm657 = vcmp.ne.s32.totalorder %v607, 0
      %vm658 = vcmp.ne.s32.totalorder %v614, 0
      %vm659 = vcmp.ne.s32.totalorder %v621, 0
      %vm660 = vcmp.ne.s32.totalorder %v628, 0
      %vm661 = vcmp.lt.s32.totalorder %v411, 0
      %vm662 = vcmp.lt.s32.totalorder %v418, 0
      %vm663 = vcmp.lt.s32.totalorder %v425, 0
      %vm664 = vcmp.lt.s32.totalorder %v432, 0
      %vm665 = vcmp.lt.s32.totalorder %v439, 0
      %vm666 = vcmp.lt.s32.totalorder %v446, 0
      %vm667 = vcmp.lt.s32.totalorder %v453, 0
      %vm668 = vcmp.lt.s32.totalorder %v460, 0
      %vm669 = vcmp.lt.s32.totalorder %v467, 0
      %vm670 = vcmp.lt.s32.totalorder %v474, 0
      %vm671 = vcmp.lt.s32.totalorder %v481, 0
      %vm672 = vcmp.lt.s32.totalorder %v488, 0
      %vm673 = vcmp.lt.s32.totalorder %v495, 0
      %vm674 = vcmp.lt.s32.totalorder %v502, 0
      %vm675 = vcmp.lt.s32.totalorder %v509, 0
      %vm676 = vcmp.lt.s32.totalorder %v516, 0
      %vm677 = vcmp.lt.s32.totalorder %v523, 0
      %vm678 = vcmp.lt.s32.totalorder %v530, 0
      %vm679 = vcmp.lt.s32.totalorder %v537, 0
      %vm680 = vcmp.lt.s32.totalorder %v544, 0
      %vm681 = vcmp.lt.s32.totalorder %v551, 0
      %vm682 = vcmp.lt.s32.totalorder %v558, 0
      %vm683 = vcmp.lt.s32.totalorder %v565, 0
      %vm684 = vcmp.lt.s32.totalorder %v572, 0
      %vm685 = vcmp.lt.s32.totalorder %v579, 0
      %vm686 = vcmp.lt.s32.totalorder %v586, 0
      %vm687 = vcmp.lt.s32.totalorder %v593, 0
      %vm688 = vcmp.lt.s32.totalorder %v600, 0
      %vm689 = vcmp.lt.s32.totalorder %v607, 0
      %vm690 = vcmp.lt.s32.totalorder %v614, 0
      %vm691 = vcmp.lt.s32.totalorder %v621, 0
      %vm692 = vcmp.lt.s32.totalorder %v628, 0
      %vm693 = vmand %vm661, %vm629
      %vm694 = vmand %vm662, %vm630
      %vm695 = vmand %vm663, %vm631
      %vm696 = vmand %vm664, %vm632
      %vm697 = vmand %vm665, %vm633
      %vm698 = vmand %vm666, %vm634
      %vm699 = vmand %vm667, %vm635
      %vm700 = vmand %vm668, %vm636
      %vm701 = vmand %vm669, %vm637
      %vm702 = vmand %vm670, %vm638
      %vm703 = vmand %vm671, %vm639
      %vm704 = vmand %vm672, %vm640
      %vm705 = vmand %vm673, %vm641
      %vm706 = vmand %vm674, %vm642
      %vm707 = vmand %vm675, %vm643
      %vm708 = vmand %vm676, %vm644
      %vm709 = vmand %vm677, %vm645
      %vm710 = vmand %vm678, %vm646
      %vm711 = vmand %vm679, %vm647
      %vm712 = vmand %vm680, %vm648
      %vm713 = vmand %vm681, %vm649
      %vm714 = vmand %vm682, %vm650
      %vm715 = vmand %vm683, %vm651
      %vm716 = vmand %vm684, %vm652
      %vm717 = vmand %vm685, %vm653
      %vm718 = vmand %vm686, %vm654
      %vm719 = vmand %vm687, %vm655
      %vm720 = vmand %vm688, %vm656
      %vm721 = vmand %vm689, %vm657
      %vm722 = vmand %vm690, %vm658
      %vm723 = vmand %vm691, %vm659
      %vm724 = vmand %vm692, %vm660
      %v725 = vadd.s32 %v411, 16
      %v726 = vadd.s32 %v418, 16
      %v727 = vadd.s32 %v425, 16
      %v728 = vadd.s32 %v432, 16
      %v729 = vadd.s32 %v439, 16
      %v730 = vadd.s32 %v446, 16
      %v731 = vadd.s32 %v453, 16
      %v732 = vadd.s32 %v460, 16
      %v733 = vadd.s32 %v467, 16
      %v734 = vadd.s32 %v474, 16
      %v735 = vadd.s32 %v481, 16
      %v736 = vadd.s32 %v488, 16
      %v737 = vadd.s32 %v495, 16
      %v738 = vadd.s32 %v502, 16
      %v739 = vadd.s32 %v509, 16
      %v740 = vadd.s32 %v516, 16
      %v741 = vadd.s32 %v523, 16
      %v742 = vadd.s32 %v530, 16
      %v743 = vadd.s32 %v537, 16
      %v744 = vadd.s32 %v544, 16
      %v745 = vadd.s32 %v551, 16
      %v746 = vadd.s32 %v558, 16
      %v747 = vadd.s32 %v565, 16
      %v748 = vadd.s32 %v572, 16
      %v749 = vadd.s32 %v579, 16
      %v750 = vadd.s32 %v586, 16
      %v751 = vadd.s32 %v593, 16
      %v752 = vadd.s32 %v600, 16
      %v753 = vadd.s32 %v607, 16
      %v754 = vadd.s32 %v614, 16
      %v755 = vadd.s32 %v621, 16
      %v756 = vadd.s32 %v628, 16
      %v757 = vsel %vm693, %v725, %v411
      %v758 = vsel %vm694, %v726, %v418
      %v759 = vsel %vm695, %v727, %v425
      %v760 = vsel %vm696, %v728, %v432
      %v761 = vsel %vm697, %v729, %v439
      %v762 = vsel %vm698, %v730, %v446
      %v763 = vsel %vm699, %v731, %v453
      %v764 = vsel %vm700, %v732, %v460
      %v765 = vsel %vm701, %v733, %v467
      %v766 = vsel %vm702, %v734, %v474
      %v767 = vsel %vm703, %v735, %v481
      %v768 = vsel %vm704, %v736, %v488
      %v769 = vsel %vm705, %v737, %v495
      %v770 = vsel %vm706, %v738, %v502
      %v771 = vsel %vm707, %v739, %v509
      %v772 = vsel %vm708, %v740, %v516
      %v773 = vsel %vm709, %v741, %v523
      %v774 = vsel %vm710, %v742, %v530
      %v775 = vsel %vm711, %v743, %v537
      %v776 = vsel %vm712, %v744, %v544
      %v777 = vsel %vm713, %v745, %v551
      %v778 = vsel %vm714, %v746, %v558
      %v779 = vsel %vm715, %v747, %v565
      %v780 = vsel %vm716, %v748, %v572
      %v781 = vsel %vm717, %v749, %v579
      %v782 = vsel %vm718, %v750, %v586
      %v783 = vsel %vm719, %v751, %v593
      %v784 = vsel %vm720, %v752, %v600
      %v785 = vsel %vm721, %v753, %v607
      %v786 = vsel %vm722, %v754, %v614
      %v787 = vsel %vm723, %v755, %v621
      %v788 = vsel %vm724, %v756, %v628
      %vm789 = vcmp.ge.s32.totalorder %v757, 1
      %vm790 = vcmp.ge.s32.totalorder %v758, 1
      %vm791 = vcmp.ge.s32.totalorder %v759, 1
      %vm792 = vcmp.ge.s32.totalorder %v760, 1
      %vm793 = vcmp.ge.s32.totalorder %v761, 1
      %vm794 = vcmp.ge.s32.totalorder %v762, 1
      %vm795 = vcmp.ge.s32.totalorder %v763, 1
      %vm796 = vcmp.ge.s32.totalorder %v764, 1
      %vm797 = vcmp.ge.s32.totalorder %v765, 1
      %vm798 = vcmp.ge.s32.totalorder %v766, 1
      %vm799 = vcmp.ge.s32.totalorder %v767, 1
      %vm800 = vcmp.ge.s32.totalorder %v768, 1
      %vm801 = vcmp.ge.s32.totalorder %v769, 1
      %vm802 = vcmp.ge.s32.totalorder %v770, 1
      %vm803 = vcmp.ge.s32.totalorder %v771, 1
      %vm804 = vcmp.ge.s32.totalorder %v772, 1
      %vm805 = vcmp.ge.s32.totalorder %v773, 1
      %vm806 = vcmp.ge.s32.totalorder %v774, 1
      %vm807 = vcmp.ge.s32.totalorder %v775, 1
      %vm808 = vcmp.ge.s32.totalorder %v776, 1
      %vm809 = vcmp.ge.s32.totalorder %v777, 1
      %vm810 = vcmp.ge.s32.totalorder %v778, 1
      %vm811 = vcmp.ge.s32.totalorder %v779, 1
      %vm812 = vcmp.ge.s32.totalorder %v780, 1
      %vm813 = vcmp.ge.s32.totalorder %v781, 1
      %vm814 = vcmp.ge.s32.totalorder %v782, 1
      %vm815 = vcmp.ge.s32.totalorder %v783, 1
      %vm816 = vcmp.ge.s32.totalorder %v784, 1
      %vm817 = vcmp.ge.s32.totalorder %v785, 1
      %vm818 = vcmp.ge.s32.totalorder %v786, 1
      %vm819 = vcmp.ge.s32.totalorder %v787, 1
      %vm820 = vcmp.ge.s32.totalorder %v788, 1
      %vm821 = vcmp.le.s32.totalorder %v757, 14
      %vm822 = vcmp.le.s32.totalorder %v758, 14
      %vm823 = vcmp.le.s32.totalorder %v759, 14
      %vm824 = vcmp.le.s32.totalorder %v760, 14
      %vm825 = vcmp.le.s32.totalorder %v761, 14
      %vm826 = vcmp.le.s32.totalorder %v762, 14
      %vm827 = vcmp.le.s32.totalorder %v763, 14
      %vm828 = vcmp.le.s32.totalorder %v764, 14
      %vm829 = vcmp.le.s32.totalorder %v765, 14
      %vm830 = vcmp.le.s32.totalorder %v766, 14
      %vm831 = vcmp.le.s32.totalorder %v767, 14
      %vm832 = vcmp.le.s32.totalorder %v768, 14
      %vm833 = vcmp.le.s32.totalorder %v769, 14
      %vm834 = vcmp.le.s32.totalorder %v770, 14
      %vm835 = vcmp.le.s32.totalorder %v771, 14
      %vm836 = vcmp.le.s32.totalorder %v772, 14
      %vm837 = vcmp.le.s32.totalorder %v773, 14
      %vm838 = vcmp.le.s32.totalorder %v774, 14
      %vm839 = vcmp.le.s32.totalorder %v775, 14
      %vm840 = vcmp.le.s32.totalorder %v776, 14
      %vm841 = vcmp.le.s32.totalorder %v777, 14
      %vm842 = vcmp.le.s32.totalorder %v778, 14
      %vm843 = vcmp.le.s32.totalorder %v779, 14
      %vm844 = vcmp.le.s32.totalorder %v780, 14
      %vm845 = vcmp.le.s32.totalorder %v781, 14
      %vm846 = vcmp.le.s32.totalorder %v782, 14
      %vm847 = vcmp.le.s32.totalorder %v783, 14
      %vm848 = vcmp.le.s32.totalorder %v784, 14
      %vm849 = vcmp.le.s32.totalorder %v785, 14
      %vm850 = vcmp.le.s32.totalorder %v786, 14
      %vm851 = vcmp.le.s32.totalorder %v787, 14
      %vm852 = vcmp.le.s32.totalorder %v788, 14
      %v853 = vld [vmem:[#allocation2 + $0x7] sm:$0xff]
      %v854 = vld [vmem:[#allocation2 + $0xf] sm:$0xff]
      %v855 = vld [vmem:[#allocation2 + $0x17] sm:$0xff]
      %v856 = vld [vmem:[#allocation2 + $0x1f] sm:$0xff]
      %v857 = vld [vmem:[#allocation2 + $0x27] sm:$0xff]
      %v858 = vld [vmem:[#allocation2 + $0x2f] sm:$0xff]
      %v859 = vld [vmem:[#allocation2 + $0x37] sm:$0xff]
      %v860 = vld [vmem:[#allocation2 + $0x3f] sm:$0xff]
      %v861 = vld [vmem:[#allocation2 + $0x47] sm:$0xff]
      %v862 = vld [vmem:[#allocation2 + $0x4f] sm:$0xff]
      %v863 = vld [vmem:[#allocation2 + $0x57] sm:$0xff]
      %v864 = vld [vmem:[#allocation2 + $0x5f] sm:$0xff]
      %v865 = vld [vmem:[#allocation2 + $0x67] sm:$0xff]
      %v866 = vld [vmem:[#allocation2 + $0x6f] sm:$0xff]
      %v867 = vld [vmem:[#allocation2 + $0x77] sm:$0xff]
      %v868 = vld [vmem:[#allocation2 + $0x7f] sm:$0xff]
      %v869 = vld [vmem:[#allocation2 + $0x87] sm:$0xff]
      %v870 = vld [vmem:[#allocation2 + $0x8f] sm:$0xff]
      %v871 = vld [vmem:[#allocation2 + $0x97] sm:$0xff]
      %v872 = vld [vmem:[#allocation2 + $0x9f] sm:$0xff]
      %v873 = vld [vmem:[#allocation2 + $0xa7] sm:$0xff]
      %v874 = vld [vmem:[#allocation2 + $0xaf] sm:$0xff]
      %v875 = vld [vmem:[#allocation2 + $0xb7] sm:$0xff]
      %v876 = vld [vmem:[#allocation2 + $0xbf] sm:$0xff]
      %v877 = vld [vmem:[#allocation2 + $0xc7] sm:$0xff]
      %v878 = vld [vmem:[#allocation2 + $0xcf] sm:$0xff]
      %v879 = vld [vmem:[#allocation2 + $0xd7] sm:$0xff]
      %v880 = vld [vmem:[#allocation2 + $0xdf] sm:$0xff]
      %v881 = vld [vmem:[#allocation2 + $0xe7] sm:$0xff]
      %v882 = vld [vmem:[#allocation2 + $0xef] sm:$0xff]
      %v883 = vld [vmem:[#allocation2 + $0xf7] sm:$0xff]
      %v884 = vld [vmem:[#allocation2 + $0xff] sm:$0xff]
      %v885 = vsel %vm789, 1, 0
      %v886 = vsel %vm790, 1, 0
      %v887 = vsel %vm791, 1, 0
      %v888 = vsel %vm792, 1, 0
      %v889 = vsel %vm793, 1, 0
      %v890 = vsel %vm794, 1, 0
      %v891 = vsel %vm795, 1, 0
      %v892 = vsel %vm796, 1, 0
      %v893 = vsel %vm797, 1, 0
      %v894 = vsel %vm798, 1, 0
      %v895 = vsel %vm799, 1, 0
      %v896 = vsel %vm800, 1, 0
      %v897 = vsel %vm801, 1, 0
      %v898 = vsel %vm802, 1, 0
      %v899 = vsel %vm803, 1, 0
      %v900 = vsel %vm804, 1, 0
      %v901 = vsel %vm805, 1, 0
      %v902 = vsel %vm806, 1, 0
      %v903 = vsel %vm807, 1, 0
      %v904 = vsel %vm808, 1, 0
      %v905 = vsel %vm809, 1, 0
      %v906 = vsel %vm810, 1, 0
      %v907 = vsel %vm811, 1, 0
      %v908 = vsel %vm812, 1, 0
      %v909 = vsel %vm813, 1, 0
      %v910 = vsel %vm814, 1, 0
      %v911 = vsel %vm815, 1, 0
      %v912 = vsel %vm816, 1, 0
      %v913 = vsel %vm817, 1, 0
      %v914 = vsel %vm818, 1, 0
      %v915 = vsel %vm819, 1, 0
      %v916 = vsel %vm820, 1, 0
      %vm917 = vcmp.eq.s32.totalorder %v885, 1
      %vm918 = vcmp.eq.s32.totalorder %v886, 1
      %vm919 = vcmp.eq.s32.totalorder %v887, 1
      %vm920 = vcmp.eq.s32.totalorder %v888, 1
      %vm921 = vcmp.eq.s32.totalorder %v889, 1
      %vm922 = vcmp.eq.s32.totalorder %v890, 1
      %vm923 = vcmp.eq.s32.totalorder %v891, 1
      %vm924 = vcmp.eq.s32.totalorder %v892, 1
      %vm925 = vcmp.eq.s32.totalorder %v893, 1
      %vm926 = vcmp.eq.s32.totalorder %v894, 1
      %vm927 = vcmp.eq.s32.totalorder %v895, 1
      %vm928 = vcmp.eq.s32.totalorder %v896, 1
      %vm929 = vcmp.eq.s32.totalorder %v897, 1
      %vm930 = vcmp.eq.s32.totalorder %v898, 1
      %vm931 = vcmp.eq.s32.totalorder %v899, 1
      %vm932 = vcmp.eq.s32.totalorder %v900, 1
      %vm933 = vcmp.eq.s32.totalorder %v901, 1
      %vm934 = vcmp.eq.s32.totalorder %v902, 1
      %vm935 = vcmp.eq.s32.totalorder %v903, 1
      %vm936 = vcmp.eq.s32.totalorder %v904, 1
      %vm937 = vcmp.eq.s32.totalorder %v905, 1
      %vm938 = vcmp.eq.s32.totalorder %v906, 1
      %vm939 = vcmp.eq.s32.totalorder %v907, 1
      %vm940 = vcmp.eq.s32.totalorder %v908, 1
      %vm941 = vcmp.eq.s32.totalorder %v909, 1
      %vm942 = vcmp.eq.s32.totalorder %v910, 1
      %vm943 = vcmp.eq.s32.totalorder %v911, 1
      %vm944 = vcmp.eq.s32.totalorder %v912, 1
      %vm945 = vcmp.eq.s32.totalorder %v913, 1
      %vm946 = vcmp.eq.s32.totalorder %v914, 1
      %vm947 = vcmp.eq.s32.totalorder %v915, 1
      %vm948 = vcmp.eq.s32.totalorder %v916, 1
      %v949 = vsel %vm917, %v853, 0.0
      %v950 = vsel %vm918, %v854, 0.0
      %v951 = vsel %vm919, %v855, 0.0
      %v952 = vsel %vm920, %v856, 0.0
      %v953 = vsel %vm921, %v857, 0.0
      %v954 = vsel %vm922, %v858, 0.0
      %v955 = vsel %vm923, %v859, 0.0
      %v956 = vsel %vm924, %v860, 0.0
      %v957 = vsel %vm925, %v861, 0.0
      %v958 = vsel %vm926, %v862, 0.0
      %v959 = vsel %vm927, %v863, 0.0
      %v960 = vsel %vm928, %v864, 0.0
      %v961 = vsel %vm929, %v865, 0.0
      %v962 = vsel %vm930, %v866, 0.0
      %v963 = vsel %vm931, %v867, 0.0
      %v964 = vsel %vm932, %v868, 0.0
      %v965 = vsel %vm933, %v869, 0.0
      %v966 = vsel %vm934, %v870, 0.0
      %v967 = vsel %vm935, %v871, 0.0
      %v968 = vsel %vm936, %v872, 0.0
      %v969 = vsel %vm937, %v873, 0.0
      %v970 = vsel %vm938, %v874, 0.0
      %v971 = vsel %vm939, %v875, 0.0
      %v972 = vsel %vm940, %v876, 0.0
      %v973 = vsel %vm941, %v877, 0.0
      %v974 = vsel %vm942, %v878, 0.0
      %v975 = vsel %vm943, %v879, 0.0
      %v976 = vsel %vm944, %v880, 0.0
      %v977 = vsel %vm945, %v881, 0.0
      %v978 = vsel %vm946, %v882, 0.0
      %v979 = vsel %vm947, %v883, 0.0
      %v980 = vsel %vm948, %v884, 0.0
      %v981 = vpack.c.bf16 %v950, %v949
      %v982 = vpack.c.bf16 %v952, %v951
      %v983 = vpack.c.bf16 %v954, %v953
      %v984 = vpack.c.bf16 %v956, %v955
      %v985 = vpack.c.bf16 %v958, %v957
      %v986 = vpack.c.bf16 %v960, %v959
      %v987 = vpack.c.bf16 %v962, %v961
      %v988 = vpack.c.bf16 %v964, %v963
      %v989 = vpack.c.bf16 %v966, %v965
      %v990 = vpack.c.bf16 %v968, %v967
      %v991 = vpack.c.bf16 %v970, %v969
      %v992 = vpack.c.bf16 %v972, %v971
      %v993 = vpack.c.bf16 %v974, %v973
      %v994 = vpack.c.bf16 %v976, %v975
      %v995 = vpack.c.bf16 %v978, %v977
      %v996 = vpack.c.bf16 %v980, %v979
      %v997 = vld [vmem:[%s1] sm:$0xf]
      %v998 = vld [vmem:[%s1 + $0x4] sm:$0xf]
      %v999 = vld [vmem:[%s1 + $0x8] sm:$0xf]
      %v1000 = vld [vmem:[%s1 + $0xc] sm:$0xf]
      %v1001 = vld [vmem:[%s1 + $0x10] sm:$0xf]
      %v1002 = vld [vmem:[%s1 + $0x14] sm:$0xf]
      %v1003 = vld [vmem:[%s1 + $0x18] sm:$0xf]
      %v1004 = vld [vmem:[%s1 + $0x1c] sm:$0xf]
      %v1005 = vld [vmem:[%s1 + $0x20] sm:$0xf]
      %v1006 = vld [vmem:[%s1 + $0x24] sm:$0xf]
      %v1007 = vld [vmem:[%s1 + $0x28] sm:$0xf]
      %v1008 = vld [vmem:[%s1 + $0x2c] sm:$0xf]
      %v1009 = vld [vmem:[%s1 + $0x30] sm:$0xf]
      %v1010 = vld [vmem:[%s1 + $0x34] sm:$0xf]
      %v1011 = vld [vmem:[%s1 + $0x38] sm:$0xf]
      %v1012 = vld [vmem:[%s1 + $0x3c] sm:$0xf]
      %v1013 = vld [vmem:[#allocation2 + $0x8] sm:$0xff]
      %v1014 = vld [vmem:[#allocation2 + $0x10] sm:$0xff]
      %v1015 = vld [vmem:[#allocation2 + $0x18] sm:$0xff]
      %v1016 = vld [vmem:[#allocation2 + $0x20] sm:$0xff]
      %v1017 = vld [vmem:[#allocation2 + $0x28] sm:$0xff]
      %v1018 = vld [vmem:[#allocation2 + $0x30] sm:$0xff]
      %v1019 = vld [vmem:[#allocation2 + $0x38] sm:$0xff]
      %v1020 = vld [vmem:[#allocation2 + $0x40] sm:$0xff]
      %v1021 = vld [vmem:[#allocation2 + $0x48] sm:$0xff]
      %v1022 = vld [vmem:[#allocation2 + $0x50] sm:$0xff]
      %v1023 = vld [vmem:[#allocation2 + $0x58] sm:$0xff]
      %v1024 = vld [vmem:[#allocation2 + $0x60] sm:$0xff]
      %v1025 = vld [vmem:[#allocation2 + $0x68] sm:$0xff]
      %v1026 = vld [vmem:[#allocation2 + $0x70] sm:$0xff]
      %v1027 = vld [vmem:[#allocation2 + $0x78] sm:$0xff]
      %v1028 = vld [vmem:[#allocation2 + $0x80] sm:$0xff]
      %v1029 = vld [vmem:[#allocation2 + $0x88] sm:$0xff]
      %v1030 = vld [vmem:[#allocation2 + $0x90] sm:$0xff]
      %v1031 = vld [vmem:[#allocation2 + $0x98] sm:$0xff]
      %v1032 = vld [vmem:[#allocation2 + $0xa0] sm:$0xff]
      %v1033 = vld [vmem:[#allocation2 + $0xa8] sm:$0xff]
      %v1034 = vld [vmem:[#allocation2 + $0xb0] sm:$0xff]
      %v1035 = vld [vmem:[#allocation2 + $0xb8] sm:$0xff]
      %v1036 = vld [vmem:[#allocation2 + $0xc0] sm:$0xff]
      %v1037 = vld [vmem:[#allocation2 + $0xc8] sm:$0xff]
      %v1038 = vld [vmem:[#allocation2 + $0xd0] sm:$0xff]
      %v1039 = vld [vmem:[#allocation2 + $0xd8] sm:$0xff]
      %v1040 = vld [vmem:[#allocation2 + $0xe0] sm:$0xff]
      %v1041 = vld [vmem:[#allocation2 + $0xe8] sm:$0xff]
      %v1042 = vld [vmem:[#allocation2 + $0xf0] sm:$0xff]
      %v1043 = vld [vmem:[#allocation2 + $0xf8] sm:$0xff]
      %v1044 = vld [vmem:[#allocation2 + $0x100] sm:$0xff]
      %v1045 = vpack.c.bf16 %v1014, %v1013
      %v1046 = vpack.c.bf16 %v1016, %v1015
      %v1047 = vpack.c.bf16 %v1018, %v1017
      %v1048 = vpack.c.bf16 %v1020, %v1019
      %v1049 = vpack.c.bf16 %v1022, %v1021
      %v1050 = vpack.c.bf16 %v1024, %v1023
      %v1051 = vpack.c.bf16 %v1026, %v1025
      %v1052 = vpack.c.bf16 %v1028, %v1027
      %v1053 = vpack.c.bf16 %v1030, %v1029
      %v1054 = vpack.c.bf16 %v1032, %v1031
      %v1055 = vpack.c.bf16 %v1034, %v1033
      %v1056 = vpack.c.bf16 %v1036, %v1035
      %v1057 = vpack.c.bf16 %v1038, %v1037
      %v1058 = vpack.c.bf16 %v1040, %v1039
      %v1059 = vpack.c.bf16 %v1042, %v1041
      %v1060 = vpack.c.bf16 %v1044, %v1043
      %s1061 = scalar_lea.vmem %s1, 64
      %v1062 = vld [vmem:[%s1061] sm:$0xf]
      %v1063 = vld [vmem:[%s1061 + $0x4] sm:$0xf]
      %v1064 = vld [vmem:[%s1061 + $0x8] sm:$0xf]
      %v1065 = vld [vmem:[%s1061 + $0xc] sm:$0xf]
      %v1066 = vld [vmem:[%s1061 + $0x10] sm:$0xf]
      %v1067 = vld [vmem:[%s1061 + $0x14] sm:$0xf]
      %v1068 = vld [vmem:[%s1061 + $0x18] sm:$0xf]
      %v1069 = vld [vmem:[%s1061 + $0x1c] sm:$0xf]
      %v1070 = vld [vmem:[%s1061 + $0x20] sm:$0xf]
      %v1071 = vld [vmem:[%s1061 + $0x24] sm:$0xf]
      %v1072 = vld [vmem:[%s1061 + $0x28] sm:$0xf]
      %v1073 = vld [vmem:[%s1061 + $0x2c] sm:$0xf]
      %v1074 = vld [vmem:[%s1061 + $0x30] sm:$0xf]
      %v1075 = vld [vmem:[%s1061 + $0x34] sm:$0xf]
      %v1076 = vld [vmem:[%s1061 + $0x38] sm:$0xf]
      %v1077 = vld [vmem:[%s1061 + $0x3c] sm:$0xf]
      %v1094 = vunpack.c.l.b16 %v1062
      %v1095 = vunpack.c.l.b16 %v1063
      %v1096 = vunpack.c.l.b16 %v1064
      %v1097 = vunpack.c.l.b16 %v1065
      %v1098 = vunpack.c.l.b16 %v1066
      %v1099 = vunpack.c.l.b16 %v1067
      %v1100 = vunpack.c.l.b16 %v1068
      %v1101 = vunpack.c.l.b16 %v1069
      %v1102 = vunpack.c.l.b16 %v1070
      %v1103 = vunpack.c.l.b16 %v1071
      %v1104 = vunpack.c.l.b16 %v1072
      %v1105 = vunpack.c.l.b16 %v1073
      %v1106 = vunpack.c.l.b16 %v1074
      %v1107 = vunpack.c.l.b16 %v1075
      %v1108 = vunpack.c.l.b16 %v1076
      %v1109 = vunpack.c.l.b16 %v1077
      %v1110 = vpack.c.b16 %v1095, %v1094
      %v1111 = vpack.c.b16 %v1097, %v1096
      %v1112 = vpack.c.b16 %v1099, %v1098
      %v1113 = vpack.c.b16 %v1101, %v1100
      %v1114 = vpack.c.b16 %v1103, %v1102
      %v1115 = vpack.c.b16 %v1105, %v1104
      %v1116 = vpack.c.b16 %v1107, %v1106
      %v1117 = vpack.c.b16 %v1109, %v1108
      %1126 = vmatprep.subr.bf16.mxu0 0
      %1127 = vmatpush1.bf16.msra.mxu0 %v1110
      %1128 = vmatprep.subr.bf16.mxu0 0
      %1129 = vmatpush1.bf16.msra.mxu0 %v1111
      %1130 = vmatprep.subr.bf16.mxu0 0
      %1131 = vmatpush1.bf16.msra.mxu0 %v1112
      %1132 = vmatprep.subr.bf16.mxu0 0
      %1133 = vmatpush1.bf16.msra.mxu0 %v1113
      %1134 = vmatprep.subr.bf16.mxu0 0
      %1135 = vmatpush1.bf16.msra.mxu0 %v1114
      %1136 = vmatprep.subr.bf16.mxu0 0
      %1137 = vmatpush1.bf16.msra.mxu0 %v1115
      %1138 = vmatprep.subr.bf16.mxu0 0
      %1139 = vmatpush1.bf16.msra.mxu0 %v1116
      %1140 = vmatprep.subr.bf16.mxu0 0
      %1141 = vmatpush1.bf16.msra.mxu0 %v1117
      %1142 = vmatprep.subr.bf16.mxu0 0
      %1143 = vmatpush1.bf16.msra.mxu0 0
      %1144 = vmatprep.subr.bf16.mxu0 0
      %1145 = vmatpush1.bf16.msra.mxu0 0
      %1146 = vmatprep.subr.bf16.mxu0 0
      %1147 = vmatpush1.bf16.msra.mxu0 0
      %1148 = vmatprep.subr.bf16.mxu0 0
      %1149 = vmatpush1.bf16.msra.mxu0 0
      %1150 = vmatprep.subr.bf16.mxu0 0
      %1151 = vmatpush1.bf16.msra.mxu0 0
      %1152 = vmatprep.subr.bf16.mxu0 0
      %1153 = vmatpush1.bf16.msra.mxu0 0
      %1154 = vmatprep.subr.bf16.mxu0 0
      %1155 = vmatpush1.bf16.msra.mxu0 0
      %1156 = vmatprep.subr.bf16.mxu0 0
      %1157 = vmatpush1.bf16.msra.mxu0 0
      %1158 = vmatprep.mubr.bf16.mxu0 0
      %1159 = vmatmul.mubr.bf16.gmra.mrb[0].mxu0 %v1045
      %v1160 = vpop.f32.mrb[0].mxu0
      %v1161 = vadd.f32 0.0, %v1160
      %v1162 = vpop.f32.mrb[0].mxu0
      %v1163 = vpop.f32.mrb[0].mxu0
      %v1164 = vadd.f32 0.0, %v1163
      %v1165 = vpop.f32.mrb[0].mxu0
      %1166 = vmatprep.mubr.bf16.mxu0 0
      %1167 = vmatmul.mubr.bf16.gmra.mrb[0].mxu0 %v1046
      %v1168 = vpop.f32.mrb[0].mxu0
      %v1169 = vadd.f32 0.0, %v1168
      %v1170 = vpop.f32.mrb[0].mxu0
      %v1171 = vpop.f32.mrb[0].mxu0
      %v1172 = vadd.f32 0.0, %v1171
      %v1173 = vpop.f32.mrb[0].mxu0
      %1174 = vmatprep.mubr.bf16.mxu0 0
      %1175 = vmatmul.mubr.bf16.gmra.mrb[0].mxu0 %v1047
      %v1176 = vpop.f32.mrb[0].mxu0
      %v1177 = vadd.f32 0.0, %v1176
      %v1178 = vpop.f32.mrb[0].mxu0
      %v1179 = vpop.f32.mrb[0].mxu0
      %v1180 = vadd.f32 0.0, %v1179
      %v1181 = vpop.f32.mrb[0].mxu0
      %1182 = vmatprep.mubr.bf16.mxu0 0
      %1183 = vmatmul.mubr.bf16.gmra.mrb[0].mxu0 %v1048
      %v1184 = vpop.f32.mrb[0].mxu0
      %v1185 = vadd.f32 0.0, %v1184
      %v1186 = vpop.f32.mrb[0].mxu0
      %v1187 = vpop.f32.mrb[0].mxu0
      %v1188 = vadd.f32 0.0, %v1187
      %v1189 = vpop.f32.mrb[0].mxu0
      %1190 = vmatprep.mubr.bf16.mxu0 0
      %1191 = vmatmul.mubr.bf16.gmra.mrb[0].mxu0 %v1049
      %v1192 = vpop.f32.mrb[0].mxu0
      %v1193 = vadd.f32 0.0, %v1192
      %v1194 = vpop.f32.mrb[0].mxu0
      %v1195 = vpop.f32.mrb[0].mxu0
      %v1196 = vadd.f32 0.0, %v1195
      %v1197 = vpop.f32.mrb[0].mxu0
      %1198 = vmatprep.mubr.bf16.mxu0 0
      %1199 = vmatmul.mubr.bf16.gmra.mrb[0].mxu0 %v1050
      %v1200 = vpop.f32.mrb[0].mxu0
      %v1201 = vadd.f32 0.0, %v1200
      %v1202 = vpop.f32.mrb[0].mxu0
      %v1203 = vpop.f32.mrb[0].mxu0
      %v1204 = vadd.f32 0.0, %v1203
      %v1205 = vpop.f32.mrb[0].mxu0
      %1206 = vmatprep.mubr.bf16.mxu0 0
      %1207 = vmatmul.mubr.bf16.gmra.mrb[0].mxu0 %v1051
      %v1208 = vpop.f32.mrb[0].mxu0
      %v1209 = vadd.f32 0.0, %v1208
      %v1210 = vpop.f32.mrb[0].mxu0
      %v1211 = vpop.f32.mrb[0].mxu0
      %v1212 = vadd.f32 0.0, %v1211
      %v1213 = vpop.f32.mrb[0].mxu0
      %1214 = vmatprep.mubr.bf16.mxu0 0
      %1215 = vmatmul.mubr.bf16.gmra.mrb[0].mxu0 %v1052
      %v1216 = vpop.f32.mrb[0].mxu0
      %v1217 = vadd.f32 0.0, %v1216
      %v1218 = vpop.f32.mrb[0].mxu0
      %v1219 = vpop.f32.mrb[0].mxu0
      %v1220 = vadd.f32 0.0, %v1219
      %v1221 = vpop.f32.mrb[0].mxu0
      %1222 = vmatprep.mubr.bf16.mxu0 0
      %1223 = vmatmul.mubr.bf16.gmra.mrb[0].mxu0 %v1053
      %v1224 = vpop.f32.mrb[0].mxu0
      %v1225 = vadd.f32 0.0, %v1224
      %v1226 = vpop.f32.mrb[0].mxu0
      %v1227 = vpop.f32.mrb[0].mxu0
      %v1228 = vadd.f32 0.0, %v1227
      %v1229 = vpop.f32.mrb[0].mxu0
      %1230 = vmatprep.mubr.bf16.mxu0 0
      %1231 = vmatmul.mubr.bf16.gmra.mrb[0].mxu0 %v1054
      %v1232 = vpop.f32.mrb[0].mxu0
      %v1233 = vadd.f32 0.0, %v1232
      %v1234 = vpop.f32.mrb[0].mxu0
      %v1235 = vpop.f32.mrb[0].mxu0
      %v1236 = vadd.f32 0.0, %v1235
      %v1237 = vpop.f32.mrb[0].mxu0
      %1238 = vmatprep.mubr.bf16.mxu0 0
      %1239 = vmatmul.mubr.bf16.gmra.mrb[0].mxu0 %v1055
      %v1240 = vpop.f32.mrb[0].mxu0
      %v1241 = vadd.f32 0.0, %v1240
      %v1242 = vpop.f32.mrb[0].mxu0
      %v1243 = vpop.f32.mrb[0].mxu0
      %v1244 = vadd.f32 0.0, %v1243
      %v1245 = vpop.f32.mrb[0].mxu0
      %1246 = vmatprep.mubr.bf16.mxu0 0
      %1247 = vmatmul.mubr.bf16.gmra.mrb[0].mxu0 %v1056
      %v1248 = vpop.f32.mrb[0].mxu0
      %v1249 = vadd.f32 0.0, %v1248
      %v1250 = vpop.f32.mrb[0].mxu0
      %v1251 = vpop.f32.mrb[0].mxu0
      %v1252 = vadd.f32 0.0, %v1251
      %v1253 = vpop.f32.mrb[0].mxu0
      %1254 = vmatprep.mubr.bf16.mxu0 0
      %1255 = vmatmul.mubr.bf16.gmra.mrb[0].mxu0 %v1057
      %v1256 = vpop.f32.mrb[0].mxu0
      %v1257 = vadd.f32 0.0, %v1256
      %v1258 = vpop.f32.mrb[0].mxu0
      %v1259 = vpop.f32.mrb[0].mxu0
      %v1260 = vadd.f32 0.0, %v1259
      %v1261 = vpop.f32.mrb[0].mxu0
      %1262 = vmatprep.mubr.bf16.mxu0 0
      %1263 = vmatmul.mubr.bf16.gmra.mrb[0].mxu0 %v1058
      %v1264 = vpop.f32.mrb[0].mxu0
      %v1265 = vadd.f32 0.0, %v1264
      %v1266 = vpop.f32.mrb[0].mxu0
      %v1267 = vpop.f32.mrb[0].mxu0
      %v1268 = vadd.f32 0.0, %v1267
      %v1269 = vpop.f32.mrb[0].mxu0
      %1270 = vmatprep.mubr.bf16.mxu0 0
      %1271 = vmatmul.mubr.bf16.gmra.mrb[0].mxu0 %v1059
      %v1272 = vpop.f32.mrb[0].mxu0
      %v1273 = vadd.f32 0.0, %v1272
      %v1274 = vpop.f32.mrb[0].mxu0
      %v1275 = vpop.f32.mrb[0].mxu0
      %v1276 = vadd.f32 0.0, %v1275
      %v1277 = vpop.f32.mrb[0].mxu0
      %1278 = vmatprep.mubr.bf16.mxu0 0
      %1279 = vmatmul.mubr.bf16.gmra.mrb[0].mxu0 %v1060
      %v1280 = vpop.f32.mrb[0].mxu0
      %v1281 = vadd.f32 0.0, %v1280
      %v1282 = vpop.f32.mrb[0].mxu0
      %v1283 = vpop.f32.mrb[0].mxu0
      %v1284 = vadd.f32 0.0, %v1283
      %v1285 = vpop.f32.mrb[0].mxu0
      %1286 = vdwg.mxu0
      %v1303 = vunpack.c.l.b16 %v997
      %v1304 = vunpack.c.l.b16 %v998
      %v1305 = vunpack.c.l.b16 %v999
      %v1306 = vunpack.c.l.b16 %v1000
      %v1307 = vunpack.c.l.b16 %v1001
      %v1308 = vunpack.c.l.b16 %v1002
      %v1309 = vunpack.c.l.b16 %v1003
      %v1310 = vunpack.c.l.b16 %v1004
      %v1311 = vunpack.c.l.b16 %v1005
      %v1312 = vunpack.c.l.b16 %v1006
      %v1313 = vunpack.c.l.b16 %v1007
      %v1314 = vunpack.c.l.b16 %v1008
      %v1315 = vunpack.c.l.b16 %v1009
      %v1316 = vunpack.c.l.b16 %v1010
      %v1317 = vunpack.c.l.b16 %v1011
      %v1318 = vunpack.c.l.b16 %v1012
      %v1319 = vpack.c.b16 %v1304, %v1303
      %v1320 = vpack.c.b16 %v1306, %v1305
      %v1321 = vpack.c.b16 %v1308, %v1307
      %v1322 = vpack.c.b16 %v1310, %v1309
      %v1323 = vpack.c.b16 %v1312, %v1311
      %v1324 = vpack.c.b16 %v1314, %v1313
      %v1325 = vpack.c.b16 %v1316, %v1315
      %v1326 = vpack.c.b16 %v1318, %v1317
      %1335 = vmatprep.subr.bf16.mxu0 0
      %1336 = vmatpush1.bf16.msra.mxu0 %v1319
      %1337 = vmatprep.subr.bf16.mxu0 0
      %1338 = vmatpush1.bf16.msra.mxu0 %v1320
      %1339 = vmatprep.subr.bf16.mxu0 0
      %1340 = vmatpush1.bf16.msra.mxu0 %v1321
      %1341 = vmatprep.subr.bf16.mxu0 0
      %1342 = vmatpush1.bf16.msra.mxu0 %v1322
      %1343 = vmatprep.subr.bf16.mxu0 0
      %1344 = vmatpush1.bf16.msra.mxu0 %v1323
      %1345 = vmatprep.subr.bf16.mxu0 0
      %1346 = vmatpush1.bf16.msra.mxu0 %v1324
      %1347 = vmatprep.subr.bf16.mxu0 0
      %1348 = vmatpush1.bf16.msra.mxu0 %v1325
      %1349 = vmatprep.subr.bf16.mxu0 0
      %1350 = vmatpush1.bf16.msra.mxu0 %v1326
      %1351 = vmatprep.subr.bf16.mxu0 0
      %1352 = vmatpush1.bf16.msra.mxu0 0
      %1353 = vmatprep.subr.bf16.mxu0 0
      %1354 = vmatpush1.bf16.msra.mxu0 0
      %1355 = vmatprep.subr.bf16.mxu0 0
      %1356 = vmatpush1.bf16.msra.mxu0 0
      %1357 = vmatprep.subr.bf16.mxu0 0
      %1358 = vmatpush1.bf16.msra.mxu0 0
      %1359 = vmatprep.subr.bf16.mxu0 0
      %1360 = vmatpush1.bf16.msra.mxu0 0
      %1361 = vmatprep.subr.bf16.mxu0 0
      %1362 = vmatpush1.bf16.msra.mxu0 0
      %1363 = vmatprep.subr.bf16.mxu0 0
      %1364 = vmatpush1.bf16.msra.mxu0 0
      %1365 = vmatprep.subr.bf16.mxu0 0
      %1366 = vmatpush1.bf16.msra.mxu0 0
      %1367 = vmatprep.mubr.bf16.mxu0 0
      %1368 = vmatmul.mubr.bf16.gmra.mrb[0].mxu0 %v981
      %v1369 = vpop.f32.mrb[0].mxu0
      %v1370 = vadd.f32 %v1161, %v1369
      %v1371 = vpop.f32.mrb[0].mxu0
      %v1372 = vpop.f32.mrb[0].mxu0
      %v1373 = vadd.f32 %v1164, %v1372
      %v1374 = vpop.f32.mrb[0].mxu0
      %1375 = vmatprep.mubr.bf16.mxu0 0
      %1376 = vmatmul.mubr.bf16.gmra.mrb[0].mxu0 %v982
      %v1377 = vpop.f32.mrb[0].mxu0
      %v1378 = vadd.f32 %v1169, %v1377
      %v1379 = vpop.f32.mrb[0].mxu0
      %v1380 = vpop.f32.mrb[0].mxu0
      %v1381 = vadd.f32 %v1172, %v1380
      %v1382 = vpop.f32.mrb[0].mxu0
      %1383 = vmatprep.mubr.bf16.mxu0 0
      %1384 = vmatmul.mubr.bf16.gmra.mrb[0].mxu0 %v983
      %v1385 = vpop.f32.mrb[0].mxu0
      %v1386 = vadd.f32 %v1177, %v1385
      %v1387 = vpop.f32.mrb[0].mxu0
      %v1388 = vpop.f32.mrb[0].mxu0
      %v1389 = vadd.f32 %v1180, %v1388
      %v1390 = vpop.f32.mrb[0].mxu0
      %1391 = vmatprep.mubr.bf16.mxu0 0
      %1392 = vmatmul.mubr.bf16.gmra.mrb[0].mxu0 %v984
      %v1393 = vpop.f32.mrb[0].mxu0
      %v1394 = vadd.f32 %v1185, %v1393
      %v1395 = vpop.f32.mrb[0].mxu0
      %v1396 = vpop.f32.mrb[0].mxu0
      %v1397 = vadd.f32 %v1188, %v1396
      %v1398 = vpop.f32.mrb[0].mxu0
      %1399 = vmatprep.mubr.bf16.mxu0 0
      %1400 = vmatmul.mubr.bf16.gmra.mrb[0].mxu0 %v985
      %v1401 = vpop.f32.mrb[0].mxu0
      %v1402 = vadd.f32 %v1193, %v1401
      %v1403 = vpop.f32.mrb[0].mxu0
      %v1404 = vpop.f32.mrb[0].mxu0
      %v1405 = vadd.f32 %v1196, %v1404
      %v1406 = vpop.f32.mrb[0].mxu0
      %1407 = vmatprep.mubr.bf16.mxu0 0
      %1408 = vmatmul.mubr.bf16.gmra.mrb[0].mxu0 %v986
      %v1409 = vpop.f32.mrb[0].mxu0
      %v1410 = vadd.f32 %v1201, %v1409
      %v1411 = vpop.f32.mrb[0].mxu0
      %v1412 = vpop.f32.mrb[0].mxu0
      %v1413 = vadd.f32 %v1204, %v1412
      %v1414 = vpop.f32.mrb[0].mxu0
      %1415 = vmatprep.mubr.bf16.mxu0 0
      %1416 = vmatmul.mubr.bf16.gmra.mrb[0].mxu0 %v987
      %v1417 = vpop.f32.mrb[0].mxu0
      %v1418 = vadd.f32 %v1209, %v1417
      %v1419 = vpop.f32.mrb[0].mxu0
      %v1420 = vpop.f32.mrb[0].mxu0
      %v1421 = vadd.f32 %v1212, %v1420
      %v1422 = vpop.f32.mrb[0].mxu0
      %1423 = vmatprep.mubr.bf16.mxu0 0
      %1424 = vmatmul.mubr.bf16.gmra.mrb[0].mxu0 %v988
      %v1425 = vpop.f32.mrb[0].mxu0
      %v1426 = vadd.f32 %v1217, %v1425
      %v1427 = vpop.f32.mrb[0].mxu0
      %v1428 = vpop.f32.mrb[0].mxu0
      %v1429 = vadd.f32 %v1220, %v1428
      %v1430 = vpop.f32.mrb[0].mxu0
      %1431 = vmatprep.mubr.bf16.mxu0 0
      %1432 = vmatmul.mubr.bf16.gmra.mrb[0].mxu0 %v989
      %v1433 = vpop.f32.mrb[0].mxu0
      %v1434 = vadd.f32 %v1225, %v1433
      %v1435 = vpop.f32.mrb[0].mxu0
      %v1436 = vpop.f32.mrb[0].mxu0
      %v1437 = vadd.f32 %v1228, %v1436
      %v1438 = vpop.f32.mrb[0].mxu0
      %1439 = vmatprep.mubr.bf16.mxu0 0
      %1440 = vmatmul.mubr.bf16.gmra.mrb[0].mxu0 %v990
      %v1441 = vpop.f32.mrb[0].mxu0
      %v1442 = vadd.f32 %v1233, %v1441
      %v1443 = vpop.f32.mrb[0].mxu0
      %v1444 = vpop.f32.mrb[0].mxu0
      %v1445 = vadd.f32 %v1236, %v1444
      %v1446 = vpop.f32.mrb[0].mxu0
      %1447 = vmatprep.mubr.bf16.mxu0 0
      %1448 = vmatmul.mubr.bf16.gmra.mrb[0].mxu0 %v991
      %v1449 = vpop.f32.mrb[0].mxu0
      %v1450 = vadd.f32 %v1241, %v1449
      %v1451 = vpop.f32.mrb[0].mxu0
      %v1452 = vpop.f32.mrb[0].mxu0
      %v1453 = vadd.f32 %v1244, %v1452
      %v1454 = vpop.f32.mrb[0].mxu0
      %1455 = vmatprep.mubr.bf16.mxu0 0
      %1456 = vmatmul.mubr.bf16.gmra.mrb[0].mxu0 %v992
      %v1457 = vpop.f32.mrb[0].mxu0
      %v1458 = vadd.f32 %v1249, %v1457
      %v1459 = vpop.f32.mrb[0].mxu0
      %v1460 = vpop.f32.mrb[0].mxu0
      %v1461 = vadd.f32 %v1252, %v1460
      %v1462 = vpop.f32.mrb[0].mxu0
      %1463 = vmatprep.mubr.bf16.mxu0 0
      %1464 = vmatmul.mubr.bf16.gmra.mrb[0].mxu0 %v993
      %v1465 = vpop.f32.mrb[0].mxu0
      %v1466 = vadd.f32 %v1257, %v1465
      %v1467 = vpop.f32.mrb[0].mxu0
      %v1468 = vpop.f32.mrb[0].mxu0
      %v1469 = vadd.f32 %v1260, %v1468
      %v1470 = vpop.f32.mrb[0].mxu0
      %1471 = vmatprep.mubr.bf16.mxu0 0
      %1472 = vmatmul.mubr.bf16.gmra.mrb[0].mxu0 %v994
      %v1473 = vpop.f32.mrb[0].mxu0
      %v1474 = vadd.f32 %v1265, %v1473
      %v1475 = vpop.f32.mrb[0].mxu0
      %v1476 = vpop.f32.mrb[0].mxu0
      %v1477 = vadd.f32 %v1268, %v1476
      %v1478 = vpop.f32.mrb[0].mxu0
      %1479 = vmatprep.mubr.bf16.mxu0 0
      %1480 = vmatmul.mubr.bf16.gmra.mrb[0].mxu0 %v995
      %v1481 = vpop.f32.mrb[0].mxu0
      %v1482 = vadd.f32 %v1273, %v1481
      %v1483 = vpop.f32.mrb[0].mxu0
      %v1484 = vpop.f32.mrb[0].mxu0
      %v1485 = vadd.f32 %v1276, %v1484
      %v1486 = vpop.f32.mrb[0].mxu0
      %1487 = vmatprep.mubr.bf16.mxu0 0
      %1488 = vmatmul.mubr.bf16.gmra.mrb[0].mxu0 %v996
      %v1489 = vpop.f32.mrb[0].mxu0
      %v1490 = vadd.f32 %v1281, %v1489
      %v1491 = vpop.f32.mrb[0].mxu0
      %v1492 = vpop.f32.mrb[0].mxu0
      %v1493 = vadd.f32 %v1284, %v1492
      %v1494 = vpop.f32.mrb[0].mxu0
      %1495 = vdwg.mxu0
      %v1496 = vld [vmem:[#allocation2 + $0x9] sm:$0xff]
      %v1497 = vld [vmem:[#allocation2 + $0x11] sm:$0xff]
      %v1498 = vld [vmem:[#allocation2 + $0x19] sm:$0xff]
      %v1499 = vld [vmem:[#allocation2 + $0x21] sm:$0xff]
      %v1500 = vld [vmem:[#allocation2 + $0x29] sm:$0xff]
      %v1501 = vld [vmem:[#allocation2 + $0x31] sm:$0xff]
      %v1502 = vld [vmem:[#allocation2 + $0x39] sm:$0xff]
      %v1503 = vld [vmem:[#allocation2 + $0x41] sm:$0xff]
      %v1504 = vld [vmem:[#allocation2 + $0x49] sm:$0xff]
      %v1505 = vld [vmem:[#allocation2 + $0x51] sm:$0xff]
      %v1506 = vld [vmem:[#allocation2 + $0x59] sm:$0xff]
      %v1507 = vld [vmem:[#allocation2 + $0x61] sm:$0xff]
      %v1508 = vld [vmem:[#allocation2 + $0x69] sm:$0xff]
      %v1509 = vld [vmem:[#allocation2 + $0x71] sm:$0xff]
      %v1510 = vld [vmem:[#allocation2 + $0x79] sm:$0xff]
      %v1511 = vld [vmem:[#allocation2 + $0x81] sm:$0xff]
      %v1512 = vld [vmem:[#allocation2 + $0x89] sm:$0xff]
      %v1513 = vld [vmem:[#allocation2 + $0x91] sm:$0xff]
      %v1514 = vld [vmem:[#allocation2 + $0x99] sm:$0xff]
      %v1515 = vld [vmem:[#allocation2 + $0xa1] sm:$0xff]
      %v1516 = vld [vmem:[#allocation2 + $0xa9] sm:$0xff]
      %v1517 = vld [vmem:[#allocation2 + $0xb1] sm:$0xff]
      %v1518 = vld [vmem:[#allocation2 + $0xb9] sm:$0xff]
      %v1519 = vld [vmem:[#allocation2 + $0xc1] sm:$0xff]
      %v1520 = vld [vmem:[#allocation2 + $0xc9] sm:$0xff]
      %v1521 = vld [vmem:[#allocation2 + $0xd1] sm:$0xff]
      %v1522 = vld [vmem:[#allocation2 + $0xd9] sm:$0xff]
      %v1523 = vld [vmem:[#allocation2 + $0xe1] sm:$0xff]
      %v1524 = vld [vmem:[#allocation2 + $0xe9] sm:$0xff]
      %v1525 = vld [vmem:[#allocation2 + $0xf1] sm:$0xff]
      %v1526 = vld [vmem:[#allocation2 + $0xf9] sm:$0xff]
      %v1527 = vld [vmem:[#allocation2 + $0x101] sm:$0xff]
      %v1528 = vsel %vm821, 1, 0
      %v1529 = vsel %vm822, 1, 0
      %v1530 = vsel %vm823, 1, 0
      %v1531 = vsel %vm824, 1, 0
      %v1532 = vsel %vm825, 1, 0
      %v1533 = vsel %vm826, 1, 0
      %v1534 = vsel %vm827, 1, 0
      %v1535 = vsel %vm828, 1, 0
      %v1536 = vsel %vm829, 1, 0
      %v1537 = vsel %vm830, 1, 0
      %v1538 = vsel %vm831, 1, 0
      %v1539 = vsel %vm832, 1, 0
      %v1540 = vsel %vm833, 1, 0
      %v1541 = vsel %vm834, 1, 0
      %v1542 = vsel %vm835, 1, 0
      %v1543 = vsel %vm836, 1, 0
      %v1544 = vsel %vm837, 1, 0
      %v1545 = vsel %vm838, 1, 0
      %v1546 = vsel %vm839, 1, 0
      %v1547 = vsel %vm840, 1, 0
      %v1548 = vsel %vm841, 1, 0
      %v1549 = vsel %vm842, 1, 0
      %v1550 = vsel %vm843, 1, 0
      %v1551 = vsel %vm844, 1, 0
      %v1552 = vsel %vm845, 1, 0
      %v1553 = vsel %vm846, 1, 0
      %v1554 = vsel %vm847, 1, 0
      %v1555 = vsel %vm848, 1, 0
      %v1556 = vsel %vm849, 1, 0
      %v1557 = vsel %vm850, 1, 0
      %v1558 = vsel %vm851, 1, 0
      %v1559 = vsel %vm852, 1, 0
      %vm1560 = vcmp.eq.s32.totalorder %v1528, 1
      %vm1561 = vcmp.eq.s32.totalorder %v1529, 1
      %vm1562 = vcmp.eq.s32.totalorder %v1530, 1
      %vm1563 = vcmp.eq.s32.totalorder %v1531, 1
      %vm1564 = vcmp.eq.s32.totalorder %v1532, 1
      %vm1565 = vcmp.eq.s32.totalorder %v1533, 1
      %vm1566 = vcmp.eq.s32.totalorder %v1534, 1
      %vm1567 = vcmp.eq.s32.totalorder %v1535, 1
      %vm1568 = vcmp.eq.s32.totalorder %v1536, 1
      %vm1569 = vcmp.eq.s32.totalorder %v1537, 1
      %vm1570 = vcmp.eq.s32.totalorder %v1538, 1
      %vm1571 = vcmp.eq.s32.totalorder %v1539, 1
      %vm1572 = vcmp.eq.s32.totalorder %v1540, 1
      %vm1573 = vcmp.eq.s32.totalorder %v1541, 1
      %vm1574 = vcmp.eq.s32.totalorder %v1542, 1
      %vm1575 = vcmp.eq.s32.totalorder %v1543, 1
      %vm1576 = vcmp.eq.s32.totalorder %v1544, 1
      %vm1577 = vcmp.eq.s32.totalorder %v1545, 1
      %vm1578 = vcmp.eq.s32.totalorder %v1546, 1
      %vm1579 = vcmp.eq.s32.totalorder %v1547, 1
      %vm1580 = vcmp.eq.s32.totalorder %v1548, 1
      %vm1581 = vcmp.eq.s32.totalorder %v1549, 1
      %vm1582 = vcmp.eq.s32.totalorder %v1550, 1
      %vm1583 = vcmp.eq.s32.totalorder %v1551, 1
      %vm1584 = vcmp.eq.s32.totalorder %v1552, 1
      %vm1585 = vcmp.eq.s32.totalorder %v1553, 1
      %vm1586 = vcmp.eq.s32.totalorder %v1554, 1
      %vm1587 = vcmp.eq.s32.totalorder %v1555, 1
      %vm1588 = vcmp.eq.s32.totalorder %v1556, 1
      %vm1589 = vcmp.eq.s32.totalorder %v1557, 1
      %vm1590 = vcmp.eq.s32.totalorder %v1558, 1
      %vm1591 = vcmp.eq.s32.totalorder %v1559, 1
      %v1592 = vsel %vm1560, %v1496, 0.0
      %v1593 = vsel %vm1561, %v1497, 0.0
      %v1594 = vsel %vm1562, %v1498, 0.0
      %v1595 = vsel %vm1563, %v1499, 0.0
      %v1596 = vsel %vm1564, %v1500, 0.0
      %v1597 = vsel %vm1565, %v1501, 0.0
      %v1598 = vsel %vm1566, %v1502, 0.0
      %v1599 = vsel %vm1567, %v1503, 0.0
      %v1600 = vsel %vm1568, %v1504, 0.0
      %v1601 = vsel %vm1569, %v1505, 0.0
      %v1602 = vsel %vm1570, %v1506, 0.0
      %v1603 = vsel %vm1571, %v1507, 0.0
      %v1604 = vsel %vm1572, %v1508, 0.0
      %v1605 = vsel %vm1573, %v1509, 0.0
      %v1606 = vsel %vm1574, %v1510, 0.0
      %v1607 = vsel %vm1575, %v1511, 0.0
      %v1608 = vsel %vm1576, %v1512, 0.0
      %v1609 = vsel %vm1577, %v1513, 0.0
      %v1610 = vsel %vm1578, %v1514, 0.0
      %v1611 = vsel %vm1579, %v1515, 0.0
      %v1612 = vsel %vm1580, %v1516, 0.0
      %v1613 = vsel %vm1581, %v1517, 0.0
      %v1614 = vsel %vm1582, %v1518, 0.0
      %v1615 = vsel %vm1583, %v1519, 0.0
      %v1616 = vsel %vm1584, %v1520, 0.0
      %v1617 = vsel %vm1585, %v1521, 0.0
      %v1618 = vsel %vm1586, %v1522, 0.0
      %v1619 = vsel %vm1587, %v1523, 0.0
      %v1620 = vsel %vm1588, %v1524, 0.0
      %v1621 = vsel %vm1589, %v1525, 0.0
      %v1622 = vsel %vm1590, %v1526, 0.0
      %v1623 = vsel %vm1591, %v1527, 0.0
      %v1624 = vpack.c.bf16 %v1593, %v1592
      %v1625 = vpack.c.bf16 %v1595, %v1594
      %v1626 = vpack.c.bf16 %v1597, %v1596
      %v1627 = vpack.c.bf16 %v1599, %v1598
      %v1628 = vpack.c.bf16 %v1601, %v1600
      %v1629 = vpack.c.bf16 %v1603, %v1602
      %v1630 = vpack.c.bf16 %v1605, %v1604
      %v1631 = vpack.c.bf16 %v1607, %v1606
      %v1632 = vpack.c.bf16 %v1609, %v1608
      %v1633 = vpack.c.bf16 %v1611, %v1610
      %v1634 = vpack.c.bf16 %v1613, %v1612
      %v1635 = vpack.c.bf16 %v1615, %v1614
      %v1636 = vpack.c.bf16 %v1617, %v1616
      %v1637 = vpack.c.bf16 %v1619, %v1618
      %v1638 = vpack.c.bf16 %v1621, %v1620
      %v1639 = vpack.c.bf16 %v1623, %v1622
      %s1640 = scalar_lea.vmem %s1, 128
      %v1641 = vld [vmem:[%s1640] sm:$0xf]
      %v1642 = vld [vmem:[%s1640 + $0x4] sm:$0xf]
      %v1643 = vld [vmem:[%s1640 + $0x8] sm:$0xf]
      %v1644 = vld [vmem:[%s1640 + $0xc] sm:$0xf]
      %v1645 = vld [vmem:[%s1640 + $0x10] sm:$0xf]
      %v1646 = vld [vmem:[%s1640 + $0x14] sm:$0xf]
      %v1647 = vld [vmem:[%s1640 + $0x18] sm:$0xf]
      %v1648 = vld [vmem:[%s1640 + $0x1c] sm:$0xf]
      %v1649 = vld [vmem:[%s1640 + $0x20] sm:$0xf]
      %v1650 = vld [vmem:[%s1640 + $0x24] sm:$0xf]
      %v1651 = vld [vmem:[%s1640 + $0x28] sm:$0xf]
      %v1652 = vld [vmem:[%s1640 + $0x2c] sm:$0xf]
      %v1653 = vld [vmem:[%s1640 + $0x30] sm:$0xf]
      %v1654 = vld [vmem:[%s1640 + $0x34] sm:$0xf]
      %v1655 = vld [vmem:[%s1640 + $0x38] sm:$0xf]
      %v1656 = vld [vmem:[%s1640 + $0x3c] sm:$0xf]
      %v1673 = vunpack.c.l.b16 %v1641
      %v1674 = vunpack.c.l.b16 %v1642
      %v1675 = vunpack.c.l.b16 %v1643
      %v1676 = vunpack.c.l.b16 %v1644
      %v1677 = vunpack.c.l.b16 %v1645
      %v1678 = vunpack.c.l.b16 %v1646
      %v1679 = vunpack.c.l.b16 %v1647
      %v1680 = vunpack.c.l.b16 %v1648
      %v1681 = vunpack.c.l.b16 %v1649
      %v1682 = vunpack.c.l.b16 %v1650
      %v1683 = vunpack.c.l.b16 %v1651
      %v1684 = vunpack.c.l.b16 %v1652
      %v1685 = vunpack.c.l.b16 %v1653
      %v1686 = vunpack.c.l.b16 %v1654
      %v1687 = vunpack.c.l.b16 %v1655
      %v1688 = vunpack.c.l.b16 %v1656
      %v1689 = vpack.c.b16 %v1674, %v1673
      %v1690 = vpack.c.b16 %v1676, %v1675
      %v1691 = vpack.c.b16 %v1678, %v1677
      %v1692 = vpack.c.b16 %v1680, %v1679
      %v1693 = vpack.c.b16 %v1682, %v1681
      %v1694 = vpack.c.b16 %v1684, %v1683
      %v1695 = vpack.c.b16 %v1686, %v1685
      %v1696 = vpack.c.b16 %v1688, %v1687
      %1705 = vmatprep.subr.bf16.mxu0 0
      %1706 = vmatpush1.bf16.msra.mxu0 %v1689
      %1707 = vmatprep.subr.bf16.mxu0 0
      %1708 = vmatpush1.bf16.msra.mxu0 %v1690
      %1709 = vmatprep.subr.bf16.mxu0 0
      %1710 = vmatpush1.bf16.msra.mxu0 %v1691
      %1711 = vmatprep.subr.bf16.mxu0 0
      %1712 = vmatpush1.bf16.msra.mxu0 %v1692
      %1713 = vmatprep.subr.bf16.mxu0 0
      %1714 = vmatpush1.bf16.msra.mxu0 %v1693
      %1715 = vmatprep.subr.bf16.mxu0 0
      %1716 = vmatpush1.bf16.msra.mxu0 %v1694
      %1717 = vmatprep.subr.bf16.mxu0 0
      %1718 = vmatpush1.bf16.msra.mxu0 %v1695
      %1719 = vmatprep.subr.bf16.mxu0 0
      %1720 = vmatpush1.bf16.msra.mxu0 %v1696
      %1721 = vmatprep.subr.bf16.mxu0 0
      %1722 = vmatpush1.bf16.msra.mxu0 0
      %1723 = vmatprep.subr.bf16.mxu0 0
      %1724 = vmatpush1.bf16.msra.mxu0 0
      %1725 = vmatprep.subr.bf16.mxu0 0
      %1726 = vmatpush1.bf16.msra.mxu0 0
      %1727 = vmatprep.subr.bf16.mxu0 0
      %1728 = vmatpush1.bf16.msra.mxu0 0
      %1729 = vmatprep.subr.bf16.mxu0 0
      %1730 = vmatpush1.bf16.msra.mxu0 0
      %1731 = vmatprep.subr.bf16.mxu0 0
      %1732 = vmatpush1.bf16.msra.mxu0 0
      %1733 = vmatprep.subr.bf16.mxu0 0
      %1734 = vmatpush1.bf16.msra.mxu0 0
      %1735 = vmatprep.subr.bf16.mxu0 0
      %1736 = vmatpush1.bf16.msra.mxu0 0
      %1737 = vmatprep.mubr.bf16.mxu0 0
      %1738 = vmatmul.mubr.bf16.gmra.mrb[0].mxu0 %v1624
      %v1739 = vpop.f32.mrb[0].mxu0
      %v1740 = vadd.f32 0.0, %v1739
      %v1741 = vpop.f32.mrb[0].mxu0
      %v1742 = vpop.f32.mrb[0].mxu0
      %v1743 = vadd.f32 0.0, %v1742
      %v1744 = vpop.f32.mrb[0].mxu0
      %1745 = vmatprep.mubr.bf16.mxu0 0
      %1746 = vmatmul.mubr.bf16.gmra.mrb[0].mxu0 %v1625
      %v1747 = vpop.f32.mrb[0].mxu0
      %v1748 = vadd.f32 0.0, %v1747
      %v1749 = vpop.f32.mrb[0].mxu0
      %v1750 = vpop.f32.mrb[0].mxu0
      %v1751 = vadd.f32 0.0, %v1750
      %v1752 = vpop.f32.mrb[0].mxu0
      %1753 = vmatprep.mubr.bf16.mxu0 0
      %1754 = vmatmul.mubr.bf16.gmra.mrb[0].mxu0 %v1626
      %v1755 = vpop.f32.mrb[0].mxu0
      %v1756 = vadd.f32 0.0, %v1755
      %v1757 = vpop.f32.mrb[0].mxu0
      %v1758 = vpop.f32.mrb[0].mxu0
      %v1759 = vadd.f32 0.0, %v1758
      %v1760 = vpop.f32.mrb[0].mxu0
      %1761 = vmatprep.mubr.bf16.mxu0 0
      %1762 = vmatmul.mubr.bf16.gmra.mrb[0].mxu0 %v1627
      %v1763 = vpop.f32.mrb[0].mxu0
      %v1764 = vadd.f32 0.0, %v1763
      %v1765 = vpop.f32.mrb[0].mxu0
      %v1766 = vpop.f32.mrb[0].mxu0
      %v1767 = vadd.f32 0.0, %v1766
      %v1768 = vpop.f32.mrb[0].mxu0
      %1769 = vmatprep.mubr.bf16.mxu0 0
      %1770 = vmatmul.mubr.bf16.gmra.mrb[0].mxu0 %v1628
      %v1771 = vpop.f32.mrb[0].mxu0
      %v1772 = vadd.f32 0.0, %v1771
      %v1773 = vpop.f32.mrb[0].mxu0
      %v1774 = vpop.f32.mrb[0].mxu0
      %v1775 = vadd.f32 0.0, %v1774
      %v1776 = vpop.f32.mrb[0].mxu0
      %1777 = vmatprep.mubr.bf16.mxu0 0
      %1778 = vmatmul.mubr.bf16.gmra.mrb[0].mxu0 %v1629
      %v1779 = vpop.f32.mrb[0].mxu0
      %v1780 = vadd.f32 0.0, %v1779
      %v1781 = vpop.f32.mrb[0].mxu0
      %v1782 = vpop.f32.mrb[0].mxu0
      %v1783 = vadd.f32 0.0, %v1782
      %v1784 = vpop.f32.mrb[0].mxu0
      %1785 = vmatprep.mubr.bf16.mxu0 0
      %1786 = vmatmul.mubr.bf16.gmra.mrb[0].mxu0 %v1630
      %v1787 = vpop.f32.mrb[0].mxu0
      %v1788 = vadd.f32 0.0, %v1787
      %v1789 = vpop.f32.mrb[0].mxu0
      %v1790 = vpop.f32.mrb[0].mxu0
      %v1791 = vadd.f32 0.0, %v1790
      %v1792 = vpop.f32.mrb[0].mxu0
      %1793 = vmatprep.mubr.bf16.mxu0 0
      %1794 = vmatmul.mubr.bf16.gmra.mrb[0].mxu0 %v1631
      %v1795 = vpop.f32.mrb[0].mxu0
      %v1796 = vadd.f32 0.0, %v1795
      %v1797 = vpop.f32.mrb[0].mxu0
      %v1798 = vpop.f32.mrb[0].mxu0
      %v1799 = vadd.f32 0.0, %v1798
      %v1800 = vpop.f32.mrb[0].mxu0
      %1801 = vmatprep.mubr.bf16.mxu0 0
      %1802 = vmatmul.mubr.bf16.gmra.mrb[0].mxu0 %v1632
      %v1803 = vpop.f32.mrb[0].mxu0
      %v1804 = vadd.f32 0.0, %v1803
      %v1805 = vpop.f32.mrb[0].mxu0
      %v1806 = vpop.f32.mrb[0].mxu0
      %v1807 = vadd.f32 0.0, %v1806
      %v1808 = vpop.f32.mrb[0].mxu0
      %1809 = vmatprep.mubr.bf16.mxu0 0
      %1810 = vmatmul.mubr.bf16.gmra.mrb[0].mxu0 %v1633
      %v1811 = vpop.f32.mrb[0].mxu0
      %v1812 = vadd.f32 0.0, %v1811
      %v1813 = vpop.f32.mrb[0].mxu0
      %v1814 = vpop.f32.mrb[0].mxu0
      %v1815 = vadd.f32 0.0, %v1814
      %v1816 = vpop.f32.mrb[0].mxu0
      %1817 = vmatprep.mubr.bf16.mxu0 0
      %1818 = vmatmul.mubr.bf16.gmra.mrb[0].mxu0 %v1634
      %v1819 = vpop.f32.mrb[0].mxu0
      %v1820 = vadd.f32 0.0, %v1819
      %v1821 = vpop.f32.mrb[0].mxu0
      %v1822 = vpop.f32.mrb[0].mxu0
      %v1823 = vadd.f32 0.0, %v1822
      %v1824 = vpop.f32.mrb[0].mxu0
      %1825 = vmatprep.mubr.bf16.mxu0 0
      %1826 = vmatmul.mubr.bf16.gmra.mrb[0].mxu0 %v1635
      %v1827 = vpop.f32.mrb[0].mxu0
      %v1828 = vadd.f32 0.0, %v1827
      %v1829 = vpop.f32.mrb[0].mxu0
      %v1830 = vpop.f32.mrb[0].mxu0
      %v1831 = vadd.f32 0.0, %v1830
      %v1832 = vpop.f32.mrb[0].mxu0
      %1833 = vmatprep.mubr.bf16.mxu0 0
      %1834 = vmatmul.mubr.bf16.gmra.mrb[0].mxu0 %v1636
      %v1835 = vpop.f32.mrb[0].mxu0
      %v1836 = vadd.f32 0.0, %v1835
      %v1837 = vpop.f32.mrb[0].mxu0
      %v1838 = vpop.f32.mrb[0].mxu0
      %v1839 = vadd.f32 0.0, %v1838
      %v1840 = vpop.f32.mrb[0].mxu0
      %1841 = vmatprep.mubr.bf16.mxu0 0
      %1842 = vmatmul.mubr.bf16.gmra.mrb[0].mxu0 %v1637
      %v1843 = vpop.f32.mrb[0].mxu0
      %v1844 = vadd.f32 0.0, %v1843
      %v1845 = vpop.f32.mrb[0].mxu0
      %v1846 = vpop.f32.mrb[0].mxu0
      %v1847 = vadd.f32 0.0, %v1846
      %v1848 = vpop.f32.mrb[0].mxu0
      %1849 = vmatprep.mubr.bf16.mxu0 0
      %1850 = vmatmul.mubr.bf16.gmra.mrb[0].mxu0 %v1638
      %v1851 = vpop.f32.mrb[0].mxu0
      %v1852 = vadd.f32 0.0, %v1851
      %v1853 = vpop.f32.mrb[0].mxu0
      %v1854 = vpop.f32.mrb[0].mxu0
      %v1855 = vadd.f32 0.0, %v1854
      %v1856 = vpop.f32.mrb[0].mxu0
      %1857 = vmatprep.mubr.bf16.mxu0 0
      %1858 = vmatmul.mubr.bf16.gmra.mrb[0].mxu0 %v1639
      %v1859 = vpop.f32.mrb[0].mxu0
      %v1860 = vadd.f32 0.0, %v1859
      %v1861 = vpop.f32.mrb[0].mxu0
      %v1862 = vpop.f32.mrb[0].mxu0
      %v1863 = vadd.f32 0.0, %v1862
      %v1864 = vpop.f32.mrb[0].mxu0
      %1865 = vdwg.mxu0
      %v1866 = vadd.f32 %v1370, %v1740
      %v1867 = vadd.f32 %v1373, %v1743
      %v1868 = vadd.f32 %v1378, %v1748
      %v1869 = vadd.f32 %v1381, %v1751
      %v1870 = vadd.f32 %v1386, %v1756
      %v1871 = vadd.f32 %v1389, %v1759
      %v1872 = vadd.f32 %v1394, %v1764
      %v1873 = vadd.f32 %v1397, %v1767
      %v1874 = vadd.f32 %v1402, %v1772
      %v1875 = vadd.f32 %v1405, %v1775
      %v1876 = vadd.f32 %v1410, %v1780
      %v1877 = vadd.f32 %v1413, %v1783
      %v1878 = vadd.f32 %v1418, %v1788
      %v1879 = vadd.f32 %v1421, %v1791
      %v1880 = vadd.f32 %v1426, %v1796
      %v1881 = vadd.f32 %v1429, %v1799
      %v1882 = vadd.f32 %v1434, %v1804
      %v1883 = vadd.f32 %v1437, %v1807
      %v1884 = vadd.f32 %v1442, %v1812
      %v1885 = vadd.f32 %v1445, %v1815
      %v1886 = vadd.f32 %v1450, %v1820
      %v1887 = vadd.f32 %v1453, %v1823
      %v1888 = vadd.f32 %v1458, %v1828
      %v1889 = vadd.f32 %v1461, %v1831
      %v1890 = vadd.f32 %v1466, %v1836
      %v1891 = vadd.f32 %v1469, %v1839
      %v1892 = vadd.f32 %v1474, %v1844
      %v1893 = vadd.f32 %v1477, %v1847
      %v1894 = vadd.f32 %v1482, %v1852
      %v1895 = vadd.f32 %v1485, %v1855
      %v1896 = vadd.f32 %v1490, %v1860
      %v1897 = vadd.f32 %v1493, %v1863
      %v1898 = vld [vmem:[#allocation2 + $0x17] sm:$0xff]
      %v1899 = vld [vmem:[#allocation2 + $0x1f] sm:$0xff]
      %v1900 = vld [vmem:[#allocation2 + $0x27] sm:$0xff]
      %v1901 = vld [vmem:[#allocation2 + $0x2f] sm:$0xff]
      %v1902 = vld [vmem:[#allocation2 + $0x37] sm:$0xff]
      %v1903 = vld [vmem:[#allocation2 + $0x3f] sm:$0xff]
      %v1904 = vld [vmem:[#allocation2 + $0x47] sm:$0xff]
      %v1905 = vld [vmem:[#allocation2 + $0x4f] sm:$0xff]
      %v1906 = vld [vmem:[#allocation2 + $0x57] sm:$0xff]
      %v1907 = vld [vmem:[#allocation2 + $0x5f] sm:$0xff]
      %v1908 = vld [vmem:[#allocation2 + $0x67] sm:$0xff]
      %v1909 = vld [vmem:[#allocation2 + $0x6f] sm:$0xff]
      %v1910 = vld [vmem:[#allocation2 + $0x77] sm:$0xff]
      %v1911 = vld [vmem:[#allocation2 + $0x7f] sm:$0xff]
      %v1912 = vld [vmem:[#allocation2 + $0x87] sm:$0xff]
      %v1913 = vld [vmem:[#allocation2 + $0x8f] sm:$0xff]
      %v1914 = vld [vmem:[#allocation2 + $0x97] sm:$0xff]
      %v1915 = vld [vmem:[#allocation2 + $0x9f] sm:$0xff]
      %v1916 = vld [vmem:[#allocation2 + $0xa7] sm:$0xff]
      %v1917 = vld [vmem:[#allocation2 + $0xaf] sm:$0xff]
      %v1918 = vld [vmem:[#allocation2 + $0xb7] sm:$0xff]
      %v1919 = vld [vmem:[#allocation2 + $0xbf] sm:$0xff]
      %v1920 = vld [vmem:[#allocation2 + $0xc7] sm:$0xff]
      %v1921 = vld [vmem:[#allocation2 + $0xcf] sm:$0xff]
      %v1922 = vld [vmem:[#allocation2 + $0xd7] sm:$0xff]
      %v1923 = vld [vmem:[#allocation2 + $0xdf] sm:$0xff]
      %v1924 = vld [vmem:[#allocation2 + $0xe7] sm:$0xff]
      %v1925 = vld [vmem:[#allocation2 + $0xef] sm:$0xff]
      %v1926 = vld [vmem:[#allocation2 + $0xf7] sm:$0xff]
      %v1927 = vld [vmem:[#allocation2 + $0xff] sm:$0xff]
      %v1928 = vld [vmem:[#allocation2 + $0x107] sm:$0xff]
      %v1929 = vld [vmem:[#allocation2 + $0x10f] sm:$0xff]
      %v1930 = vsel %vm917, %v1898, 0.0
      %v1931 = vsel %vm918, %v1899, 0.0
      %v1932 = vsel %vm919, %v1900, 0.0
      %v1933 = vsel %vm920, %v1901, 0.0
      %v1934 = vsel %vm921, %v1902, 0.0
      %v1935 = vsel %vm922, %v1903, 0.0
      %v1936 = vsel %vm923, %v1904, 0.0
      %v1937 = vsel %vm924, %v1905, 0.0
      %v1938 = vsel %vm925, %v1906, 0.0
      %v1939 = vsel %vm926, %v1907, 0.0
      %v1940 = vsel %vm927, %v1908, 0.0
      %v1941 = vsel %vm928, %v1909, 0.0
      %v1942 = vsel %vm929, %v1910, 0.0
      %v1943 = vsel %vm930, %v1911, 0.0
      %v1944 = vsel %vm931, %v1912, 0.0
      %v1945 = vsel %vm932, %v1913, 0.0
      %v1946 = vsel %vm933, %v1914, 0.0
      %v1947 = vsel %vm934, %v1915, 0.0
      %v1948 = vsel %vm935, %v1916, 0.0
      %v1949 = vsel %vm936, %v1917, 0.0
      %v1950 = vsel %vm937, %v1918, 0.0
      %v1951 = vsel %vm938, %v1919, 0.0
      %v1952 = vsel %vm939, %v1920, 0.0
      %v1953 = vsel %vm940, %v1921, 0.0
      %v1954 = vsel %vm941, %v1922, 0.0
      %v1955 = vsel %vm942, %v1923, 0.0
      %v1956 = vsel %vm943, %v1924, 0.0
      %v1957 = vsel %vm944, %v1925, 0.0
      %v1958 = vsel %vm945, %v1926, 0.0
      %v1959 = vsel %vm946, %v1927, 0.0
      %v1960 = vsel %vm947, %v1928, 0.0
      %v1961 = vsel %vm948, %v1929, 0.0
      %v1962 = vpack.c.bf16 %v1931, %v1930
      %v1963 = vpack.c.bf16 %v1933, %v1932
      %v1964 = vpack.c.bf16 %v1935, %v1934
      %v1965 = vpack.c.bf16 %v1937, %v1936
      %v1966 = vpack.c.bf16 %v1939, %v1938
      %v1967 = vpack.c.bf16 %v1941, %v1940
      %v1968 = vpack.c.bf16 %v1943, %v1942
      %v1969 = vpack.c.bf16 %v1945, %v1944
      %v1970 = vpack.c.bf16 %v1947, %v1946
      %v1971 = vpack.c.bf16 %v1949, %v1948
      %v1972 = vpack.c.bf16 %v1951, %v1950
      %v1973 = vpack.c.bf16 %v1953, %v1952
      %v1974 = vpack.c.bf16 %v1955, %v1954
      %v1975 = vpack.c.bf16 %v1957, %v1956
      %v1976 = vpack.c.bf16 %v1959, %v1958
      %v1977 = vpack.c.bf16 %v1961, %v1960
      %s1978 = scalar_lea.vmem %s1, 192
      %v1979 = vld [vmem:[%s1978] sm:$0xf]
      %v1980 = vld [vmem:[%s1978 + $0x4] sm:$0xf]
      %v1981 = vld [vmem:[%s1978 + $0x8] sm:$0xf]
      %v1982 = vld [vmem:[%s1978 + $0xc] sm:$0xf]
      %v1983 = vld [vmem:[%s1978 + $0x10] sm:$0xf]
      %v1984 = vld [vmem:[%s1978 + $0x14] sm:$0xf]
      %v1985 = vld [vmem:[%s1978 + $0x18] sm:$0xf]
      %v1986 = vld [vmem:[%s1978 + $0x1c] sm:$0xf]
      %v1987 = vld [vmem:[%s1978 + $0x20] sm:$0xf]
      %v1988 = vld [vmem:[%s1978 + $0x24] sm:$0xf]
      %v1989 = vld [vmem:[%s1978 + $0x28] sm:$0xf]
      %v1990 = vld [vmem:[%s1978 + $0x2c] sm:$0xf]
      %v1991 = vld [vmem:[%s1978 + $0x30] sm:$0xf]
      %v1992 = vld [vmem:[%s1978 + $0x34] sm:$0xf]
      %v1993 = vld [vmem:[%s1978 + $0x38] sm:$0xf]
      %v1994 = vld [vmem:[%s1978 + $0x3c] sm:$0xf]
      %v2011 = vunpack.c.l.b16 %v1979
      %v2012 = vunpack.c.l.b16 %v1980
      %v2013 = vunpack.c.l.b16 %v1981
      %v2014 = vunpack.c.l.b16 %v1982
      %v2015 = vunpack.c.l.b16 %v1983
      %v2016 = vunpack.c.l.b16 %v1984
      %v2017 = vunpack.c.l.b16 %v1985
      %v2018 = vunpack.c.l.b16 %v1986
      %v2019 = vunpack.c.l.b16 %v1987
      %v2020 = vunpack.c.l.b16 %v1988
      %v2021 = vunpack.c.l.b16 %v1989
      %v2022 = vunpack.c.l.b16 %v1990
      %v2023 = vunpack.c.l.b16 %v1991
      %v2024 = vunpack.c.l.b16 %v1992
      %v2025 = vunpack.c.l.b16 %v1993
      %v2026 = vunpack.c.l.b16 %v1994
      %v2027 = vpack.c.b16 %v2012, %v2011
      %v2028 = vpack.c.b16 %v2014, %v2013
      %v2029 = vpack.c.b16 %v2016, %v2015
      %v2030 = vpack.c.b16 %v2018, %v2017
      %v2031 = vpack.c.b16 %v2020, %v2019
      %v2032 = vpack.c.b16 %v2022, %v2021
      %v2033 = vpack.c.b16 %v2024, %v2023
      %v2034 = vpack.c.b16 %v2026, %v2025
      %2043 = vmatprep.subr.bf16.mxu0 0
      %2044 = vmatpush1.bf16.msra.mxu0 %v2027
      %2045 = vmatprep.subr.bf16.mxu0 0
      %2046 = vmatpush1.bf16.msra.mxu0 %v2028
      %2047 = vmatprep.subr.bf16.mxu0 0
      %2048 = vmatpush1.bf16.msra.mxu0 %v2029
      %2049 = vmatprep.subr.bf16.mxu0 0
      %2050 = vmatpush1.bf16.msra.mxu0 %v2030
      %2051 = vmatprep.subr.bf16.mxu0 0
      %2052 = vmatpush1.bf16.msra.mxu0 %v2031
      %2053 = vmatprep.subr.bf16.mxu0 0
      %2054 = vmatpush1.bf16.msra.mxu0 %v2032
      %2055 = vmatprep.subr.bf16.mxu0 0
      %2056 = vmatpush1.bf16.msra.mxu0 %v2033
      %2057 = vmatprep.subr.bf16.mxu0 0
      %2058 = vmatpush1.bf16.msra.mxu0 %v2034
      %2059 = vmatprep.subr.bf16.mxu0 0
      %2060 = vmatpush1.bf16.msra.mxu0 0
      %2061 = vmatprep.subr.bf16.mxu0 0
      %2062 = vmatpush1.bf16.msra.mxu0 0
      %2063 = vmatprep.subr.bf16.mxu0 0
      %2064 = vmatpush1.bf16.msra.mxu0 0
      %2065 = vmatprep.subr.bf16.mxu0 0
      %2066 = vmatpush1.bf16.msra.mxu0 0
      %2067 = vmatprep.subr.bf16.mxu0 0
      %2068 = vmatpush1.bf16.msra.mxu0 0
      %2069 = vmatprep.subr.bf16.mxu0 0
      %2070 = vmatpush1.bf16.msra.mxu0 0
      %2071 = vmatprep.subr.bf16.mxu0 0
      %2072 = vmatpush1.bf16.msra.mxu0 0
      %2073 = vmatprep.subr.bf16.mxu0 0
      %2074 = vmatpush1.bf16.msra.mxu0 0
      %2075 = vmatprep.mubr.bf16.mxu0 0
      %2076 = vmatmul.mubr.bf16.gmra.mrb[0].mxu0 %v1962
      %v2077 = vpop.f32.mrb[0].mxu0
      %v2078 = vadd.f32 0.0, %v2077
      %v2079 = vpop.f32.mrb[0].mxu0
      %v2080 = vpop.f32.mrb[0].mxu0
      %v2081 = vadd.f32 0.0, %v2080
      %v2082 = vpop.f32.mrb[0].mxu0
      %2083 = vmatprep.mubr.bf16.mxu0 0
      %2084 = vmatmul.mubr.bf16.gmra.mrb[0].mxu0 %v1963
      %v2085 = vpop.f32.mrb[0].mxu0
      %v2086 = vadd.f32 0.0, %v2085
      %v2087 = vpop.f32.mrb[0].mxu0
      %v2088 = vpop.f32.mrb[0].mxu0
      %v2089 = vadd.f32 0.0, %v2088
      %v2090 = vpop.f32.mrb[0].mxu0
      %2091 = vmatprep.mubr.bf16.mxu0 0
      %2092 = vmatmul.mubr.bf16.gmra.mrb[0].mxu0 %v1964
      %v2093 = vpop.f32.mrb[0].mxu0
      %v2094 = vadd.f32 0.0, %v2093
      %v2095 = vpop.f32.mrb[0].mxu0
      %v2096 = vpop.f32.mrb[0].mxu0
      %v2097 = vadd.f32 0.0, %v2096
      %v2098 = vpop.f32.mrb[0].mxu0
      %2099 = vmatprep.mubr.bf16.mxu0 0
      %2100 = vmatmul.mubr.bf16.gmra.mrb[0].mxu0 %v1965
      %v2101 = vpop.f32.mrb[0].mxu0
      %v2102 = vadd.f32 0.0, %v2101
      %v2103 = vpop.f32.mrb[0].mxu0
      %v2104 = vpop.f32.mrb[0].mxu0
      %v2105 = vadd.f32 0.0, %v2104
      %v2106 = vpop.f32.mrb[0].mxu0
      %2107 = vmatprep.mubr.bf16.mxu0 0
      %2108 = vmatmul.mubr.bf16.gmra.mrb[0].mxu0 %v1966
      %v2109 = vpop.f32.mrb[0].mxu0
      %v2110 = vadd.f32 0.0, %v2109
      %v2111 = vpop.f32.mrb[0].mxu0
      %v2112 = vpop.f32.mrb[0].mxu0
      %v2113 = vadd.f32 0.0, %v2112
      %v2114 = vpop.f32.mrb[0].mxu0
      %2115 = vmatprep.mubr.bf16.mxu0 0
      %2116 = vmatmul.mubr.bf16.gmra.mrb[0].mxu0 %v1967
      %v2117 = vpop.f32.mrb[0].mxu0
      %v2118 = vadd.f32 0.0, %v2117
      %v2119 = vpop.f32.mrb[0].mxu0
      %v2120 = vpop.f32.mrb[0].mxu0
      %v2121 = vadd.f32 0.0, %v2120
      %v2122 = vpop.f32.mrb[0].mxu0
      %2123 = vmatprep.mubr.bf16.mxu0 0
      %2124 = vmatmul.mubr.bf16.gmra.mrb[0].mxu0 %v1968
      %v2125 = vpop.f32.mrb[0].mxu0
      %v2126 = vadd.f32 0.0, %v2125
      %v2127 = vpop.f32.mrb[0].mxu0
      %v2128 = vpop.f32.mrb[0].mxu0
      %v2129 = vadd.f32 0.0, %v2128
      %v2130 = vpop.f32.mrb[0].mxu0
      %2131 = vmatprep.mubr.bf16.mxu0 0
      %2132 = vmatmul.mubr.bf16.gmra.mrb[0].mxu0 %v1969
      %v2133 = vpop.f32.mrb[0].mxu0
      %v2134 = vadd.f32 0.0, %v2133
      %v2135 = vpop.f32.mrb[0].mxu0
      %v2136 = vpop.f32.mrb[0].mxu0
      %v2137 = vadd.f32 0.0, %v2136
      %v2138 = vpop.f32.mrb[0].mxu0
      %2139 = vmatprep.mubr.bf16.mxu0 0
      %2140 = vmatmul.mubr.bf16.gmra.mrb[0].mxu0 %v1970
      %v2141 = vpop.f32.mrb[0].mxu0
      %v2142 = vadd.f32 0.0, %v2141
      %v2143 = vpop.f32.mrb[0].mxu0
      %v2144 = vpop.f32.mrb[0].mxu0
      %v2145 = vadd.f32 0.0, %v2144
      %v2146 = vpop.f32.mrb[0].mxu0
      %2147 = vmatprep.mubr.bf16.mxu0 0
      %2148 = vmatmul.mubr.bf16.gmra.mrb[0].mxu0 %v1971
      %v2149 = vpop.f32.mrb[0].mxu0
      %v2150 = vadd.f32 0.0, %v2149
      %v2151 = vpop.f32.mrb[0].mxu0
      %v2152 = vpop.f32.mrb[0].mxu0
      %v2153 = vadd.f32 0.0, %v2152
      %v2154 = vpop.f32.mrb[0].mxu0
      %2155 = vmatprep.mubr.bf16.mxu0 0
      %2156 = vmatmul.mubr.bf16.gmra.mrb[0].mxu0 %v1972
      %v2157 = vpop.f32.mrb[0].mxu0
      %v2158 = vadd.f32 0.0, %v2157
      %v2159 = vpop.f32.mrb[0].mxu0
      %v2160 = vpop.f32.mrb[0].mxu0
      %v2161 = vadd.f32 0.0, %v2160
      %v2162 = vpop.f32.mrb[0].mxu0
      %2163 = vmatprep.mubr.bf16.mxu0 0
      %2164 = vmatmul.mubr.bf16.gmra.mrb[0].mxu0 %v1973
      %v2165 = vpop.f32.mrb[0].mxu0
      %v2166 = vadd.f32 0.0, %v2165
      %v2167 = vpop.f32.mrb[0].mxu0
      %v2168 = vpop.f32.mrb[0].mxu0
      %v2169 = vadd.f32 0.0, %v2168
      %v2170 = vpop.f32.mrb[0].mxu0
      %2171 = vmatprep.mubr.bf16.mxu0 0
      %2172 = vmatmul.mubr.bf16.gmra.mrb[0].mxu0 %v1974
      %v2173 = vpop.f32.mrb[0].mxu0
      %v2174 = vadd.f32 0.0, %v2173
      %v2175 = vpop.f32.mrb[0].mxu0
      %v2176 = vpop.f32.mrb[0].mxu0
      %v2177 = vadd.f32 0.0, %v2176
      %v2178 = vpop.f32.mrb[0].mxu0
      %2179 = vmatprep.mubr.bf16.mxu0 0
      %2180 = vmatmul.mubr.bf16.gmra.mrb[0].mxu0 %v1975
      %v2181 = vpop.f32.mrb[0].mxu0
      %v2182 = vadd.f32 0.0, %v2181
      %v2183 = vpop.f32.mrb[0].mxu0
      %v2184 = vpop.f32.mrb[0].mxu0
      %v2185 = vadd.f32 0.0, %v2184
      %v2186 = vpop.f32.mrb[0].mxu0
      %2187 = vmatprep.mubr.bf16.mxu0 0
      %2188 = vmatmul.mubr.bf16.gmra.mrb[0].mxu0 %v1976
      %v2189 = vpop.f32.mrb[0].mxu0
      %v2190 = vadd.f32 0.0, %v2189
      %v2191 = vpop.f32.mrb[0].mxu0
      %v2192 = vpop.f32.mrb[0].mxu0
      %v2193 = vadd.f32 0.0, %v2192
      %v2194 = vpop.f32.mrb[0].mxu0
      %2195 = vmatprep.mubr.bf16.mxu0 0
      %2196 = vmatmul.mubr.bf16.gmra.mrb[0].mxu0 %v1977
      %v2197 = vpop.f32.mrb[0].mxu0
      %v2198 = vadd.f32 0.0, %v2197
      %v2199 = vpop.f32.mrb[0].mxu0
      %v2200 = vpop.f32.mrb[0].mxu0
      %v2201 = vadd.f32 0.0, %v2200
      %v2202 = vpop.f32.mrb[0].mxu0
      %2203 = vdwg.mxu0
      %v2204 = vadd.f32 %v1866, %v2078
      %v2205 = vadd.f32 %v1867, %v2081
      %v2206 = vadd.f32 %v1868, %v2086
      %v2207 = vadd.f32 %v1869, %v2089
      %v2208 = vadd.f32 %v1870, %v2094
      %v2209 = vadd.f32 %v1871, %v2097
      %v2210 = vadd.f32 %v1872, %v2102
      %v2211 = vadd.f32 %v1873, %v2105
      %v2212 = vadd.f32 %v1874, %v2110
      %v2213 = vadd.f32 %v1875, %v2113
      %v2214 = vadd.f32 %v1876, %v2118
      %v2215 = vadd.f32 %v1877, %v2121
      %v2216 = vadd.f32 %v1878, %v2126
      %v2217 = vadd.f32 %v1879, %v2129
      %v2218 = vadd.f32 %v1880, %v2134
      %v2219 = vadd.f32 %v1881, %v2137
      %v2220 = vadd.f32 %v1882, %v2142
      %v2221 = vadd.f32 %v1883, %v2145
      %v2222 = vadd.f32 %v1884, %v2150
      %v2223 = vadd.f32 %v1885, %v2153
      %v2224 = vadd.f32 %v1886, %v2158
      %v2225 = vadd.f32 %v1887, %v2161
      %v2226 = vadd.f32 %v1888, %v2166
      %v2227 = vadd.f32 %v1889, %v2169
      %v2228 = vadd.f32 %v1890, %v2174
      %v2229 = vadd.f32 %v1891, %v2177
      %v2230 = vadd.f32 %v1892, %v2182
      %v2231 = vadd.f32 %v1893, %v2185
      %v2232 = vadd.f32 %v1894, %v2190
      %v2233 = vadd.f32 %v1895, %v2193
      %v2234 = vadd.f32 %v1896, %v2198
      %v2235 = vadd.f32 %v1897, %v2201
      %v2236 = vld [vmem:[#allocation2 + $0x18] sm:$0xff]
      %v2237 = vld [vmem:[#allocation2 + $0x20] sm:$0xff]
      %v2238 = vld [vmem:[#allocation2 + $0x28] sm:$0xff]
      %v2239 = vld [vmem:[#allocation2 + $0x30] sm:$0xff]
      %v2240 = vld [vmem:[#allocation2 + $0x38] sm:$0xff]
      %v2241 = vld [vmem:[#allocation2 + $0x40] sm:$0xff]
      %v2242 = vld [vmem:[#allocation2 + $0x48] sm:$0xff]
      %v2243 = vld [vmem:[#allocation2 + $0x50] sm:$0xff]
      %v2244 = vld [vmem:[#allocation2 + $0x58] sm:$0xff]
      %v2245 = vld [vmem:[#allocation2 + $0x60] sm:$0xff]
      %v2246 = vld [vmem:[#allocation2 + $0x68] sm:$0xff]
      %v2247 = vld [vmem:[#allocation2 + $0x70] sm:$0xff]
      %v2248 = vld [vmem:[#allocation2 + $0x78] sm:$0xff]
      %v2249 = vld [vmem:[#allocation2 + $0x80] sm:$0xff]
      %v2250 = vld [vmem:[#allocation2 + $0x88] sm:$0xff]
      %v2251 = vld [vmem:[#allocation2 + $0x90] sm:$0xff]
      %v2252 = vld [vmem:[#allocation2 + $0x98] sm:$0xff]
      %v2253 = vld [vmem:[#allocation2 + $0xa0] sm:$0xff]
      %v2254 = vld [vmem:[#allocation2 + $0xa8] sm:$0xff]
      %v2255 = vld [vmem:[#allocation2 + $0xb0] sm:$0xff]
      %v2256 = vld [vmem:[#allocation2 + $0xb8] sm:$0xff]
      %v2257 = vld [vmem:[#allocation2 + $0xc0] sm:$0xff]
      %v2258 = vld [vmem:[#allocation2 + $0xc8] sm:$0xff]
      %v2259 = vld [vmem:[#allocation2 + $0xd0] sm:$0xff]
      %v2260 = vld [vmem:[#allocation2 + $0xd8] sm:$0xff]
      %v2261 = vld [vmem:[#allocation2 + $0xe0] sm:$0xff]
      %v2262 = vld [vmem:[#allocation2 + $0xe8] sm:$0xff]
      %v2263 = vld [vmem:[#allocation2 + $0xf0] sm:$0xff]
      %v2264 = vld [vmem:[#allocation2 + $0xf8] sm:$0xff]
      %v2265 = vld [vmem:[#allocation2 + $0x100] sm:$0xff]
      %v2266 = vld [vmem:[#allocation2 + $0x108] sm:$0xff]
      %v2267 = vld [vmem:[#allocation2 + $0x110] sm:$0xff]
      %v2268 = vpack.c.bf16 %v2237, %v2236
      %v2269 = vpack.c.bf16 %v2239, %v2238
      %v2270 = vpack.c.bf16 %v2241, %v2240
      %v2271 = vpack.c.bf16 %v2243, %v2242
      %v2272 = vpack.c.bf16 %v2245, %v2244
      %v2273 = vpack.c.bf16 %v2247, %v2246
      %v2274 = vpack.c.bf16 %v2249, %v2248
      %v2275 = vpack.c.bf16 %v2251, %v2250
      %v2276 = vpack.c.bf16 %v2253, %v2252
      %v2277 = vpack.c.bf16 %v2255, %v2254
      %v2278 = vpack.c.bf16 %v2257, %v2256
      %v2279 = vpack.c.bf16 %v2259, %v2258
      %v2280 = vpack.c.bf16 %v2261, %v2260
      %v2281 = vpack.c.bf16 %v2263, %v2262
      %v2282 = vpack.c.bf16 %v2265, %v2264
      %v2283 = vpack.c.bf16 %v2267, %v2266
      %s2284 = scalar_lea.vmem %s1, 256
      %v2285 = vld [vmem:[%s2284] sm:$0xf]
      %v2286 = vld [vmem:[%s2284 + $0x4] sm:$0xf]
      %v2287 = vld [vmem:[%s2284 + $0x8] sm:$0xf]
      %v2288 = vld [vmem:[%s2284 + $0xc] sm:$0xf]
      %v2289 = vld [vmem:[%s2284 + $0x10] sm:$0xf]
      %v2290 = vld [vmem:[%s2284 + $0x14] sm:$0xf]
      %v2291 = vld [vmem:[%s2284 + $0x18] sm:$0xf]
      %v2292 = vld [vmem:[%s2284 + $0x1c] sm:$0xf]
      %v2293 = vld [vmem:[%s2284 + $0x20] sm:$0xf]
      %v2294 = vld [vmem:[%s2284 + $0x24] sm:$0xf]
      %v2295 = vld [vmem:[%s2284 + $0x28] sm:$0xf]
      %v2296 = vld [vmem:[%s2284 + $0x2c] sm:$0xf]
      %v2297 = vld [vmem:[%s2284 + $0x30] sm:$0xf]
      %v2298 = vld [vmem:[%s2284 + $0x34] sm:$0xf]
      %v2299 = vld [vmem:[%s2284 + $0x38] sm:$0xf]
      %v2300 = vld [vmem:[%s2284 + $0x3c] sm:$0xf]
      %v2317 = vunpack.c.l.b16 %v2285
      %v2318 = vunpack.c.l.b16 %v2286
      %v2319 = vunpack.c.l.b16 %v2287
      %v2320 = vunpack.c.l.b16 %v2288
      %v2321 = vunpack.c.l.b16 %v2289
      %v2322 = vunpack.c.l.b16 %v2290
      %v2323 = vunpack.c.l.b16 %v2291
      %v2324 = vunpack.c.l.b16 %v2292
      %v2325 = vunpack.c.l.b16 %v2293
      %v2326 = vunpack.c.l.b16 %v2294
      %v2327 = vunpack.c.l.b16 %v2295
      %v2328 = vunpack.c.l.b16 %v2296
      %v2329 = vunpack.c.l.b16 %v2297
      %v2330 = vunpack.c.l.b16 %v2298
      %v2331 = vunpack.c.l.b16 %v2299
      %v2332 = vunpack.c.l.b16 %v2300
      %v2333 = vpack.c.b16 %v2318, %v2317
      %v2334 = vpack.c.b16 %v2320, %v2319
      %v2335 = vpack.c.b16 %v2322, %v2321
      %v2336 = vpack.c.b16 %v2324, %v2323
      %v2337 = vpack.c.b16 %v2326, %v2325
      %v2338 = vpack.c.b16 %v2328, %v2327
      %v2339 = vpack.c.b16 %v2330, %v2329
      %v2340 = vpack.c.b16 %v2332, %v2331
      %2349 = vmatprep.subr.bf16.mxu0 0
      %2350 = vmatpush1.bf16.msra.mxu0 %v2333
      %2351 = vmatprep.subr.bf16.mxu0 0
      %2352 = vmatpush1.bf16.msra.mxu0 %v2334
      %2353 = vmatprep.subr.bf16.mxu0 0
      %2354 = vmatpush1.bf16.msra.mxu0 %v2335
      %2355 = vmatprep.subr.bf16.mxu0 0
      %2356 = vmatpush1.bf16.msra.mxu0 %v2336
      %2357 = vmatprep.subr.bf16.mxu0 0
      %2358 = vmatpush1.bf16.msra.mxu0 %v2337
      %2359 = vmatprep.subr.bf16.mxu0 0
      %2360 = vmatpush1.bf16.msra.mxu0 %v2338
      %2361 = vmatprep.subr.bf16.mxu0 0
      %2362 = vmatpush1.bf16.msra.mxu0 %v2339
      %2363 = vmatprep.subr.bf16.mxu0 0
      %2364 = vmatpush1.bf16.msra.mxu0 %v2340
      %2365 = vmatprep.subr.bf16.mxu0 0
      %2366 = vmatpush1.bf16.msra.mxu0 0
      %2367 = vmatprep.subr.bf16.mxu0 0
      %2368 = vmatpush1.bf16.msra.mxu0 0
      %2369 = vmatprep.subr.bf16.mxu0 0
      %2370 = vmatpush1.bf16.msra.mxu0 0
      %2371 = vmatprep.subr.bf16.mxu0 0
      %2372 = vmatpush1.bf16.msra.mxu0 0
      %2373 = vmatprep.subr.bf16.mxu0 0
      %2374 = vmatpush1.bf16.msra.mxu0 0
      %2375 = vmatprep.subr.bf16.mxu0 0
      %2376 = vmatpush1.bf16.msra.mxu0 0
      %2377 = vmatprep.subr.bf16.mxu0 0
      %2378 = vmatpush1.bf16.msra.mxu0 0
      %2379 = vmatprep.subr.bf16.mxu0 0
      %2380 = vmatpush1.bf16.msra.mxu0 0
      %2381 = vmatprep.mubr.bf16.mxu0 0
      %2382 = vmatmul.mubr.bf16.gmra.mrb[0].mxu0 %v2268
      %v2383 = vpop.f32.mrb[0].mxu0
      %v2384 = vadd.f32 0.0, %v2383
      %v2385 = vpop.f32.mrb[0].mxu0
      %v2386 = vpop.f32.mrb[0].mxu0
      %v2387 = vadd.f32 0.0, %v2386
      %v2388 = vpop.f32.mrb[0].mxu0
      %2389 = vmatprep.mubr.bf16.mxu0 0
      %2390 = vmatmul.mubr.bf16.gmra.mrb[0].mxu0 %v2269
      %v2391 = vpop.f32.mrb[0].mxu0
      %v2392 = vadd.f32 0.0, %v2391
      %v2393 = vpop.f32.mrb[0].mxu0
      %v2394 = vpop.f32.mrb[0].mxu0
      %v2395 = vadd.f32 0.0, %v2394
      %v2396 = vpop.f32.mrb[0].mxu0
      %2397 = vmatprep.mubr.bf16.mxu0 0
      %2398 = vmatmul.mubr.bf16.gmra.mrb[0].mxu0 %v2270
      %v2399 = vpop.f32.mrb[0].mxu0
      %v2400 = vadd.f32 0.0, %v2399
      %v2401 = vpop.f32.mrb[0].mxu0
      %v2402 = vpop.f32.mrb[0].mxu0
      %v2403 = vadd.f32 0.0, %v2402
      %v2404 = vpop.f32.mrb[0].mxu0
      %2405 = vmatprep.mubr.bf16.mxu0 0
      %2406 = vmatmul.mubr.bf16.gmra.mrb[0].mxu0 %v2271
      %v2407 = vpop.f32.mrb[0].mxu0
      %v2408 = vadd.f32 0.0, %v2407
      %v2409 = vpop.f32.mrb[0].mxu0
      %v2410 = vpop.f32.mrb[0].mxu0
      %v2411 = vadd.f32 0.0, %v2410
      %v2412 = vpop.f32.mrb[0].mxu0
      %2413 = vmatprep.mubr.bf16.mxu0 0
      %2414 = vmatmul.mubr.bf16.gmra.mrb[0].mxu0 %v2272
      %v2415 = vpop.f32.mrb[0].mxu0
      %v2416 = vadd.f32 0.0, %v2415
      %v2417 = vpop.f32.mrb[0].mxu0
      %v2418 = vpop.f32.mrb[0].mxu0
      %v2419 = vadd.f32 0.0, %v2418
      %v2420 = vpop.f32.mrb[0].mxu0
      %2421 = vmatprep.mubr.bf16.mxu0 0
      %2422 = vmatmul.mubr.bf16.gmra.mrb[0].mxu0 %v2273
      %v2423 = vpop.f32.mrb[0].mxu0
      %v2424 = vadd.f32 0.0, %v2423
      %v2425 = vpop.f32.mrb[0].mxu0
      %v2426 = vpop.f32.mrb[0].mxu0
      %v2427 = vadd.f32 0.0, %v2426
      %v2428 = vpop.f32.mrb[0].mxu0
      %2429 = vmatprep.mubr.bf16.mxu0 0
      %2430 = vmatmul.mubr.bf16.gmra.mrb[0].mxu0 %v2274
      %v2431 = vpop.f32.mrb[0].mxu0
      %v2432 = vadd.f32 0.0, %v2431
      %v2433 = vpop.f32.mrb[0].mxu0
      %v2434 = vpop.f32.mrb[0].mxu0
      %v2435 = vadd.f32 0.0, %v2434
      %v2436 = vpop.f32.mrb[0].mxu0
      %2437 = vmatprep.mubr.bf16.mxu0 0
      %2438 = vmatmul.mubr.bf16.gmra.mrb[0].mxu0 %v2275
      %v2439 = vpop.f32.mrb[0].mxu0
      %v2440 = vadd.f32 0.0, %v2439
      %v2441 = vpop.f32.mrb[0].mxu0
      %v2442 = vpop.f32.mrb[0].mxu0
      %v2443 = vadd.f32 0.0, %v2442
      %v2444 = vpop.f32.mrb[0].mxu0
      %2445 = vmatprep.mubr.bf16.mxu0 0
      %2446 = vmatmul.mubr.bf16.gmra.mrb[0].mxu0 %v2276
      %v2447 = vpop.f32.mrb[0].mxu0
      %v2448 = vadd.f32 0.0, %v2447
      %v2449 = vpop.f32.mrb[0].mxu0
      %v2450 = vpop.f32.mrb[0].mxu0
      %v2451 = vadd.f32 0.0, %v2450
      %v2452 = vpop.f32.mrb[0].mxu0
      %2453 = vmatprep.mubr.bf16.mxu0 0
      %2454 = vmatmul.mubr.bf16.gmra.mrb[0].mxu0 %v2277
      %v2455 = vpop.f32.mrb[0].mxu0
      %v2456 = vadd.f32 0.0, %v2455
      %v2457 = vpop.f32.mrb[0].mxu0
      %v2458 = vpop.f32.mrb[0].mxu0
      %v2459 = vadd.f32 0.0, %v2458
      %v2460 = vpop.f32.mrb[0].mxu0
      %2461 = vmatprep.mubr.bf16.mxu0 0
      %2462 = vmatmul.mubr.bf16.gmra.mrb[0].mxu0 %v2278
      %v2463 = vpop.f32.mrb[0].mxu0
      %v2464 = vadd.f32 0.0, %v2463
      %v2465 = vpop.f32.mrb[0].mxu0
      %v2466 = vpop.f32.mrb[0].mxu0
      %v2467 = vadd.f32 0.0, %v2466
      %v2468 = vpop.f32.mrb[0].mxu0
      %2469 = vmatprep.mubr.bf16.mxu0 0
      %2470 = vmatmul.mubr.bf16.gmra.mrb[0].mxu0 %v2279
      %v2471 = vpop.f32.mrb[0].mxu0
      %v2472 = vadd.f32 0.0, %v2471
      %v2473 = vpop.f32.mrb[0].mxu0
      %v2474 = vpop.f32.mrb[0].mxu0
      %v2475 = vadd.f32 0.0, %v2474
      %v2476 = vpop.f32.mrb[0].mxu0
      %2477 = vmatprep.mubr.bf16.mxu0 0
      %2478 = vmatmul.mubr.bf16.gmra.mrb[0].mxu0 %v2280
      %v2479 = vpop.f32.mrb[0].mxu0
      %v2480 = vadd.f32 0.0, %v2479
      %v2481 = vpop.f32.mrb[0].mxu0
      %v2482 = vpop.f32.mrb[0].mxu0
      %v2483 = vadd.f32 0.0, %v2482
      %v2484 = vpop.f32.mrb[0].mxu0
      %2485 = vmatprep.mubr.bf16.mxu0 0
      %2486 = vmatmul.mubr.bf16.gmra.mrb[0].mxu0 %v2281
      %v2487 = vpop.f32.mrb[0].mxu0
      %v2488 = vadd.f32 0.0, %v2487
      %v2489 = vpop.f32.mrb[0].mxu0
      %v2490 = vpop.f32.mrb[0].mxu0
      %v2491 = vadd.f32 0.0, %v2490
      %v2492 = vpop.f32.mrb[0].mxu0
      %2493 = vmatprep.mubr.bf16.mxu0 0
      %2494 = vmatmul.mubr.bf16.gmra.mrb[0].mxu0 %v2282
      %v2495 = vpop.f32.mrb[0].mxu0
      %v2496 = vadd.f32 0.0, %v2495
      %v2497 = vpop.f32.mrb[0].mxu0
      %v2498 = vpop.f32.mrb[0].mxu0
      %v2499 = vadd.f32 0.0, %v2498
      %v2500 = vpop.f32.mrb[0].mxu0
      %2501 = vmatprep.mubr.bf16.mxu0 0
      %2502 = vmatmul.mubr.bf16.gmra.mrb[0].mxu0 %v2283
      %v2503 = vpop.f32.mrb[0].mxu0
      %v2504 = vadd.f32 0.0, %v2503
      %v2505 = vpop.f32.mrb[0].mxu0
      %v2506 = vpop.f32.mrb[0].mxu0
      %v2507 = vadd.f32 0.0, %v2506
      %v2508 = vpop.f32.mrb[0].mxu0
      %2509 = vdwg.mxu0
      %v2510 = vadd.f32 %v2204, %v2384
      %v2511 = vadd.f32 %v2205, %v2387
      %v2512 = vadd.f32 %v2206, %v2392
      %v2513 = vadd.f32 %v2207, %v2395
      %v2514 = vadd.f32 %v2208, %v2400
      %v2515 = vadd.f32 %v2209, %v2403
      %v2516 = vadd.f32 %v2210, %v2408
      %v2517 = vadd.f32 %v2211, %v2411
      %v2518 = vadd.f32 %v2212, %v2416
      %v2519 = vadd.f32 %v2213, %v2419
      %v2520 = vadd.f32 %v2214, %v2424
      %v2521 = vadd.f32 %v2215, %v2427
      %v2522 = vadd.f32 %v2216, %v2432
      %v2523 = vadd.f32 %v2217, %v2435
      %v2524 = vadd.f32 %v2218, %v2440
      %v2525 = vadd.f32 %v2219, %v2443
      %v2526 = vadd.f32 %v2220, %v2448
      %v2527 = vadd.f32 %v2221, %v2451
      %v2528 = vadd.f32 %v2222, %v2456
      %v2529 = vadd.f32 %v2223, %v2459
      %v2530 = vadd.f32 %v2224, %v2464
      %v2531 = vadd.f32 %v2225, %v2467
      %v2532 = vadd.f32 %v2226, %v2472
      %v2533 = vadd.f32 %v2227, %v2475
      %v2534 = vadd.f32 %v2228, %v2480
      %v2535 = vadd.f32 %v2229, %v2483
      %v2536 = vadd.f32 %v2230, %v2488
      %v2537 = vadd.f32 %v2231, %v2491
      %v2538 = vadd.f32 %v2232, %v2496
      %v2539 = vadd.f32 %v2233, %v2499
      %v2540 = vadd.f32 %v2234, %v2504
      %v2541 = vadd.f32 %v2235, %v2507
      %v2542 = vld [vmem:[#allocation2 + $0x19] sm:$0xff]
      %v2543 = vld [vmem:[#allocation2 + $0x21] sm:$0xff]
      %v2544 = vld [vmem:[#allocation2 + $0x29] sm:$0xff]
      %v2545 = vld [vmem:[#allocation2 + $0x31] sm:$0xff]
      %v2546 = vld [vmem:[#allocation2 + $0x39] sm:$0xff]
      %v2547 = vld [vmem:[#allocation2 + $0x41] sm:$0xff]
      %v2548 = vld [vmem:[#allocation2 + $0x49] sm:$0xff]
      %v2549 = vld [vmem:[#allocation2 + $0x51] sm:$0xff]
      %v2550 = vld [vmem:[#allocation2 + $0x59] sm:$0xff]
      %v2551 = vld [vmem:[#allocation2 + $0x61] sm:$0xff]
      %v2552 = vld [vmem:[#allocation2 + $0x69] sm:$0xff]
      %v2553 = vld [vmem:[#allocation2 + $0x71] sm:$0xff]
      %v2554 = vld [vmem:[#allocation2 + $0x79] sm:$0xff]
      %v2555 = vld [vmem:[#allocation2 + $0x81] sm:$0xff]
      %v2556 = vld [vmem:[#allocation2 + $0x89] sm:$0xff]
      %v2557 = vld [vmem:[#allocation2 + $0x91] sm:$0xff]
      %v2558 = vld [vmem:[#allocation2 + $0x99] sm:$0xff]
      %v2559 = vld [vmem:[#allocation2 + $0xa1] sm:$0xff]
      %v2560 = vld [vmem:[#allocation2 + $0xa9] sm:$0xff]
      %v2561 = vld [vmem:[#allocation2 + $0xb1] sm:$0xff]
      %v2562 = vld [vmem:[#allocation2 + $0xb9] sm:$0xff]
      %v2563 = vld [vmem:[#allocation2 + $0xc1] sm:$0xff]
      %v2564 = vld [vmem:[#allocation2 + $0xc9] sm:$0xff]
      %v2565 = vld [vmem:[#allocation2 + $0xd1] sm:$0xff]
      %v2566 = vld [vmem:[#allocation2 + $0xd9] sm:$0xff]
      %v2567 = vld [vmem:[#allocation2 + $0xe1] sm:$0xff]
      %v2568 = vld [vmem:[#allocation2 + $0xe9] sm:$0xff]
      %v2569 = vld [vmem:[#allocation2 + $0xf1] sm:$0xff]
      %v2570 = vld [vmem:[#allocation2 + $0xf9] sm:$0xff]
      %v2571 = vld [vmem:[#allocation2 + $0x101] sm:$0xff]
      %v2572 = vld [vmem:[#allocation2 + $0x109] sm:$0xff]
      %v2573 = vld [vmem:[#allocation2 + $0x111] sm:$0xff]
      %v2574 = vsel %vm1560, %v2542, 0.0
      %v2575 = vsel %vm1561, %v2543, 0.0
      %v2576 = vsel %vm1562, %v2544, 0.0
      %v2577 = vsel %vm1563, %v2545, 0.0
      %v2578 = vsel %vm1564, %v2546, 0.0
      %v2579 = vsel %vm1565, %v2547, 0.0
      %v2580 = vsel %vm1566, %v2548, 0.0
      %v2581 = vsel %vm1567, %v2549, 0.0
      %v2582 = vsel %vm1568, %v2550, 0.0
      %v2583 = vsel %vm1569, %v2551, 0.0
      %v2584 = vsel %vm1570, %v2552, 0.0
      %v2585 = vsel %vm1571, %v2553, 0.0
      %v2586 = vsel %vm1572, %v2554, 0.0
      %v2587 = vsel %vm1573, %v2555, 0.0
      %v2588 = vsel %vm1574, %v2556, 0.0
      %v2589 = vsel %vm1575, %v2557, 0.0
      %v2590 = vsel %vm1576, %v2558, 0.0
      %v2591 = vsel %vm1577, %v2559, 0.0
      %v2592 = vsel %vm1578, %v2560, 0.0
      %v2593 = vsel %vm1579, %v2561, 0.0
      %v2594 = vsel %vm1580, %v2562, 0.0
      %v2595 = vsel %vm1581, %v2563, 0.0
      %v2596 = vsel %vm1582, %v2564, 0.0
      %v2597 = vsel %vm1583, %v2565, 0.0
      %v2598 = vsel %vm1584, %v2566, 0.0
      %v2599 = vsel %vm1585, %v2567, 0.0
      %v2600 = vsel %vm1586, %v2568, 0.0
      %v2601 = vsel %vm1587, %v2569, 0.0
      %v2602 = vsel %vm1588, %v2570, 0.0
      %v2603 = vsel %vm1589, %v2571, 0.0
      %v2604 = vsel %vm1590, %v2572, 0.0
      %v2605 = vsel %vm1591, %v2573, 0.0
      %v2606 = vpack.c.bf16 %v2575, %v2574
      %v2607 = vpack.c.bf16 %v2577, %v2576
      %v2608 = vpack.c.bf16 %v2579, %v2578
      %v2609 = vpack.c.bf16 %v2581, %v2580
      %v2610 = vpack.c.bf16 %v2583, %v2582
      %v2611 = vpack.c.bf16 %v2585, %v2584
      %v2612 = vpack.c.bf16 %v2587, %v2586
      %v2613 = vpack.c.bf16 %v2589, %v2588
      %v2614 = vpack.c.bf16 %v2591, %v2590
      %v2615 = vpack.c.bf16 %v2593, %v2592
      %v2616 = vpack.c.bf16 %v2595, %v2594
      %v2617 = vpack.c.bf16 %v2597, %v2596
      %v2618 = vpack.c.bf16 %v2599, %v2598
      %v2619 = vpack.c.bf16 %v2601, %v2600
      %v2620 = vpack.c.bf16 %v2603, %v2602
      %v2621 = vpack.c.bf16 %v2605, %v2604
      %s2622 = scalar_lea.vmem %s1, 320
      %v2623 = vld [vmem:[%s2622] sm:$0xf]
      %v2624 = vld [vmem:[%s2622 + $0x4] sm:$0xf]
      %v2625 = vld [vmem:[%s2622 + $0x8] sm:$0xf]
      %v2626 = vld [vmem:[%s2622 + $0xc] sm:$0xf]
      %v2627 = vld [vmem:[%s2622 + $0x10] sm:$0xf]
      %v2628 = vld [vmem:[%s2622 + $0x14] sm:$0xf]
      %v2629 = vld [vmem:[%s2622 + $0x18] sm:$0xf]
      %v2630 = vld [vmem:[%s2622 + $0x1c] sm:$0xf]
      %v2631 = vld [vmem:[%s2622 + $0x20] sm:$0xf]
      %v2632 = vld [vmem:[%s2622 + $0x24] sm:$0xf]
      %v2633 = vld [vmem:[%s2622 + $0x28] sm:$0xf]
      %v2634 = vld [vmem:[%s2622 + $0x2c] sm:$0xf]
      %v2635 = vld [vmem:[%s2622 + $0x30] sm:$0xf]
      %v2636 = vld [vmem:[%s2622 + $0x34] sm:$0xf]
      %v2637 = vld [vmem:[%s2622 + $0x38] sm:$0xf]
      %v2638 = vld [vmem:[%s2622 + $0x3c] sm:$0xf]
      %v2655 = vunpack.c.l.b16 %v2623
      %v2656 = vunpack.c.l.b16 %v2624
      %v2657 = vunpack.c.l.b16 %v2625
      %v2658 = vunpack.c.l.b16 %v2626
      %v2659 = vunpack.c.l.b16 %v2627
      %v2660 = vunpack.c.l.b16 %v2628
      %v2661 = vunpack.c.l.b16 %v2629
      %v2662 = vunpack.c.l.b16 %v2630
      %v2663 = vunpack.c.l.b16 %v2631
      %v2664 = vunpack.c.l.b16 %v2632
      %v2665 = vunpack.c.l.b16 %v2633
      %v2666 = vunpack.c.l.b16 %v2634
      %v2667 = vunpack.c.l.b16 %v2635
      %v2668 = vunpack.c.l.b16 %v2636
      %v2669 = vunpack.c.l.b16 %v2637
      %v2670 = vunpack.c.l.b16 %v2638
      %v2671 = vpack.c.b16 %v2656, %v2655
      %v2672 = vpack.c.b16 %v2658, %v2657
      %v2673 = vpack.c.b16 %v2660, %v2659
      %v2674 = vpack.c.b16 %v2662, %v2661
      %v2675 = vpack.c.b16 %v2664, %v2663
      %v2676 = vpack.c.b16 %v2666, %v2665
      %v2677 = vpack.c.b16 %v2668, %v2667
      %v2678 = vpack.c.b16 %v2670, %v2669
      %2687 = vmatprep.subr.bf16.mxu0 0
      %2688 = vmatpush1.bf16.msra.mxu0 %v2671
      %2689 = vmatprep.subr.bf16.mxu0 0
      %2690 = vmatpush1.bf16.msra.mxu0 %v2672
      %2691 = vmatprep.subr.bf16.mxu0 0
      %2692 = vmatpush1.bf16.msra.mxu0 %v2673
      %2693 = vmatprep.subr.bf16.mxu0 0
      %2694 = vmatpush1.bf16.msra.mxu0 %v2674
      %2695 = vmatprep.subr.bf16.mxu0 0
      %2696 = vmatpush1.bf16.msra.mxu0 %v2675
      %2697 = vmatprep.subr.bf16.mxu0 0
      %2698 = vmatpush1.bf16.msra.mxu0 %v2676
      %2699 = vmatprep.subr.bf16.mxu0 0
      %2700 = vmatpush1.bf16.msra.mxu0 %v2677
      %2701 = vmatprep.subr.bf16.mxu0 0
      %2702 = vmatpush1.bf16.msra.mxu0 %v2678
      %2703 = vmatprep.subr.bf16.mxu0 0
      %2704 = vmatpush1.bf16.msra.mxu0 0
      %2705 = vmatprep.subr.bf16.mxu0 0
      %2706 = vmatpush1.bf16.msra.mxu0 0
      %2707 = vmatprep.subr.bf16.mxu0 0
      %2708 = vmatpush1.bf16.msra.mxu0 0
      %2709 = vmatprep.subr.bf16.mxu0 0
      %2710 = vmatpush1.bf16.msra.mxu0 0
      %2711 = vmatprep.subr.bf16.mxu0 0
      %2712 = vmatpush1.bf16.msra.mxu0 0
      %2713 = vmatprep.subr.bf16.mxu0 0
      %2714 = vmatpush1.bf16.msra.mxu0 0
      %2715 = vmatprep.subr.bf16.mxu0 0
      %2716 = vmatpush1.bf16.msra.mxu0 0
      %2717 = vmatprep.subr.bf16.mxu0 0
      %2718 = vmatpush1.bf16.msra.mxu0 0
      %2719 = vmatprep.mubr.bf16.mxu0 0
      %2720 = vmatmul.mubr.bf16.gmra.mrb[0].mxu0 %v2606
      %v2721 = vpop.f32.mrb[0].mxu0
      %v2722 = vadd.f32 0.0, %v2721
      %v2723 = vpop.f32.mrb[0].mxu0
      %v2724 = vpop.f32.mrb[0].mxu0
      %v2725 = vadd.f32 0.0, %v2724
      %v2726 = vpop.f32.mrb[0].mxu0
      %2727 = vmatprep.mubr.bf16.mxu0 0
      %2728 = vmatmul.mubr.bf16.gmra.mrb[0].mxu0 %v2607
      %v2729 = vpop.f32.mrb[0].mxu0
      %v2730 = vadd.f32 0.0, %v2729
      %v2731 = vpop.f32.mrb[0].mxu0
      %v2732 = vpop.f32.mrb[0].mxu0
      %v2733 = vadd.f32 0.0, %v2732
      %v2734 = vpop.f32.mrb[0].mxu0
      %2735 = vmatprep.mubr.bf16.mxu0 0
      %2736 = vmatmul.mubr.bf16.gmra.mrb[0].mxu0 %v2608
      %v2737 = vpop.f32.mrb[0].mxu0
      %v2738 = vadd.f32 0.0, %v2737
      %v2739 = vpop.f32.mrb[0].mxu0
      %v2740 = vpop.f32.mrb[0].mxu0
      %v2741 = vadd.f32 0.0, %v2740
      %v2742 = vpop.f32.mrb[0].mxu0
      %2743 = vmatprep.mubr.bf16.mxu0 0
      %2744 = vmatmul.mubr.bf16.gmra.mrb[0].mxu0 %v2609
      %v2745 = vpop.f32.mrb[0].mxu0
      %v2746 = vadd.f32 0.0, %v2745
      %v2747 = vpop.f32.mrb[0].mxu0
      %v2748 = vpop.f32.mrb[0].mxu0
      %v2749 = vadd.f32 0.0, %v2748
      %v2750 = vpop.f32.mrb[0].mxu0
      %2751 = vmatprep.mubr.bf16.mxu0 0
      %2752 = vmatmul.mubr.bf16.gmra.mrb[0].mxu0 %v2610
      %v2753 = vpop.f32.mrb[0].mxu0
      %v2754 = vadd.f32 0.0, %v2753
      %v2755 = vpop.f32.mrb[0].mxu0
      %v2756 = vpop.f32.mrb[0].mxu0
      %v2757 = vadd.f32 0.0, %v2756
      %v2758 = vpop.f32.mrb[0].mxu0
      %2759 = vmatprep.mubr.bf16.mxu0 0
      %2760 = vmatmul.mubr.bf16.gmra.mrb[0].mxu0 %v2611
      %v2761 = vpop.f32.mrb[0].mxu0
      %v2762 = vadd.f32 0.0, %v2761
      %v2763 = vpop.f32.mrb[0].mxu0
      %v2764 = vpop.f32.mrb[0].mxu0
      %v2765 = vadd.f32 0.0, %v2764
      %v2766 = vpop.f32.mrb[0].mxu0
      %2767 = vmatprep.mubr.bf16.mxu0 0
      %2768 = vmatmul.mubr.bf16.gmra.mrb[0].mxu0 %v2612
      %v2769 = vpop.f32.mrb[0].mxu0
      %v2770 = vadd.f32 0.0, %v2769
      %v2771 = vpop.f32.mrb[0].mxu0
      %v2772 = vpop.f32.mrb[0].mxu0
      %v2773 = vadd.f32 0.0, %v2772
      %v2774 = vpop.f32.mrb[0].mxu0
      %2775 = vmatprep.mubr.bf16.mxu0 0
      %2776 = vmatmul.mubr.bf16.gmra.mrb[0].mxu0 %v2613
      %v2777 = vpop.f32.mrb[0].mxu0
      %v2778 = vadd.f32 0.0, %v2777
      %v2779 = vpop.f32.mrb[0].mxu0
      %v2780 = vpop.f32.mrb[0].mxu0
      %v2781 = vadd.f32 0.0, %v2780
      %v2782 = vpop.f32.mrb[0].mxu0
      %2783 = vmatprep.mubr.bf16.mxu0 0
      %2784 = vmatmul.mubr.bf16.gmra.mrb[0].mxu0 %v2614
      %v2785 = vpop.f32.mrb[0].mxu0
      %v2786 = vadd.f32 0.0, %v2785
      %v2787 = vpop.f32.mrb[0].mxu0
      %v2788 = vpop.f32.mrb[0].mxu0
      %v2789 = vadd.f32 0.0, %v2788
      %v2790 = vpop.f32.mrb[0].mxu0
      %2791 = vmatprep.mubr.bf16.mxu0 0
      %2792 = vmatmul.mubr.bf16.gmra.mrb[0].mxu0 %v2615
      %v2793 = vpop.f32.mrb[0].mxu0
      %v2794 = vadd.f32 0.0, %v2793
      %v2795 = vpop.f32.mrb[0].mxu0
      %v2796 = vpop.f32.mrb[0].mxu0
      %v2797 = vadd.f32 0.0, %v2796
      %v2798 = vpop.f32.mrb[0].mxu0
      %2799 = vmatprep.mubr.bf16.mxu0 0
      %2800 = vmatmul.mubr.bf16.gmra.mrb[0].mxu0 %v2616
      %v2801 = vpop.f32.mrb[0].mxu0
      %v2802 = vadd.f32 0.0, %v2801
      %v2803 = vpop.f32.mrb[0].mxu0
      %v2804 = vpop.f32.mrb[0].mxu0
      %v2805 = vadd.f32 0.0, %v2804
      %v2806 = vpop.f32.mrb[0].mxu0
      %2807 = vmatprep.mubr.bf16.mxu0 0
      %2808 = vmatmul.mubr.bf16.gmra.mrb[0].mxu0 %v2617
      %v2809 = vpop.f32.mrb[0].mxu0
      %v2810 = vadd.f32 0.0, %v2809
      %v2811 = vpop.f32.mrb[0].mxu0
      %v2812 = vpop.f32.mrb[0].mxu0
      %v2813 = vadd.f32 0.0, %v2812
      %v2814 = vpop.f32.mrb[0].mxu0
      %2815 = vmatprep.mubr.bf16.mxu0 0
      %2816 = vmatmul.mubr.bf16.gmra.mrb[0].mxu0 %v2618
      %v2817 = vpop.f32.mrb[0].mxu0
      %v2818 = vadd.f32 0.0, %v2817
      %v2819 = vpop.f32.mrb[0].mxu0
      %v2820 = vpop.f32.mrb[0].mxu0
      %v2821 = vadd.f32 0.0, %v2820
      %v2822 = vpop.f32.mrb[0].mxu0
      %2823 = vmatprep.mubr.bf16.mxu0 0
      %2824 = vmatmul.mubr.bf16.gmra.mrb[0].mxu0 %v2619
      %v2825 = vpop.f32.mrb[0].mxu0
      %v2826 = vadd.f32 0.0, %v2825
      %v2827 = vpop.f32.mrb[0].mxu0
      %v2828 = vpop.f32.mrb[0].mxu0
      %v2829 = vadd.f32 0.0, %v2828
      %v2830 = vpop.f32.mrb[0].mxu0
      %2831 = vmatprep.mubr.bf16.mxu0 0
      %2832 = vmatmul.mubr.bf16.gmra.mrb[0].mxu0 %v2620
      %v2833 = vpop.f32.mrb[0].mxu0
      %v2834 = vadd.f32 0.0, %v2833
      %v2835 = vpop.f32.mrb[0].mxu0
      %v2836 = vpop.f32.mrb[0].mxu0
      %v2837 = vadd.f32 0.0, %v2836
      %v2838 = vpop.f32.mrb[0].mxu0
      %2839 = vmatprep.mubr.bf16.mxu0 0
      %2840 = vmatmul.mubr.bf16.gmra.mrb[0].mxu0 %v2621
      %v2841 = vpop.f32.mrb[0].mxu0
      %v2842 = vadd.f32 0.0, %v2841
      %v2843 = vpop.f32.mrb[0].mxu0
      %v2844 = vpop.f32.mrb[0].mxu0
      %v2845 = vadd.f32 0.0, %v2844
      %v2846 = vpop.f32.mrb[0].mxu0
      %2847 = vdwg.mxu0
      %v2848 = vadd.f32 %v2510, %v2722
      %v2849 = vadd.f32 %v2511, %v2725
      %v2850 = vadd.f32 %v2512, %v2730
      %v2851 = vadd.f32 %v2513, %v2733
      %v2852 = vadd.f32 %v2514, %v2738
      %v2853 = vadd.f32 %v2515, %v2741
      %v2854 = vadd.f32 %v2516, %v2746
      %v2855 = vadd.f32 %v2517, %v2749
      %v2856 = vadd.f32 %v2518, %v2754
      %v2857 = vadd.f32 %v2519, %v2757
      %v2858 = vadd.f32 %v2520, %v2762
      %v2859 = vadd.f32 %v2521, %v2765
      %v2860 = vadd.f32 %v2522, %v2770
      %v2861 = vadd.f32 %v2523, %v2773
      %v2862 = vadd.f32 %v2524, %v2778
      %v2863 = vadd.f32 %v2525, %v2781
      %v2864 = vadd.f32 %v2526, %v2786
      %v2865 = vadd.f32 %v2527, %v2789
      %v2866 = vadd.f32 %v2528, %v2794
      %v2867 = vadd.f32 %v2529, %v2797
      %v2868 = vadd.f32 %v2530, %v2802
      %v2869 = vadd.f32 %v2531, %v2805
      %v2870 = vadd.f32 %v2532, %v2810
      %v2871 = vadd.f32 %v2533, %v2813
      %v2872 = vadd.f32 %v2534, %v2818
      %v2873 = vadd.f32 %v2535, %v2821
      %v2874 = vadd.f32 %v2536, %v2826
      %v2875 = vadd.f32 %v2537, %v2829
      %v2876 = vadd.f32 %v2538, %v2834
      %v2877 = vadd.f32 %v2539, %v2837
      %v2878 = vadd.f32 %v2540, %v2842
      %v2879 = vadd.f32 %v2541, %v2845
      %v2880 = vld [vmem:[#allocation2 + $0x27] sm:$0xff]
      %v2881 = vld [vmem:[#allocation2 + $0x2f] sm:$0xff]
      %v2882 = vld [vmem:[#allocation2 + $0x37] sm:$0xff]
      %v2883 = vld [vmem:[#allocation2 + $0x3f] sm:$0xff]
      %v2884 = vld [vmem:[#allocation2 + $0x47] sm:$0xff]
      %v2885 = vld [vmem:[#allocation2 + $0x4f] sm:$0xff]
      %v2886 = vld [vmem:[#allocation2 + $0x57] sm:$0xff]
      %v2887 = vld [vmem:[#allocation2 + $0x5f] sm:$0xff]
      %v2888 = vld [vmem:[#allocation2 + $0x67] sm:$0xff]
      %v2889 = vld [vmem:[#allocation2 + $0x6f] sm:$0xff]
      %v2890 = vld [vmem:[#allocation2 + $0x77] sm:$0xff]
      %v2891 = vld [vmem:[#allocation2 + $0x7f] sm:$0xff]
      %v2892 = vld [vmem:[#allocation2 + $0x87] sm:$0xff]
      %v2893 = vld [vmem:[#allocation2 + $0x8f] sm:$0xff]
      %v2894 = vld [vmem:[#allocation2 + $0x97] sm:$0xff]
      %v2895 = vld [vmem:[#allocation2 + $0x9f] sm:$0xff]
      %v2896 = vld [vmem:[#allocation2 + $0xa7] sm:$0xff]
      %v2897 = vld [vmem:[#allocation2 + $0xaf] sm:$0xff]
      %v2898 = vld [vmem:[#allocation2 + $0xb7] sm:$0xff]
      %v2899 = vld [vmem:[#allocation2 + $0xbf] sm:$0xff]
      %v2900 = vld [vmem:[#allocation2 + $0xc7] sm:$0xff]
      %v2901 = vld [vmem:[#allocation2 + $0xcf] sm:$0xff]
      %v2902 = vld [vmem:[#allocation2 + $0xd7] sm:$0xff]
      %v2903 = vld [vmem:[#allocation2 + $0xdf] sm:$0xff]
      %v2904 = vld [vmem:[#allocation2 + $0xe7] sm:$0xff]
      %v2905 = vld [vmem:[#allocation2 + $0xef] sm:$0xff]
      %v2906 = vld [vmem:[#allocation2 + $0xf7] sm:$0xff]
      %v2907 = vld [vmem:[#allocation2 + $0xff] sm:$0xff]
      %v2908 = vld [vmem:[#allocation2 + $0x107] sm:$0xff]
      %v2909 = vld [vmem:[#allocation2 + $0x10f] sm:$0xff]
      %v2910 = vld [vmem:[#allocation2 + $0x117] sm:$0xff]
      %v2911 = vld [vmem:[#allocation2 + $0x11f] sm:$0xff]
      %v2912 = vsel %vm917, %v2880, 0.0
      %v2913 = vsel %vm918, %v2881, 0.0
      %v2914 = vsel %vm919, %v2882, 0.0
      %v2915 = vsel %vm920, %v2883, 0.0
      %v2916 = vsel %vm921, %v2884, 0.0
      %v2917 = vsel %vm922, %v2885, 0.0
      %v2918 = vsel %vm923, %v2886, 0.0
      %v2919 = vsel %vm924, %v2887, 0.0
      %v2920 = vsel %vm925, %v2888, 0.0
      %v2921 = vsel %vm926, %v2889, 0.0
      %v2922 = vsel %vm927, %v2890, 0.0
      %v2923 = vsel %vm928, %v2891, 0.0
      %v2924 = vsel %vm929, %v2892, 0.0
      %v2925 = vsel %vm930, %v2893, 0.0
      %v2926 = vsel %vm931, %v2894, 0.0
      %v2927 = vsel %vm932, %v2895, 0.0
      %v2928 = vsel %vm933, %v2896, 0.0
      %v2929 = vsel %vm934, %v2897, 0.0
      %v2930 = vsel %vm935, %v2898, 0.0
      %v2931 = vsel %vm936, %v2899, 0.0
      %v2932 = vsel %vm937, %v2900, 0.0
      %v2933 = vsel %vm938, %v2901, 0.0
      %v2934 = vsel %vm939, %v2902, 0.0
      %v2935 = vsel %vm940, %v2903, 0.0
      %v2936 = vsel %vm941, %v2904, 0.0
      %v2937 = vsel %vm942, %v2905, 0.0
      %v2938 = vsel %vm943, %v2906, 0.0
      %v2939 = vsel %vm944, %v2907, 0.0
      %v2940 = vsel %vm945, %v2908, 0.0
      %v2941 = vsel %vm946, %v2909, 0.0
      %v2942 = vsel %vm947, %v2910, 0.0
      %v2943 = vsel %vm948, %v2911, 0.0
      %v2944 = vpack.c.bf16 %v2913, %v2912
      %v2945 = vpack.c.bf16 %v2915, %v2914
      %v2946 = vpack.c.bf16 %v2917, %v2916
      %v2947 = vpack.c.bf16 %v2919, %v2918
      %v2948 = vpack.c.bf16 %v2921, %v2920
      %v2949 = vpack.c.bf16 %v2923, %v2922
      %v2950 = vpack.c.bf16 %v2925, %v2924
      %v2951 = vpack.c.bf16 %v2927, %v2926
      %v2952 = vpack.c.bf16 %v2929, %v2928
      %v2953 = vpack.c.bf16 %v2931, %v2930
      %v2954 = vpack.c.bf16 %v2933, %v2932
      %v2955 = vpack.c.bf16 %v2935, %v2934
      %v2956 = vpack.c.bf16 %v2937, %v2936
      %v2957 = vpack.c.bf16 %v2939, %v2938
      %v2958 = vpack.c.bf16 %v2941, %v2940
      %v2959 = vpack.c.bf16 %v2943, %v2942
      %s2960 = scalar_lea.vmem %s1, 384
      %v2961 = vld [vmem:[%s2960] sm:$0xf]
      %v2962 = vld [vmem:[%s2960 + $0x4] sm:$0xf]
      %v2963 = vld [vmem:[%s2960 + $0x8] sm:$0xf]
      %v2964 = vld [vmem:[%s2960 + $0xc] sm:$0xf]
      %v2965 = vld [vmem:[%s2960 + $0x10] sm:$0xf]
      %v2966 = vld [vmem:[%s2960 + $0x14] sm:$0xf]
      %v2967 = vld [vmem:[%s2960 + $0x18] sm:$0xf]
      %v2968 = vld [vmem:[%s2960 + $0x1c] sm:$0xf]
      %v2969 = vld [vmem:[%s2960 + $0x20] sm:$0xf]
      %v2970 = vld [vmem:[%s2960 + $0x24] sm:$0xf]
      %v2971 = vld [vmem:[%s2960 + $0x28] sm:$0xf]
      %v2972 = vld [vmem:[%s2960 + $0x2c] sm:$0xf]
      %v2973 = vld [vmem:[%s2960 + $0x30] sm:$0xf]
      %v2974 = vld [vmem:[%s2960 + $0x34] sm:$0xf]
      %v2975 = vld [vmem:[%s2960 + $0x38] sm:$0xf]
      %v2976 = vld [vmem:[%s2960 + $0x3c] sm:$0xf]
      %v2993 = vunpack.c.l.b16 %v2961
      %v2994 = vunpack.c.l.b16 %v2962
      %v2995 = vunpack.c.l.b16 %v2963
      %v2996 = vunpack.c.l.b16 %v2964
      %v2997 = vunpack.c.l.b16 %v2965
      %v2998 = vunpack.c.l.b16 %v2966
      %v2999 = vunpack.c.l.b16 %v2967
      %v3000 = vunpack.c.l.b16 %v2968
      %v3001 = vunpack.c.l.b16 %v2969
      %v3002 = vunpack.c.l.b16 %v2970
      %v3003 = vunpack.c.l.b16 %v2971
      %v3004 = vunpack.c.l.b16 %v2972
      %v3005 = vunpack.c.l.b16 %v2973
      %v3006 = vunpack.c.l.b16 %v2974
      %v3007 = vunpack.c.l.b16 %v2975
      %v3008 = vunpack.c.l.b16 %v2976
      %v3009 = vpack.c.b16 %v2994, %v2993
      %v3010 = vpack.c.b16 %v2996, %v2995
      %v3011 = vpack.c.b16 %v2998, %v2997
      %v3012 = vpack.c.b16 %v3000, %v2999
      %v3013 = vpack.c.b16 %v3002, %v3001
      %v3014 = vpack.c.b16 %v3004, %v3003
      %v3015 = vpack.c.b16 %v3006, %v3005
      %v3016 = vpack.c.b16 %v3008, %v3007
      %3025 = vmatprep.subr.bf16.mxu0 0
      %3026 = vmatpush1.bf16.msra.mxu0 %v3009
      %3027 = vmatprep.subr.bf16.mxu0 0
      %3028 = vmatpush1.bf16.msra.mxu0 %v3010
      %3029 = vmatprep.subr.bf16.mxu0 0
      %3030 = vmatpush1.bf16.msra.mxu0 %v3011
      %3031 = vmatprep.subr.bf16.mxu0 0
      %3032 = vmatpush1.bf16.msra.mxu0 %v3012
      %3033 = vmatprep.subr.bf16.mxu0 0
      %3034 = vmatpush1.bf16.msra.mxu0 %v3013
      %3035 = vmatprep.subr.bf16.mxu0 0
      %3036 = vmatpush1.bf16.msra.mxu0 %v3014
      %3037 = vmatprep.subr.bf16.mxu0 0
      %3038 = vmatpush1.bf16.msra.mxu0 %v3015
      %3039 = vmatprep.subr.bf16.mxu0 0
      %3040 = vmatpush1.bf16.msra.mxu0 %v3016
      %3041 = vmatprep.subr.bf16.mxu0 0
      %3042 = vmatpush1.bf16.msra.mxu0 0
      %3043 = vmatprep.subr.bf16.mxu0 0
      %3044 = vmatpush1.bf16.msra.mxu0 0
      %3045 = vmatprep.subr.bf16.mxu0 0
      %3046 = vmatpush1.bf16.msra.mxu0 0
      %3047 = vmatprep.subr.bf16.mxu0 0
      %3048 = vmatpush1.bf16.msra.mxu0 0
      %3049 = vmatprep.subr.bf16.mxu0 0
      %3050 = vmatpush1.bf16.msra.mxu0 0
      %3051 = vmatprep.subr.bf16.mxu0 0
      %3052 = vmatpush1.bf16.msra.mxu0 0
      %3053 = vmatprep.subr.bf16.mxu0 0
      %3054 = vmatpush1.bf16.msra.mxu0 0
      %3055 = vmatprep.subr.bf16.mxu0 0
      %3056 = vmatpush1.bf16.msra.mxu0 0
      %3057 = vmatprep.mubr.bf16.mxu0 0
      %3058 = vmatmul.mubr.bf16.gmra.mrb[0].mxu0 %v2944
      %v3059 = vpop.f32.mrb[0].mxu0
      %v3060 = vadd.f32 0.0, %v3059
      %v3061 = vpop.f32.mrb[0].mxu0
      %v3062 = vpop.f32.mrb[0].mxu0
      %v3063 = vadd.f32 0.0, %v3062
      %v3064 = vpop.f32.mrb[0].mxu0
      %3065 = vmatprep.mubr.bf16.mxu0 0
      %3066 = vmatmul.mubr.bf16.gmra.mrb[0].mxu0 %v2945
      %v3067 = vpop.f32.mrb[0].mxu0
      %v3068 = vadd.f32 0.0, %v3067
      %v3069 = vpop.f32.mrb[0].mxu0
      %v3070 = vpop.f32.mrb[0].mxu0
      %v3071 = vadd.f32 0.0, %v3070
      %v3072 = vpop.f32.mrb[0].mxu0
      %3073 = vmatprep.mubr.bf16.mxu0 0
      %3074 = vmatmul.mubr.bf16.gmra.mrb[0].mxu0 %v2946
      %v3075 = vpop.f32.mrb[0].mxu0
      %v3076 = vadd.f32 0.0, %v3075
      %v3077 = vpop.f32.mrb[0].mxu0
      %v3078 = vpop.f32.mrb[0].mxu0
      %v3079 = vadd.f32 0.0, %v3078
      %v3080 = vpop.f32.mrb[0].mxu0
      %3081 = vmatprep.mubr.bf16.mxu0 0
      %3082 = vmatmul.mubr.bf16.gmra.mrb[0].mxu0 %v2947
      %v3083 = vpop.f32.mrb[0].mxu0
      %v3084 = vadd.f32 0.0, %v3083
      %v3085 = vpop.f32.mrb[0].mxu0
      %v3086 = vpop.f32.mrb[0].mxu0
      %v3087 = vadd.f32 0.0, %v3086
      %v3088 = vpop.f32.mrb[0].mxu0
      %3089 = vmatprep.mubr.bf16.mxu0 0
      %3090 = vmatmul.mubr.bf16.gmra.mrb[0].mxu0 %v2948
      %v3091 = vpop.f32.mrb[0].mxu0
      %v3092 = vadd.f32 0.0, %v3091
      %v3093 = vpop.f32.mrb[0].mxu0
      %v3094 = vpop.f32.mrb[0].mxu0
      %v3095 = vadd.f32 0.0, %v3094
      %v3096 = vpop.f32.mrb[0].mxu0
      %3097 = vmatprep.mubr.bf16.mxu0 0
      %3098 = vmatmul.mubr.bf16.gmra.mrb[0].mxu0 %v2949
      %v3099 = vpop.f32.mrb[0].mxu0
      %v3100 = vadd.f32 0.0, %v3099
      %v3101 = vpop.f32.mrb[0].mxu0
      %v3102 = vpop.f32.mrb[0].mxu0
      %v3103 = vadd.f32 0.0, %v3102
      %v3104 = vpop.f32.mrb[0].mxu0
      %3105 = vmatprep.mubr.bf16.mxu0 0
      %3106 = vmatmul.mubr.bf16.gmra.mrb[0].mxu0 %v2950
      %v3107 = vpop.f32.mrb[0].mxu0
      %v3108 = vadd.f32 0.0, %v3107
      %v3109 = vpop.f32.mrb[0].mxu0
      %v3110 = vpop.f32.mrb[0].mxu0
      %v3111 = vadd.f32 0.0, %v3110
      %v3112 = vpop.f32.mrb[0].mxu0
      %3113 = vmatprep.mubr.bf16.mxu0 0
      %3114 = vmatmul.mubr.bf16.gmra.mrb[0].mxu0 %v2951
      %v3115 = vpop.f32.mrb[0].mxu0
      %v3116 = vadd.f32 0.0, %v3115
      %v3117 = vpop.f32.mrb[0].mxu0
      %v3118 = vpop.f32.mrb[0].mxu0
      %v3119 = vadd.f32 0.0, %v3118
      %v3120 = vpop.f32.mrb[0].mxu0
      %3121 = vmatprep.mubr.bf16.mxu0 0
      %3122 = vmatmul.mubr.bf16.gmra.mrb[0].mxu0 %v2952
      %v3123 = vpop.f32.mrb[0].mxu0
      %v3124 = vadd.f32 0.0, %v3123
      %v3125 = vpop.f32.mrb[0].mxu0
      %v3126 = vpop.f32.mrb[0].mxu0
      %v3127 = vadd.f32 0.0, %v3126
      %v3128 = vpop.f32.mrb[0].mxu0
      %3129 = vmatprep.mubr.bf16.mxu0 0
      %3130 = vmatmul.mubr.bf16.gmra.mrb[0].mxu0 %v2953
      %v3131 = vpop.f32.mrb[0].mxu0
      %v3132 = vadd.f32 0.0, %v3131
      %v3133 = vpop.f32.mrb[0].mxu0
      %v3134 = vpop.f32.mrb[0].mxu0
      %v3135 = vadd.f32 0.0, %v3134
      %v3136 = vpop.f32.mrb[0].mxu0
      %3137 = vmatprep.mubr.bf16.mxu0 0
      %3138 = vmatmul.mubr.bf16.gmra.mrb[0].mxu0 %v2954
      %v3139 = vpop.f32.mrb[0].mxu0
      %v3140 = vadd.f32 0.0, %v3139
      %v3141 = vpop.f32.mrb[0].mxu0
      %v3142 = vpop.f32.mrb[0].mxu0
      %v3143 = vadd.f32 0.0, %v3142
      %v3144 = vpop.f32.mrb[0].mxu0
      %3145 = vmatprep.mubr.bf16.mxu0 0
      %3146 = vmatmul.mubr.bf16.gmra.mrb[0].mxu0 %v2955
      %v3147 = vpop.f32.mrb[0].mxu0
      %v3148 = vadd.f32 0.0, %v3147
      %v3149 = vpop.f32.mrb[0].mxu0
      %v3150 = vpop.f32.mrb[0].mxu0
      %v3151 = vadd.f32 0.0, %v3150
      %v3152 = vpop.f32.mrb[0].mxu0
      %3153 = vmatprep.mubr.bf16.mxu0 0
      %3154 = vmatmul.mubr.bf16.gmra.mrb[0].mxu0 %v2956
      %v3155 = vpop.f32.mrb[0].mxu0
      %v3156 = vadd.f32 0.0, %v3155
      %v3157 = vpop.f32.mrb[0].mxu0
      %v3158 = vpop.f32.mrb[0].mxu0
      %v3159 = vadd.f32 0.0, %v3158
      %v3160 = vpop.f32.mrb[0].mxu0
      %3161 = vmatprep.mubr.bf16.mxu0 0
      %3162 = vmatmul.mubr.bf16.gmra.mrb[0].mxu0 %v2957
      %v3163 = vpop.f32.mrb[0].mxu0
      %v3164 = vadd.f32 0.0, %v3163
      %v3165 = vpop.f32.mrb[0].mxu0
      %v3166 = vpop.f32.mrb[0].mxu0
      %v3167 = vadd.f32 0.0, %v3166
      %v3168 = vpop.f32.mrb[0].mxu0
      %3169 = vmatprep.mubr.bf16.mxu0 0
      %3170 = vmatmul.mubr.bf16.gmra.mrb[0].mxu0 %v2958
      %v3171 = vpop.f32.mrb[0].mxu0
      %v3172 = vadd.f32 0.0, %v3171
      %v3173 = vpop.f32.mrb[0].mxu0
      %v3174 = vpop.f32.mrb[0].mxu0
      %v3175 = vadd.f32 0.0, %v3174
      %v3176 = vpop.f32.mrb[0].mxu0
      %3177 = vmatprep.mubr.bf16.mxu0 0
      %3178 = vmatmul.mubr.bf16.gmra.mrb[0].mxu0 %v2959
      %v3179 = vpop.f32.mrb[0].mxu0
      %v3180 = vadd.f32 0.0, %v3179
      %v3181 = vpop.f32.mrb[0].mxu0
      %v3182 = vpop.f32.mrb[0].mxu0
      %v3183 = vadd.f32 0.0, %v3182
      %v3184 = vpop.f32.mrb[0].mxu0
      %3185 = vdwg.mxu0
      %v3186 = vadd.f32 %v2848, %v3060
      %v3187 = vadd.f32 %v2849, %v3063
      %v3188 = vadd.f32 %v2850, %v3068
      %v3189 = vadd.f32 %v2851, %v3071
      %v3190 = vadd.f32 %v2852, %v3076
      %v3191 = vadd.f32 %v2853, %v3079
      %v3192 = vadd.f32 %v2854, %v3084
      %v3193 = vadd.f32 %v2855, %v3087
      %v3194 = vadd.f32 %v2856, %v3092
      %v3195 = vadd.f32 %v2857, %v3095
      %v3196 = vadd.f32 %v2858, %v3100
      %v3197 = vadd.f32 %v2859, %v3103
      %v3198 = vadd.f32 %v2860, %v3108
      %v3199 = vadd.f32 %v2861, %v3111
      %v3200 = vadd.f32 %v2862, %v3116
      %v3201 = vadd.f32 %v2863, %v3119
      %v3202 = vadd.f32 %v2864, %v3124
      %v3203 = vadd.f32 %v2865, %v3127
      %v3204 = vadd.f32 %v2866, %v3132
      %v3205 = vadd.f32 %v2867, %v3135
      %v3206 = vadd.f32 %v2868, %v3140
      %v3207 = vadd.f32 %v2869, %v3143
      %v3208 = vadd.f32 %v2870, %v3148
      %v3209 = vadd.f32 %v2871, %v3151
      %v3210 = vadd.f32 %v2872, %v3156
      %v3211 = vadd.f32 %v2873, %v3159
      %v3212 = vadd.f32 %v2874, %v3164
      %v3213 = vadd.f32 %v2875, %v3167
      %v3214 = vadd.f32 %v2876, %v3172
      %v3215 = vadd.f32 %v2877, %v3175
      %v3216 = vadd.f32 %v2878, %v3180
      %v3217 = vadd.f32 %v2879, %v3183
      %v3218 = vld [vmem:[#allocation2 + $0x28] sm:$0xff]
      %v3219 = vld [vmem:[#allocation2 + $0x30] sm:$0xff]
      %v3220 = vld [vmem:[#allocation2 + $0x38] sm:$0xff]
      %v3221 = vld [vmem:[#allocation2 + $0x40] sm:$0xff]
      %v3222 = vld [vmem:[#allocation2 + $0x48] sm:$0xff]
      %v3223 = vld [vmem:[#allocation2 + $0x50] sm:$0xff]
      %v3224 = vld [vmem:[#allocation2 + $0x58] sm:$0xff]
      %v3225 = vld [vmem:[#allocation2 + $0x60] sm:$0xff]
      %v3226 = vld [vmem:[#allocation2 + $0x68] sm:$0xff]
      %v3227 = vld [vmem:[#allocation2 + $0x70] sm:$0xff]
      %v3228 = vld [vmem:[#allocation2 + $0x78] sm:$0xff]
      %v3229 = vld [vmem:[#allocation2 + $0x80] sm:$0xff]
      %v3230 = vld [vmem:[#allocation2 + $0x88] sm:$0xff]
      %v3231 = vld [vmem:[#allocation2 + $0x90] sm:$0xff]
      %v3232 = vld [vmem:[#allocation2 + $0x98] sm:$0xff]
      %v3233 = vld [vmem:[#allocation2 + $0xa0] sm:$0xff]
      %v3234 = vld [vmem:[#allocation2 + $0xa8] sm:$0xff]
      %v3235 = vld [vmem:[#allocation2 + $0xb0] sm:$0xff]
      %v3236 = vld [vmem:[#allocation2 + $0xb8] sm:$0xff]
      %v3237 = vld [vmem:[#allocation2 + $0xc0] sm:$0xff]
      %v3238 = vld [vmem:[#allocation2 + $0xc8] sm:$0xff]
      %v3239 = vld [vmem:[#allocation2 + $0xd0] sm:$0xff]
      %v3240 = vld [vmem:[#allocation2 + $0xd8] sm:$0xff]
      %v3241 = vld [vmem:[#allocation2 + $0xe0] sm:$0xff]
      %v3242 = vld [vmem:[#allocation2 + $0xe8] sm:$0xff]
      %v3243 = vld [vmem:[#allocation2 + $0xf0] sm:$0xff]
      %v3244 = vld [vmem:[#allocation2 + $0xf8] sm:$0xff]
      %v3245 = vld [vmem:[#allocation2 + $0x100] sm:$0xff]
      %v3246 = vld [vmem:[#allocation2 + $0x108] sm:$0xff]
      %v3247 = vld [vmem:[#allocation2 + $0x110] sm:$0xff]
      %v3248 = vld [vmem:[#allocation2 + $0x118] sm:$0xff]
      %v3249 = vld [vmem:[#allocation2 + $0x120] sm:$0xff]
      %v3250 = vpack.c.bf16 %v3219, %v3218
      %v3251 = vpack.c.bf16 %v3221, %v3220
      %v3252 = vpack.c.bf16 %v3223, %v3222
      %v3253 = vpack.c.bf16 %v3225, %v3224
      %v3254 = vpack.c.bf16 %v3227, %v3226
      %v3255 = vpack.c.bf16 %v3229, %v3228
      %v3256 = vpack.c.bf16 %v3231, %v3230
      %v3257 = vpack.c.bf16 %v3233, %v3232
      %v3258 = vpack.c.bf16 %v3235, %v3234
      %v3259 = vpack.c.bf16 %v3237, %v3236
      %v3260 = vpack.c.bf16 %v3239, %v3238
      %v3261 = vpack.c.bf16 %v3241, %v3240
      %v3262 = vpack.c.bf16 %v3243, %v3242
      %v3263 = vpack.c.bf16 %v3245, %v3244
      %v3264 = vpack.c.bf16 %v3247, %v3246
      %v3265 = vpack.c.bf16 %v3249, %v3248
      %s3266 = scalar_lea.vmem %s1, 448
      %v3267 = vld [vmem:[%s3266] sm:$0xf]
      %v3268 = vld [vmem:[%s3266 + $0x4] sm:$0xf]
      %v3269 = vld [vmem:[%s3266 + $0x8] sm:$0xf]
      %v3270 = vld [vmem:[%s3266 + $0xc] sm:$0xf]
      %v3271 = vld [vmem:[%s3266 + $0x10] sm:$0xf]
      %v3272 = vld [vmem:[%s3266 + $0x14] sm:$0xf]
      %v3273 = vld [vmem:[%s3266 + $0x18] sm:$0xf]
      %v3274 = vld [vmem:[%s3266 + $0x1c] sm:$0xf]
      %v3275 = vld [vmem:[%s3266 + $0x20] sm:$0xf]
      %v3276 = vld [vmem:[%s3266 + $0x24] sm:$0xf]
      %v3277 = vld [vmem:[%s3266 + $0x28] sm:$0xf]
      %v3278 = vld [vmem:[%s3266 + $0x2c] sm:$0xf]
      %v3279 = vld [vmem:[%s3266 + $0x30] sm:$0xf]
      %v3280 = vld [vmem:[%s3266 + $0x34] sm:$0xf]
      %v3281 = vld [vmem:[%s3266 + $0x38] sm:$0xf]
      %v3282 = vld [vmem:[%s3266 + $0x3c] sm:$0xf]
      %v3299 = vunpack.c.l.b16 %v3267
      %v3300 = vunpack.c.l.b16 %v3268
      %v3301 = vunpack.c.l.b16 %v3269
      %v3302 = vunpack.c.l.b16 %v3270
      %v3303 = vunpack.c.l.b16 %v3271
      %v3304 = vunpack.c.l.b16 %v3272
      %v3305 = vunpack.c.l.b16 %v3273
      %v3306 = vunpack.c.l.b16 %v3274
      %v3307 = vunpack.c.l.b16 %v3275
      %v3308 = vunpack.c.l.b16 %v3276
      %v3309 = vunpack.c.l.b16 %v3277
      %v3310 = vunpack.c.l.b16 %v3278
      %v3311 = vunpack.c.l.b16 %v3279
      %v3312 = vunpack.c.l.b16 %v3280
      %v3313 = vunpack.c.l.b16 %v3281
      %v3314 = vunpack.c.l.b16 %v3282
      %v3315 = vpack.c.b16 %v3300, %v3299
      %v3316 = vpack.c.b16 %v3302, %v3301
      %v3317 = vpack.c.b16 %v3304, %v3303
      %v3318 = vpack.c.b16 %v3306, %v3305
      %v3319 = vpack.c.b16 %v3308, %v3307
      %v3320 = vpack.c.b16 %v3310, %v3309
      %v3321 = vpack.c.b16 %v3312, %v3311
      %v3322 = vpack.c.b16 %v3314, %v3313
      %3331 = vmatprep.subr.bf16.mxu0 0
      %3332 = vmatpush1.bf16.msra.mxu0 %v3315
      %3333 = vmatprep.subr.bf16.mxu0 0
      %3334 = vmatpush1.bf16.msra.mxu0 %v3316
      %3335 = vmatprep.subr.bf16.mxu0 0
      %3336 = vmatpush1.bf16.msra.mxu0 %v3317
      %3337 = vmatprep.subr.bf16.mxu0 0
      %3338 = vmatpush1.bf16.msra.mxu0 %v3318
      %3339 = vmatprep.subr.bf16.mxu0 0
      %3340 = vmatpush1.bf16.msra.mxu0 %v3319
      %3341 = vmatprep.subr.bf16.mxu0 0
      %3342 = vmatpush1.bf16.msra.mxu0 %v3320
      %3343 = vmatprep.subr.bf16.mxu0 0
      %3344 = vmatpush1.bf16.msra.mxu0 %v3321
      %3345 = vmatprep.subr.bf16.mxu0 0
      %3346 = vmatpush1.bf16.msra.mxu0 %v3322
      %3347 = vmatprep.subr.bf16.mxu0 0
      %3348 = vmatpush1.bf16.msra.mxu0 0
      %3349 = vmatprep.subr.bf16.mxu0 0
      %3350 = vmatpush1.bf16.msra.mxu0 0
      %3351 = vmatprep.subr.bf16.mxu0 0
      %3352 = vmatpush1.bf16.msra.mxu0 0
      %3353 = vmatprep.subr.bf16.mxu0 0
      %3354 = vmatpush1.bf16.msra.mxu0 0
      %3355 = vmatprep.subr.bf16.mxu0 0
      %3356 = vmatpush1.bf16.msra.mxu0 0
      %3357 = vmatprep.subr.bf16.mxu0 0
      %3358 = vmatpush1.bf16.msra.mxu0 0
      %3359 = vmatprep.subr.bf16.mxu0 0
      %3360 = vmatpush1.bf16.msra.mxu0 0
      %3361 = vmatprep.subr.bf16.mxu0 0
      %3362 = vmatpush1.bf16.msra.mxu0 0
      %3363 = vmatprep.mubr.bf16.mxu0 0
      %3364 = vmatmul.mubr.bf16.gmra.mrb[0].mxu0 %v3250
      %v3365 = vpop.f32.mrb[0].mxu0
      %v3366 = vadd.f32 0.0, %v3365
      %v3367 = vpop.f32.mrb[0].mxu0
      %v3368 = vpop.f32.mrb[0].mxu0
      %v3369 = vadd.f32 0.0, %v3368
      %v3370 = vpop.f32.mrb[0].mxu0
      %3371 = vmatprep.mubr.bf16.mxu0 0
      %3372 = vmatmul.mubr.bf16.gmra.mrb[0].mxu0 %v3251
      %v3373 = vpop.f32.mrb[0].mxu0
      %v3374 = vadd.f32 0.0, %v3373
      %v3375 = vpop.f32.mrb[0].mxu0
      %v3376 = vpop.f32.mrb[0].mxu0
      %v3377 = vadd.f32 0.0, %v3376
      %v3378 = vpop.f32.mrb[0].mxu0
      %3379 = vmatprep.mubr.bf16.mxu0 0
      %3380 = vmatmul.mubr.bf16.gmra.mrb[0].mxu0 %v3252
      %v3381 = vpop.f32.mrb[0].mxu0
      %v3382 = vadd.f32 0.0, %v3381
      %v3383 = vpop.f32.mrb[0].mxu0
      %v3384 = vpop.f32.mrb[0].mxu0
      %v3385 = vadd.f32 0.0, %v3384
      %v3386 = vpop.f32.mrb[0].mxu0
      %3387 = vmatprep.mubr.bf16.mxu0 0
      %3388 = vmatmul.mubr.bf16.gmra.mrb[0].mxu0 %v3253
      %v3389 = vpop.f32.mrb[0].mxu0
      %v3390 = vadd.f32 0.0, %v3389
      %v3391 = vpop.f32.mrb[0].mxu0
      %v3392 = vpop.f32.mrb[0].mxu0
      %v3393 = vadd.f32 0.0, %v3392
      %v3394 = vpop.f32.mrb[0].mxu0
      %3395 = vmatprep.mubr.bf16.mxu0 0
      %3396 = vmatmul.mubr.bf16.gmra.mrb[0].mxu0 %v3254
      %v3397 = vpop.f32.mrb[0].mxu0
      %v3398 = vadd.f32 0.0, %v3397
      %v3399 = vpop.f32.mrb[0].mxu0
      %v3400 = vpop.f32.mrb[0].mxu0
      %v3401 = vadd.f32 0.0, %v3400
      %v3402 = vpop.f32.mrb[0].mxu0
      %3403 = vmatprep.mubr.bf16.mxu0 0
      %3404 = vmatmul.mubr.bf16.gmra.mrb[0].mxu0 %v3255
      %v3405 = vpop.f32.mrb[0].mxu0
      %v3406 = vadd.f32 0.0, %v3405
      %v3407 = vpop.f32.mrb[0].mxu0
      %v3408 = vpop.f32.mrb[0].mxu0
      %v3409 = vadd.f32 0.0, %v3408
      %v3410 = vpop.f32.mrb[0].mxu0
      %3411 = vmatprep.mubr.bf16.mxu0 0
      %3412 = vmatmul.mubr.bf16.gmra.mrb[0].mxu0 %v3256
      %v3413 = vpop.f32.mrb[0].mxu0
      %v3414 = vadd.f32 0.0, %v3413
      %v3415 = vpop.f32.mrb[0].mxu0
      %v3416 = vpop.f32.mrb[0].mxu0
      %v3417 = vadd.f32 0.0, %v3416
      %v3418 = vpop.f32.mrb[0].mxu0
      %3419 = vmatprep.mubr.bf16.mxu0 0
      %3420 = vmatmul.mubr.bf16.gmra.mrb[0].mxu0 %v3257
      %v3421 = vpop.f32.mrb[0].mxu0
      %v3422 = vadd.f32 0.0, %v3421
      %v3423 = vpop.f32.mrb[0].mxu0
      %v3424 = vpop.f32.mrb[0].mxu0
      %v3425 = vadd.f32 0.0, %v3424
      %v3426 = vpop.f32.mrb[0].mxu0
      %3427 = vmatprep.mubr.bf16.mxu0 0
      %3428 = vmatmul.mubr.bf16.gmra.mrb[0].mxu0 %v3258
      %v3429 = vpop.f32.mrb[0].mxu0
      %v3430 = vadd.f32 0.0, %v3429
      %v3431 = vpop.f32.mrb[0].mxu0
      %v3432 = vpop.f32.mrb[0].mxu0
      %v3433 = vadd.f32 0.0, %v3432
      %v3434 = vpop.f32.mrb[0].mxu0
      %3435 = vmatprep.mubr.bf16.mxu0 0
      %3436 = vmatmul.mubr.bf16.gmra.mrb[0].mxu0 %v3259
      %v3437 = vpop.f32.mrb[0].mxu0
      %v3438 = vadd.f32 0.0, %v3437
      %v3439 = vpop.f32.mrb[0].mxu0
      %v3440 = vpop.f32.mrb[0].mxu0
      %v3441 = vadd.f32 0.0, %v3440
      %v3442 = vpop.f32.mrb[0].mxu0
      %3443 = vmatprep.mubr.bf16.mxu0 0
      %3444 = vmatmul.mubr.bf16.gmra.mrb[0].mxu0 %v3260
      %v3445 = vpop.f32.mrb[0].mxu0
      %v3446 = vadd.f32 0.0, %v3445
      %v3447 = vpop.f32.mrb[0].mxu0
      %v3448 = vpop.f32.mrb[0].mxu0
      %v3449 = vadd.f32 0.0, %v3448
      %v3450 = vpop.f32.mrb[0].mxu0
      %3451 = vmatprep.mubr.bf16.mxu0 0
      %3452 = vmatmul.mubr.bf16.gmra.mrb[0].mxu0 %v3261
      %v3453 = vpop.f32.mrb[0].mxu0
      %v3454 = vadd.f32 0.0, %v3453
      %v3455 = vpop.f32.mrb[0].mxu0
      %v3456 = vpop.f32.mrb[0].mxu0
      %v3457 = vadd.f32 0.0, %v3456
      %v3458 = vpop.f32.mrb[0].mxu0
      %3459 = vmatprep.mubr.bf16.mxu0 0
      %3460 = vmatmul.mubr.bf16.gmra.mrb[0].mxu0 %v3262
      %v3461 = vpop.f32.mrb[0].mxu0
      %v3462 = vadd.f32 0.0, %v3461
      %v3463 = vpop.f32.mrb[0].mxu0
      %v3464 = vpop.f32.mrb[0].mxu0
      %v3465 = vadd.f32 0.0, %v3464
      %v3466 = vpop.f32.mrb[0].mxu0
      %3467 = vmatprep.mubr.bf16.mxu0 0
      %3468 = vmatmul.mubr.bf16.gmra.mrb[0].mxu0 %v3263
      %v3469 = vpop.f32.mrb[0].mxu0
      %v3470 = vadd.f32 0.0, %v3469
      %v3471 = vpop.f32.mrb[0].mxu0
      %v3472 = vpop.f32.mrb[0].mxu0
      %v3473 = vadd.f32 0.0, %v3472
      %v3474 = vpop.f32.mrb[0].mxu0
      %3475 = vmatprep.mubr.bf16.mxu0 0
      %3476 = vmatmul.mubr.bf16.gmra.mrb[0].mxu0 %v3264
      %v3477 = vpop.f32.mrb[0].mxu0
      %v3478 = vadd.f32 0.0, %v3477
      %v3479 = vpop.f32.mrb[0].mxu0
      %v3480 = vpop.f32.mrb[0].mxu0
      %v3481 = vadd.f32 0.0, %v3480
      %v3482 = vpop.f32.mrb[0].mxu0
      %3483 = vmatprep.mubr.bf16.mxu0 0
      %3484 = vmatmul.mubr.bf16.gmra.mrb[0].mxu0 %v3265
      %v3485 = vpop.f32.mrb[0].mxu0
      %v3486 = vadd.f32 0.0, %v3485
      %v3487 = vpop.f32.mrb[0].mxu0
      %v3488 = vpop.f32.mrb[0].mxu0
      %v3489 = vadd.f32 0.0, %v3488
      %v3490 = vpop.f32.mrb[0].mxu0
      %3491 = vdwg.mxu0
      %v3492 = vadd.f32 %v3186, %v3366
      %v3493 = vadd.f32 %v3187, %v3369
      %v3494 = vadd.f32 %v3188, %v3374
      %v3495 = vadd.f32 %v3189, %v3377
      %v3496 = vadd.f32 %v3190, %v3382
      %v3497 = vadd.f32 %v3191, %v3385
      %v3498 = vadd.f32 %v3192, %v3390
      %v3499 = vadd.f32 %v3193, %v3393
      %v3500 = vadd.f32 %v3194, %v3398
      %v3501 = vadd.f32 %v3195, %v3401
      %v3502 = vadd.f32 %v3196, %v3406
      %v3503 = vadd.f32 %v3197, %v3409
      %v3504 = vadd.f32 %v3198, %v3414
      %v3505 = vadd.f32 %v3199, %v3417
      %v3506 = vadd.f32 %v3200, %v3422
      %v3507 = vadd.f32 %v3201, %v3425
      %v3508 = vadd.f32 %v3202, %v3430
      %v3509 = vadd.f32 %v3203, %v3433
      %v3510 = vadd.f32 %v3204, %v3438
      %v3511 = vadd.f32 %v3205, %v3441
      %v3512 = vadd.f32 %v3206, %v3446
      %v3513 = vadd.f32 %v3207, %v3449
      %v3514 = vadd.f32 %v3208, %v3454
      %v3515 = vadd.f32 %v3209, %v3457
      %v3516 = vadd.f32 %v3210, %v3462
      %v3517 = vadd.f32 %v3211, %v3465
      %v3518 = vadd.f32 %v3212, %v3470
      %v3519 = vadd.f32 %v3213, %v3473
      %v3520 = vadd.f32 %v3214, %v3478
      %v3521 = vadd.f32 %v3215, %v3481
      %v3522 = vadd.f32 %v3216, %v3486
      %v3523 = vadd.f32 %v3217, %v3489
      %v3524 = vld [vmem:[#allocation2 + $0x29] sm:$0xff]
      %v3525 = vld [vmem:[#allocation2 + $0x31] sm:$0xff]
      %v3526 = vld [vmem:[#allocation2 + $0x39] sm:$0xff]
      %v3527 = vld [vmem:[#allocation2 + $0x41] sm:$0xff]
      %v3528 = vld [vmem:[#allocation2 + $0x49] sm:$0xff]
      %v3529 = vld [vmem:[#allocation2 + $0x51] sm:$0xff]
      %v3530 = vld [vmem:[#allocation2 + $0x59] sm:$0xff]
      %v3531 = vld [vmem:[#allocation2 + $0x61] sm:$0xff]
      %v3532 = vld [vmem:[#allocation2 + $0x69] sm:$0xff]
      %v3533 = vld [vmem:[#allocation2 + $0x71] sm:$0xff]
      %v3534 = vld [vmem:[#allocation2 + $0x79] sm:$0xff]
      %v3535 = vld [vmem:[#allocation2 + $0x81] sm:$0xff]
      %v3536 = vld [vmem:[#allocation2 + $0x89] sm:$0xff]
      %v3537 = vld [vmem:[#allocation2 + $0x91] sm:$0xff]
      %v3538 = vld [vmem:[#allocation2 + $0x99] sm:$0xff]
      %v3539 = vld [vmem:[#allocation2 + $0xa1] sm:$0xff]
      %v3540 = vld [vmem:[#allocation2 + $0xa9] sm:$0xff]
      %v3541 = vld [vmem:[#allocation2 + $0xb1] sm:$0xff]
      %v3542 = vld [vmem:[#allocation2 + $0xb9] sm:$0xff]
      %v3543 = vld [vmem:[#allocation2 + $0xc1] sm:$0xff]
      %v3544 = vld [vmem:[#allocation2 + $0xc9] sm:$0xff]
      %v3545 = vld [vmem:[#allocation2 + $0xd1] sm:$0xff]
      %v3546 = vld [vmem:[#allocation2 + $0xd9] sm:$0xff]
      %v3547 = vld [vmem:[#allocation2 + $0xe1] sm:$0xff]
      %v3548 = vld [vmem:[#allocation2 + $0xe9] sm:$0xff]
      %v3549 = vld [vmem:[#allocation2 + $0xf1] sm:$0xff]
      %v3550 = vld [vmem:[#allocation2 + $0xf9] sm:$0xff]
      %v3551 = vld [vmem:[#allocation2 + $0x101] sm:$0xff]
      %v3552 = vld [vmem:[#allocation2 + $0x109] sm:$0xff]
      %v3553 = vld [vmem:[#allocation2 + $0x111] sm:$0xff]
      %v3554 = vld [vmem:[#allocation2 + $0x119] sm:$0xff]
      %v3555 = vld [vmem:[#allocation2 + $0x121] sm:$0xff]
      %v3556 = vsel %vm1560, %v3524, 0.0
      %v3557 = vsel %vm1561, %v3525, 0.0
      %v3558 = vsel %vm1562, %v3526, 0.0
      %v3559 = vsel %vm1563, %v3527, 0.0
      %v3560 = vsel %vm1564, %v3528, 0.0
      %v3561 = vsel %vm1565, %v3529, 0.0
      %v3562 = vsel %vm1566, %v3530, 0.0
      %v3563 = vsel %vm1567, %v3531, 0.0
      %v3564 = vsel %vm1568, %v3532, 0.0
      %v3565 = vsel %vm1569, %v3533, 0.0
      %v3566 = vsel %vm1570, %v3534, 0.0
      %v3567 = vsel %vm1571, %v3535, 0.0
      %v3568 = vsel %vm1572, %v3536, 0.0
      %v3569 = vsel %vm1573, %v3537, 0.0
      %v3570 = vsel %vm1574, %v3538, 0.0
      %v3571 = vsel %vm1575, %v3539, 0.0
      %v3572 = vsel %vm1576, %v3540, 0.0
      %v3573 = vsel %vm1577, %v3541, 0.0
      %v3574 = vsel %vm1578, %v3542, 0.0
      %v3575 = vsel %vm1579, %v3543, 0.0
      %v3576 = vsel %vm1580, %v3544, 0.0
      %v3577 = vsel %vm1581, %v3545, 0.0
      %v3578 = vsel %vm1582, %v3546, 0.0
      %v3579 = vsel %vm1583, %v3547, 0.0
      %v3580 = vsel %vm1584, %v3548, 0.0
      %v3581 = vsel %vm1585, %v3549, 0.0
      %v3582 = vsel %vm1586, %v3550, 0.0
      %v3583 = vsel %vm1587, %v3551, 0.0
      %v3584 = vsel %vm1588, %v3552, 0.0
      %v3585 = vsel %vm1589, %v3553, 0.0
      %v3586 = vsel %vm1590, %v3554, 0.0
      %v3587 = vsel %vm1591, %v3555, 0.0
      %v3588 = vpack.c.bf16 %v3557, %v3556
      %v3589 = vpack.c.bf16 %v3559, %v3558
      %v3590 = vpack.c.bf16 %v3561, %v3560
      %v3591 = vpack.c.bf16 %v3563, %v3562
      %v3592 = vpack.c.bf16 %v3565, %v3564
      %v3593 = vpack.c.bf16 %v3567, %v3566
      %v3594 = vpack.c.bf16 %v3569, %v3568
      %v3595 = vpack.c.bf16 %v3571, %v3570
      %v3596 = vpack.c.bf16 %v3573, %v3572
      %v3597 = vpack.c.bf16 %v3575, %v3574
      %v3598 = vpack.c.bf16 %v3577, %v3576
      %v3599 = vpack.c.bf16 %v3579, %v3578
      %v3600 = vpack.c.bf16 %v3581, %v3580
      %v3601 = vpack.c.bf16 %v3583, %v3582
      %v3602 = vpack.c.bf16 %v3585, %v3584
      %v3603 = vpack.c.bf16 %v3587, %v3586
      %s3604 = scalar_lea.vmem %s1, 512
      %v3605 = vld [vmem:[%s3604] sm:$0xf]
      %v3606 = vld [vmem:[%s3604 + $0x4] sm:$0xf]
      %v3607 = vld [vmem:[%s3604 + $0x8] sm:$0xf]
      %v3608 = vld [vmem:[%s3604 + $0xc] sm:$0xf]
      %v3609 = vld [vmem:[%s3604 + $0x10] sm:$0xf]
      %v3610 = vld [vmem:[%s3604 + $0x14] sm:$0xf]
      %v3611 = vld [vmem:[%s3604 + $0x18] sm:$0xf]
      %v3612 = vld [vmem:[%s3604 + $0x1c] sm:$0xf]
      %v3613 = vld [vmem:[%s3604 + $0x20] sm:$0xf]
      %v3614 = vld [vmem:[%s3604 + $0x24] sm:$0xf]
      %v3615 = vld [vmem:[%s3604 + $0x28] sm:$0xf]
      %v3616 = vld [vmem:[%s3604 + $0x2c] sm:$0xf]
      %v3617 = vld [vmem:[%s3604 + $0x30] sm:$0xf]
      %v3618 = vld [vmem:[%s3604 + $0x34] sm:$0xf]
      %v3619 = vld [vmem:[%s3604 + $0x38] sm:$0xf]
      %v3620 = vld [vmem:[%s3604 + $0x3c] sm:$0xf]
      %v3637 = vunpack.c.l.b16 %v3605
      %v3638 = vunpack.c.l.b16 %v3606
      %v3639 = vunpack.c.l.b16 %v3607
      %v3640 = vunpack.c.l.b16 %v3608
      %v3641 = vunpack.c.l.b16 %v3609
      %v3642 = vunpack.c.l.b16 %v3610
      %v3643 = vunpack.c.l.b16 %v3611
      %v3644 = vunpack.c.l.b16 %v3612
      %v3645 = vunpack.c.l.b16 %v3613
      %v3646 = vunpack.c.l.b16 %v3614
      %v3647 = vunpack.c.l.b16 %v3615
      %v3648 = vunpack.c.l.b16 %v3616
      %v3649 = vunpack.c.l.b16 %v3617
      %v3650 = vunpack.c.l.b16 %v3618
      %v3651 = vunpack.c.l.b16 %v3619
      %v3652 = vunpack.c.l.b16 %v3620
      %v3653 = vpack.c.b16 %v3638, %v3637
      %v3654 = vpack.c.b16 %v3640, %v3639
      %v3655 = vpack.c.b16 %v3642, %v3641
      %v3656 = vpack.c.b16 %v3644, %v3643
      %v3657 = vpack.c.b16 %v3646, %v3645
      %v3658 = vpack.c.b16 %v3648, %v3647
      %v3659 = vpack.c.b16 %v3650, %v3649
      %v3660 = vpack.c.b16 %v3652, %v3651
      %3669 = vmatprep.subr.bf16.mxu0 0
      %3670 = vmatpush1.bf16.msra.mxu0 %v3653
      %3671 = vmatprep.subr.bf16.mxu0 0
      %3672 = vmatpush1.bf16.msra.mxu0 %v3654
      %3673 = vmatprep.subr.bf16.mxu0 0
      %3674 = vmatpush1.bf16.msra.mxu0 %v3655
      %3675 = vmatprep.subr.bf16.mxu0 0
      %3676 = vmatpush1.bf16.msra.mxu0 %v3656
      %3677 = vmatprep.subr.bf16.mxu0 0
      %3678 = vmatpush1.bf16.msra.mxu0 %v3657
      %3679 = vmatprep.subr.bf16.mxu0 0
      %3680 = vmatpush1.bf16.msra.mxu0 %v3658
      %3681 = vmatprep.subr.bf16.mxu0 0
      %3682 = vmatpush1.bf16.msra.mxu0 %v3659
      %3683 = vmatprep.subr.bf16.mxu0 0
      %3684 = vmatpush1.bf16.msra.mxu0 %v3660
      %3685 = vmatprep.subr.bf16.mxu0 0
      %3686 = vmatpush1.bf16.msra.mxu0 0
      %3687 = vmatprep.subr.bf16.mxu0 0
      %3688 = vmatpush1.bf16.msra.mxu0 0
      %3689 = vmatprep.subr.bf16.mxu0 0
      %3690 = vmatpush1.bf16.msra.mxu0 0
      %3691 = vmatprep.subr.bf16.mxu0 0
      %3692 = vmatpush1.bf16.msra.mxu0 0
      %3693 = vmatprep.subr.bf16.mxu0 0
      %3694 = vmatpush1.bf16.msra.mxu0 0
      %3695 = vmatprep.subr.bf16.mxu0 0
      %3696 = vmatpush1.bf16.msra.mxu0 0
      %3697 = vmatprep.subr.bf16.mxu0 0
      %3698 = vmatpush1.bf16.msra.mxu0 0
      %3699 = vmatprep.subr.bf16.mxu0 0
      %3700 = vmatpush1.bf16.msra.mxu0 0
      %3701 = vmatprep.mubr.bf16.mxu0 0
      %3702 = vmatmul.mubr.bf16.gmra.mrb[0].mxu0 %v3588
      %v3703 = vpop.f32.mrb[0].mxu0
      %v3704 = vadd.f32 0.0, %v3703
      %v3705 = vpop.f32.mrb[0].mxu0
      %v3706 = vpop.f32.mrb[0].mxu0
      %v3707 = vadd.f32 0.0, %v3706
      %v3708 = vpop.f32.mrb[0].mxu0
      %3709 = vmatprep.mubr.bf16.mxu0 0
      %3710 = vmatmul.mubr.bf16.gmra.mrb[0].mxu0 %v3589
      %v3711 = vpop.f32.mrb[0].mxu0
      %v3712 = vadd.f32 0.0, %v3711
      %v3713 = vpop.f32.mrb[0].mxu0
      %v3714 = vpop.f32.mrb[0].mxu0
      %v3715 = vadd.f32 0.0, %v3714
      %v3716 = vpop.f32.mrb[0].mxu0
      %3717 = vmatprep.mubr.bf16.mxu0 0
      %3718 = vmatmul.mubr.bf16.gmra.mrb[0].mxu0 %v3590
      %v3719 = vpop.f32.mrb[0].mxu0
      %v3720 = vadd.f32 0.0, %v3719
      %v3721 = vpop.f32.mrb[0].mxu0
      %v3722 = vpop.f32.mrb[0].mxu0
      %v3723 = vadd.f32 0.0, %v3722
      %v3724 = vpop.f32.mrb[0].mxu0
      %3725 = vmatprep.mubr.bf16.mxu0 0
      %3726 = vmatmul.mubr.bf16.gmra.mrb[0].mxu0 %v3591
      %v3727 = vpop.f32.mrb[0].mxu0
      %v3728 = vadd.f32 0.0, %v3727
      %v3729 = vpop.f32.mrb[0].mxu0
      %v3730 = vpop.f32.mrb[0].mxu0
      %v3731 = vadd.f32 0.0, %v3730
      %v3732 = vpop.f32.mrb[0].mxu0
      %3733 = vmatprep.mubr.bf16.mxu0 0
      %3734 = vmatmul.mubr.bf16.gmra.mrb[0].mxu0 %v3592
      %v3735 = vpop.f32.mrb[0].mxu0
      %v3736 = vadd.f32 0.0, %v3735
      %v3737 = vpop.f32.mrb[0].mxu0
      %v3738 = vpop.f32.mrb[0].mxu0
      %v3739 = vadd.f32 0.0, %v3738
      %v3740 = vpop.f32.mrb[0].mxu0
      %3741 = vmatprep.mubr.bf16.mxu0 0
      %3742 = vmatmul.mubr.bf16.gmra.mrb[0].mxu0 %v3593
      %v3743 = vpop.f32.mrb[0].mxu0
      %v3744 = vadd.f32 0.0, %v3743
      %v3745 = vpop.f32.mrb[0].mxu0
      %v3746 = vpop.f32.mrb[0].mxu0
      %v3747 = vadd.f32 0.0, %v3746
      %v3748 = vpop.f32.mrb[0].mxu0
      %3749 = vmatprep.mubr.bf16.mxu0 0
      %3750 = vmatmul.mubr.bf16.gmra.mrb[0].mxu0 %v3594
      %v3751 = vpop.f32.mrb[0].mxu0
      %v3752 = vadd.f32 0.0, %v3751
      %v3753 = vpop.f32.mrb[0].mxu0
      %v3754 = vpop.f32.mrb[0].mxu0
      %v3755 = vadd.f32 0.0, %v3754
      %v3756 = vpop.f32.mrb[0].mxu0
      %3757 = vmatprep.mubr.bf16.mxu0 0
      %3758 = vmatmul.mubr.bf16.gmra.mrb[0].mxu0 %v3595
      %v3759 = vpop.f32.mrb[0].mxu0
      %v3760 = vadd.f32 0.0, %v3759
      %v3761 = vpop.f32.mrb[0].mxu0
      %v3762 = vpop.f32.mrb[0].mxu0
      %v3763 = vadd.f32 0.0, %v3762
      %v3764 = vpop.f32.mrb[0].mxu0
      %3765 = vmatprep.mubr.bf16.mxu0 0
      %3766 = vmatmul.mubr.bf16.gmra.mrb[0].mxu0 %v3596
      %v3767 = vpop.f32.mrb[0].mxu0
      %v3768 = vadd.f32 0.0, %v3767
      %v3769 = vpop.f32.mrb[0].mxu0
      %v3770 = vpop.f32.mrb[0].mxu0
      %v3771 = vadd.f32 0.0, %v3770
      %v3772 = vpop.f32.mrb[0].mxu0
      %3773 = vmatprep.mubr.bf16.mxu0 0
      %3774 = vmatmul.mubr.bf16.gmra.mrb[0].mxu0 %v3597
      %v3775 = vpop.f32.mrb[0].mxu0
      %v3776 = vadd.f32 0.0, %v3775
      %v3777 = vpop.f32.mrb[0].mxu0
      %v3778 = vpop.f32.mrb[0].mxu0
      %v3779 = vadd.f32 0.0, %v3778
      %v3780 = vpop.f32.mrb[0].mxu0
      %3781 = vmatprep.mubr.bf16.mxu0 0
      %3782 = vmatmul.mubr.bf16.gmra.mrb[0].mxu0 %v3598
      %v3783 = vpop.f32.mrb[0].mxu0
      %v3784 = vadd.f32 0.0, %v3783
      %v3785 = vpop.f32.mrb[0].mxu0
      %v3786 = vpop.f32.mrb[0].mxu0
      %v3787 = vadd.f32 0.0, %v3786
      %v3788 = vpop.f32.mrb[0].mxu0
      %3789 = vmatprep.mubr.bf16.mxu0 0
      %3790 = vmatmul.mubr.bf16.gmra.mrb[0].mxu0 %v3599
      %v3791 = vpop.f32.mrb[0].mxu0
      %v3792 = vadd.f32 0.0, %v3791
      %v3793 = vpop.f32.mrb[0].mxu0
      %v3794 = vpop.f32.mrb[0].mxu0
      %v3795 = vadd.f32 0.0, %v3794
      %v3796 = vpop.f32.mrb[0].mxu0
      %3797 = vmatprep.mubr.bf16.mxu0 0
      %3798 = vmatmul.mubr.bf16.gmra.mrb[0].mxu0 %v3600
      %v3799 = vpop.f32.mrb[0].mxu0
      %v3800 = vadd.f32 0.0, %v3799
      %v3801 = vpop.f32.mrb[0].mxu0
      %v3802 = vpop.f32.mrb[0].mxu0
      %v3803 = vadd.f32 0.0, %v3802
      %v3804 = vpop.f32.mrb[0].mxu0
      %3805 = vmatprep.mubr.bf16.mxu0 0
      %3806 = vmatmul.mubr.bf16.gmra.mrb[0].mxu0 %v3601
      %v3807 = vpop.f32.mrb[0].mxu0
      %v3808 = vadd.f32 0.0, %v3807
      %v3809 = vpop.f32.mrb[0].mxu0
      %v3810 = vpop.f32.mrb[0].mxu0
      %v3811 = vadd.f32 0.0, %v3810
      %v3812 = vpop.f32.mrb[0].mxu0
      %3813 = vmatprep.mubr.bf16.mxu0 0
      %3814 = vmatmul.mubr.bf16.gmra.mrb[0].mxu0 %v3602
      %v3815 = vpop.f32.mrb[0].mxu0
      %v3816 = vadd.f32 0.0, %v3815
      %v3817 = vpop.f32.mrb[0].mxu0
      %v3818 = vpop.f32.mrb[0].mxu0
      %v3819 = vadd.f32 0.0, %v3818
      %v3820 = vpop.f32.mrb[0].mxu0
      %3821 = vmatprep.mubr.bf16.mxu0 0
      %3822 = vmatmul.mubr.bf16.gmra.mrb[0].mxu0 %v3603
      %v3823 = vpop.f32.mrb[0].mxu0
      %v3824 = vadd.f32 0.0, %v3823
      %v3825 = vpop.f32.mrb[0].mxu0
      %v3826 = vpop.f32.mrb[0].mxu0
      %v3827 = vadd.f32 0.0, %v3826
      %v3828 = vpop.f32.mrb[0].mxu0
      %3829 = vdwg.mxu0
      %v3830 = vadd.f32 %v3492, %v3704
      %v3831 = vadd.f32 %v3493, %v3707
      %v3832 = vadd.f32 %v3494, %v3712
      %v3833 = vadd.f32 %v3495, %v3715
      %v3834 = vadd.f32 %v3496, %v3720
      %v3835 = vadd.f32 %v3497, %v3723
      %v3836 = vadd.f32 %v3498, %v3728
      %v3837 = vadd.f32 %v3499, %v3731
      %v3838 = vadd.f32 %v3500, %v3736
      %v3839 = vadd.f32 %v3501, %v3739
      %v3840 = vadd.f32 %v3502, %v3744
      %v3841 = vadd.f32 %v3503, %v3747
      %v3842 = vadd.f32 %v3504, %v3752
      %v3843 = vadd.f32 %v3505, %v3755
      %v3844 = vadd.f32 %v3506, %v3760
      %v3845 = vadd.f32 %v3507, %v3763
      %v3846 = vadd.f32 %v3508, %v3768
      %v3847 = vadd.f32 %v3509, %v3771
      %v3848 = vadd.f32 %v3510, %v3776
      %v3849 = vadd.f32 %v3511, %v3779
      %v3850 = vadd.f32 %v3512, %v3784
      %v3851 = vadd.f32 %v3513, %v3787
      %v3852 = vadd.f32 %v3514, %v3792
      %v3853 = vadd.f32 %v3515, %v3795
      %v3854 = vadd.f32 %v3516, %v3800
      %v3855 = vadd.f32 %v3517, %v3803
      %v3856 = vadd.f32 %v3518, %v3808
      %v3857 = vadd.f32 %v3519, %v3811
      %v3858 = vadd.f32 %v3520, %v3816
      %v3859 = vadd.f32 %v3521, %v3819
      %v3860 = vadd.f32 %v3522, %v3824
      %v3861 = vadd.f32 %v3523, %v3827
      %v3862 = vpack.c.bf16 %v3831, %v3830
      %v3863 = vpack.c.bf16 %v3833, %v3832
      %v3864 = vpack.c.bf16 %v3835, %v3834
      %v3865 = vpack.c.bf16 %v3837, %v3836
      %v3866 = vpack.c.bf16 %v3839, %v3838
      %v3867 = vpack.c.bf16 %v3841, %v3840
      %v3868 = vpack.c.bf16 %v3843, %v3842
      %v3869 = vpack.c.bf16 %v3845, %v3844
      %v3870 = vpack.c.bf16 %v3847, %v3846
      %v3871 = vpack.c.bf16 %v3849, %v3848
      %v3872 = vpack.c.bf16 %v3851, %v3850
      %v3873 = vpack.c.bf16 %v3853, %v3852
      %v3874 = vpack.c.bf16 %v3855, %v3854
      %v3875 = vpack.c.bf16 %v3857, %v3856
      %v3876 = vpack.c.bf16 %v3859, %v3858
      %v3877 = vpack.c.bf16 %v3861, %v3860
      %v3894 = vunpack.c.l.b16 %v3862
      %v3895 = vunpack.c.h.b16 %v3862
      %v3896 = vunpack.c.l.b16 %v3863
      %v3897 = vunpack.c.h.b16 %v3863
      %v3898 = vunpack.c.l.b16 %v3864
      %v3899 = vunpack.c.h.b16 %v3864
      %v3900 = vunpack.c.l.b16 %v3865
      %v3901 = vunpack.c.h.b16 %v3865
      %v3902 = vunpack.c.l.b16 %v3866
      %v3903 = vunpack.c.h.b16 %v3866
      %v3904 = vunpack.c.l.b16 %v3867
      %v3905 = vunpack.c.h.b16 %v3867
      %v3906 = vunpack.c.l.b16 %v3868
      %v3907 = vunpack.c.h.b16 %v3868
      %v3908 = vunpack.c.l.b16 %v3869
      %v3909 = vunpack.c.h.b16 %v3869
      %v3910 = vunpack.c.l.b16 %v3870
      %v3911 = vunpack.c.h.b16 %v3870
      %v3912 = vunpack.c.l.b16 %v3871
      %v3913 = vunpack.c.h.b16 %v3871
      %v3914 = vunpack.c.l.b16 %v3872
      %v3915 = vunpack.c.h.b16 %v3872
      %v3916 = vunpack.c.l.b16 %v3873
      %v3917 = vunpack.c.h.b16 %v3873
      %v3918 = vunpack.c.l.b16 %v3874
      %v3919 = vunpack.c.h.b16 %v3874
      %v3920 = vunpack.c.l.b16 %v3875
      %v3921 = vunpack.c.h.b16 %v3875
      %v3922 = vunpack.c.l.b16 %v3876
      %v3923 = vunpack.c.h.b16 %v3876
      %v3924 = vunpack.c.l.b16 %v3877
      %v3925 = vunpack.c.h.b16 %v3877
      %v3926 = vpack.c.b16 %v3894, %v3894
      %v3927 = vpack.c.b16 %v3895, %v3895
      %v3928 = vpack.c.b16 %v3896, %v3896
      %v3929 = vpack.c.b16 %v3897, %v3897
      %v3930 = vpack.c.b16 %v3898, %v3898
      %v3931 = vpack.c.b16 %v3899, %v3899
      %v3932 = vpack.c.b16 %v3900, %v3900
      %v3933 = vpack.c.b16 %v3901, %v3901
      %v3934 = vpack.c.b16 %v3902, %v3902
      %v3935 = vpack.c.b16 %v3903, %v3903
      %v3936 = vpack.c.b16 %v3904, %v3904
      %v3937 = vpack.c.b16 %v3905, %v3905
      %v3938 = vpack.c.b16 %v3906, %v3906
      %v3939 = vpack.c.b16 %v3907, %v3907
      %v3940 = vpack.c.b16 %v3908, %v3908
      %v3941 = vpack.c.b16 %v3909, %v3909
      %v3942 = vpack.c.b16 %v3910, %v3910
      %v3943 = vpack.c.b16 %v3911, %v3911
      %v3944 = vpack.c.b16 %v3912, %v3912
      %v3945 = vpack.c.b16 %v3913, %v3913
      %v3946 = vpack.c.b16 %v3914, %v3914
      %v3947 = vpack.c.b16 %v3915, %v3915
      %v3948 = vpack.c.b16 %v3916, %v3916
      %v3949 = vpack.c.b16 %v3917, %v3917
      %v3950 = vpack.c.b16 %v3918, %v3918
      %v3951 = vpack.c.b16 %v3919, %v3919
      %v3952 = vpack.c.b16 %v3920, %v3920
      %v3953 = vpack.c.b16 %v3921, %v3921
      %v3954 = vpack.c.b16 %v3922, %v3922
      %v3955 = vpack.c.b16 %v3923, %v3923
      %v3956 = vpack.c.b16 %v3924, %v3924
      %v3957 = vpack.c.b16 %v3925, %v3925
      %3990 = vst [vmem:[%s262] sm:$0xf] %v3926
      %3991 = vst [vmem:[%s262 + $0x4] sm:$0xf] %v3927
      %3992 = vst [vmem:[%s262 + $0x8] sm:$0xf] %v3928
      %3993 = vst [vmem:[%s262 + $0xc] sm:$0xf] %v3929
      %3994 = vst [vmem:[%s262 + $0x10] sm:$0xf] %v3930
      %3995 = vst [vmem:[%s262 + $0x14] sm:$0xf] %v3931
      %3996 = vst [vmem:[%s262 + $0x18] sm:$0xf] %v3932
      %3997 = vst [vmem:[%s262 + $0x1c] sm:$0xf] %v3933
      %3998 = vst [vmem:[%s262 + $0x20] sm:$0xf] %v3934
      %3999 = vst [vmem:[%s262 + $0x24] sm:$0xf] %v3935
      %4000 = vst [vmem:[%s262 + $0x28] sm:$0xf] %v3936
      %4001 = vst [vmem:[%s262 + $0x2c] sm:$0xf] %v3937
      %4002 = vst [vmem:[%s262 + $0x30] sm:$0xf] %v3938
      %4003 = vst [vmem:[%s262 + $0x34] sm:$0xf] %v3939
      %4004 = vst [vmem:[%s262 + $0x38] sm:$0xf] %v3940
      %4005 = vst [vmem:[%s262 + $0x3c] sm:$0xf] %v3941
      %4006 = vst [vmem:[%s262 + $0x40] sm:$0xf] %v3942
      %4007 = vst [vmem:[%s262 + $0x44] sm:$0xf] %v3943
      %4008 = vst [vmem:[%s262 + $0x48] sm:$0xf] %v3944
      %4009 = vst [vmem:[%s262 + $0x4c] sm:$0xf] %v3945
      %4010 = vst [vmem:[%s262 + $0x50] sm:$0xf] %v3946
      %4011 = vst [vmem:[%s262 + $0x54] sm:$0xf] %v3947
      %4012 = vst [vmem:[%s262 + $0x58] sm:$0xf] %v3948
      %4013 = vst [vmem:[%s262 + $0x5c] sm:$0xf] %v3949
      %4014 = vst [vmem:[%s262 + $0x60] sm:$0xf] %v3950
      %4015 = vst [vmem:[%s262 + $0x64] sm:$0xf] %v3951
      %4016 = vst [vmem:[%s262 + $0x68] sm:$0xf] %v3952
      %4017 = vst [vmem:[%s262 + $0x6c] sm:$0xf] %v3953
      %4018 = vst [vmem:[%s262 + $0x70] sm:$0xf] %v3954
      %4019 = vst [vmem:[%s262 + $0x74] sm:$0xf] %v3955
      %4020 = vst [vmem:[%s262 + $0x78] sm:$0xf] %v3956
      %4021 = vst [vmem:[%s262 + $0x7c] sm:$0xf] %v3957
      %v4022 = vadd.f32 %v3830, %v3831
      %v4023 = vadd.f32 %v4022, %v3832
      %v4024 = vadd.f32 %v4023, %v3833
      %v4025 = vadd.f32 %v4024, %v3834
      %v4026 = vadd.f32 %v4025, %v3835
      %v4027 = vadd.f32 %v4026, %v3836
      %v4028 = vadd.f32 %v4027, %v3837
      %v4029 = vadd.f32 %v4028, %v3838
      %v4030 = vadd.f32 %v4029, %v3839
      %v4031 = vadd.f32 %v4030, %v3840
      %v4032 = vadd.f32 %v4031, %v3841
      %v4033 = vadd.f32 %v4032, %v3842
      %v4034 = vadd.f32 %v4033, %v3843
      %v4035 = vadd.f32 %v4034, %v3844
      %v4036 = vadd.f32 %v4035, %v3845
      %v4037 = vadd.f32 %v4036, %v3846
      %v4038 = vadd.f32 %v4037, %v3847
      %v4039 = vadd.f32 %v4038, %v3848
      %v4040 = vadd.f32 %v4039, %v3849
      %v4041 = vadd.f32 %v4040, %v3850
      %v4042 = vadd.f32 %v4041, %v3851
      %v4043 = vadd.f32 %v4042, %v3852
      %v4044 = vadd.f32 %v4043, %v3853
      %v4045 = vadd.f32 %v4044, %v3854
      %v4046 = vadd.f32 %v4045, %v3855
      %v4047 = vadd.f32 %v4046, %v3856
      %v4048 = vadd.f32 %v4047, %v3857
      %v4049 = vadd.f32 %v4048, %v3858
      %v4050 = vadd.f32 %v4049, %v3859
      %v4051 = vadd.f32 %v4050, %v3860
      %v4052 = vadd.f32 %v4051, %v3861
      %v4053 = vrot.slane %v4052, 4
      %v4054 = vadd.f32 %v4052, %v4053
      %v4055 = vrot.slane %v4054, 2
      %v4056 = vadd.f32 %v4054, %v4055
      %v4057 = vrot.slane %v4056, 1
      %v4058 = vadd.f32 %v4056, %v4057
      %4059 = vst [vmem:[%s265] sm:$0x1] %v4058
      %v4060 = vmul.f32 %v3830, %v3830
      %v4061 = vmul.f32 %v3831, %v3831
      %v4062 = vmul.f32 %v3832, %v3832
      %v4063 = vmul.f32 %v3833, %v3833
      %v4064 = vmul.f32 %v3834, %v3834
      %v4065 = vmul.f32 %v3835, %v3835
      %v4066 = vmul.f32 %v3836, %v3836
      %v4067 = vmul.f32 %v3837, %v3837
      %v4068 = vmul.f32 %v3838, %v3838
      %v4069 = vmul.f32 %v3839, %v3839
      %v4070 = vmul.f32 %v3840, %v3840
      %v4071 = vmul.f32 %v3841, %v3841
      %v4072 = vmul.f32 %v3842, %v3842
      %v4073 = vmul.f32 %v3843, %v3843
      %v4074 = vmul.f32 %v3844, %v3844
      %v4075 = vmul.f32 %v3845, %v3845
      %v4076 = vmul.f32 %v3846, %v3846
      %v4077 = vmul.f32 %v3847, %v3847
      %v4078 = vmul.f32 %v3848, %v3848
      %v4079 = vmul.f32 %v3849, %v3849
      %v4080 = vmul.f32 %v3850, %v3850
      %v4081 = vmul.f32 %v3851, %v3851
      %v4082 = vmul.f32 %v3852, %v3852
      %v4083 = vmul.f32 %v3853, %v3853
      %v4084 = vmul.f32 %v3854, %v3854
      %v4085 = vmul.f32 %v3855, %v3855
      %v4086 = vmul.f32 %v3856, %v3856
      %v4087 = vmul.f32 %v3857, %v3857
      %v4088 = vmul.f32 %v3858, %v3858
      %v4089 = vmul.f32 %v3859, %v3859
      %v4090 = vmul.f32 %v3860, %v3860
      %v4091 = vmul.f32 %v3861, %v3861
      %v4092 = vadd.f32 %v4060, %v4061
      %v4093 = vadd.f32 %v4092, %v4062
      %v4094 = vadd.f32 %v4093, %v4063
      %v4095 = vadd.f32 %v4094, %v4064
      %v4096 = vadd.f32 %v4095, %v4065
      %v4097 = vadd.f32 %v4096, %v4066
      %v4098 = vadd.f32 %v4097, %v4067
      %v4099 = vadd.f32 %v4098, %v4068
      %v4100 = vadd.f32 %v4099, %v4069
      %v4101 = vadd.f32 %v4100, %v4070
      %v4102 = vadd.f32 %v4101, %v4071
      %v4103 = vadd.f32 %v4102, %v4072
      %v4104 = vadd.f32 %v4103, %v4073
      %v4105 = vadd.f32 %v4104, %v4074
      %v4106 = vadd.f32 %v4105, %v4075
      %v4107 = vadd.f32 %v4106, %v4076
      %v4108 = vadd.f32 %v4107, %v4077
      %v4109 = vadd.f32 %v4108, %v4078
      %v4110 = vadd.f32 %v4109, %v4079
      %v4111 = vadd.f32 %v4110, %v4080
      %v4112 = vadd.f32 %v4111, %v4081
      %v4113 = vadd.f32 %v4112, %v4082
      %v4114 = vadd.f32 %v4113, %v4083
      %v4115 = vadd.f32 %v4114, %v4084
      %v4116 = vadd.f32 %v4115, %v4085
      %v4117 = vadd.f32 %v4116, %v4086
      %v4118 = vadd.f32 %v4117, %v4087
      %v4119 = vadd.f32 %v4118, %v4088
      %v4120 = vadd.f32 %v4119, %v4089
      %v4121 = vadd.f32 %v4120, %v4090
      %v4122 = vadd.f32 %v4121, %v4091
      %v4123 = vrot.slane %v4122, 4
      %v4124 = vadd.f32 %v4122, %v4123
      %v4125 = vrot.slane %v4124, 2
      %v4126 = vadd.f32 %v4124, %v4125
      %v4127 = vrot.slane %v4126, 1
      %v4128 = vadd.f32 %v4126, %v4127
      %4129 = vst [vmem:[%s268] sm:$0x1] %v4128
      %p4130 = scmp.lt.s32.totalorder %s18, 1
      %s4131 = scalar_select %p4130, %s18, 1
      %s4132 = smul.addr %s4131, 32
      %s4133 = smul.addr %s4132, 4
      %s4134 = scalar_lea.vmem %s4, %s4133
      %p4135 = scmp.lt.s32.totalorder %s18, 1
      %s4136 = scalar_select %p4135, %s18, 1
      %s4137 = scalar_lea.vmem %s5, %s4136
      %p4138 = scmp.lt.s32.totalorder %s18, 1
      %s4139 = scalar_select %p4138, %s18, 1
      %s4140 = scalar_lea.vmem %s6, %s4139
      // Predicated region
      $region37: #{double_conv.3} parent=35 // pred_check
        %p4141 = pneg %p125
      $region38: #{double_conv.3} parent=35 // pred_check_branch
        %4143 = sbr.rel (%p4141) target = $region40
      $region39: #{double_conv.3} parent=35 // pred_region
        _
      $region40: #{double_conv.3} parent=35 // pred_fallthru
        _
      // Predicated region
      $region41: #{double_conv.3} parent=35 // pred_check
        %p4144 = pneg %p151
      $region42: #{double_conv.3} parent=35 // pred_check_branch
        %4146 = sbr.rel (%p4144) target = $region44
      $region43: #{double_conv.3} parent=35 // pred_region
        _
      $region44: #{double_conv.3} parent=35 // pred_fallthru
        _
      // Predicated region
      $region45: #{double_conv.3} parent=35 // pred_check
        %p4147 = pneg %p177
      $region46: #{double_conv.3} parent=35 // pred_check_branch
        %4149 = sbr.rel (%p4147) target = $region48
      $region47: #{double_conv.3} parent=35 // pred_region
        _
      $region48: #{double_conv.3} parent=35 // pred_fallthru
        _
    $region36: #{double_conv.3} parent=5 // pred_fallthru
      _
    %p4150 = scmp.le.s32.totalorder 2, %s13
    // Predicated region
    $region49: #{double_conv.3} parent=5 // pred_check
      %p4151 = pneg %p4150
    $region50: #{double_conv.3} parent=5 // pred_check_branch
      %4153 = sbr.rel (%p4151) target = $region52
    $region51: #{double_conv.3} parent=5 // pred_region
      %s4154 = ssub.s32 %s13, 2
      // Predicated region
      $region53: #{double_conv.3} parent=51 // pred_check
        %p4155 = pneg %p131
      $region54: #{double_conv.3} parent=51 // pred_check_branch
        %4157 = sbr.rel (%p4155) target = $region56
      $region55: #{double_conv.3} parent=51 // pred_region
        %p4158 = scmp.lt.s32.totalorder %s19, 1
        %s4159 = scalar_select %p4158, %s19, 1
        %s4160 = smul.addr %s4159, 32
        %s4161 = smul.addr %s4160, 4
        %s4162 = scalar_lea.vmem %s4, %s4161
      $region56: #{double_conv.3} parent=51 // pred_fallthru
        _
      // Predicated region
      $region57: #{double_conv.3} parent=51 // pred_check
        %p4163 = pneg %p157
      $region58: #{double_conv.3} parent=51 // pred_check_branch
        %4165 = sbr.rel (%p4163) target = $region60
      $region59: #{double_conv.3} parent=51 // pred_region
        %p4166 = scmp.lt.s32.totalorder %s19, 1
        %s4167 = scalar_select %p4166, %s19, 1
        %s4168 = scalar_lea.vmem %s5, %s4167
      $region60: #{double_conv.3} parent=51 // pred_fallthru
        _
      // Predicated region
      $region61: #{double_conv.3} parent=51 // pred_check
        %p4169 = pneg %p183
      $region62: #{double_conv.3} parent=51 // pred_check_branch
        %4171 = sbr.rel (%p4169) target = $region64
      $region63: #{double_conv.3} parent=51 // pred_region
        %p4172 = scmp.lt.s32.totalorder %s19, 1
        %s4173 = scalar_select %p4172, %s19, 1
        %s4174 = scalar_lea.vmem %s6, %s4173
      $region64: #{double_conv.3} parent=51 // pred_fallthru
        _
    $region52: #{double_conv.3} parent=5 // pred_fallthru
      _
  $region6: #{double_conv.3} parent=0 // loop_footer
    %s17 = sadd.s32 1, %s13
  $region7: #{double_conv.3} parent=0 // loop_footer_branch
    %12 = sbr.rel target = $region3
  $region8: #{double_conv.3} parent=0 // loop_exit
    _

</llo_original>
